<compile_context>
chip_gen: v6e
topology: v6e:2x2x1
jax: 0.10.0
libtpu: 0.0.40
codegen_flags: <defaults>
</compile_context>

<pallas_src>
import functools

import jax
import jax.numpy as jnp
from jax import lax
from jax.experimental import pallas as pl
from jax.experimental.pallas import tpu as pltpu


def _round_up(x, m):
    return ((x + m - 1) // m) * m


# ----------------------------------------------------------------------------
# Kernel: one grid step == one batch element; full T x 2-layer recurrence inside.
# ----------------------------------------------------------------------------
def _gcgru_kernel(a_ref, x_ref,
                  w0_ref, wc0_ref, b0_ref,
                  w1_ref, wc1_ref, b1_ref,
                  out_ref, *, seq_len, rp, n_nodes):
    a = a_ref[...]                                   # (N, N) normalized adjacency
    w0, wc0, b0 = w0_ref[...], wc0_ref[...], b0_ref[...]
    w1, wc1, b1 = w1_ref[...], wc1_ref[...], b1_ref[...]

    def cell(x_in, h, w_all, wc_h, bias):
        # One A-matmul for [x|h], then one wide gate matmul producing the
        # r / u / c pre-activations in lane-aligned 128-column groups.
        xh = jnp.concatenate([x_in, h], axis=1)                      # (N, Pin+Rp)
        axh = jnp.dot(a, xh, preferred_element_type=jnp.float32)     # (N, Pin+Rp)
        g = jnp.dot(axh, w_all, preferred_element_type=jnp.float32) + bias
        r = jax.nn.sigmoid(g[:, :rp])                                # (N, Rp)
        u = jax.nn.sigmoid(g[:, rp:2 * rp])
        arh = jnp.dot(a, r * h, preferred_element_type=jnp.float32)
        c = jnp.tanh(g[:, 2 * rp:]
                     + jnp.dot(arh, wc_h, preferred_element_type=jnp.float32))
        return u * h + (1.0 - u) * c

    def step(t, carry):
        h0, h1 = carry
        x_t = x_ref[t]                                               # (N, Fp)
        h0 = cell(x_t, h0, w0, wc0, b0)
        h1 = cell(h0, h1, w1, wc1, b1)
        return (h0, h1)

    h0 = jnp.zeros((n_nodes, rp), jnp.float32)
    h1 = jnp.zeros((n_nodes, rp), jnp.float32)
    h0, h1 = lax.fori_loop(0, seq_len, step, (h0, h1), unroll=True)

    out_ref[0] = h0.astype(out_ref.dtype)                            # lane-dense stores
    out_ref[1] = h1.astype(out_ref.dtype)


# ----------------------------------------------------------------------------
# One-time weight packing: fused, lane-aligned gate matrices.
#   w_all  : (Pin + Rp, 3*Rp)  rows [0:in_dim] = x-part of r|u|c gates,
#                              rows [Pin:Pin+R] = h-part of r|u gates (c part zero)
#   wc_h   : (Rp, Rp)          h-part of the candidate gate (applied to A@(r*h))
#   bias   : (1, 3*Rp)         [br | bu | bc] in 128-lane groups
# ----------------------------------------------------------------------------
def _pack_cell(cp, in_dim, pin, R, Rp):
    Wr, Wu, Wc = cp["Wr"], cp["Wu"], cp["Wc"]        # PyTorch Linear layout (out, in)
    w_all = jnp.zeros((pin + Rp, 3 * Rp), jnp.float32)
    w_all = w_all.at[:in_dim, 0:R].set(Wr[:, :in_dim].T)
    w_all = w_all.at[:in_dim, Rp:Rp + R].set(Wu[:, :in_dim].T)
    w_all = w_all.at[:in_dim, 2 * Rp:2 * Rp + R].set(Wc[:, :in_dim].T)
    w_all = w_all.at[pin:pin + R, 0:R].set(Wr[:, in_dim:].T)
    w_all = w_all.at[pin:pin + R, Rp:Rp + R].set(Wu[:, in_dim:].T)
    wc_h = jnp.zeros((Rp, Rp), jnp.float32).at[:R, :R].set(Wc[:, in_dim:].T)
    bias = (jnp.zeros((1, 3 * Rp), jnp.float32)
            .at[0, 0:R].set(cp["br"])
            .at[0, Rp:Rp + R].set(cp["bu"])
            .at[0, 2 * Rp:2 * Rp + R].set(cp["bc"]))
    return w_all, wc_h, bias


# ----------------------------------------------------------------------------
# Wrapper: single pallas_call, batch-parallel grid.
# ----------------------------------------------------------------------------
def gcgru_model_forward(params, inputs, norm_adj, opt):
    """inputs: (B, T, N, F), norm_adj: (B, N, N)
    returns (output (B, N, R), hidden (num_layers, B, N, R))"""
    B, T, N, F = inputs.shape
    R = opt["hidden_dim"] // 2
    L = 2                                    # GCGRUModel hard-codes two stacked cells
    Rp = _round_up(R, 128)                   # lane-aligned per-gate width
    Fp = _round_up(F, 128)                   # lane-aligned input feature width

    w0, wc0, b0 = _pack_cell(params["cells"][0], F, Fp, R, Rp)
    w1, wc1, b1 = _pack_cell(params["cells"][1], R, Rp, R, Rp)

    # Pad feature dim once so every in-kernel slab is lane-dense.
    x_pad = jnp.pad(inputs.astype(jnp.float32),
                    ((0, 0), (0, 0), (0, 0), (0, Fp - F)))           # (B, T, N, Fp)

    const = lambda shape: pl.BlockSpec(shape, lambda b: (0,) * len(shape))

    hid_pad = pl.pallas_call(
        functools.partial(_gcgru_kernel, seq_len=T, rp=Rp, n_nodes=N),
        out_shape=jax.ShapeDtypeStruct((B, L, N, Rp), jnp.float32),
        grid=(B,),
        in_specs=[
            pl.BlockSpec((None, N, N), lambda b: (b, 0, 0)),          # per-batch adjacency
            pl.BlockSpec((None, T, N, Fp), lambda b: (b, 0, 0, 0)),   # whole per-batch sequence
            const((Fp + Rp, 3 * Rp)), const((Rp, Rp)), const((1, 3 * Rp)),   # layer 0
            const((Rp + Rp, 3 * Rp)), const((Rp, Rp)), const((1, 3 * Rp)),   # layer 1
        ],
        out_specs=pl.BlockSpec((None, L, N, Rp), lambda b: (b, 0, 0, 0)),
        compiler_params=pltpu.CompilerParams(
            dimension_semantics=("parallel",),                        # 2x on v7x (2 TCs)
            vmem_limit_bytes=32 * 1024 * 1024),
    )(norm_adj.astype(jnp.float32), x_pad, w0, wc0, b0, w1, wc1, b1)

    hidden = jnp.transpose(hid_pad[..., :R], (1, 0, 2, 3))            # (L, B, N, R)
    output = hidden[-1]
    return output, hidden


# ----------------------------------------------------------------------------
# Parameters (deterministic, PyTorch-Linear-style uniform init)
# ----------------------------------------------------------------------------
def init_linear(key, fan_in, fan_out):
    k1, k2 = jax.random.split(key)
    bound = 1.0 / jnp.sqrt(jnp.float32(fan_in))
    W = jax.random.uniform(k1, (fan_out, fan_in), jnp.float32, -bound, bound)
    b = jax.random.uniform(k2, (fan_out,), jnp.float32, -bound, bound)
    return W, b


def init_params(key, opt):
    F = opt["num_feature"]
    R = opt["hidden_dim"] // 2
    keys = jax.random.split(key, 6)
    cells = []
    for l, in_dim in enumerate([F, R]):
        cp = {}
        cp["Wr"], cp["br"] = init_linear(keys[3 * l + 0], in_dim + R, R)
        cp["Wu"], cp["bu"] = init_linear(keys[3 * l + 1], in_dim + R, R)
        cp["Wc"], cp["bc"] = init_linear(keys[3 * l + 2], in_dim + R, R)
        cells.append(cp)
    return {"cells": cells}


# ----------------------------------------------------------------------------
# Pure-JAX reference (concat formulation, matches the PyTorch module exactly)
# ----------------------------------------------------------------------------
def ref_forward(params, inputs, norm_adj, rnn_units, num_layers=2):
    B, T, N, _ = inputs.shape
    R = rnn_units

    def gcn(A, x, W, b, act):
        ax = jnp.einsum("bij,bjf->bif", A, x)
        y = jnp.einsum("bnf,of->bno", ax, W) + b
        return jax.nn.sigmoid(y) if act == "sigmoid" else jnp.tanh(y)

    def cell(A, x, hh, cp):
        xh = jnp.concatenate([x, hh], axis=2)
        r = gcn(A, xh, cp["Wr"], cp["br"], "sigmoid")
        u = gcn(A, xh, cp["Wu"], cp["bu"], "sigmoid")
        xrh = jnp.concatenate([x, r * hh], axis=2)
        c = gcn(A, xrh, cp["Wc"], cp["bc"], "tanh")
        return u * hh + (1.0 - u) * c

    h = [jnp.zeros((B, N, R), jnp.float32) for _ in range(num_layers)]
    out = None
    for t in range(T):
        inp = inputs[:, t]
        for l in range(num_layers):
            h[l] = cell(norm_adj, inp, h[l], params["cells"][l])
            inp = h[l]
        out = inp
    return out, jnp.stack(h)


# ----------------------------------------------------------------------------
if __name__ == "__main__":
    opt = {"num_feature": 8, "hidden_dim": 32, "num_adj": 8, "num_layer": 2}
    key = jax.random.PRNGKey(0)
    kp, ks, ka = jax.random.split(key, 3)
    params = init_params(kp, opt)

    B, T, N, F = 2, 8, opt["num_adj"], opt["num_feature"]
    R = opt["hidden_dim"] // 2
    inputs = jax.random.normal(ks, (B, T, N, F), jnp.float32)
    adj_raw = jax.random.uniform(ka, (B, N, N), jnp.float32, 0.1, 1.0)
    norm_adj = adj_raw / jnp.sum(adj_raw, axis=-1, keepdims=True)  # row-normalized adjacency

    output, hidden = gcgru_model_forward(params, inputs, norm_adj, opt)
    output = jax.block_until_ready(output)
    hidden = jax.block_until_ready(hidden)

    ref_out, ref_hid = ref_forward(params, inputs, norm_adj, R)
    assert output.shape == (B, N, R), output.shape
    assert hidden.shape == (2, B, N, R), hidden.shape
    assert jnp.allclose(output, ref_out, rtol=1e-4, atol=1e-5), (output, ref_out)
    assert jnp.allclose(hidden, ref_hid, rtol=1e-4, atol=1e-5), (hidden, ref_hid)
    print("KERNEL_OK")
</pallas_src>

<mosaic_0001>
module attributes {stable_mosaic.version = 11 : i64} {
  func.func @_gcgru_kernel(%arg0: i32, %arg1: memref<1x8x8xf32, #tpu.memory_space<vmem>>, %arg2: memref<1x8x8x128xf32, #tpu.memory_space<vmem>>, %arg3: memref<256x384xf32, #tpu.memory_space<vmem>>, %arg4: memref<128x128xf32, #tpu.memory_space<vmem>>, %arg5: memref<1x384xf32, #tpu.memory_space<vmem>>, %arg6: memref<256x384xf32, #tpu.memory_space<vmem>>, %arg7: memref<128x128xf32, #tpu.memory_space<vmem>>, %arg8: memref<1x384xf32, #tpu.memory_space<vmem>>, %arg9: memref<1x2x8x128xf32, #tpu.memory_space<vmem>>) attributes {dimension_semantics = [#tpu.dimension_semantics<parallel>], iteration_bounds = array<i64: 2>, scalar_prefetch = 0 : i64, scratch_operands = 0 : i64, tpu.core_type = #tpu.core_type<tc>, window_params = [{transform_indices = @transform_0, window_bounds = array<i64: 1, 8, 8>}, {transform_indices = @transform_1, window_bounds = array<i64: 1, 8, 8, 128>}, {pipeline_mode = #tpu.pipeline_mode<synchronous>, transform_indices = @transform_2, window_bounds = array<i64: 256, 384>}, {pipeline_mode = #tpu.pipeline_mode<synchronous>, transform_indices = @transform_3, window_bounds = array<i64: 128, 128>}, {pipeline_mode = #tpu.pipeline_mode<synchronous>, transform_indices = @transform_4, window_bounds = array<i64: 1, 384>}, {pipeline_mode = #tpu.pipeline_mode<synchronous>, transform_indices = @transform_5, window_bounds = array<i64: 256, 384>}, {pipeline_mode = #tpu.pipeline_mode<synchronous>, transform_indices = @transform_6, window_bounds = array<i64: 128, 128>}, {pipeline_mode = #tpu.pipeline_mode<synchronous>, transform_indices = @transform_7, window_bounds = array<i64: 1, 384>}, {transform_indices = @transform_8, window_bounds = array<i64: 1, 2, 8, 128>}]} {
    %c0 = arith.constant 0 : index
    %c0_0 = arith.constant 0 : index
    %c0_1 = arith.constant 0 : index
    %0 = vector.load %arg1[%c0, %c0_0, %c0_1] : memref<1x8x8xf32, #tpu.memory_space<vmem>>, vector<1x8x8xf32>
    %1 = vector.shape_cast %0 : vector<1x8x8xf32> to vector<8x8xf32>
    %c0_2 = arith.constant 0 : index
    %c0_3 = arith.constant 0 : index
    %2 = vector.load %arg3[%c0_2, %c0_3] : memref<256x384xf32, #tpu.memory_space<vmem>>, vector<256x384xf32>
    %c0_4 = arith.constant 0 : index
    %c0_5 = arith.constant 0 : index
    %3 = vector.load %arg4[%c0_4, %c0_5] : memref<128x128xf32, #tpu.memory_space<vmem>>, vector<128x128xf32>
    %c0_6 = arith.constant 0 : index
    %c0_7 = arith.constant 0 : index
    %4 = vector.load %arg5[%c0_6, %c0_7] : memref<1x384xf32, #tpu.memory_space<vmem>>, vector<1x384xf32>
    %c0_8 = arith.constant 0 : index
    %c0_9 = arith.constant 0 : index
    %5 = vector.load %arg6[%c0_8, %c0_9] : memref<256x384xf32, #tpu.memory_space<vmem>>, vector<256x384xf32>
    %c0_10 = arith.constant 0 : index
    %c0_11 = arith.constant 0 : index
    %6 = vector.load %arg7[%c0_10, %c0_11] : memref<128x128xf32, #tpu.memory_space<vmem>>, vector<128x128xf32>
    %c0_12 = arith.constant 0 : index
    %c0_13 = arith.constant 0 : index
    %7 = vector.load %arg8[%c0_12, %c0_13] : memref<1x384xf32, #tpu.memory_space<vmem>>, vector<1x384xf32>
    %cst = arith.constant 0.000000e+00 : f32
    %8 = vector.broadcast %cst : f32 to vector<8x128xf32>
    %cst_14 = arith.constant 0.000000e+00 : f32
    %9 = vector.broadcast %cst_14 : f32 to vector<8x128xf32>
    %c0_i32 = arith.constant 0 : i32
    %c0_15 = arith.constant 0 : index
    %10 = arith.index_cast %c0_i32 : i32 to index
    %c0_16 = arith.constant 0 : index
    %c0_17 = arith.constant 0 : index
    %11 = vector.load %arg2[%c0_15, %10, %c0_16, %c0_17] : memref<1x8x8x128xf32, #tpu.memory_space<vmem>>, vector<1x1x8x128xf32>
    %12 = vector.shape_cast %11 : vector<1x1x8x128xf32> to vector<8x128xf32>
    %13 = tpu.concatenate %12, %8 in 1 : vector<8x128xf32>, vector<8x128xf32> -> vector<8x256xf32>
    %cst_18 = arith.constant dense<0.000000e+00> : vector<8x256xf32>
    %14 = tpu.matmul %1, %13, %cst_18 {dimension_numbers = #tpu.dot_dimension_numbers<[1], [0], [0], [1], [0, 0, 1, 1], [], []>} : vector<8x8xf32>, vector<8x256xf32>, vector<8x256xf32> -> vector<8x256xf32>
    %cst_19 = arith.constant dense<0.000000e+00> : vector<8x384xf32>
    %15 = tpu.matmul %14, %2, %cst_19 {dimension_numbers = #tpu.dot_dimension_numbers<[1], [0], [0], [1], [0, 0, 1, 1], [], []>} : vector<8x256xf32>, vector<256x384xf32>, vector<8x384xf32> -> vector<8x384xf32>
    %16 = vector.broadcast %4 : vector<1x384xf32> to vector<8x384xf32>
    %17 = arith.addf %15, %16 : vector<8x384xf32>
    %18 = vector.extract_strided_slice %17 {offsets = [0, 0], sizes = [8, 128], strides = [1, 1]} : vector<8x384xf32> to vector<8x128xf32>
    %19 = arith.negf %18 : vector<8x128xf32>
    %20 = math.exp %19 : vector<8x128xf32>
    %cst_20 = arith.constant 1.000000e+00 : f32
    %21 = vector.broadcast %cst_20 : f32 to vector<8x128xf32>
    %22 = arith.addf %21, %20 : vector<8x128xf32>
    %23 = arith.divf %21, %22 : vector<8x128xf32>
    %24 = vector.extract_strided_slice %17 {offsets = [0, 128], sizes = [8, 128], strides = [1, 1]} : vector<8x384xf32> to vector<8x128xf32>
    %25 = arith.negf %24 : vector<8x128xf32>
    %26 = math.exp %25 : vector<8x128xf32>
    %cst_21 = arith.constant 1.000000e+00 : f32
    %27 = vector.broadcast %cst_21 : f32 to vector<8x128xf32>
    %28 = arith.addf %27, %26 : vector<8x128xf32>
    %29 = arith.divf %27, %28 : vector<8x128xf32>
    %30 = arith.mulf %23, %8 : vector<8x128xf32>
    %cst_22 = arith.constant dense<0.000000e+00> : vector<8x128xf32>
    %31 = tpu.matmul %1, %30, %cst_22 {dimension_numbers = #tpu.dot_dimension_numbers<[1], [0], [0], [1], [0, 0, 1, 1], [], []>} : vector<8x8xf32>, vector<8x128xf32>, vector<8x128xf32> -> vector<8x128xf32>
    %32 = vector.extract_strided_slice %17 {offsets = [0, 256], sizes = [8, 128], strides = [1, 1]} : vector<8x384xf32> to vector<8x128xf32>
    %cst_23 = arith.constant dense<0.000000e+00> : vector<8x128xf32>
    %33 = tpu.matmul %31, %3, %cst_23 {dimension_numbers = #tpu.dot_dimension_numbers<[1], [0], [0], [1], [0, 0, 1, 1], [], []>} : vector<8x128xf32>, vector<128x128xf32>, vector<8x128xf32> -> vector<8x128xf32>
    %34 = arith.addf %32, %33 : vector<8x128xf32>
    %35 = math.tanh %34 : vector<8x128xf32>
    %36 = arith.mulf %29, %8 : vector<8x128xf32>
    %cst_24 = arith.constant 1.000000e+00 : f32
    %37 = vector.broadcast %cst_24 : f32 to vector<8x128xf32>
    %38 = arith.subf %37, %29 : vector<8x128xf32>
    %39 = arith.mulf %38, %35 : vector<8x128xf32>
    %40 = arith.addf %36, %39 : vector<8x128xf32>
    %41 = tpu.concatenate %40, %9 in 1 : vector<8x128xf32>, vector<8x128xf32> -> vector<8x256xf32>
    %cst_25 = arith.constant dense<0.000000e+00> : vector<8x256xf32>
    %42 = tpu.matmul %1, %41, %cst_25 {dimension_numbers = #tpu.dot_dimension_numbers<[1], [0], [0], [1], [0, 0, 1, 1], [], []>} : vector<8x8xf32>, vector<8x256xf32>, vector<8x256xf32> -> vector<8x256xf32>
    %cst_26 = arith.constant dense<0.000000e+00> : vector<8x384xf32>
    %43 = tpu.matmul %42, %5, %cst_26 {dimension_numbers = #tpu.dot_dimension_numbers<[1], [0], [0], [1], [0, 0, 1, 1], [], []>} : vector<8x256xf32>, vector<256x384xf32>, vector<8x384xf32> -> vector<8x384xf32>
    %44 = vector.broadcast %7 : vector<1x384xf32> to vector<8x384xf32>
    %45 = arith.addf %43, %44 : vector<8x384xf32>
    %46 = vector.extract_strided_slice %45 {offsets = [0, 0], sizes = [8, 128], strides = [1, 1]} : vector<8x384xf32> to vector<8x128xf32>
    %47 = arith.negf %46 : vector<8x128xf32>
    %48 = math.exp %47 : vector<8x128xf32>
    %cst_27 = arith.constant 1.000000e+00 : f32
    %49 = vector.broadcast %cst_27 : f32 to vector<8x128xf32>
    %50 = arith.addf %49, %48 : vector<8x128xf32>
    %51 = arith.divf %49, %50 : vector<8x128xf32>
    %52 = vector.extract_strided_slice %45 {offsets = [0, 128], sizes = [8, 128], strides = [1, 1]} : vector<8x384xf32> to vector<8x128xf32>
    %53 = arith.negf %52 : vector<8x128xf32>
    %54 = math.exp %53 : vector<8x128xf32>
    %cst_28 = arith.constant 1.000000e+00 : f32
    %55 = vector.broadcast %cst_28 : f32 to vector<8x128xf32>
    %56 = arith.addf %55, %54 : vector<8x128xf32>
    %57 = arith.divf %55, %56 : vector<8x128xf32>
    %58 = arith.mulf %51, %9 : vector<8x128xf32>
    %cst_29 = arith.constant dense<0.000000e+00> : vector<8x128xf32>
    %59 = tpu.matmul %1, %58, %cst_29 {dimension_numbers = #tpu.dot_dimension_numbers<[1], [0], [0], [1], [0, 0, 1, 1], [], []>} : vector<8x8xf32>, vector<8x128xf32>, vector<8x128xf32> -> vector<8x128xf32>
    %60 = vector.extract_strided_slice %45 {offsets = [0, 256], sizes = [8, 128], strides = [1, 1]} : vector<8x384xf32> to vector<8x128xf32>
    %cst_30 = arith.constant dense<0.000000e+00> : vector<8x128xf32>
    %61 = tpu.matmul %59, %6, %cst_30 {dimension_numbers = #tpu.dot_dimension_numbers<[1], [0], [0], [1], [0, 0, 1, 1], [], []>} : vector<8x128xf32>, vector<128x128xf32>, vector<8x128xf32> -> vector<8x128xf32>
    %62 = arith.addf %60, %61 : vector<8x128xf32>
    %63 = math.tanh %62 : vector<8x128xf32>
    %64 = arith.mulf %57, %9 : vector<8x128xf32>
    %cst_31 = arith.constant 1.000000e+00 : f32
    %65 = vector.broadcast %cst_31 : f32 to vector<8x128xf32>
    %66 = arith.subf %65, %57 : vector<8x128xf32>
    %67 = arith.mulf %66, %63 : vector<8x128xf32>
    %68 = arith.addf %64, %67 : vector<8x128xf32>
    %c1_i32 = arith.constant 1 : i32
    %c0_32 = arith.constant 0 : index
    %69 = arith.index_cast %c1_i32 : i32 to index
    %c0_33 = arith.constant 0 : index
    %c0_34 = arith.constant 0 : index
    %70 = vector.load %arg2[%c0_32, %69, %c0_33, %c0_34] : memref<1x8x8x128xf32, #tpu.memory_space<vmem>>, vector<1x1x8x128xf32>
    %71 = vector.shape_cast %70 : vector<1x1x8x128xf32> to vector<8x128xf32>
    %72 = tpu.concatenate %71, %40 in 1 : vector<8x128xf32>, vector<8x128xf32> -> vector<8x256xf32>
    %cst_35 = arith.constant dense<0.000000e+00> : vector<8x256xf32>
    %73 = tpu.matmul %1, %72, %cst_35 {dimension_numbers = #tpu.dot_dimension_numbers<[1], [0], [0], [1], [0, 0, 1, 1], [], []>} : vector<8x8xf32>, vector<8x256xf32>, vector<8x256xf32> -> vector<8x256xf32>
    %cst_36 = arith.constant dense<0.000000e+00> : vector<8x384xf32>
    %74 = tpu.matmul %73, %2, %cst_36 {dimension_numbers = #tpu.dot_dimension_numbers<[1], [0], [0], [1], [0, 0, 1, 1], [], []>} : vector<8x256xf32>, vector<256x384xf32>, vector<8x384xf32> -> vector<8x384xf32>
    %75 = vector.broadcast %4 : vector<1x384xf32> to vector<8x384xf32>
    %76 = arith.addf %74, %75 : vector<8x384xf32>
    %77 = vector.extract_strided_slice %76 {offsets = [0, 0], sizes = [8, 128], strides = [1, 1]} : vector<8x384xf32> to vector<8x128xf32>
    %78 = arith.negf %77 : vector<8x128xf32>
    %79 = math.exp %78 : vector<8x128xf32>
    %cst_37 = arith.constant 1.000000e+00 : f32
    %80 = vector.broadcast %cst_37 : f32 to vector<8x128xf32>
    %81 = arith.addf %80, %79 : vector<8x128xf32>
    %82 = arith.divf %80, %81 : vector<8x128xf32>
    %83 = vector.extract_strided_slice %76 {offsets = [0, 128], sizes = [8, 128], strides = [1, 1]} : vector<8x384xf32> to vector<8x128xf32>
    %84 = arith.negf %83 : vector<8x128xf32>
    %85 = math.exp %84 : vector<8x128xf32>
    %cst_38 = arith.constant 1.000000e+00 : f32
    %86 = vector.broadcast %cst_38 : f32 to vector<8x128xf32>
    %87 = arith.addf %86, %85 : vector<8x128xf32>
    %88 = arith.divf %86, %87 : vector<8x128xf32>
    %89 = arith.mulf %82, %40 : vector<8x128xf32>
    %cst_39 = arith.constant dense<0.000000e+00> : vector<8x128xf32>
    %90 = tpu.matmul %1, %89, %cst_39 {dimension_numbers = #tpu.dot_dimension_numbers<[1], [0], [0], [1], [0, 0, 1, 1], [], []>} : vector<8x8xf32>, vector<8x128xf32>, vector<8x128xf32> -> vector<8x128xf32>
    %91 = vector.extract_strided_slice %76 {offsets = [0, 256], sizes = [8, 128], strides = [1, 1]} : vector<8x384xf32> to vector<8x128xf32>
    %cst_40 = arith.constant dense<0.000000e+00> : vector<8x128xf32>
    %92 = tpu.matmul %90, %3, %cst_40 {dimension_numbers = #tpu.dot_dimension_numbers<[1], [0], [0], [1], [0, 0, 1, 1], [], []>} : vector<8x128xf32>, vector<128x128xf32>, vector<8x128xf32> -> vector<8x128xf32>
    %93 = arith.addf %91, %92 : vector<8x128xf32>
    %94 = math.tanh %93 : vector<8x128xf32>
    %95 = arith.mulf %88, %40 : vector<8x128xf32>
    %cst_41 = arith.constant 1.000000e+00 : f32
    %96 = vector.broadcast %cst_41 : f32 to vector<8x128xf32>
    %97 = arith.subf %96, %88 : vector<8x128xf32>
    %98 = arith.mulf %97, %94 : vector<8x128xf32>
    %99 = arith.addf %95, %98 : vector<8x128xf32>
    %100 = tpu.concatenate %99, %68 in 1 : vector<8x128xf32>, vector<8x128xf32> -> vector<8x256xf32>
    %cst_42 = arith.constant dense<0.000000e+00> : vector<8x256xf32>
    %101 = tpu.matmul %1, %100, %cst_42 {dimension_numbers = #tpu.dot_dimension_numbers<[1], [0], [0], [1], [0, 0, 1, 1], [], []>} : vector<8x8xf32>, vector<8x256xf32>, vector<8x256xf32> -> vector<8x256xf32>
    %cst_43 = arith.constant dense<0.000000e+00> : vector<8x384xf32>
    %102 = tpu.matmul %101, %5, %cst_43 {dimension_numbers = #tpu.dot_dimension_numbers<[1], [0], [0], [1], [0, 0, 1, 1], [], []>} : vector<8x256xf32>, vector<256x384xf32>, vector<8x384xf32> -> vector<8x384xf32>
    %103 = vector.broadcast %7 : vector<1x384xf32> to vector<8x384xf32>
    %104 = arith.addf %102, %103 : vector<8x384xf32>
    %105 = vector.extract_strided_slice %104 {offsets = [0, 0], sizes = [8, 128], strides = [1, 1]} : vector<8x384xf32> to vector<8x128xf32>
    %106 = arith.negf %105 : vector<8x128xf32>
    %107 = math.exp %106 : vector<8x128xf32>
    %cst_44 = arith.constant 1.000000e+00 : f32
    %108 = vector.broadcast %cst_44 : f32 to vector<8x128xf32>
    %109 = arith.addf %108, %107 : vector<8x128xf32>
    %110 = arith.divf %108, %109 : vector<8x128xf32>
    %111 = vector.extract_strided_slice %104 {offsets = [0, 128], sizes = [8, 128], strides = [1, 1]} : vector<8x384xf32> to vector<8x128xf32>
    %112 = arith.negf %111 : vector<8x128xf32>
    %113 = math.exp %112 : vector<8x128xf32>
    %cst_45 = arith.constant 1.000000e+00 : f32
    %114 = vector.broadcast %cst_45 : f32 to vector<8x128xf32>
    %115 = arith.addf %114, %113 : vector<8x128xf32>
    %116 = arith.divf %114, %115 : vector<8x128xf32>
    %117 = arith.mulf %110, %68 : vector<8x128xf32>
    %cst_46 = arith.constant dense<0.000000e+00> : vector<8x128xf32>
    %118 = tpu.matmul %1, %117, %cst_46 {dimension_numbers = #tpu.dot_dimension_numbers<[1], [0], [0], [1], [0, 0, 1, 1], [], []>} : vector<8x8xf32>, vector<8x128xf32>, vector<8x128xf32> -> vector<8x128xf32>
    %119 = vector.extract_strided_slice %104 {offsets = [0, 256], sizes = [8, 128], strides = [1, 1]} : vector<8x384xf32> to vector<8x128xf32>
    %cst_47 = arith.constant dense<0.000000e+00> : vector<8x128xf32>
    %120 = tpu.matmul %118, %6, %cst_47 {dimension_numbers = #tpu.dot_dimension_numbers<[1], [0], [0], [1], [0, 0, 1, 1], [], []>} : vector<8x128xf32>, vector<128x128xf32>, vector<8x128xf32> -> vector<8x128xf32>
    %121 = arith.addf %119, %120 : vector<8x128xf32>
    %122 = math.tanh %121 : vector<8x128xf32>
    %123 = arith.mulf %116, %68 : vector<8x128xf32>
    %cst_48 = arith.constant 1.000000e+00 : f32
    %124 = vector.broadcast %cst_48 : f32 to vector<8x128xf32>
    %125 = arith.subf %124, %116 : vector<8x128xf32>
    %126 = arith.mulf %125, %122 : vector<8x128xf32>
    %127 = arith.addf %123, %126 : vector<8x128xf32>
    %c2_i32 = arith.constant 2 : i32
    %c0_49 = arith.constant 0 : index
    %128 = arith.index_cast %c2_i32 : i32 to index
    %c0_50 = arith.constant 0 : index
    %c0_51 = arith.constant 0 : index
    %129 = vector.load %arg2[%c0_49, %128, %c0_50, %c0_51] : memref<1x8x8x128xf32, #tpu.memory_space<vmem>>, vector<1x1x8x128xf32>
    %130 = vector.shape_cast %129 : vector<1x1x8x128xf32> to vector<8x128xf32>
    %131 = tpu.concatenate %130, %99 in 1 : vector<8x128xf32>, vector<8x128xf32> -> vector<8x256xf32>
    %cst_52 = arith.constant dense<0.000000e+00> : vector<8x256xf32>
    %132 = tpu.matmul %1, %131, %cst_52 {dimension_numbers = #tpu.dot_dimension_numbers<[1], [0], [0], [1], [0, 0, 1, 1], [], []>} : vector<8x8xf32>, vector<8x256xf32>, vector<8x256xf32> -> vector<8x256xf32>
    %cst_53 = arith.constant dense<0.000000e+00> : vector<8x384xf32>
    %133 = tpu.matmul %132, %2, %cst_53 {dimension_numbers = #tpu.dot_dimension_numbers<[1], [0], [0], [1], [0, 0, 1, 1], [], []>} : vector<8x256xf32>, vector<256x384xf32>, vector<8x384xf32> -> vector<8x384xf32>
    %134 = vector.broadcast %4 : vector<1x384xf32> to vector<8x384xf32>
    %135 = arith.addf %133, %134 : vector<8x384xf32>
    %136 = vector.extract_strided_slice %135 {offsets = [0, 0], sizes = [8, 128], strides = [1, 1]} : vector<8x384xf32> to vector<8x128xf32>
    %137 = arith.negf %136 : vector<8x128xf32>
    %138 = math.exp %137 : vector<8x128xf32>
    %cst_54 = arith.constant 1.000000e+00 : f32
    %139 = vector.broadcast %cst_54 : f32 to vector<8x128xf32>
    %140 = arith.addf %139, %138 : vector<8x128xf32>
    %141 = arith.divf %139, %140 : vector<8x128xf32>
    %142 = vector.extract_strided_slice %135 {offsets = [0, 128], sizes = [8, 128], strides = [1, 1]} : vector<8x384xf32> to vector<8x128xf32>
    %143 = arith.negf %142 : vector<8x128xf32>
    %144 = math.exp %143 : vector<8x128xf32>
    %cst_55 = arith.constant 1.000000e+00 : f32
    %145 = vector.broadcast %cst_55 : f32 to vector<8x128xf32>
    %146 = arith.addf %145, %144 : vector<8x128xf32>
    %147 = arith.divf %145, %146 : vector<8x128xf32>
    %148 = arith.mulf %141, %99 : vector<8x128xf32>
    %cst_56 = arith.constant dense<0.000000e+00> : vector<8x128xf32>
    %149 = tpu.matmul %1, %148, %cst_56 {dimension_numbers = #tpu.dot_dimension_numbers<[1], [0], [0], [1], [0, 0, 1, 1], [], []>} : vector<8x8xf32>, vector<8x128xf32>, vector<8x128xf32> -> vector<8x128xf32>
    %150 = vector.extract_strided_slice %135 {offsets = [0, 256], sizes = [8, 128], strides = [1, 1]} : vector<8x384xf32> to vector<8x128xf32>
    %cst_57 = arith.constant dense<0.000000e+00> : vector<8x128xf32>
    %151 = tpu.matmul %149, %3, %cst_57 {dimension_numbers = #tpu.dot_dimension_numbers<[1], [0], [0], [1], [0, 0, 1, 1], [], []>} : vector<8x128xf32>, vector<128x128xf32>, vector<8x128xf32> -> vector<8x128xf32>
    %152 = arith.addf %150, %151 : vector<8x128xf32>
    %153 = math.tanh %152 : vector<8x128xf32>
    %154 = arith.mulf %147, %99 : vector<8x128xf32>
    %cst_58 = arith.constant 1.000000e+00 : f32
    %155 = vector.broadcast %cst_58 : f32 to vector<8x128xf32>
    %156 = arith.subf %155, %147 : vector<8x128xf32>
    %157 = arith.mulf %156, %153 : vector<8x128xf32>
    %158 = arith.addf %154, %157 : vector<8x128xf32>
    %159 = tpu.concatenate %158, %127 in 1 : vector<8x128xf32>, vector<8x128xf32> -> vector<8x256xf32>
    %cst_59 = arith.constant dense<0.000000e+00> : vector<8x256xf32>
    %160 = tpu.matmul %1, %159, %cst_59 {dimension_numbers = #tpu.dot_dimension_numbers<[1], [0], [0], [1], [0, 0, 1, 1], [], []>} : vector<8x8xf32>, vector<8x256xf32>, vector<8x256xf32> -> vector<8x256xf32>
    %cst_60 = arith.constant dense<0.000000e+00> : vector<8x384xf32>
    %161 = tpu.matmul %160, %5, %cst_60 {dimension_numbers = #tpu.dot_dimension_numbers<[1], [0], [0], [1], [0, 0, 1, 1], [], []>} : vector<8x256xf32>, vector<256x384xf32>, vector<8x384xf32> -> vector<8x384xf32>
    %162 = vector.broadcast %7 : vector<1x384xf32> to vector<8x384xf32>
    %163 = arith.addf %161, %162 : vector<8x384xf32>
    %164 = vector.extract_strided_slice %163 {offsets = [0, 0], sizes = [8, 128], strides = [1, 1]} : vector<8x384xf32> to vector<8x128xf32>
    %165 = arith.negf %164 : vector<8x128xf32>
    %166 = math.exp %165 : vector<8x128xf32>
    %cst_61 = arith.constant 1.000000e+00 : f32
    %167 = vector.broadcast %cst_61 : f32 to vector<8x128xf32>
    %168 = arith.addf %167, %166 : vector<8x128xf32>
    %169 = arith.divf %167, %168 : vector<8x128xf32>
    %170 = vector.extract_strided_slice %163 {offsets = [0, 128], sizes = [8, 128], strides = [1, 1]} : vector<8x384xf32> to vector<8x128xf32>
    %171 = arith.negf %170 : vector<8x128xf32>
    %172 = math.exp %171 : vector<8x128xf32>
    %cst_62 = arith.constant 1.000000e+00 : f32
    %173 = vector.broadcast %cst_62 : f32 to vector<8x128xf32>
    %174 = arith.addf %173, %172 : vector<8x128xf32>
    %175 = arith.divf %173, %174 : vector<8x128xf32>
    %176 = arith.mulf %169, %127 : vector<8x128xf32>
    %cst_63 = arith.constant dense<0.000000e+00> : vector<8x128xf32>
    %177 = tpu.matmul %1, %176, %cst_63 {dimension_numbers = #tpu.dot_dimension_numbers<[1], [0], [0], [1], [0, 0, 1, 1], [], []>} : vector<8x8xf32>, vector<8x128xf32>, vector<8x128xf32> -> vector<8x128xf32>
    %178 = vector.extract_strided_slice %163 {offsets = [0, 256], sizes = [8, 128], strides = [1, 1]} : vector<8x384xf32> to vector<8x128xf32>
    %cst_64 = arith.constant dense<0.000000e+00> : vector<8x128xf32>
    %179 = tpu.matmul %177, %6, %cst_64 {dimension_numbers = #tpu.dot_dimension_numbers<[1], [0], [0], [1], [0, 0, 1, 1], [], []>} : vector<8x128xf32>, vector<128x128xf32>, vector<8x128xf32> -> vector<8x128xf32>
    %180 = arith.addf %178, %179 : vector<8x128xf32>
    %181 = math.tanh %180 : vector<8x128xf32>
    %182 = arith.mulf %175, %127 : vector<8x128xf32>
    %cst_65 = arith.constant 1.000000e+00 : f32
    %183 = vector.broadcast %cst_65 : f32 to vector<8x128xf32>
    %184 = arith.subf %183, %175 : vector<8x128xf32>
    %185 = arith.mulf %184, %181 : vector<8x128xf32>
    %186 = arith.addf %182, %185 : vector<8x128xf32>
    %c3_i32 = arith.constant 3 : i32
    %c0_66 = arith.constant 0 : index
    %187 = arith.index_cast %c3_i32 : i32 to index
    %c0_67 = arith.constant 0 : index
    %c0_68 = arith.constant 0 : index
    %188 = vector.load %arg2[%c0_66, %187, %c0_67, %c0_68] : memref<1x8x8x128xf32, #tpu.memory_space<vmem>>, vector<1x1x8x128xf32>
    %189 = vector.shape_cast %188 : vector<1x1x8x128xf32> to vector<8x128xf32>
    %190 = tpu.concatenate %189, %158 in 1 : vector<8x128xf32>, vector<8x128xf32> -> vector<8x256xf32>
    %cst_69 = arith.constant dense<0.000000e+00> : vector<8x256xf32>
    %191 = tpu.matmul %1, %190, %cst_69 {dimension_numbers = #tpu.dot_dimension_numbers<[1], [0], [0], [1], [0, 0, 1, 1], [], []>} : vector<8x8xf32>, vector<8x256xf32>, vector<8x256xf32> -> vector<8x256xf32>
    %cst_70 = arith.constant dense<0.000000e+00> : vector<8x384xf32>
    %192 = tpu.matmul %191, %2, %cst_70 {dimension_numbers = #tpu.dot_dimension_numbers<[1], [0], [0], [1], [0, 0, 1, 1], [], []>} : vector<8x256xf32>, vector<256x384xf32>, vector<8x384xf32> -> vector<8x384xf32>
    %193 = vector.broadcast %4 : vector<1x384xf32> to vector<8x384xf32>
    %194 = arith.addf %192, %193 : vector<8x384xf32>
    %195 = vector.extract_strided_slice %194 {offsets = [0, 0], sizes = [8, 128], strides = [1, 1]} : vector<8x384xf32> to vector<8x128xf32>
    %196 = arith.negf %195 : vector<8x128xf32>
    %197 = math.exp %196 : vector<8x128xf32>
    %cst_71 = arith.constant 1.000000e+00 : f32
    %198 = vector.broadcast %cst_71 : f32 to vector<8x128xf32>
    %199 = arith.addf %198, %197 : vector<8x128xf32>
    %200 = arith.divf %198, %199 : vector<8x128xf32>
    %201 = vector.extract_strided_slice %194 {offsets = [0, 128], sizes = [8, 128], strides = [1, 1]} : vector<8x384xf32> to vector<8x128xf32>
    %202 = arith.negf %201 : vector<8x128xf32>
    %203 = math.exp %202 : vector<8x128xf32>
    %cst_72 = arith.constant 1.000000e+00 : f32
    %204 = vector.broadcast %cst_72 : f32 to vector<8x128xf32>
    %205 = arith.addf %204, %203 : vector<8x128xf32>
    %206 = arith.divf %204, %205 : vector<8x128xf32>
    %207 = arith.mulf %200, %158 : vector<8x128xf32>
    %cst_73 = arith.constant dense<0.000000e+00> : vector<8x128xf32>
    %208 = tpu.matmul %1, %207, %cst_73 {dimension_numbers = #tpu.dot_dimension_numbers<[1], [0], [0], [1], [0, 0, 1, 1], [], []>} : vector<8x8xf32>, vector<8x128xf32>, vector<8x128xf32> -> vector<8x128xf32>
    %209 = vector.extract_strided_slice %194 {offsets = [0, 256], sizes = [8, 128], strides = [1, 1]} : vector<8x384xf32> to vector<8x128xf32>
    %cst_74 = arith.constant dense<0.000000e+00> : vector<8x128xf32>
    %210 = tpu.matmul %208, %3, %cst_74 {dimension_numbers = #tpu.dot_dimension_numbers<[1], [0], [0], [1], [0, 0, 1, 1], [], []>} : vector<8x128xf32>, vector<128x128xf32>, vector<8x128xf32> -> vector<8x128xf32>
    %211 = arith.addf %209, %210 : vector<8x128xf32>
    %212 = math.tanh %211 : vector<8x128xf32>
    %213 = arith.mulf %206, %158 : vector<8x128xf32>
    %cst_75 = arith.constant 1.000000e+00 : f32
    %214 = vector.broadcast %cst_75 : f32 to vector<8x128xf32>
    %215 = arith.subf %214, %206 : vector<8x128xf32>
    %216 = arith.mulf %215, %212 : vector<8x128xf32>
    %217 = arith.addf %213, %216 : vector<8x128xf32>
    %218 = tpu.concatenate %217, %186 in 1 : vector<8x128xf32>, vector<8x128xf32> -> vector<8x256xf32>
    %cst_76 = arith.constant dense<0.000000e+00> : vector<8x256xf32>
    %219 = tpu.matmul %1, %218, %cst_76 {dimension_numbers = #tpu.dot_dimension_numbers<[1], [0], [0], [1], [0, 0, 1, 1], [], []>} : vector<8x8xf32>, vector<8x256xf32>, vector<8x256xf32> -> vector<8x256xf32>
    %cst_77 = arith.constant dense<0.000000e+00> : vector<8x384xf32>
    %220 = tpu.matmul %219, %5, %cst_77 {dimension_numbers = #tpu.dot_dimension_numbers<[1], [0], [0], [1], [0, 0, 1, 1], [], []>} : vector<8x256xf32>, vector<256x384xf32>, vector<8x384xf32> -> vector<8x384xf32>
    %221 = vector.broadcast %7 : vector<1x384xf32> to vector<8x384xf32>
    %222 = arith.addf %220, %221 : vector<8x384xf32>
    %223 = vector.extract_strided_slice %222 {offsets = [0, 0], sizes = [8, 128], strides = [1, 1]} : vector<8x384xf32> to vector<8x128xf32>
    %224 = arith.negf %223 : vector<8x128xf32>
    %225 = math.exp %224 : vector<8x128xf32>
    %cst_78 = arith.constant 1.000000e+00 : f32
    %226 = vector.broadcast %cst_78 : f32 to vector<8x128xf32>
    %227 = arith.addf %226, %225 : vector<8x128xf32>
    %228 = arith.divf %226, %227 : vector<8x128xf32>
    %229 = vector.extract_strided_slice %222 {offsets = [0, 128], sizes = [8, 128], strides = [1, 1]} : vector<8x384xf32> to vector<8x128xf32>
    %230 = arith.negf %229 : vector<8x128xf32>
    %231 = math.exp %230 : vector<8x128xf32>
    %cst_79 = arith.constant 1.000000e+00 : f32
    %232 = vector.broadcast %cst_79 : f32 to vector<8x128xf32>
    %233 = arith.addf %232, %231 : vector<8x128xf32>
    %234 = arith.divf %232, %233 : vector<8x128xf32>
    %235 = arith.mulf %228, %186 : vector<8x128xf32>
    %cst_80 = arith.constant dense<0.000000e+00> : vector<8x128xf32>
    %236 = tpu.matmul %1, %235, %cst_80 {dimension_numbers = #tpu.dot_dimension_numbers<[1], [0], [0], [1], [0, 0, 1, 1], [], []>} : vector<8x8xf32>, vector<8x128xf32>, vector<8x128xf32> -> vector<8x128xf32>
    %237 = vector.extract_strided_slice %222 {offsets = [0, 256], sizes = [8, 128], strides = [1, 1]} : vector<8x384xf32> to vector<8x128xf32>
    %cst_81 = arith.constant dense<0.000000e+00> : vector<8x128xf32>
    %238 = tpu.matmul %236, %6, %cst_81 {dimension_numbers = #tpu.dot_dimension_numbers<[1], [0], [0], [1], [0, 0, 1, 1], [], []>} : vector<8x128xf32>, vector<128x128xf32>, vector<8x128xf32> -> vector<8x128xf32>
    %239 = arith.addf %237, %238 : vector<8x128xf32>
    %240 = math.tanh %239 : vector<8x128xf32>
    %241 = arith.mulf %234, %186 : vector<8x128xf32>
    %cst_82 = arith.constant 1.000000e+00 : f32
    %242 = vector.broadcast %cst_82 : f32 to vector<8x128xf32>
    %243 = arith.subf %242, %234 : vector<8x128xf32>
    %244 = arith.mulf %243, %240 : vector<8x128xf32>
    %245 = arith.addf %241, %244 : vector<8x128xf32>
    %c4_i32 = arith.constant 4 : i32
    %c0_83 = arith.constant 0 : index
    %246 = arith.index_cast %c4_i32 : i32 to index
    %c0_84 = arith.constant 0 : index
    %c0_85 = arith.constant 0 : index
    %247 = vector.load %arg2[%c0_83, %246, %c0_84, %c0_85] : memref<1x8x8x128xf32, #tpu.memory_space<vmem>>, vector<1x1x8x128xf32>
    %248 = vector.shape_cast %247 : vector<1x1x8x128xf32> to vector<8x128xf32>
    %249 = tpu.concatenate %248, %217 in 1 : vector<8x128xf32>, vector<8x128xf32> -> vector<8x256xf32>
    %cst_86 = arith.constant dense<0.000000e+00> : vector<8x256xf32>
    %250 = tpu.matmul %1, %249, %cst_86 {dimension_numbers = #tpu.dot_dimension_numbers<[1], [0], [0], [1], [0, 0, 1, 1], [], []>} : vector<8x8xf32>, vector<8x256xf32>, vector<8x256xf32> -> vector<8x256xf32>
    %cst_87 = arith.constant dense<0.000000e+00> : vector<8x384xf32>
    %251 = tpu.matmul %250, %2, %cst_87 {dimension_numbers = #tpu.dot_dimension_numbers<[1], [0], [0], [1], [0, 0, 1, 1], [], []>} : vector<8x256xf32>, vector<256x384xf32>, vector<8x384xf32> -> vector<8x384xf32>
    %252 = vector.broadcast %4 : vector<1x384xf32> to vector<8x384xf32>
    %253 = arith.addf %251, %252 : vector<8x384xf32>
    %254 = vector.extract_strided_slice %253 {offsets = [0, 0], sizes = [8, 128], strides = [1, 1]} : vector<8x384xf32> to vector<8x128xf32>
    %255 = arith.negf %254 : vector<8x128xf32>
    %256 = math.exp %255 : vector<8x128xf32>
    %cst_88 = arith.constant 1.000000e+00 : f32
    %257 = vector.broadcast %cst_88 : f32 to vector<8x128xf32>
    %258 = arith.addf %257, %256 : vector<8x128xf32>
    %259 = arith.divf %257, %258 : vector<8x128xf32>
    %260 = vector.extract_strided_slice %253 {offsets = [0, 128], sizes = [8, 128], strides = [1, 1]} : vector<8x384xf32> to vector<8x128xf32>
    %261 = arith.negf %260 : vector<8x128xf32>
    %262 = math.exp %261 : vector<8x128xf32>
    %cst_89 = arith.constant 1.000000e+00 : f32
    %263 = vector.broadcast %cst_89 : f32 to vector<8x128xf32>
    %264 = arith.addf %263, %262 : vector<8x128xf32>
    %265 = arith.divf %263, %264 : vector<8x128xf32>
    %266 = arith.mulf %259, %217 : vector<8x128xf32>
    %cst_90 = arith.constant dense<0.000000e+00> : vector<8x128xf32>
    %267 = tpu.matmul %1, %266, %cst_90 {dimension_numbers = #tpu.dot_dimension_numbers<[1], [0], [0], [1], [0, 0, 1, 1], [], []>} : vector<8x8xf32>, vector<8x128xf32>, vector<8x128xf32> -> vector<8x128xf32>
    %268 = vector.extract_strided_slice %253 {offsets = [0, 256], sizes = [8, 128], strides = [1, 1]} : vector<8x384xf32> to vector<8x128xf32>
    %cst_91 = arith.constant dense<0.000000e+00> : vector<8x128xf32>
    %269 = tpu.matmul %267, %3, %cst_91 {dimension_numbers = #tpu.dot_dimension_numbers<[1], [0], [0], [1], [0, 0, 1, 1], [], []>} : vector<8x128xf32>, vector<128x128xf32>, vector<8x128xf32> -> vector<8x128xf32>
    %270 = arith.addf %268, %269 : vector<8x128xf32>
    %271 = math.tanh %270 : vector<8x128xf32>
    %272 = arith.mulf %265, %217 : vector<8x128xf32>
    %cst_92 = arith.constant 1.000000e+00 : f32
    %273 = vector.broadcast %cst_92 : f32 to vector<8x128xf32>
    %274 = arith.subf %273, %265 : vector<8x128xf32>
    %275 = arith.mulf %274, %271 : vector<8x128xf32>
    %276 = arith.addf %272, %275 : vector<8x128xf32>
    %277 = tpu.concatenate %276, %245 in 1 : vector<8x128xf32>, vector<8x128xf32> -> vector<8x256xf32>
    %cst_93 = arith.constant dense<0.000000e+00> : vector<8x256xf32>
    %278 = tpu.matmul %1, %277, %cst_93 {dimension_numbers = #tpu.dot_dimension_numbers<[1], [0], [0], [1], [0, 0, 1, 1], [], []>} : vector<8x8xf32>, vector<8x256xf32>, vector<8x256xf32> -> vector<8x256xf32>
    %cst_94 = arith.constant dense<0.000000e+00> : vector<8x384xf32>
    %279 = tpu.matmul %278, %5, %cst_94 {dimension_numbers = #tpu.dot_dimension_numbers<[1], [0], [0], [1], [0, 0, 1, 1], [], []>} : vector<8x256xf32>, vector<256x384xf32>, vector<8x384xf32> -> vector<8x384xf32>
    %280 = vector.broadcast %7 : vector<1x384xf32> to vector<8x384xf32>
    %281 = arith.addf %279, %280 : vector<8x384xf32>
    %282 = vector.extract_strided_slice %281 {offsets = [0, 0], sizes = [8, 128], strides = [1, 1]} : vector<8x384xf32> to vector<8x128xf32>
    %283 = arith.negf %282 : vector<8x128xf32>
    %284 = math.exp %283 : vector<8x128xf32>
    %cst_95 = arith.constant 1.000000e+00 : f32
    %285 = vector.broadcast %cst_95 : f32 to vector<8x128xf32>
    %286 = arith.addf %285, %284 : vector<8x128xf32>
    %287 = arith.divf %285, %286 : vector<8x128xf32>
    %288 = vector.extract_strided_slice %281 {offsets = [0, 128], sizes = [8, 128], strides = [1, 1]} : vector<8x384xf32> to vector<8x128xf32>
    %289 = arith.negf %288 : vector<8x128xf32>
    %290 = math.exp %289 : vector<8x128xf32>
    %cst_96 = arith.constant 1.000000e+00 : f32
    %291 = vector.broadcast %cst_96 : f32 to vector<8x128xf32>
    %292 = arith.addf %291, %290 : vector<8x128xf32>
    %293 = arith.divf %291, %292 : vector<8x128xf32>
    %294 = arith.mulf %287, %245 : vector<8x128xf32>
    %cst_97 = arith.constant dense<0.000000e+00> : vector<8x128xf32>
    %295 = tpu.matmul %1, %294, %cst_97 {dimension_numbers = #tpu.dot_dimension_numbers<[1], [0], [0], [1], [0, 0, 1, 1], [], []>} : vector<8x8xf32>, vector<8x128xf32>, vector<8x128xf32> -> vector<8x128xf32>
    %296 = vector.extract_strided_slice %281 {offsets = [0, 256], sizes = [8, 128], strides = [1, 1]} : vector<8x384xf32> to vector<8x128xf32>
    %cst_98 = arith.constant dense<0.000000e+00> : vector<8x128xf32>
    %297 = tpu.matmul %295, %6, %cst_98 {dimension_numbers = #tpu.dot_dimension_numbers<[1], [0], [0], [1], [0, 0, 1, 1], [], []>} : vector<8x128xf32>, vector<128x128xf32>, vector<8x128xf32> -> vector<8x128xf32>
    %298 = arith.addf %296, %297 : vector<8x128xf32>
    %299 = math.tanh %298 : vector<8x128xf32>
    %300 = arith.mulf %293, %245 : vector<8x128xf32>
    %cst_99 = arith.constant 1.000000e+00 : f32
    %301 = vector.broadcast %cst_99 : f32 to vector<8x128xf32>
    %302 = arith.subf %301, %293 : vector<8x128xf32>
    %303 = arith.mulf %302, %299 : vector<8x128xf32>
    %304 = arith.addf %300, %303 : vector<8x128xf32>
    %c5_i32 = arith.constant 5 : i32
    %c0_100 = arith.constant 0 : index
    %305 = arith.index_cast %c5_i32 : i32 to index
    %c0_101 = arith.constant 0 : index
    %c0_102 = arith.constant 0 : index
    %306 = vector.load %arg2[%c0_100, %305, %c0_101, %c0_102] : memref<1x8x8x128xf32, #tpu.memory_space<vmem>>, vector<1x1x8x128xf32>
    %307 = vector.shape_cast %306 : vector<1x1x8x128xf32> to vector<8x128xf32>
    %308 = tpu.concatenate %307, %276 in 1 : vector<8x128xf32>, vector<8x128xf32> -> vector<8x256xf32>
    %cst_103 = arith.constant dense<0.000000e+00> : vector<8x256xf32>
    %309 = tpu.matmul %1, %308, %cst_103 {dimension_numbers = #tpu.dot_dimension_numbers<[1], [0], [0], [1], [0, 0, 1, 1], [], []>} : vector<8x8xf32>, vector<8x256xf32>, vector<8x256xf32> -> vector<8x256xf32>
    %cst_104 = arith.constant dense<0.000000e+00> : vector<8x384xf32>
    %310 = tpu.matmul %309, %2, %cst_104 {dimension_numbers = #tpu.dot_dimension_numbers<[1], [0], [0], [1], [0, 0, 1, 1], [], []>} : vector<8x256xf32>, vector<256x384xf32>, vector<8x384xf32> -> vector<8x384xf32>
    %311 = vector.broadcast %4 : vector<1x384xf32> to vector<8x384xf32>
    %312 = arith.addf %310, %311 : vector<8x384xf32>
    %313 = vector.extract_strided_slice %312 {offsets = [0, 0], sizes = [8, 128], strides = [1, 1]} : vector<8x384xf32> to vector<8x128xf32>
    %314 = arith.negf %313 : vector<8x128xf32>
    %315 = math.exp %314 : vector<8x128xf32>
    %cst_105 = arith.constant 1.000000e+00 : f32
    %316 = vector.broadcast %cst_105 : f32 to vector<8x128xf32>
    %317 = arith.addf %316, %315 : vector<8x128xf32>
    %318 = arith.divf %316, %317 : vector<8x128xf32>
    %319 = vector.extract_strided_slice %312 {offsets = [0, 128], sizes = [8, 128], strides = [1, 1]} : vector<8x384xf32> to vector<8x128xf32>
    %320 = arith.negf %319 : vector<8x128xf32>
    %321 = math.exp %320 : vector<8x128xf32>
    %cst_106 = arith.constant 1.000000e+00 : f32
    %322 = vector.broadcast %cst_106 : f32 to vector<8x128xf32>
    %323 = arith.addf %322, %321 : vector<8x128xf32>
    %324 = arith.divf %322, %323 : vector<8x128xf32>
    %325 = arith.mulf %318, %276 : vector<8x128xf32>
    %cst_107 = arith.constant dense<0.000000e+00> : vector<8x128xf32>
    %326 = tpu.matmul %1, %325, %cst_107 {dimension_numbers = #tpu.dot_dimension_numbers<[1], [0], [0], [1], [0, 0, 1, 1], [], []>} : vector<8x8xf32>, vector<8x128xf32>, vector<8x128xf32> -> vector<8x128xf32>
    %327 = vector.extract_strided_slice %312 {offsets = [0, 256], sizes = [8, 128], strides = [1, 1]} : vector<8x384xf32> to vector<8x128xf32>
    %cst_108 = arith.constant dense<0.000000e+00> : vector<8x128xf32>
    %328 = tpu.matmul %326, %3, %cst_108 {dimension_numbers = #tpu.dot_dimension_numbers<[1], [0], [0], [1], [0, 0, 1, 1], [], []>} : vector<8x128xf32>, vector<128x128xf32>, vector<8x128xf32> -> vector<8x128xf32>
    %329 = arith.addf %327, %328 : vector<8x128xf32>
    %330 = math.tanh %329 : vector<8x128xf32>
    %331 = arith.mulf %324, %276 : vector<8x128xf32>
    %cst_109 = arith.constant 1.000000e+00 : f32
    %332 = vector.broadcast %cst_109 : f32 to vector<8x128xf32>
    %333 = arith.subf %332, %324 : vector<8x128xf32>
    %334 = arith.mulf %333, %330 : vector<8x128xf32>
    %335 = arith.addf %331, %334 : vector<8x128xf32>
    %336 = tpu.concatenate %335, %304 in 1 : vector<8x128xf32>, vector<8x128xf32> -> vector<8x256xf32>
    %cst_110 = arith.constant dense<0.000000e+00> : vector<8x256xf32>
    %337 = tpu.matmul %1, %336, %cst_110 {dimension_numbers = #tpu.dot_dimension_numbers<[1], [0], [0], [1], [0, 0, 1, 1], [], []>} : vector<8x8xf32>, vector<8x256xf32>, vector<8x256xf32> -> vector<8x256xf32>
    %cst_111 = arith.constant dense<0.000000e+00> : vector<8x384xf32>
    %338 = tpu.matmul %337, %5, %cst_111 {dimension_numbers = #tpu.dot_dimension_numbers<[1], [0], [0], [1], [0, 0, 1, 1], [], []>} : vector<8x256xf32>, vector<256x384xf32>, vector<8x384xf32> -> vector<8x384xf32>
    %339 = vector.broadcast %7 : vector<1x384xf32> to vector<8x384xf32>
    %340 = arith.addf %338, %339 : vector<8x384xf32>
    %341 = vector.extract_strided_slice %340 {offsets = [0, 0], sizes = [8, 128], strides = [1, 1]} : vector<8x384xf32> to vector<8x128xf32>
    %342 = arith.negf %341 : vector<8x128xf32>
    %343 = math.exp %342 : vector<8x128xf32>
    %cst_112 = arith.constant 1.000000e+00 : f32
    %344 = vector.broadcast %cst_112 : f32 to vector<8x128xf32>
    %345 = arith.addf %344, %343 : vector<8x128xf32>
    %346 = arith.divf %344, %345 : vector<8x128xf32>
    %347 = vector.extract_strided_slice %340 {offsets = [0, 128], sizes = [8, 128], strides = [1, 1]} : vector<8x384xf32> to vector<8x128xf32>
    %348 = arith.negf %347 : vector<8x128xf32>
    %349 = math.exp %348 : vector<8x128xf32>
    %cst_113 = arith.constant 1.000000e+00 : f32
    %350 = vector.broadcast %cst_113 : f32 to vector<8x128xf32>
    %351 = arith.addf %350, %349 : vector<8x128xf32>
    %352 = arith.divf %350, %351 : vector<8x128xf32>
    %353 = arith.mulf %346, %304 : vector<8x128xf32>
    %cst_114 = arith.constant dense<0.000000e+00> : vector<8x128xf32>
    %354 = tpu.matmul %1, %353, %cst_114 {dimension_numbers = #tpu.dot_dimension_numbers<[1], [0], [0], [1], [0, 0, 1, 1], [], []>} : vector<8x8xf32>, vector<8x128xf32>, vector<8x128xf32> -> vector<8x128xf32>
    %355 = vector.extract_strided_slice %340 {offsets = [0, 256], sizes = [8, 128], strides = [1, 1]} : vector<8x384xf32> to vector<8x128xf32>
    %cst_115 = arith.constant dense<0.000000e+00> : vector<8x128xf32>
    %356 = tpu.matmul %354, %6, %cst_115 {dimension_numbers = #tpu.dot_dimension_numbers<[1], [0], [0], [1], [0, 0, 1, 1], [], []>} : vector<8x128xf32>, vector<128x128xf32>, vector<8x128xf32> -> vector<8x128xf32>
    %357 = arith.addf %355, %356 : vector<8x128xf32>
    %358 = math.tanh %357 : vector<8x128xf32>
    %359 = arith.mulf %352, %304 : vector<8x128xf32>
    %cst_116 = arith.constant 1.000000e+00 : f32
    %360 = vector.broadcast %cst_116 : f32 to vector<8x128xf32>
    %361 = arith.subf %360, %352 : vector<8x128xf32>
    %362 = arith.mulf %361, %358 : vector<8x128xf32>
    %363 = arith.addf %359, %362 : vector<8x128xf32>
    %c6_i32 = arith.constant 6 : i32
    %c0_117 = arith.constant 0 : index
    %364 = arith.index_cast %c6_i32 : i32 to index
    %c0_118 = arith.constant 0 : index
    %c0_119 = arith.constant 0 : index
    %365 = vector.load %arg2[%c0_117, %364, %c0_118, %c0_119] : memref<1x8x8x128xf32, #tpu.memory_space<vmem>>, vector<1x1x8x128xf32>
    %366 = vector.shape_cast %365 : vector<1x1x8x128xf32> to vector<8x128xf32>
    %367 = tpu.concatenate %366, %335 in 1 : vector<8x128xf32>, vector<8x128xf32> -> vector<8x256xf32>
    %cst_120 = arith.constant dense<0.000000e+00> : vector<8x256xf32>
    %368 = tpu.matmul %1, %367, %cst_120 {dimension_numbers = #tpu.dot_dimension_numbers<[1], [0], [0], [1], [0, 0, 1, 1], [], []>} : vector<8x8xf32>, vector<8x256xf32>, vector<8x256xf32> -> vector<8x256xf32>
    %cst_121 = arith.constant dense<0.000000e+00> : vector<8x384xf32>
    %369 = tpu.matmul %368, %2, %cst_121 {dimension_numbers = #tpu.dot_dimension_numbers<[1], [0], [0], [1], [0, 0, 1, 1], [], []>} : vector<8x256xf32>, vector<256x384xf32>, vector<8x384xf32> -> vector<8x384xf32>
    %370 = vector.broadcast %4 : vector<1x384xf32> to vector<8x384xf32>
    %371 = arith.addf %369, %370 : vector<8x384xf32>
    %372 = vector.extract_strided_slice %371 {offsets = [0, 0], sizes = [8, 128], strides = [1, 1]} : vector<8x384xf32> to vector<8x128xf32>
    %373 = arith.negf %372 : vector<8x128xf32>
    %374 = math.exp %373 : vector<8x128xf32>
    %cst_122 = arith.constant 1.000000e+00 : f32
    %375 = vector.broadcast %cst_122 : f32 to vector<8x128xf32>
    %376 = arith.addf %375, %374 : vector<8x128xf32>
    %377 = arith.divf %375, %376 : vector<8x128xf32>
    %378 = vector.extract_strided_slice %371 {offsets = [0, 128], sizes = [8, 128], strides = [1, 1]} : vector<8x384xf32> to vector<8x128xf32>
    %379 = arith.negf %378 : vector<8x128xf32>
    %380 = math.exp %379 : vector<8x128xf32>
    %cst_123 = arith.constant 1.000000e+00 : f32
    %381 = vector.broadcast %cst_123 : f32 to vector<8x128xf32>
    %382 = arith.addf %381, %380 : vector<8x128xf32>
    %383 = arith.divf %381, %382 : vector<8x128xf32>
    %384 = arith.mulf %377, %335 : vector<8x128xf32>
    %cst_124 = arith.constant dense<0.000000e+00> : vector<8x128xf32>
    %385 = tpu.matmul %1, %384, %cst_124 {dimension_numbers = #tpu.dot_dimension_numbers<[1], [0], [0], [1], [0, 0, 1, 1], [], []>} : vector<8x8xf32>, vector<8x128xf32>, vector<8x128xf32> -> vector<8x128xf32>
    %386 = vector.extract_strided_slice %371 {offsets = [0, 256], sizes = [8, 128], strides = [1, 1]} : vector<8x384xf32> to vector<8x128xf32>
    %cst_125 = arith.constant dense<0.000000e+00> : vector<8x128xf32>
    %387 = tpu.matmul %385, %3, %cst_125 {dimension_numbers = #tpu.dot_dimension_numbers<[1], [0], [0], [1], [0, 0, 1, 1], [], []>} : vector<8x128xf32>, vector<128x128xf32>, vector<8x128xf32> -> vector<8x128xf32>
    %388 = arith.addf %386, %387 : vector<8x128xf32>
    %389 = math.tanh %388 : vector<8x128xf32>
    %390 = arith.mulf %383, %335 : vector<8x128xf32>
    %cst_126 = arith.constant 1.000000e+00 : f32
    %391 = vector.broadcast %cst_126 : f32 to vector<8x128xf32>
    %392 = arith.subf %391, %383 : vector<8x128xf32>
    %393 = arith.mulf %392, %389 : vector<8x128xf32>
    %394 = arith.addf %390, %393 : vector<8x128xf32>
    %395 = tpu.concatenate %394, %363 in 1 : vector<8x128xf32>, vector<8x128xf32> -> vector<8x256xf32>
    %cst_127 = arith.constant dense<0.000000e+00> : vector<8x256xf32>
    %396 = tpu.matmul %1, %395, %cst_127 {dimension_numbers = #tpu.dot_dimension_numbers<[1], [0], [0], [1], [0, 0, 1, 1], [], []>} : vector<8x8xf32>, vector<8x256xf32>, vector<8x256xf32> -> vector<8x256xf32>
    %cst_128 = arith.constant dense<0.000000e+00> : vector<8x384xf32>
    %397 = tpu.matmul %396, %5, %cst_128 {dimension_numbers = #tpu.dot_dimension_numbers<[1], [0], [0], [1], [0, 0, 1, 1], [], []>} : vector<8x256xf32>, vector<256x384xf32>, vector<8x384xf32> -> vector<8x384xf32>
    %398 = vector.broadcast %7 : vector<1x384xf32> to vector<8x384xf32>
    %399 = arith.addf %397, %398 : vector<8x384xf32>
    %400 = vector.extract_strided_slice %399 {offsets = [0, 0], sizes = [8, 128], strides = [1, 1]} : vector<8x384xf32> to vector<8x128xf32>
    %401 = arith.negf %400 : vector<8x128xf32>
    %402 = math.exp %401 : vector<8x128xf32>
    %cst_129 = arith.constant 1.000000e+00 : f32
    %403 = vector.broadcast %cst_129 : f32 to vector<8x128xf32>
    %404 = arith.addf %403, %402 : vector<8x128xf32>
    %405 = arith.divf %403, %404 : vector<8x128xf32>
    %406 = vector.extract_strided_slice %399 {offsets = [0, 128], sizes = [8, 128], strides = [1, 1]} : vector<8x384xf32> to vector<8x128xf32>
    %407 = arith.negf %406 : vector<8x128xf32>
    %408 = math.exp %407 : vector<8x128xf32>
    %cst_130 = arith.constant 1.000000e+00 : f32
    %409 = vector.broadcast %cst_130 : f32 to vector<8x128xf32>
    %410 = arith.addf %409, %408 : vector<8x128xf32>
    %411 = arith.divf %409, %410 : vector<8x128xf32>
    %412 = arith.mulf %405, %363 : vector<8x128xf32>
    %cst_131 = arith.constant dense<0.000000e+00> : vector<8x128xf32>
    %413 = tpu.matmul %1, %412, %cst_131 {dimension_numbers = #tpu.dot_dimension_numbers<[1], [0], [0], [1], [0, 0, 1, 1], [], []>} : vector<8x8xf32>, vector<8x128xf32>, vector<8x128xf32> -> vector<8x128xf32>
    %414 = vector.extract_strided_slice %399 {offsets = [0, 256], sizes = [8, 128], strides = [1, 1]} : vector<8x384xf32> to vector<8x128xf32>
    %cst_132 = arith.constant dense<0.000000e+00> : vector<8x128xf32>
    %415 = tpu.matmul %413, %6, %cst_132 {dimension_numbers = #tpu.dot_dimension_numbers<[1], [0], [0], [1], [0, 0, 1, 1], [], []>} : vector<8x128xf32>, vector<128x128xf32>, vector<8x128xf32> -> vector<8x128xf32>
    %416 = arith.addf %414, %415 : vector<8x128xf32>
    %417 = math.tanh %416 : vector<8x128xf32>
    %418 = arith.mulf %411, %363 : vector<8x128xf32>
    %cst_133 = arith.constant 1.000000e+00 : f32
    %419 = vector.broadcast %cst_133 : f32 to vector<8x128xf32>
    %420 = arith.subf %419, %411 : vector<8x128xf32>
    %421 = arith.mulf %420, %417 : vector<8x128xf32>
    %422 = arith.addf %418, %421 : vector<8x128xf32>
    %c7_i32 = arith.constant 7 : i32
    %c0_134 = arith.constant 0 : index
    %423 = arith.index_cast %c7_i32 : i32 to index
    %c0_135 = arith.constant 0 : index
    %c0_136 = arith.constant 0 : index
    %424 = vector.load %arg2[%c0_134, %423, %c0_135, %c0_136] : memref<1x8x8x128xf32, #tpu.memory_space<vmem>>, vector<1x1x8x128xf32>
    %425 = vector.shape_cast %424 : vector<1x1x8x128xf32> to vector<8x128xf32>
    %426 = tpu.concatenate %425, %394 in 1 : vector<8x128xf32>, vector<8x128xf32> -> vector<8x256xf32>
    %cst_137 = arith.constant dense<0.000000e+00> : vector<8x256xf32>
    %427 = tpu.matmul %1, %426, %cst_137 {dimension_numbers = #tpu.dot_dimension_numbers<[1], [0], [0], [1], [0, 0, 1, 1], [], []>} : vector<8x8xf32>, vector<8x256xf32>, vector<8x256xf32> -> vector<8x256xf32>
    %cst_138 = arith.constant dense<0.000000e+00> : vector<8x384xf32>
    %428 = tpu.matmul %427, %2, %cst_138 {dimension_numbers = #tpu.dot_dimension_numbers<[1], [0], [0], [1], [0, 0, 1, 1], [], []>} : vector<8x256xf32>, vector<256x384xf32>, vector<8x384xf32> -> vector<8x384xf32>
    %429 = vector.broadcast %4 : vector<1x384xf32> to vector<8x384xf32>
    %430 = arith.addf %428, %429 : vector<8x384xf32>
    %431 = vector.extract_strided_slice %430 {offsets = [0, 0], sizes = [8, 128], strides = [1, 1]} : vector<8x384xf32> to vector<8x128xf32>
    %432 = arith.negf %431 : vector<8x128xf32>
    %433 = math.exp %432 : vector<8x128xf32>
    %cst_139 = arith.constant 1.000000e+00 : f32
    %434 = vector.broadcast %cst_139 : f32 to vector<8x128xf32>
    %435 = arith.addf %434, %433 : vector<8x128xf32>
    %436 = arith.divf %434, %435 : vector<8x128xf32>
    %437 = vector.extract_strided_slice %430 {offsets = [0, 128], sizes = [8, 128], strides = [1, 1]} : vector<8x384xf32> to vector<8x128xf32>
    %438 = arith.negf %437 : vector<8x128xf32>
    %439 = math.exp %438 : vector<8x128xf32>
    %cst_140 = arith.constant 1.000000e+00 : f32
    %440 = vector.broadcast %cst_140 : f32 to vector<8x128xf32>
    %441 = arith.addf %440, %439 : vector<8x128xf32>
    %442 = arith.divf %440, %441 : vector<8x128xf32>
    %443 = arith.mulf %436, %394 : vector<8x128xf32>
    %cst_141 = arith.constant dense<0.000000e+00> : vector<8x128xf32>
    %444 = tpu.matmul %1, %443, %cst_141 {dimension_numbers = #tpu.dot_dimension_numbers<[1], [0], [0], [1], [0, 0, 1, 1], [], []>} : vector<8x8xf32>, vector<8x128xf32>, vector<8x128xf32> -> vector<8x128xf32>
    %445 = vector.extract_strided_slice %430 {offsets = [0, 256], sizes = [8, 128], strides = [1, 1]} : vector<8x384xf32> to vector<8x128xf32>
    %cst_142 = arith.constant dense<0.000000e+00> : vector<8x128xf32>
    %446 = tpu.matmul %444, %3, %cst_142 {dimension_numbers = #tpu.dot_dimension_numbers<[1], [0], [0], [1], [0, 0, 1, 1], [], []>} : vector<8x128xf32>, vector<128x128xf32>, vector<8x128xf32> -> vector<8x128xf32>
    %447 = arith.addf %445, %446 : vector<8x128xf32>
    %448 = math.tanh %447 : vector<8x128xf32>
    %449 = arith.mulf %442, %394 : vector<8x128xf32>
    %cst_143 = arith.constant 1.000000e+00 : f32
    %450 = vector.broadcast %cst_143 : f32 to vector<8x128xf32>
    %451 = arith.subf %450, %442 : vector<8x128xf32>
    %452 = arith.mulf %451, %448 : vector<8x128xf32>
    %453 = arith.addf %449, %452 : vector<8x128xf32>
    %454 = tpu.concatenate %453, %422 in 1 : vector<8x128xf32>, vector<8x128xf32> -> vector<8x256xf32>
    %cst_144 = arith.constant dense<0.000000e+00> : vector<8x256xf32>
    %455 = tpu.matmul %1, %454, %cst_144 {dimension_numbers = #tpu.dot_dimension_numbers<[1], [0], [0], [1], [0, 0, 1, 1], [], []>} : vector<8x8xf32>, vector<8x256xf32>, vector<8x256xf32> -> vector<8x256xf32>
    %cst_145 = arith.constant dense<0.000000e+00> : vector<8x384xf32>
    %456 = tpu.matmul %455, %5, %cst_145 {dimension_numbers = #tpu.dot_dimension_numbers<[1], [0], [0], [1], [0, 0, 1, 1], [], []>} : vector<8x256xf32>, vector<256x384xf32>, vector<8x384xf32> -> vector<8x384xf32>
    %457 = vector.broadcast %7 : vector<1x384xf32> to vector<8x384xf32>
    %458 = arith.addf %456, %457 : vector<8x384xf32>
    %459 = vector.extract_strided_slice %458 {offsets = [0, 0], sizes = [8, 128], strides = [1, 1]} : vector<8x384xf32> to vector<8x128xf32>
    %460 = arith.negf %459 : vector<8x128xf32>
    %461 = math.exp %460 : vector<8x128xf32>
    %cst_146 = arith.constant 1.000000e+00 : f32
    %462 = vector.broadcast %cst_146 : f32 to vector<8x128xf32>
    %463 = arith.addf %462, %461 : vector<8x128xf32>
    %464 = arith.divf %462, %463 : vector<8x128xf32>
    %465 = vector.extract_strided_slice %458 {offsets = [0, 128], sizes = [8, 128], strides = [1, 1]} : vector<8x384xf32> to vector<8x128xf32>
    %466 = arith.negf %465 : vector<8x128xf32>
    %467 = math.exp %466 : vector<8x128xf32>
    %cst_147 = arith.constant 1.000000e+00 : f32
    %468 = vector.broadcast %cst_147 : f32 to vector<8x128xf32>
    %469 = arith.addf %468, %467 : vector<8x128xf32>
    %470 = arith.divf %468, %469 : vector<8x128xf32>
    %471 = arith.mulf %464, %422 : vector<8x128xf32>
    %cst_148 = arith.constant dense<0.000000e+00> : vector<8x128xf32>
    %472 = tpu.matmul %1, %471, %cst_148 {dimension_numbers = #tpu.dot_dimension_numbers<[1], [0], [0], [1], [0, 0, 1, 1], [], []>} : vector<8x8xf32>, vector<8x128xf32>, vector<8x128xf32> -> vector<8x128xf32>
    %473 = vector.extract_strided_slice %458 {offsets = [0, 256], sizes = [8, 128], strides = [1, 1]} : vector<8x384xf32> to vector<8x128xf32>
    %cst_149 = arith.constant dense<0.000000e+00> : vector<8x128xf32>
    %474 = tpu.matmul %472, %6, %cst_149 {dimension_numbers = #tpu.dot_dimension_numbers<[1], [0], [0], [1], [0, 0, 1, 1], [], []>} : vector<8x128xf32>, vector<128x128xf32>, vector<8x128xf32> -> vector<8x128xf32>
    %475 = arith.addf %473, %474 : vector<8x128xf32>
    %476 = math.tanh %475 : vector<8x128xf32>
    %477 = arith.mulf %470, %422 : vector<8x128xf32>
    %cst_150 = arith.constant 1.000000e+00 : f32
    %478 = vector.broadcast %cst_150 : f32 to vector<8x128xf32>
    %479 = arith.subf %478, %470 : vector<8x128xf32>
    %480 = arith.mulf %479, %476 : vector<8x128xf32>
    %481 = arith.addf %477, %480 : vector<8x128xf32>
    %c8_i32 = arith.constant 8 : i32
    %c0_151 = arith.constant 0 : index
    %c0_152 = arith.constant 0 : index
    %c0_153 = arith.constant 0 : index
    %c0_154 = arith.constant 0 : index
    %482 = vector.load %arg9[%c0_151, %c0_152, %c0_153, %c0_154] : memref<1x2x8x128xf32, #tpu.memory_space<vmem>>, vector<1x1x8x128xf32>
    %483 = vector.shape_cast %482 : vector<1x1x8x128xf32> to vector<8x128xf32>
    %484 = vector.shape_cast %453 : vector<8x128xf32> to vector<1x1x8x128xf32>
    tpu.vector_store %arg9[%c0_151, %c0_152, %c0_153, %c0_154], %484 {strides = array<i32>} : memref<1x2x8x128xf32, #tpu.memory_space<vmem>>, vector<1x1x8x128xf32>,
    %c0_155 = arith.constant 0 : index
    %c1 = arith.constant 1 : index
    %c0_156 = arith.constant 0 : index
    %c0_157 = arith.constant 0 : index
    %485 = vector.load %arg9[%c0_155, %c1, %c0_156, %c0_157] : memref<1x2x8x128xf32, #tpu.memory_space<vmem>>, vector<1x1x8x128xf32>
    %486 = vector.shape_cast %485 : vector<1x1x8x128xf32> to vector<8x128xf32>
    %487 = vector.shape_cast %481 : vector<8x128xf32> to vector<1x1x8x128xf32>
    tpu.vector_store %arg9[%c0_155, %c1, %c0_156, %c0_157], %487 {strides = array<i32>} : memref<1x2x8x128xf32, #tpu.memory_space<vmem>>, vector<1x1x8x128xf32>,
    return
  }
  func.func @transform_0(%arg0: i32) -> (i32, i32, i32) {
    %c0_i32 = arith.constant 0 : i32
    %c0_i32_0 = arith.constant 0 : i32
    %c0_i32_1 = arith.constant 0 : i32
    return %arg0, %c0_i32, %c0_i32_0 : i32, i32, i32
  }
  func.func @transform_1(%arg0: i32) -> (i32, i32, i32, i32) {
    %c0_i32 = arith.constant 0 : i32
    %c0_i32_0 = arith.constant 0 : i32
    %c0_i32_1 = arith.constant 0 : i32
    %c0_i32_2 = arith.constant 0 : i32
    return %arg0, %c0_i32, %c0_i32_0, %c0_i32_1 : i32, i32, i32, i32
  }
  func.func @transform_2(%arg0: i32) -> (i32, i32) {
    %c0_i32 = arith.constant 0 : i32
    %c0_i32_0 = arith.constant 0 : i32
    %c0_i32_1 = arith.constant 0 : i32
    return %c0_i32, %c0_i32_0 : i32, i32
  }
  func.func @transform_3(%arg0: i32) -> (i32, i32) {
    %c0_i32 = arith.constant 0 : i32
    %c0_i32_0 = arith.constant 0 : i32
    %c0_i32_1 = arith.constant 0 : i32
    return %c0_i32, %c0_i32_0 : i32, i32
  }
  func.func @transform_4(%arg0: i32) -> (i32, i32) {
    %c0_i32 = arith.constant 0 : i32
    %c0_i32_0 = arith.constant 0 : i32
    %c0_i32_1 = arith.constant 0 : i32
    return %c0_i32, %c0_i32_0 : i32, i32
  }
  func.func @transform_5(%arg0: i32) -> (i32, i32) {
    %c0_i32 = arith.constant 0 : i32
    %c0_i32_0 = arith.constant 0 : i32
    %c0_i32_1 = arith.constant 0 : i32
    return %c0_i32, %c0_i32_0 : i32, i32
  }
  func.func @transform_6(%arg0: i32) -> (i32, i32) {
    %c0_i32 = arith.constant 0 : i32
    %c0_i32_0 = arith.constant 0 : i32
    %c0_i32_1 = arith.constant 0 : i32
    return %c0_i32, %c0_i32_0 : i32, i32
  }
  func.func @transform_7(%arg0: i32) -> (i32, i32) {
    %c0_i32 = arith.constant 0 : i32
    %c0_i32_0 = arith.constant 0 : i32
    %c0_i32_1 = arith.constant 0 : i32
    return %c0_i32, %c0_i32_0 : i32, i32
  }
  func.func @transform_8(%arg0: i32) -> (i32, i32, i32, i32) {
    %c0_i32 = arith.constant 0 : i32
    %c0_i32_0 = arith.constant 0 : i32
    %c0_i32_1 = arith.constant 0 : i32
    %c0_i32_2 = arith.constant 0 : i32
    return %arg0, %c0_i32, %c0_i32_0, %c0_i32_1 : i32, i32, i32, i32
  }
}

</mosaic_0001>

<llo_original>
// kernel: tpu_custom_call.1
$region0: #{tpu_custom_call.1}
  #allocation0 [shape = 'u32[]', space=smem, size = 0x4, offset = 0x4, fixed_abs, tag = 'smem constant byte address 0x4 - core index']
  #allocation1 [shape = 'u32[144,128]{1,0:T(1,128)}', space=vmem, size = 0x12000, scoped, tag = 'internal scratch']
  %s0 = inlined_call_operand.hbm [shape: f32[2,8,8], index: 0, kind: input, shape index: {}]
  %s1 = inlined_call_operand.hbm [shape: f32[2,8,8,128], index: 1, kind: input, shape index: {}]
  %s2 = inlined_call_operand.hbm [shape: f32[256,384], index: 2, kind: input, shape index: {}]
  %s3 = inlined_call_operand.hbm [shape: f32[128,128], index: 3, kind: input, shape index: {}]
  %s4 = inlined_call_operand.vmem [shape: f32[1,384], index: 4, kind: input, shape index: {}]
  %s5 = inlined_call_operand.hbm [shape: f32[256,384], index: 5, kind: input, shape index: {}]
  %s6 = inlined_call_operand.hbm [shape: f32[128,128], index: 6, kind: input, shape index: {}]
  %s7 = inlined_call_operand.vmem [shape: f32[1,384], index: 7, kind: input, shape index: {}]
  %s8 = inlined_call_operand.hbm [shape: f32[2,2,8,128], index: 8, kind: output, shape index: {}]
  %s9 = sld [smem:[#allocation0]]
  $region89: #{tpu_custom_call.1} parent=0
    _
  %s11 = ssub.s32 1, %s9
  %s12 = scalar_select 0, %s11, %s9
  $region1: #{tpu_custom_call.1} parent=0
    #allocation2 [shape = 'u8[8192]{0}', space=vmem, size = 0x2000, scoped, tag = 'input window, operand 0']
    #allocation3 [shape = 's32[2]{0}', space=sflag, size = 0x8, scoped, tag = 'scoped memory for tpu_custom_call.1']
    #allocation4 [shape = 's32[2]{0}', space=sflag, size = 0x8, scoped, tag = 'scoped memory for tpu_custom_call.1']
    #allocation5 [shape = 'u8[65536]{0}', space=vmem, size = 0x10000, scoped, tag = 'input window, operand 1']
    #allocation6 [shape = 's32[2]{0}', space=sflag, size = 0x8, scoped, tag = 'scoped memory for tpu_custom_call.1']
    #allocation7 [shape = 'u8[393216]{0}', space=vmem, size = 0x60000, scoped, tag = 'input window, operand 2, single buffered']
    #allocation8 [shape = 'u8[65536]{0}', space=vmem, size = 0x10000, scoped, tag = 'input window, operand 3, single buffered']
    #allocation9 [shape = 's32[1]{0}', space=sflag, size = 0x4, scoped, tag = 'scoped memory for tpu_custom_call.1']
    #allocation10 [shape = 'u8[393216]{0}', space=vmem, size = 0x60000, scoped, tag = 'input window, operand 5, single buffered']
    #allocation11 [shape = 'u8[65536]{0}', space=vmem, size = 0x10000, scoped, tag = 'input window, operand 6, single buffered']
    #allocation12 [shape = 's32[1]{0}', space=sflag, size = 0x4, scoped, tag = 'scoped memory for tpu_custom_call.1']
    #allocation13 [shape = 'u8[16384]{0}', space=vmem, size = 0x4000, scoped, tag = 'output window, operand 0']
    %13 = vsyncpa [#allocation3], 0
    %s14 = scalar_lea.sflag [#allocation3], 1
    %15 = vsyncpa %s14, 0
    %16 = vsyncpa [#allocation6], 0
    %s17 = scalar_lea.sflag [#allocation6], 1
    %18 = vsyncpa %s17, 0
    %19 = vsyncpa [#allocation9], 0
    %20 = vsyncpa [#allocation12], 0
    %21 = vsyncpa [#allocation4], 0
    %s22 = scalar_lea.sflag [#allocation4], 1
    %23 = vsyncpa %s22, 0
    loop: start=0, step=1, limit=4
    $region2: #{tpu_custom_call.1} parent=1 // loop_pre_header
      _
    $region3: #{tpu_custom_call.1} parent=1 // loop_header
      %s25 = sphi 0, %s29
      %p26 = scmp.ge.s32.totalorder %s25, 4
      %s35 = sphi 0, %s37
      %s38 = sphi 0, %s35
      %s39 = sphi 0, %s38
      %s55 = sphi 0, %s39
      %s61 = sphi 0, %s63
      %s64 = sphi 0, %s61
      %s65 = sphi 0, %s64
      %s81 = sphi 0, %s65
      %s85 = sphi 0, %s85
      %s87 = sphi 0, %s85
      %s88 = sphi 0, %s87
      %s102 = sphi 0, %s88
      %s106 = sphi 0, %s106
      %s108 = sphi 0, %s106
      %s109 = sphi 0, %s108
      %s123 = sphi 0, %s109
      %s127 = sphi 0, %s127
      %s129 = sphi 0, %s127
      %s130 = sphi 0, %s129
      %s144 = sphi 0, %s130
      %s148 = sphi 0, %s148
      %s150 = sphi 0, %s148
      %s151 = sphi 0, %s150
      %s165 = sphi 0, %s151
      %s169 = sphi 0, %s169
      %s171 = sphi 0, %s169
      %s172 = sphi 0, %s171
      %s186 = sphi 0, %s172
      %s190 = sphi 0, %s190
      %s192 = sphi 0, %s190
      %s193 = sphi 0, %s192
      %s207 = sphi 0, %s193
      %s213 = sphi 0, %s215
      %s216 = sphi 0, %s213
      %s217 = sphi 0, %s216
      %s233 = sphi 0, %s217
    $region4: #{tpu_custom_call.1} parent=1 // loop_header_branch
      %28 = sbr.rel (%p26) target = $region8
    $region5: #{tpu_custom_call.1} parent=1 // loop_body
      %s30 = ssub.s32 %s25, 1
      %s31 = ssub.s32 %s25, 2
      %s32 = sadd.s32 %s25, 1
      %s33 = ssub.s32 %s25, %s32
      %p34 = scmp.eq.s32.totalorder %s33, 0
      %s36 = sadd.s32 %s35, 1
      %s37 = scalar_select %p34, %s35, %s36
      %p40 = pneg %p34
      %p41 = scmp.eq.s32.totalorder %s25, 1
      %p42 = por %p40, %p41
      %p43 = scmp.ne.s32.totalorder %s35, %s38
      %p44 = scmp.eq.s32.totalorder %s25, 0
      %p45 = por %p43, %p44
      %p46 = scmp.ne.s32.totalorder %s35, %s38
      %p47 = scmp.eq.s32.totalorder %s30, 1
      %p48 = por %p46, %p47
      %p49 = scmp.ne.s32.totalorder %s38, %s39
      %p50 = scmp.eq.s32.totalorder %s30, 0
      %p51 = por %p49, %p50
      %p52 = scmp.ne.s32.totalorder %s38, %s39
      %p53 = scmp.eq.s32.totalorder %s31, 1
      %p54 = por %p52, %p53
      %p56 = scmp.ne.s32.totalorder %s39, %s55
      %p57 = scmp.eq.s32.totalorder %s31, 0
      %p58 = por %p56, %p57
      %s59 = ssub.s32 %s25, %s32
      %p60 = scmp.eq.s32.totalorder %s59, 0
      %s62 = sadd.s32 %s61, 1
      %s63 = scalar_select %p60, %s61, %s62
      %p66 = pneg %p60
      %p67 = scmp.eq.s32.totalorder %s25, 1
      %p68 = por %p66, %p67
      %p69 = scmp.ne.s32.totalorder %s61, %s64
      %p70 = scmp.eq.s32.totalorder %s25, 0
      %p71 = por %p69, %p70
      %p72 = scmp.ne.s32.totalorder %s61, %s64
      %p73 = scmp.eq.s32.totalorder %s30, 1
      %p74 = por %p72, %p73
      %p75 = scmp.ne.s32.totalorder %s64, %s65
      %p76 = scmp.eq.s32.totalorder %s30, 0
      %p77 = por %p75, %p76
      %p78 = scmp.ne.s32.totalorder %s64, %s65
      %p79 = scmp.eq.s32.totalorder %s31, 1
      %p80 = por %p78, %p79
      %p82 = scmp.ne.s32.totalorder %s65, %s81
      %p83 = scmp.eq.s32.totalorder %s31, 0
      %p84 = por %p82, %p83
      %s86 = sadd.s32 %s85, 1
      %p89 = scmp.eq.s32.totalorder %s25, 1
      %p90 = scmp.ne.s32.totalorder %s85, %s87
      %p91 = scmp.eq.s32.totalorder %s25, 0
      %p92 = por %p90, %p91
      %p93 = scmp.ne.s32.totalorder %s85, %s87
      %p94 = scmp.eq.s32.totalorder %s30, 1
      %p95 = por %p93, %p94
      %p96 = scmp.ne.s32.totalorder %s87, %s88
      %p97 = scmp.eq.s32.totalorder %s30, 0
      %p98 = por %p96, %p97
      %p99 = scmp.ne.s32.totalorder %s87, %s88
      %p100 = scmp.eq.s32.totalorder %s31, 1
      %p101 = por %p99, %p100
      %p103 = scmp.ne.s32.totalorder %s88, %s102
      %p104 = scmp.eq.s32.totalorder %s31, 0
      %p105 = por %p103, %p104
      %s107 = sadd.s32 %s106, 1
      %p110 = scmp.eq.s32.totalorder %s25, 1
      %p111 = scmp.ne.s32.totalorder %s106, %s108
      %p112 = scmp.eq.s32.totalorder %s25, 0
      %p113 = por %p111, %p112
      %p114 = scmp.ne.s32.totalorder %s106, %s108
      %p115 = scmp.eq.s32.totalorder %s30, 1
      %p116 = por %p114, %p115
      %p117 = scmp.ne.s32.totalorder %s108, %s109
      %p118 = scmp.eq.s32.totalorder %s30, 0
      %p119 = por %p117, %p118
      %p120 = scmp.ne.s32.totalorder %s108, %s109
      %p121 = scmp.eq.s32.totalorder %s31, 1
      %p122 = por %p120, %p121
      %p124 = scmp.ne.s32.totalorder %s109, %s123
      %p125 = scmp.eq.s32.totalorder %s31, 0
      %p126 = por %p124, %p125
      %s128 = sadd.s32 %s127, 1
      %p131 = scmp.eq.s32.totalorder %s25, 1
      %p132 = scmp.ne.s32.totalorder %s127, %s129
      %p133 = scmp.eq.s32.totalorder %s25, 0
      %p134 = por %p132, %p133
      %p135 = scmp.ne.s32.totalorder %s127, %s129
      %p136 = scmp.eq.s32.totalorder %s30, 1
      %p137 = por %p135, %p136
      %p138 = scmp.ne.s32.totalorder %s129, %s130
      %p139 = scmp.eq.s32.totalorder %s30, 0
      %p140 = por %p138, %p139
      %p141 = scmp.ne.s32.totalorder %s129, %s130
      %p142 = scmp.eq.s32.totalorder %s31, 1
      %p143 = por %p141, %p142
      %p145 = scmp.ne.s32.totalorder %s130, %s144
      %p146 = scmp.eq.s32.totalorder %s31, 0
      %p147 = por %p145, %p146
      %s149 = sadd.s32 %s148, 1
      %p152 = scmp.eq.s32.totalorder %s25, 1
      %p153 = scmp.ne.s32.totalorder %s148, %s150
      %p154 = scmp.eq.s32.totalorder %s25, 0
      %p155 = por %p153, %p154
      %p156 = scmp.ne.s32.totalorder %s148, %s150
      %p157 = scmp.eq.s32.totalorder %s30, 1
      %p158 = por %p156, %p157
      %p159 = scmp.ne.s32.totalorder %s150, %s151
      %p160 = scmp.eq.s32.totalorder %s30, 0
      %p161 = por %p159, %p160
      %p162 = scmp.ne.s32.totalorder %s150, %s151
      %p163 = scmp.eq.s32.totalorder %s31, 1
      %p164 = por %p162, %p163
      %p166 = scmp.ne.s32.totalorder %s151, %s165
      %p167 = scmp.eq.s32.totalorder %s31, 0
      %p168 = por %p166, %p167
      %s170 = sadd.s32 %s169, 1
      %p173 = scmp.eq.s32.totalorder %s25, 1
      %p174 = scmp.ne.s32.totalorder %s169, %s171
      %p175 = scmp.eq.s32.totalorder %s25, 0
      %p176 = por %p174, %p175
      %p177 = scmp.ne.s32.totalorder %s169, %s171
      %p178 = scmp.eq.s32.totalorder %s30, 1
      %p179 = por %p177, %p178
      %p180 = scmp.ne.s32.totalorder %s171, %s172
      %p181 = scmp.eq.s32.totalorder %s30, 0
      %p182 = por %p180, %p181
      %p183 = scmp.ne.s32.totalorder %s171, %s172
      %p184 = scmp.eq.s32.totalorder %s31, 1
      %p185 = por %p183, %p184
      %p187 = scmp.ne.s32.totalorder %s172, %s186
      %p188 = scmp.eq.s32.totalorder %s31, 0
      %p189 = por %p187, %p188
      %s191 = sadd.s32 %s190, 1
      %p194 = scmp.eq.s32.totalorder %s25, 1
      %p195 = scmp.ne.s32.totalorder %s190, %s192
      %p196 = scmp.eq.s32.totalorder %s25, 0
      %p197 = por %p195, %p196
      %p198 = scmp.ne.s32.totalorder %s190, %s192
      %p199 = scmp.eq.s32.totalorder %s30, 1
      %p200 = por %p198, %p199
      %p201 = scmp.ne.s32.totalorder %s192, %s193
      %p202 = scmp.eq.s32.totalorder %s30, 0
      %p203 = por %p201, %p202
      %p204 = scmp.ne.s32.totalorder %s192, %s193
      %p205 = scmp.eq.s32.totalorder %s31, 1
      %p206 = por %p204, %p205
      %p208 = scmp.ne.s32.totalorder %s193, %s207
      %p209 = scmp.eq.s32.totalorder %s31, 0
      %p210 = por %p208, %p209
      %s211 = ssub.s32 %s25, %s32
      %p212 = scmp.eq.s32.totalorder %s211, 0
      %s214 = sadd.s32 %s213, 1
      %s215 = scalar_select %p212, %s213, %s214
      %p218 = pneg %p212
      %p219 = scmp.eq.s32.totalorder %s25, 1
      %p220 = por %p218, %p219
      %p221 = scmp.ne.s32.totalorder %s213, %s216
      %p222 = scmp.eq.s32.totalorder %s25, 0
      %p223 = por %p221, %p222
      %p224 = scmp.ne.s32.totalorder %s213, %s216
      %p225 = scmp.eq.s32.totalorder %s30, 1
      %p226 = por %p224, %p225
      %p227 = scmp.ne.s32.totalorder %s216, %s217
      %p228 = scmp.eq.s32.totalorder %s30, 0
      %p229 = por %p227, %p228
      %p230 = scmp.ne.s32.totalorder %s216, %s217
      %p231 = scmp.eq.s32.totalorder %s31, 1
      %p232 = por %p230, %p231
      %p234 = scmp.ne.s32.totalorder %s217, %s233
      %p235 = scmp.eq.s32.totalorder %s31, 0
      %p236 = por %p234, %p235
      %p237 = scmp.le.s32.totalorder 1, %s25
      %p238 = scmp.lt.s32.totalorder %s25, 3
      %p239 = pnand %p237, %p238
      %p240 = pneg %p239
      // Predicated region
      $region9: #{tpu_custom_call.1} parent=5 // pred_check
        _
      $region10: #{tpu_custom_call.1} parent=5 // pred_check_branch
        %242 = sbr.rel (%p239) target = $region12
      $region11: #{tpu_custom_call.1} parent=5 // pred_region
        %s243 = ssub.s32 %s25, 1
        // Predicated region
        $region13: #{tpu_custom_call.1} parent=11 // pred_check
          %p244 = pneg %p98
        $region14: #{tpu_custom_call.1} parent=11 // pred_check_branch
          %246 = sbr.rel (%p244) target = $region16
        $region15: #{tpu_custom_call.1} parent=11 // pred_region
          %s248 = ssub.s32 12288, 12288
          %249 = vsyncadd [#allocation6], %s248
          %s250 = sshll.u32 [#allocation7], 4
          %s251 = int_to_ptr.vmem [resolvable:$true] %s250
          %256 = dma.hbm_to_vmem [thread:$0]  %s2, 12288, %s251, [#allocation6], 384, 384, 24
        $region16: #{tpu_custom_call.1} parent=11 // pred_fallthru
          _
        // Predicated region
        $region17: #{tpu_custom_call.1} parent=11 // pred_check
          %p257 = pneg %p119
        $region18: #{tpu_custom_call.1} parent=11 // pred_check_branch
          %259 = sbr.rel (%p257) target = $region20
        $region19: #{tpu_custom_call.1} parent=11 // pred_region
          %s261 = ssub.s32 2048, 2048
          %262 = vsyncadd [#allocation9], %s261
          %s263 = sshll.u32 [#allocation8], 4
          %s264 = int_to_ptr.vmem [resolvable:$true] %s263
          %269 = dma.hbm_to_vmem [thread:$0]  %s3, 2048, %s264, [#allocation9], 128, 128, 8
        $region20: #{tpu_custom_call.1} parent=11 // pred_fallthru
          _
        // Predicated region
        $region21: #{tpu_custom_call.1} parent=11 // pred_check
          %p270 = pneg %p140
        $region22: #{tpu_custom_call.1} parent=11 // pred_check_branch
          %272 = sbr.rel (%p270) target = $region24
        $region23: #{tpu_custom_call.1} parent=11 // pred_region
          _
        $region24: #{tpu_custom_call.1} parent=11 // pred_fallthru
          _
        // Predicated region
        $region25: #{tpu_custom_call.1} parent=11 // pred_check
          %p273 = pneg %p161
        $region26: #{tpu_custom_call.1} parent=11 // pred_check_branch
          %275 = sbr.rel (%p273) target = $region28
        $region27: #{tpu_custom_call.1} parent=11 // pred_region
          %s277 = ssub.s32 12288, 12288
          %278 = vsyncadd [#allocation9], %s277
          %s279 = sshll.u32 [#allocation10], 4
          %s280 = int_to_ptr.vmem [resolvable:$true] %s279
          %285 = dma.hbm_to_vmem [thread:$0]  %s5, 12288, %s280, [#allocation9], 384, 384, 24
        $region28: #{tpu_custom_call.1} parent=11 // pred_fallthru
          _
        // Predicated region
        $region29: #{tpu_custom_call.1} parent=11 // pred_check
          %p286 = pneg %p182
        $region30: #{tpu_custom_call.1} parent=11 // pred_check_branch
          %288 = sbr.rel (%p286) target = $region32
        $region31: #{tpu_custom_call.1} parent=11 // pred_region
          %s290 = ssub.s32 2048, 2048
          %291 = vsyncadd [#allocation12], %s290
          %s292 = sshll.u32 [#allocation11], 4
          %s293 = int_to_ptr.vmem [resolvable:$true] %s292
          %298 = dma.hbm_to_vmem [thread:$0]  %s6, 2048, %s293, [#allocation12], 128, 128, 8
        $region32: #{tpu_custom_call.1} parent=11 // pred_fallthru
          _
        // Predicated region
        $region33: #{tpu_custom_call.1} parent=11 // pred_check
          %p299 = pneg %p203
        $region34: #{tpu_custom_call.1} parent=11 // pred_check_branch
          %301 = sbr.rel (%p299) target = $region36
        $region35: #{tpu_custom_call.1} parent=11 // pred_region
          _
        $region36: #{tpu_custom_call.1} parent=11 // pred_fallthru
          _
      $region12: #{tpu_custom_call.1} parent=5 // pred_fallthru
        _
      %p302 = scmp.lt.s32.totalorder %s25, 2
      // Predicated region
      $region37: #{tpu_custom_call.1} parent=5 // pred_check
        %p303 = pneg %p302
      $region38: #{tpu_custom_call.1} parent=5 // pred_check_branch
        %305 = sbr.rel (%p303) target = $region40
      $region39: #{tpu_custom_call.1} parent=5 // pred_region
        // Predicated region
        $region41: #{tpu_custom_call.1} parent=39 // pred_check
          %p306 = pneg %p45
        $region42: #{tpu_custom_call.1} parent=39 // pred_check_branch
          %308 = sbr.rel (%p306) target = $region44
        $region43: #{tpu_custom_call.1} parent=39 // pred_region
          %s309 = sand.u32 %s35, 1
          %s310 = scalar_lea.sflag [#allocation3], %s309
          %s311 = sand.u32 %s35, 1
          %s312 = smul.addr %s311, 8
          %s313 = scalar_lea.vmem [#allocation2], %s312
          %s315 = ssub.s32 128, 128
          %316 = vsyncadd %s310, %s315
          %s317 = smul.addr %s25, 128
          %s318 = scalar_lea.hbm %s0, %s317
          %s320 = sshll.u32 %s313, 4
          %s321 = int_to_ptr.vmem [resolvable:$true] %s320
          %323 = dma.hbm_to_vmem [thread:$0]  %s318, 128, %s321, %s310
        $region44: #{tpu_custom_call.1} parent=39 // pred_fallthru
          _
        // Predicated region
        $region45: #{tpu_custom_call.1} parent=39 // pred_check
          %p324 = pneg %p71
        $region46: #{tpu_custom_call.1} parent=39 // pred_check_branch
          %326 = sbr.rel (%p324) target = $region48
        $region47: #{tpu_custom_call.1} parent=39 // pred_region
          %s327 = sand.u32 %s25, 1
          %s328 = scalar_lea.sflag [#allocation6], %s327
          %s329 = sand.u32 %s61, 1
          %s330 = smul.addr %s329, 64
          %s331 = scalar_lea.vmem [#allocation5], %s330
          %s333 = ssub.s32 1024, 1024
          %334 = vsyncadd %s328, %s333
          %s335 = smul.addr %s25, 8
          %s336 = smul.addr %s335, 128
          %s337 = scalar_lea.hbm %s1, %s336
          %s338 = sshll.u32 %s331, 4
          %s339 = int_to_ptr.vmem [resolvable:$true] %s338
          %344 = dma.hbm_to_vmem [thread:$0]  %s337, 1024, %s339, %s328, 128, 128, 8
        $region48: #{tpu_custom_call.1} parent=39 // pred_fallthru
          _
      $region40: #{tpu_custom_call.1} parent=5 // pred_fallthru
        _
      %p345 = scmp.le.s32.totalorder 1, %s25
      %p346 = scmp.lt.s32.totalorder %s25, 3
      %p347 = pnand %p345, %p346
      %p348 = pneg %p347
      // Predicated region
      $region49: #{tpu_custom_call.1} parent=5 // pred_check
        _
      $region50: #{tpu_custom_call.1} parent=5 // pred_check_branch
        %350 = sbr.rel (%p347) target = $region52
      $region51: #{tpu_custom_call.1} parent=5 // pred_region
        %s351 = ssub.s32 %s25, 1
        %s352 = sand.u32 %s38, 1
        %s353 = scalar_lea.sflag [#allocation3], %s352
        %s354 = sand.u32 %s38, 1
        %s355 = smul.addr %s354, 8
        %s356 = scalar_lea.vmem [#allocation2], %s355
        // Predicated region
        $region53: #{tpu_custom_call.1} parent=51 // pred_check
          %p357 = pneg %p51
        $region54: #{tpu_custom_call.1} parent=51 // pred_check_branch
          %359 = sbr.rel (%p357) target = $region56
        $region55: #{tpu_custom_call.1} parent=51 // pred_region
          %360 = dma.done %s353, 128
        $region56: #{tpu_custom_call.1} parent=51 // pred_fallthru
          _
        %s361 = sand.u32 %s30, 1
        %s362 = scalar_lea.sflag [#allocation6], %s361
        %s363 = sand.u32 %s64, 1
        %s364 = smul.addr %s363, 64
        %s365 = scalar_lea.vmem [#allocation5], %s364
        // Predicated region
        $region57: #{tpu_custom_call.1} parent=51 // pred_check
          %p366 = pneg %p77
        $region58: #{tpu_custom_call.1} parent=51 // pred_check_branch
          %368 = sbr.rel (%p366) target = $region60
        $region59: #{tpu_custom_call.1} parent=51 // pred_region
          %369 = dma.done %s362, 1024
        $region60: #{tpu_custom_call.1} parent=51 // pred_fallthru
          _
        // Predicated region
        $region61: #{tpu_custom_call.1} parent=51 // pred_check
          %p370 = pneg %p98
        $region62: #{tpu_custom_call.1} parent=51 // pred_check_branch
          %372 = sbr.rel (%p370) target = $region64
        $region63: #{tpu_custom_call.1} parent=51 // pred_region
          %373 = dma.done [#allocation6], 12288
        $region64: #{tpu_custom_call.1} parent=51 // pred_fallthru
          _
        // Predicated region
        $region65: #{tpu_custom_call.1} parent=51 // pred_check
          %p374 = pneg %p119
        $region66: #{tpu_custom_call.1} parent=51 // pred_check_branch
          %376 = sbr.rel (%p374) target = $region68
        $region67: #{tpu_custom_call.1} parent=51 // pred_region
          %377 = dma.done [#allocation9], 2048
        $region68: #{tpu_custom_call.1} parent=51 // pred_fallthru
          _
        // Predicated region
        $region69: #{tpu_custom_call.1} parent=51 // pred_check
          %p378 = pneg %p161
        $region70: #{tpu_custom_call.1} parent=51 // pred_check_branch
          %380 = sbr.rel (%p378) target = $region72
        $region71: #{tpu_custom_call.1} parent=51 // pred_region
          %381 = dma.done [#allocation9], 12288
        $region72: #{tpu_custom_call.1} parent=51 // pred_fallthru
          _
        // Predicated region
        $region73: #{tpu_custom_call.1} parent=51 // pred_check
          %p382 = pneg %p182
        $region74: #{tpu_custom_call.1} parent=51 // pred_check_branch
          %384 = sbr.rel (%p382) target = $region76
        $region75: #{tpu_custom_call.1} parent=51 // pred_region
          %385 = dma.done [#allocation12], 2048
        $region76: #{tpu_custom_call.1} parent=51 // pred_fallthru
          _
        %s386 = sand.u32 %s38, 1
        %s387 = scalar_lea.sflag [#allocation3], %s386
        %s388 = sand.u32 %s38, 1
        %s389 = smul.addr %s388, 8
        %s390 = scalar_lea.vmem [#allocation2], %s389
        %p391 = pneg %p51
        %p392 = pneg %p48
        %s393 = sand.u32 %s30, 1
        %s394 = scalar_lea.sflag [#allocation6], %s393
        %s395 = sand.u32 %s64, 1
        %s396 = smul.addr %s395, 64
        %s397 = scalar_lea.vmem [#allocation5], %s396
        %p398 = pneg %p77
        %p399 = pneg %p74
        %p400 = pneg %p98
        %p401 = pneg %p95
        %p402 = pneg %p119
        %p403 = pneg %p116
        %p404 = pneg %p140
        %p405 = pneg %p137
        %p406 = pneg %p161
        %p407 = pneg %p158
        %p408 = pneg %p182
        %p409 = pneg %p179
        %p410 = pneg %p203
        %p411 = pneg %p200
        %p412 = pneg %p229
        %p413 = pneg %p226
        %s414 = sand.u32 %s216, 1
        %s415 = scalar_lea.sflag [#allocation4], %s414
        %s416 = sand.u32 %s216, 1
        %s417 = smul.addr %s416, 16
        %s418 = scalar_lea.vmem [#allocation13], %s417
        %v419 = vld [vmem:[%s356] sm:$0xff]
        %v420 = vld [vmem:[#allocation7] sm:$0xff]
        %v421 = vld [vmem:[#allocation7 + $0x8] sm:$0xff]
        %v422 = vld [vmem:[#allocation7 + $0x10] sm:$0xff]
        %v423 = vld [vmem:[#allocation7 + $0x18] sm:$0xff]
        %v424 = vld [vmem:[#allocation7 + $0x20] sm:$0xff]
        %v425 = vld [vmem:[#allocation7 + $0x28] sm:$0xff]
        %v426 = vld [vmem:[#allocation7 + $0x30] sm:$0xff]
        %v427 = vld [vmem:[#allocation7 + $0x38] sm:$0xff]
        %v428 = vld [vmem:[#allocation7 + $0x40] sm:$0xff]
        %v429 = vld [vmem:[#allocation7 + $0x48] sm:$0xff]
        %v430 = vld [vmem:[#allocation7 + $0x50] sm:$0xff]
        %v431 = vld [vmem:[#allocation7 + $0x58] sm:$0xff]
        %v432 = vld [vmem:[#allocation7 + $0x60] sm:$0xff]
        %v433 = vld [vmem:[#allocation7 + $0x68] sm:$0xff]
        %v434 = vld [vmem:[#allocation7 + $0x70] sm:$0xff]
        %v435 = vld [vmem:[#allocation7 + $0x78] sm:$0xff]
        %v436 = vld [vmem:[#allocation7 + $0x80] sm:$0xff]
        %v437 = vld [vmem:[#allocation7 + $0x88] sm:$0xff]
        %v438 = vld [vmem:[#allocation7 + $0x90] sm:$0xff]
        %v439 = vld [vmem:[#allocation7 + $0x98] sm:$0xff]
        %v440 = vld [vmem:[#allocation7 + $0xa0] sm:$0xff]
        %v441 = vld [vmem:[#allocation7 + $0xa8] sm:$0xff]
        %v442 = vld [vmem:[#allocation7 + $0xb0] sm:$0xff]
        %v443 = vld [vmem:[#allocation7 + $0xb8] sm:$0xff]
        %v444 = vld [vmem:[#allocation7 + $0xc0] sm:$0xff]
        %v445 = vld [vmem:[#allocation7 + $0xc8] sm:$0xff]
        %v446 = vld [vmem:[#allocation7 + $0xd0] sm:$0xff]
        %v447 = vld [vmem:[#allocation7 + $0xd8] sm:$0xff]
        %v448 = vld [vmem:[#allocation7 + $0xe0] sm:$0xff]
        %v449 = vld [vmem:[#allocation7 + $0xe8] sm:$0xff]
        %v450 = vld [vmem:[#allocation7 + $0xf0] sm:$0xff]
        %v451 = vld [vmem:[#allocation7 + $0xf8] sm:$0xff]
        %v452 = vld [vmem:[#allocation7 + $0x100] sm:$0xff]
        %v453 = vld [vmem:[#allocation7 + $0x108] sm:$0xff]
        %v454 = vld [vmem:[#allocation7 + $0x110] sm:$0xff]
        %v455 = vld [vmem:[#allocation7 + $0x118] sm:$0xff]
        %v456 = vld [vmem:[#allocation7 + $0x120] sm:$0xff]
        %v457 = vld [vmem:[#allocation7 + $0x128] sm:$0xff]
        %v458 = vld [vmem:[#allocation7 + $0x130] sm:$0xff]
        %v459 = vld [vmem:[#allocation7 + $0x138] sm:$0xff]
        %v460 = vld [vmem:[#allocation7 + $0x140] sm:$0xff]
        %v461 = vld [vmem:[#allocation7 + $0x148] sm:$0xff]
        %v462 = vld [vmem:[#allocation7 + $0x150] sm:$0xff]
        %v463 = vld [vmem:[#allocation7 + $0x158] sm:$0xff]
        %v464 = vld [vmem:[#allocation7 + $0x160] sm:$0xff]
        %v465 = vld [vmem:[#allocation7 + $0x168] sm:$0xff]
        %v466 = vld [vmem:[#allocation7 + $0x170] sm:$0xff]
        %v467 = vld [vmem:[#allocation7 + $0x178] sm:$0xff]
        %v468 = vld [vmem:[#allocation7 + $0x180] sm:$0xff]
        %v469 = vld [vmem:[#allocation7 + $0x188] sm:$0xff]
        %v470 = vld [vmem:[#allocation7 + $0x190] sm:$0xff]
        %v471 = vld [vmem:[#allocation7 + $0x198] sm:$0xff]
        %v472 = vld [vmem:[#allocation7 + $0x1a0] sm:$0xff]
        %v473 = vld [vmem:[#allocation7 + $0x1a8] sm:$0xff]
        %v474 = vld [vmem:[#allocation7 + $0x1b0] sm:$0xff]
        %v475 = vld [vmem:[#allocation7 + $0x1b8] sm:$0xff]
        %v476 = vld [vmem:[#allocation7 + $0x1c0] sm:$0xff]
        %v477 = vld [vmem:[#allocation7 + $0x1c8] sm:$0xff]
        %v478 = vld [vmem:[#allocation7 + $0x1d0] sm:$0xff]
        %v479 = vld [vmem:[#allocation7 + $0x1d8] sm:$0xff]
        %v480 = vld [vmem:[#allocation7 + $0x1e0] sm:$0xff]
        %v481 = vld [vmem:[#allocation7 + $0x1e8] sm:$0xff]
        %v482 = vld [vmem:[#allocation7 + $0x1f0] sm:$0xff]
        %v483 = vld [vmem:[#allocation7 + $0x1f8] sm:$0xff]
        %v484 = vld [vmem:[#allocation7 + $0x200] sm:$0xff]
        %v485 = vld [vmem:[#allocation7 + $0x208] sm:$0xff]
        %v486 = vld [vmem:[#allocation7 + $0x210] sm:$0xff]
        %v487 = vld [vmem:[#allocation7 + $0x218] sm:$0xff]
        %v488 = vld [vmem:[#allocation7 + $0x220] sm:$0xff]
        %v489 = vld [vmem:[#allocation7 + $0x228] sm:$0xff]
        %v490 = vld [vmem:[#allocation7 + $0x230] sm:$0xff]
        %v491 = vld [vmem:[#allocation7 + $0x238] sm:$0xff]
        %v492 = vld [vmem:[#allocation7 + $0x240] sm:$0xff]
        %v493 = vld [vmem:[#allocation7 + $0x248] sm:$0xff]
        %v494 = vld [vmem:[#allocation7 + $0x250] sm:$0xff]
        %v495 = vld [vmem:[#allocation7 + $0x258] sm:$0xff]
        %v496 = vld [vmem:[#allocation7 + $0x260] sm:$0xff]
        %v497 = vld [vmem:[#allocation7 + $0x268] sm:$0xff]
        %v498 = vld [vmem:[#allocation7 + $0x270] sm:$0xff]
        %v499 = vld [vmem:[#allocation7 + $0x278] sm:$0xff]
        %v500 = vld [vmem:[#allocation7 + $0x280] sm:$0xff]
        %v501 = vld [vmem:[#allocation7 + $0x288] sm:$0xff]
        %v502 = vld [vmem:[#allocation7 + $0x290] sm:$0xff]
        %v503 = vld [vmem:[#allocation7 + $0x298] sm:$0xff]
        %v504 = vld [vmem:[#allocation7 + $0x2a0] sm:$0xff]
        %v505 = vld [vmem:[#allocation7 + $0x2a8] sm:$0xff]
        %v506 = vld [vmem:[#allocation7 + $0x2b0] sm:$0xff]
        %v507 = vld [vmem:[#allocation7 + $0x2b8] sm:$0xff]
        %v508 = vld [vmem:[#allocation7 + $0x2c0] sm:$0xff]
        %v509 = vld [vmem:[#allocation7 + $0x2c8] sm:$0xff]
        %v510 = vld [vmem:[#allocation7 + $0x2d0] sm:$0xff]
        %v511 = vld [vmem:[#allocation7 + $0x2d8] sm:$0xff]
        %v512 = vld [vmem:[#allocation7 + $0x2e0] sm:$0xff]
        %v513 = vld [vmem:[#allocation7 + $0x2e8] sm:$0xff]
        %v514 = vld [vmem:[#allocation7 + $0x2f0] sm:$0xff]
        %v515 = vld [vmem:[#allocation7 + $0x2f8] sm:$0xff]
        %v516 = vld [vmem:[#allocation8] sm:$0xff]
        %v517 = vld [vmem:[#allocation8 + $0x8] sm:$0xff]
        %v518 = vld [vmem:[#allocation8 + $0x10] sm:$0xff]
        %v519 = vld [vmem:[#allocation8 + $0x18] sm:$0xff]
        %v520 = vld [vmem:[#allocation8 + $0x20] sm:$0xff]
        %v521 = vld [vmem:[#allocation8 + $0x28] sm:$0xff]
        %v522 = vld [vmem:[#allocation8 + $0x30] sm:$0xff]
        %v523 = vld [vmem:[#allocation8 + $0x38] sm:$0xff]
        %v524 = vld [vmem:[#allocation8 + $0x40] sm:$0xff]
        %v525 = vld [vmem:[#allocation8 + $0x48] sm:$0xff]
        %v526 = vld [vmem:[#allocation8 + $0x50] sm:$0xff]
        %v527 = vld [vmem:[#allocation8 + $0x58] sm:$0xff]
        %v528 = vld [vmem:[#allocation8 + $0x60] sm:$0xff]
        %v529 = vld [vmem:[#allocation8 + $0x68] sm:$0xff]
        %v530 = vld [vmem:[#allocation8 + $0x70] sm:$0xff]
        %v531 = vld [vmem:[#allocation8 + $0x78] sm:$0xff]
        %v532 = vld [vmem:[%s4] sm:$0x7]
        %v533 = vld [vmem:[#allocation10] sm:$0xff]
        %v534 = vld [vmem:[#allocation10 + $0x8] sm:$0xff]
        %v535 = vld [vmem:[#allocation10 + $0x10] sm:$0xff]
        %v536 = vld [vmem:[#allocation10 + $0x18] sm:$0xff]
        %v537 = vld [vmem:[#allocation10 + $0x20] sm:$0xff]
        %v538 = vld [vmem:[#allocation10 + $0x28] sm:$0xff]
        %v539 = vld [vmem:[#allocation10 + $0x30] sm:$0xff]
        %v540 = vld [vmem:[#allocation10 + $0x38] sm:$0xff]
        %v541 = vld [vmem:[#allocation10 + $0x40] sm:$0xff]
        %v542 = vld [vmem:[#allocation10 + $0x48] sm:$0xff]
        %v543 = vld [vmem:[#allocation10 + $0x50] sm:$0xff]
        %v544 = vld [vmem:[#allocation10 + $0x58] sm:$0xff]
        %v545 = vld [vmem:[#allocation10 + $0x60] sm:$0xff]
        %v546 = vld [vmem:[#allocation10 + $0x68] sm:$0xff]
        %v547 = vld [vmem:[#allocation10 + $0x70] sm:$0xff]
        %v548 = vld [vmem:[#allocation10 + $0x78] sm:$0xff]
        %v549 = vld [vmem:[#allocation10 + $0x80] sm:$0xff]
        %v550 = vld [vmem:[#allocation10 + $0x88] sm:$0xff]
        %v551 = vld [vmem:[#allocation10 + $0x90] sm:$0xff]
        %v552 = vld [vmem:[#allocation10 + $0x98] sm:$0xff]
        %v553 = vld [vmem:[#allocation10 + $0xa0] sm:$0xff]
        %v554 = vld [vmem:[#allocation10 + $0xa8] sm:$0xff]
        %v555 = vld [vmem:[#allocation10 + $0xb0] sm:$0xff]
        %v556 = vld [vmem:[#allocation10 + $0xb8] sm:$0xff]
        %v557 = vld [vmem:[#allocation10 + $0xc0] sm:$0xff]
        %v558 = vld [vmem:[#allocation10 + $0xc8] sm:$0xff]
        %v559 = vld [vmem:[#allocation10 + $0xd0] sm:$0xff]
        %v560 = vld [vmem:[#allocation10 + $0xd8] sm:$0xff]
        %v561 = vld [vmem:[#allocation10 + $0xe0] sm:$0xff]
        %v562 = vld [vmem:[#allocation10 + $0xe8] sm:$0xff]
        %v563 = vld [vmem:[#allocation10 + $0xf0] sm:$0xff]
        %v564 = vld [vmem:[#allocation10 + $0xf8] sm:$0xff]
        %v565 = vld [vmem:[#allocation10 + $0x100] sm:$0xff]
        %v566 = vld [vmem:[#allocation10 + $0x108] sm:$0xff]
        %v567 = vld [vmem:[#allocation10 + $0x110] sm:$0xff]
        %v568 = vld [vmem:[#allocation10 + $0x118] sm:$0xff]
        %v569 = vld [vmem:[#allocation10 + $0x120] sm:$0xff]
        %v570 = vld [vmem:[#allocation10 + $0x128] sm:$0xff]
        %v571 = vld [vmem:[#allocation10 + $0x130] sm:$0xff]
        %v572 = vld [vmem:[#allocation10 + $0x138] sm:$0xff]
        %v573 = vld [vmem:[#allocation10 + $0x140] sm:$0xff]
        %v574 = vld [vmem:[#allocation10 + $0x148] sm:$0xff]
        %v575 = vld [vmem:[#allocation10 + $0x150] sm:$0xff]
        %v576 = vld [vmem:[#allocation10 + $0x158] sm:$0xff]
        %v577 = vld [vmem:[#allocation10 + $0x160] sm:$0xff]
        %v578 = vld [vmem:[#allocation10 + $0x168] sm:$0xff]
        %v579 = vld [vmem:[#allocation10 + $0x170] sm:$0xff]
        %v580 = vld [vmem:[#allocation10 + $0x178] sm:$0xff]
        %v581 = vld [vmem:[#allocation10 + $0x180] sm:$0xff]
        %v582 = vld [vmem:[#allocation10 + $0x188] sm:$0xff]
        %v583 = vld [vmem:[#allocation10 + $0x190] sm:$0xff]
        %v584 = vld [vmem:[#allocation10 + $0x198] sm:$0xff]
        %v585 = vld [vmem:[#allocation10 + $0x1a0] sm:$0xff]
        %v586 = vld [vmem:[#allocation10 + $0x1a8] sm:$0xff]
        %v587 = vld [vmem:[#allocation10 + $0x1b0] sm:$0xff]
        %v588 = vld [vmem:[#allocation10 + $0x1b8] sm:$0xff]
        %v589 = vld [vmem:[#allocation10 + $0x1c0] sm:$0xff]
        %v590 = vld [vmem:[#allocation10 + $0x1c8] sm:$0xff]
        %v591 = vld [vmem:[#allocation10 + $0x1d0] sm:$0xff]
        %v592 = vld [vmem:[#allocation10 + $0x1d8] sm:$0xff]
        %v593 = vld [vmem:[#allocation10 + $0x1e0] sm:$0xff]
        %v594 = vld [vmem:[#allocation10 + $0x1e8] sm:$0xff]
        %v595 = vld [vmem:[#allocation10 + $0x1f0] sm:$0xff]
        %v596 = vld [vmem:[#allocation10 + $0x1f8] sm:$0xff]
        %v597 = vld [vmem:[#allocation10 + $0x200] sm:$0xff]
        %v598 = vld [vmem:[#allocation10 + $0x208] sm:$0xff]
        %v599 = vld [vmem:[#allocation10 + $0x210] sm:$0xff]
        %v600 = vld [vmem:[#allocation10 + $0x218] sm:$0xff]
        %v601 = vld [vmem:[#allocation10 + $0x220] sm:$0xff]
        %v602 = vld [vmem:[#allocation10 + $0x228] sm:$0xff]
        %v603 = vld [vmem:[#allocation10 + $0x230] sm:$0xff]
        %v604 = vld [vmem:[#allocation10 + $0x238] sm:$0xff]
        %v605 = vld [vmem:[#allocation10 + $0x240] sm:$0xff]
        %v606 = vld [vmem:[#allocation10 + $0x248] sm:$0xff]
        %v607 = vld [vmem:[#allocation10 + $0x250] sm:$0xff]
        %v608 = vld [vmem:[#allocation10 + $0x258] sm:$0xff]
        %v609 = vld [vmem:[#allocation10 + $0x260] sm:$0xff]
        %v610 = vld [vmem:[#allocation10 + $0x268] sm:$0xff]
        %v611 = vld [vmem:[#allocation10 + $0x270] sm:$0xff]
        %v612 = vld [vmem:[#allocation10 + $0x278] sm:$0xff]
        %v613 = vld [vmem:[#allocation10 + $0x280] sm:$0xff]
        %v614 = vld [vmem:[#allocation10 + $0x288] sm:$0xff]
        %v615 = vld [vmem:[#allocation10 + $0x290] sm:$0xff]
        %v616 = vld [vmem:[#allocation10 + $0x298] sm:$0xff]
        %v617 = vld [vmem:[#allocation10 + $0x2a0] sm:$0xff]
        %v618 = vld [vmem:[#allocation10 + $0x2a8] sm:$0xff]
        %v619 = vld [vmem:[#allocation10 + $0x2b0] sm:$0xff]
        %v620 = vld [vmem:[#allocation10 + $0x2b8] sm:$0xff]
        %v621 = vld [vmem:[#allocation10 + $0x2c0] sm:$0xff]
        %v622 = vld [vmem:[#allocation10 + $0x2c8] sm:$0xff]
        %v623 = vld [vmem:[#allocation10 + $0x2d0] sm:$0xff]
        %v624 = vld [vmem:[#allocation10 + $0x2d8] sm:$0xff]
        %v625 = vld [vmem:[#allocation10 + $0x2e0] sm:$0xff]
        %v626 = vld [vmem:[#allocation10 + $0x2e8] sm:$0xff]
        %v627 = vld [vmem:[#allocation10 + $0x2f0] sm:$0xff]
        %v628 = vld [vmem:[#allocation10 + $0x2f8] sm:$0xff]
        %v629 = vld [vmem:[#allocation11] sm:$0xff]
        %v630 = vld [vmem:[#allocation11 + $0x8] sm:$0xff]
        %v631 = vld [vmem:[#allocation11 + $0x10] sm:$0xff]
        %v632 = vld [vmem:[#allocation11 + $0x18] sm:$0xff]
        %v633 = vld [vmem:[#allocation11 + $0x20] sm:$0xff]
        %v634 = vld [vmem:[#allocation11 + $0x28] sm:$0xff]
        %v635 = vld [vmem:[#allocation11 + $0x30] sm:$0xff]
        %v636 = vld [vmem:[#allocation11 + $0x38] sm:$0xff]
        %v637 = vld [vmem:[#allocation11 + $0x40] sm:$0xff]
        %v638 = vld [vmem:[#allocation11 + $0x48] sm:$0xff]
        %v639 = vld [vmem:[#allocation11 + $0x50] sm:$0xff]
        %v640 = vld [vmem:[#allocation11 + $0x58] sm:$0xff]
        %v641 = vld [vmem:[#allocation11 + $0x60] sm:$0xff]
        %v642 = vld [vmem:[#allocation11 + $0x68] sm:$0xff]
        %v643 = vld [vmem:[#allocation11 + $0x70] sm:$0xff]
        %v644 = vld [vmem:[#allocation11 + $0x78] sm:$0xff]
        %v645 = vld [vmem:[%s7] sm:$0x7]
        %v646 = vld [vmem:[%s365] sm:$0xff]
        %vm647 = vcmask 64512
        %v649 = vsel %vm647, %v419, 0
        %651 = vmatprep.subr.mxu0 0.0
        %652 = vmatpush1.msra.mxu0 0.0
        %653 = vmatprep.subr.mxu0 0.0
        %654 = vmatpush1.msra.mxu0 0.0
        %655 = vmatprep.subr.mxu0 0.0
        %656 = vmatpush1.msra.mxu0 0.0
        %657 = vmatprep.subr.mxu0 0.0
        %658 = vmatpush1.msra.mxu0 0.0
        %659 = vmatprep.subr.mxu0 0.0
        %660 = vmatpush1.msra.mxu0 0.0
        %661 = vmatprep.subr.mxu0 0.0
        %662 = vmatpush1.msra.mxu0 0.0
        %663 = vmatprep.subr.mxu0 0.0
        %664 = vmatpush1.msra.mxu0 0.0
        %665 = vmatprep.subr.mxu0 0.0
        %666 = vmatpush1.msra.mxu0 0.0
        %667 = vmatprep.subr.mxu0 0.0
        %668 = vmatpush1.msra.mxu0 0.0
        %669 = vmatprep.subr.mxu0 0.0
        %670 = vmatpush1.msra.mxu0 0.0
        %671 = vmatprep.subr.mxu0 0.0
        %672 = vmatpush1.msra.mxu0 0.0
        %673 = vmatprep.subr.mxu0 0.0
        %674 = vmatpush1.msra.mxu0 0.0
        %675 = vmatprep.subr.mxu0 0.0
        %676 = vmatpush1.msra.mxu0 0.0
        %677 = vmatprep.subr.mxu0 0.0
        %678 = vmatpush1.msra.mxu0 0.0
        %679 = vmatprep.subr.mxu0 0.0
        %680 = vmatpush1.msra.mxu0 0.0
        %681 = vmatprep.subr.mxu0 0.0
        %682 = vmatpush1.msra.mxu0 %v646
        %683 = vmatprep.subr.mxu0 0.0
        %684 = vmatpush2.msra.mxu0 0.0
        %685 = vmatprep.subr.mxu0 0.0
        %686 = vmatpush2.msra.mxu0 0.0
        %687 = vmatprep.subr.mxu0 0.0
        %688 = vmatpush2.msra.mxu0 0.0
        %689 = vmatprep.subr.mxu0 0.0
        %690 = vmatpush2.msra.mxu0 0.0
        %691 = vmatprep.subr.mxu0 0.0
        %692 = vmatpush2.msra.mxu0 0.0
        %693 = vmatprep.subr.mxu0 0.0
        %694 = vmatpush2.msra.mxu0 0.0
        %695 = vmatprep.subr.mxu0 0.0
        %696 = vmatpush2.msra.mxu0 0.0
        %697 = vmatprep.subr.mxu0 0.0
        %698 = vmatpush2.msra.mxu0 0.0
        %699 = vmatprep.subr.mxu0 0.0
        %700 = vmatpush2.msra.mxu0 0.0
        %701 = vmatprep.subr.mxu0 0.0
        %702 = vmatpush2.msra.mxu0 0.0
        %703 = vmatprep.subr.mxu0 0.0
        %704 = vmatpush2.msra.mxu0 0.0
        %705 = vmatprep.subr.mxu0 0.0
        %706 = vmatpush2.msra.mxu0 0.0
        %707 = vmatprep.subr.mxu0 0.0
        %708 = vmatpush2.msra.mxu0 0.0
        %709 = vmatprep.subr.mxu0 0.0
        %710 = vmatpush2.msra.mxu0 0.0
        %711 = vmatprep.subr.mxu0 0.0
        %712 = vmatpush2.msra.mxu0 0.0
        %713 = vmatprep.subr.mxu0 0.0
        %714 = vmatpush2.msra.mxu0 0.0
        %715 = vmatprep.mubr.f32.mxu0 0.0
        %716 = vmatmul.mubr.f32.gmra.mxu0 %v649
        %v717 = vpop.f32.mrf.mxu0
        %v718 = vadd.f32 0.0, %v717
        %v719 = vpop.f32.mrf.mxu0
        %v720 = vadd.f32 0.0, %v719
        %721 = vdwg.mxu0
        %v723 = vlaneseq
        %v724 = vshrl.u32 %v723, 7
        %v725 = vsub.s32 0, %v724
        %v726 = vrot.slane %v532, %v725
        %v727 = vlaneseq
        %v728 = vshrl.u32 %v727, 7
        %v729 = vsub.s32 1, %v728
        %v730 = vrot.slane %v532, %v729
        %v731 = vlaneseq
        %v732 = vshrl.u32 %v731, 7
        %v733 = vsub.s32 2, %v732
        %v734 = vrot.slane %v532, %v733
        %738 = vmatprep.subr.mxu0 %v466
        %739 = vmatpush1.msra.mxu0 %v465
        %740 = vmatprep.subr.mxu0 %v463
        %741 = vmatpush1.msra.mxu0 %v462
        %742 = vmatprep.subr.mxu0 %v460
        %743 = vmatpush1.msra.mxu0 %v459
        %744 = vmatprep.subr.mxu0 %v457
        %745 = vmatpush1.msra.mxu0 %v456
        %746 = vmatprep.subr.mxu0 %v454
        %747 = vmatpush1.msra.mxu0 %v453
        %748 = vmatprep.subr.mxu0 %v451
        %749 = vmatpush1.msra.mxu0 %v450
        %750 = vmatprep.subr.mxu0 %v448
        %751 = vmatpush1.msra.mxu0 %v447
        %752 = vmatprep.subr.mxu0 %v445
        %753 = vmatpush1.msra.mxu0 %v444
        %754 = vmatprep.subr.mxu0 %v442
        %755 = vmatpush1.msra.mxu0 %v441
        %756 = vmatprep.subr.mxu0 %v439
        %757 = vmatpush1.msra.mxu0 %v438
        %758 = vmatprep.subr.mxu0 %v436
        %759 = vmatpush1.msra.mxu0 %v435
        %760 = vmatprep.subr.mxu0 %v433
        %761 = vmatpush1.msra.mxu0 %v432
        %762 = vmatprep.subr.mxu0 %v430
        %763 = vmatpush1.msra.mxu0 %v429
        %764 = vmatprep.subr.mxu0 %v427
        %765 = vmatpush1.msra.mxu0 %v426
        %766 = vmatprep.subr.mxu0 %v424
        %767 = vmatpush1.msra.mxu0 %v423
        %768 = vmatprep.subr.mxu0 %v421
        %769 = vmatpush1.msra.mxu0 %v420
        %770 = vmatprep.subr.mxu0 %v514
        %771 = vmatpush2.msra.mxu0 %v513
        %772 = vmatprep.subr.mxu0 %v511
        %773 = vmatpush2.msra.mxu0 %v510
        %774 = vmatprep.subr.mxu0 %v508
        %775 = vmatpush2.msra.mxu0 %v507
        %776 = vmatprep.subr.mxu0 %v505
        %777 = vmatpush2.msra.mxu0 %v504
        %778 = vmatprep.subr.mxu0 %v502
        %779 = vmatpush2.msra.mxu0 %v501
        %780 = vmatprep.subr.mxu0 %v499
        %781 = vmatpush2.msra.mxu0 %v498
        %782 = vmatprep.subr.mxu0 %v496
        %783 = vmatpush2.msra.mxu0 %v495
        %784 = vmatprep.subr.mxu0 %v493
        %785 = vmatpush2.msra.mxu0 %v492
        %786 = vmatprep.subr.mxu0 %v490
        %787 = vmatpush2.msra.mxu0 %v489
        %788 = vmatprep.subr.mxu0 %v487
        %789 = vmatpush2.msra.mxu0 %v486
        %790 = vmatprep.subr.mxu0 %v484
        %791 = vmatpush2.msra.mxu0 %v483
        %792 = vmatprep.subr.mxu0 %v481
        %793 = vmatpush2.msra.mxu0 %v480
        %794 = vmatprep.subr.mxu0 %v478
        %795 = vmatpush2.msra.mxu0 %v477
        %796 = vmatprep.subr.mxu0 %v475
        %797 = vmatpush2.msra.mxu0 %v474
        %798 = vmatprep.subr.mxu0 %v472
        %799 = vmatpush2.msra.mxu0 %v471
        %800 = vmatprep.subr.mxu0 %v469
        %801 = vmatpush2.msra.mxu0 %v468
        %802 = vmatprep.mubr.f32.mxu0 %v720
        %803 = vmatmul.mubr.f32.gmra.mxu0 %v718
        %v804 = vpop.f32.mrf.mxu0
        %v805 = vadd.f32 %v726, %v804
        %v806 = vpop.f32.mrf.mxu0
        %v807 = vadd.f32 %v730, %v806
        %808 = vdwg.mxu0
        %809 = vmatprep.subr.mxu0 0.0
        %810 = vmatpush1.msra.mxu0 %v467
        %811 = vmatprep.subr.mxu0 0.0
        %812 = vmatpush1.msra.mxu0 %v464
        %813 = vmatprep.subr.mxu0 0.0
        %814 = vmatpush1.msra.mxu0 %v461
        %815 = vmatprep.subr.mxu0 0.0
        %816 = vmatpush1.msra.mxu0 %v458
        %817 = vmatprep.subr.mxu0 0.0
        %818 = vmatpush1.msra.mxu0 %v455
        %819 = vmatprep.subr.mxu0 0.0
        %820 = vmatpush1.msra.mxu0 %v452
        %821 = vmatprep.subr.mxu0 0.0
        %822 = vmatpush1.msra.mxu0 %v449
        %823 = vmatprep.subr.mxu0 0.0
        %824 = vmatpush1.msra.mxu0 %v446
        %825 = vmatprep.subr.mxu0 0.0
        %826 = vmatpush1.msra.mxu0 %v443
        %827 = vmatprep.subr.mxu0 0.0
        %828 = vmatpush1.msra.mxu0 %v440
        %829 = vmatprep.subr.mxu0 0.0
        %830 = vmatpush1.msra.mxu0 %v437
        %831 = vmatprep.subr.mxu0 0.0
        %832 = vmatpush1.msra.mxu0 %v434
        %833 = vmatprep.subr.mxu0 0.0
        %834 = vmatpush1.msra.mxu0 %v431
        %835 = vmatprep.subr.mxu0 0.0
        %836 = vmatpush1.msra.mxu0 %v428
        %837 = vmatprep.subr.mxu0 0.0
        %838 = vmatpush1.msra.mxu0 %v425
        %839 = vmatprep.subr.mxu0 0.0
        %840 = vmatpush1.msra.mxu0 %v422
        %841 = vmatprep.subr.mxu0 0.0
        %842 = vmatpush2.msra.mxu0 %v515
        %843 = vmatprep.subr.mxu0 0.0
        %844 = vmatpush2.msra.mxu0 %v512
        %845 = vmatprep.subr.mxu0 0.0
        %846 = vmatpush2.msra.mxu0 %v509
        %847 = vmatprep.subr.mxu0 0.0
        %848 = vmatpush2.msra.mxu0 %v506
        %849 = vmatprep.subr.mxu0 0.0
        %850 = vmatpush2.msra.mxu0 %v503
        %851 = vmatprep.subr.mxu0 0.0
        %852 = vmatpush2.msra.mxu0 %v500
        %853 = vmatprep.subr.mxu0 0.0
        %854 = vmatpush2.msra.mxu0 %v497
        %855 = vmatprep.subr.mxu0 0.0
        %856 = vmatpush2.msra.mxu0 %v494
        %857 = vmatprep.subr.mxu0 0.0
        %858 = vmatpush2.msra.mxu0 %v491
        %859 = vmatprep.subr.mxu0 0.0
        %860 = vmatpush2.msra.mxu0 %v488
        %861 = vmatprep.subr.mxu0 0.0
        %862 = vmatpush2.msra.mxu0 %v485
        %863 = vmatprep.subr.mxu0 0.0
        %864 = vmatpush2.msra.mxu0 %v482
        %865 = vmatprep.subr.mxu0 0.0
        %866 = vmatpush2.msra.mxu0 %v479
        %867 = vmatprep.subr.mxu0 0.0
        %868 = vmatpush2.msra.mxu0 %v476
        %869 = vmatprep.subr.mxu0 0.0
        %870 = vmatpush2.msra.mxu0 %v473
        %871 = vmatprep.subr.mxu0 0.0
        %872 = vmatpush2.msra.mxu0 %v470
        %873 = vmatprep.mubr.f32.mxu0 %v720
        %874 = vmatmul.mubr.f32.gmra.mxu0 %v718
        %v875 = vpop.f32.mrf.mxu0
        %v876 = vadd.f32 %v734, %v875
        %v877 = vpop.f32.mrf.mxu0
        %878 = vdwg.mxu0
        %v879 = vxor.u32 %v805, 2147483648
        %v880 = vmul.f32 %v879, 1.442695
        %v881 = vpow.pop %v880
        %v882 = vadd.f32 %v881, 1.0
        %v883 = vrcp.pop %v882
        %v884 = vmul.f32 1.0, %v883
        %v885 = vxor.u32 %v807, 2147483648
        %v886 = vmul.f32 %v885, 1.442695
        %v887 = vpow.pop %v886
        %v888 = vadd.f32 %v887, 1.0
        %v889 = vrcp.pop %v888
        %v890 = vmul.f32 1.0, %v889
        %v891 = vmul.f32 %v884, 0.0
        %892 = vmatprep.subr.mxu0 0.0
        %893 = vmatpush1.msra.mxu0 0.0
        %894 = vmatprep.subr.mxu0 0.0
        %895 = vmatpush1.msra.mxu0 0.0
        %896 = vmatprep.subr.mxu0 0.0
        %897 = vmatpush1.msra.mxu0 0.0
        %898 = vmatprep.subr.mxu0 0.0
        %899 = vmatpush1.msra.mxu0 0.0
        %900 = vmatprep.subr.mxu0 0.0
        %901 = vmatpush1.msra.mxu0 0.0
        %902 = vmatprep.subr.mxu0 0.0
        %903 = vmatpush1.msra.mxu0 0.0
        %904 = vmatprep.subr.mxu0 0.0
        %905 = vmatpush1.msra.mxu0 0.0
        %906 = vmatprep.subr.mxu0 0.0
        %907 = vmatpush1.msra.mxu0 0.0
        %908 = vmatprep.subr.mxu0 0.0
        %909 = vmatpush1.msra.mxu0 0.0
        %910 = vmatprep.subr.mxu0 0.0
        %911 = vmatpush1.msra.mxu0 0.0
        %912 = vmatprep.subr.mxu0 0.0
        %913 = vmatpush1.msra.mxu0 0.0
        %914 = vmatprep.subr.mxu0 0.0
        %915 = vmatpush1.msra.mxu0 0.0
        %916 = vmatprep.subr.mxu0 0.0
        %917 = vmatpush1.msra.mxu0 0.0
        %918 = vmatprep.subr.mxu0 0.0
        %919 = vmatpush1.msra.mxu0 0.0
        %920 = vmatprep.subr.mxu0 0.0
        %921 = vmatpush1.msra.mxu0 0.0
        %922 = vmatprep.subr.mxu0 0.0
        %923 = vmatpush1.msra.mxu0 %v891
        %924 = vmatprep.subr.mxu0 0.0
        %925 = vmatpush2.msra.mxu0 0.0
        %926 = vmatprep.subr.mxu0 0.0
        %927 = vmatpush2.msra.mxu0 0.0
        %928 = vmatprep.subr.mxu0 0.0
        %929 = vmatpush2.msra.mxu0 0.0
        %930 = vmatprep.subr.mxu0 0.0
        %931 = vmatpush2.msra.mxu0 0.0
        %932 = vmatprep.subr.mxu0 0.0
        %933 = vmatpush2.msra.mxu0 0.0
        %934 = vmatprep.subr.mxu0 0.0
        %935 = vmatpush2.msra.mxu0 0.0
        %936 = vmatprep.subr.mxu0 0.0
        %937 = vmatpush2.msra.mxu0 0.0
        %938 = vmatprep.subr.mxu0 0.0
        %939 = vmatpush2.msra.mxu0 0.0
        %940 = vmatprep.subr.mxu0 0.0
        %941 = vmatpush2.msra.mxu0 0.0
        %942 = vmatprep.subr.mxu0 0.0
        %943 = vmatpush2.msra.mxu0 0.0
        %944 = vmatprep.subr.mxu0 0.0
        %945 = vmatpush2.msra.mxu0 0.0
        %946 = vmatprep.subr.mxu0 0.0
        %947 = vmatpush2.msra.mxu0 0.0
        %948 = vmatprep.subr.mxu0 0.0
        %949 = vmatpush2.msra.mxu0 0.0
        %950 = vmatprep.subr.mxu0 0.0
        %951 = vmatpush2.msra.mxu0 0.0
        %952 = vmatprep.subr.mxu0 0.0
        %953 = vmatpush2.msra.mxu0 0.0
        %954 = vmatprep.subr.mxu0 0.0
        %955 = vmatpush2.msra.mxu0 0.0
        %956 = vmatprep.mubr.f32.mxu0 0.0
        %957 = vmatmul.mubr.f32.gmra.mxu0 %v649
        %v958 = vpop.f32.mrf.mxu0
        %v959 = vadd.f32 0.0, %v958
        %v960 = vpop.f32.mrf.mxu0
        %961 = vdwg.mxu0
        %962 = vmatprep.subr.mxu0 0.0
        %963 = vmatpush1.msra.mxu0 %v531
        %964 = vmatprep.subr.mxu0 0.0
        %965 = vmatpush1.msra.mxu0 %v530
        %966 = vmatprep.subr.mxu0 0.0
        %967 = vmatpush1.msra.mxu0 %v529
        %968 = vmatprep.subr.mxu0 0.0
        %969 = vmatpush1.msra.mxu0 %v528
        %970 = vmatprep.subr.mxu0 0.0
        %971 = vmatpush1.msra.mxu0 %v527
        %972 = vmatprep.subr.mxu0 0.0
        %973 = vmatpush1.msra.mxu0 %v526
        %974 = vmatprep.subr.mxu0 0.0
        %975 = vmatpush1.msra.mxu0 %v525
        %976 = vmatprep.subr.mxu0 0.0
        %977 = vmatpush1.msra.mxu0 %v524
        %978 = vmatprep.subr.mxu0 0.0
        %979 = vmatpush1.msra.mxu0 %v523
        %980 = vmatprep.subr.mxu0 0.0
        %981 = vmatpush1.msra.mxu0 %v522
        %982 = vmatprep.subr.mxu0 0.0
        %983 = vmatpush1.msra.mxu0 %v521
        %984 = vmatprep.subr.mxu0 0.0
        %985 = vmatpush1.msra.mxu0 %v520
        %986 = vmatprep.subr.mxu0 0.0
        %987 = vmatpush1.msra.mxu0 %v519
        %988 = vmatprep.subr.mxu0 0.0
        %989 = vmatpush1.msra.mxu0 %v518
        %990 = vmatprep.subr.mxu0 0.0
        %991 = vmatpush1.msra.mxu0 %v517
        %992 = vmatprep.subr.mxu0 0.0
        %993 = vmatpush1.msra.mxu0 %v516
        %994 = vmatprep.subr.mxu0 0.0
        %995 = vmatpush2.msra.mxu0 0.0
        %996 = vmatprep.subr.mxu0 0.0
        %997 = vmatpush2.msra.mxu0 0.0
        %998 = vmatprep.subr.mxu0 0.0
        %999 = vmatpush2.msra.mxu0 0.0
        %1000 = vmatprep.subr.mxu0 0.0
        %1001 = vmatpush2.msra.mxu0 0.0
        %1002 = vmatprep.subr.mxu0 0.0
        %1003 = vmatpush2.msra.mxu0 0.0
        %1004 = vmatprep.subr.mxu0 0.0
        %1005 = vmatpush2.msra.mxu0 0.0
        %1006 = vmatprep.subr.mxu0 0.0
        %1007 = vmatpush2.msra.mxu0 0.0
        %1008 = vmatprep.subr.mxu0 0.0
        %1009 = vmatpush2.msra.mxu0 0.0
        %1010 = vmatprep.subr.mxu0 0.0
        %1011 = vmatpush2.msra.mxu0 0.0
        %1012 = vmatprep.subr.mxu0 0.0
        %1013 = vmatpush2.msra.mxu0 0.0
        %1014 = vmatprep.subr.mxu0 0.0
        %1015 = vmatpush2.msra.mxu0 0.0
        %1016 = vmatprep.subr.mxu0 0.0
        %1017 = vmatpush2.msra.mxu0 0.0
        %1018 = vmatprep.subr.mxu0 0.0
        %1019 = vmatpush2.msra.mxu0 0.0
        %1020 = vmatprep.subr.mxu0 0.0
        %1021 = vmatpush2.msra.mxu0 0.0
        %1022 = vmatprep.subr.mxu0 0.0
        %1023 = vmatpush2.msra.mxu0 0.0
        %1024 = vmatprep.subr.mxu0 0.0
        %1025 = vmatpush2.msra.mxu0 0.0
        %1026 = vmatprep.mubr.f32.mxu0 0.0
        %1027 = vmatmul.mubr.f32.gmra.mxu0 %v959
        %v1028 = vpop.f32.mrf.mxu0
        %v1029 = vadd.f32 0.0, %v1028
        %v1030 = vpop.f32.mrf.mxu0
        %1031 = vdwg.mxu0
        %v1032 = vadd.f32 %v876, %v1029
        %v1033 = vtanh.pop %v1032
        %v1034 = vmul.f32 %v890, 0.0
        %v1035 = vsub.f32 1.0, %v890
        %v1036 = vmul.f32 %v1035, %v1033
        %v1037 = vadd.f32 %v1034, %v1036
        %1038 = vmatprep.subr.mxu0 0.0
        %1039 = vmatpush1.msra.mxu0 0.0
        %1040 = vmatprep.subr.mxu0 0.0
        %1041 = vmatpush1.msra.mxu0 0.0
        %1042 = vmatprep.subr.mxu0 0.0
        %1043 = vmatpush1.msra.mxu0 0.0
        %1044 = vmatprep.subr.mxu0 0.0
        %1045 = vmatpush1.msra.mxu0 0.0
        %1046 = vmatprep.subr.mxu0 0.0
        %1047 = vmatpush1.msra.mxu0 0.0
        %1048 = vmatprep.subr.mxu0 0.0
        %1049 = vmatpush1.msra.mxu0 0.0
        %1050 = vmatprep.subr.mxu0 0.0
        %1051 = vmatpush1.msra.mxu0 0.0
        %1052 = vmatprep.subr.mxu0 0.0
        %1053 = vmatpush1.msra.mxu0 0.0
        %1054 = vmatprep.subr.mxu0 0.0
        %1055 = vmatpush1.msra.mxu0 0.0
        %1056 = vmatprep.subr.mxu0 0.0
        %1057 = vmatpush1.msra.mxu0 0.0
        %1058 = vmatprep.subr.mxu0 0.0
        %1059 = vmatpush1.msra.mxu0 0.0
        %1060 = vmatprep.subr.mxu0 0.0
        %1061 = vmatpush1.msra.mxu0 0.0
        %1062 = vmatprep.subr.mxu0 0.0
        %1063 = vmatpush1.msra.mxu0 0.0
        %1064 = vmatprep.subr.mxu0 0.0
        %1065 = vmatpush1.msra.mxu0 0.0
        %1066 = vmatprep.subr.mxu0 0.0
        %1067 = vmatpush1.msra.mxu0 0.0
        %1068 = vmatprep.subr.mxu0 0.0
        %1069 = vmatpush1.msra.mxu0 %v1037
        %1070 = vmatprep.subr.mxu0 0.0
        %1071 = vmatpush2.msra.mxu0 0.0
        %1072 = vmatprep.subr.mxu0 0.0
        %1073 = vmatpush2.msra.mxu0 0.0
        %1074 = vmatprep.subr.mxu0 0.0
        %1075 = vmatpush2.msra.mxu0 0.0
        %1076 = vmatprep.subr.mxu0 0.0
        %1077 = vmatpush2.msra.mxu0 0.0
        %1078 = vmatprep.subr.mxu0 0.0
        %1079 = vmatpush2.msra.mxu0 0.0
        %1080 = vmatprep.subr.mxu0 0.0
        %1081 = vmatpush2.msra.mxu0 0.0
        %1082 = vmatprep.subr.mxu0 0.0
        %1083 = vmatpush2.msra.mxu0 0.0
        %1084 = vmatprep.subr.mxu0 0.0
        %1085 = vmatpush2.msra.mxu0 0.0
        %1086 = vmatprep.subr.mxu0 0.0
        %1087 = vmatpush2.msra.mxu0 0.0
        %1088 = vmatprep.subr.mxu0 0.0
        %1089 = vmatpush2.msra.mxu0 0.0
        %1090 = vmatprep.subr.mxu0 0.0
        %1091 = vmatpush2.msra.mxu0 0.0
        %1092 = vmatprep.subr.mxu0 0.0
        %1093 = vmatpush2.msra.mxu0 0.0
        %1094 = vmatprep.subr.mxu0 0.0
        %1095 = vmatpush2.msra.mxu0 0.0
        %1096 = vmatprep.subr.mxu0 0.0
        %1097 = vmatpush2.msra.mxu0 0.0
        %1098 = vmatprep.subr.mxu0 0.0
        %1099 = vmatpush2.msra.mxu0 0.0
        %1100 = vmatprep.subr.mxu0 0.0
        %1101 = vmatpush2.msra.mxu0 0.0
        %1102 = vmatprep.mubr.f32.mxu0 0.0
        %1103 = vmatmul.mubr.f32.gmra.mxu0 %v649
        %v1104 = vpop.f32.mrf.mxu0
        %v1105 = vadd.f32 0.0, %v1104
        %v1106 = vpop.f32.mrf.mxu0
        %v1107 = vadd.f32 0.0, %v1106
        %1108 = vdwg.mxu0
        %v1110 = vlaneseq
        %v1111 = vshrl.u32 %v1110, 7
        %v1112 = vsub.s32 0, %v1111
        %v1113 = vrot.slane %v645, %v1112
        %v1114 = vlaneseq
        %v1115 = vshrl.u32 %v1114, 7
        %v1116 = vsub.s32 1, %v1115
        %v1117 = vrot.slane %v645, %v1116
        %v1118 = vlaneseq
        %v1119 = vshrl.u32 %v1118, 7
        %v1120 = vsub.s32 2, %v1119
        %v1121 = vrot.slane %v645, %v1120
        %1125 = vmatprep.subr.mxu0 %v579
        %1126 = vmatpush1.msra.mxu0 %v578
        %1127 = vmatprep.subr.mxu0 %v576
        %1128 = vmatpush1.msra.mxu0 %v575
        %1129 = vmatprep.subr.mxu0 %v573
        %1130 = vmatpush1.msra.mxu0 %v572
        %1131 = vmatprep.subr.mxu0 %v570
        %1132 = vmatpush1.msra.mxu0 %v569
        %1133 = vmatprep.subr.mxu0 %v567
        %1134 = vmatpush1.msra.mxu0 %v566
        %1135 = vmatprep.subr.mxu0 %v564
        %1136 = vmatpush1.msra.mxu0 %v563
        %1137 = vmatprep.subr.mxu0 %v561
        %1138 = vmatpush1.msra.mxu0 %v560
        %1139 = vmatprep.subr.mxu0 %v558
        %1140 = vmatpush1.msra.mxu0 %v557
        %1141 = vmatprep.subr.mxu0 %v555
        %1142 = vmatpush1.msra.mxu0 %v554
        %1143 = vmatprep.subr.mxu0 %v552
        %1144 = vmatpush1.msra.mxu0 %v551
        %1145 = vmatprep.subr.mxu0 %v549
        %1146 = vmatpush1.msra.mxu0 %v548
        %1147 = vmatprep.subr.mxu0 %v546
        %1148 = vmatpush1.msra.mxu0 %v545
        %1149 = vmatprep.subr.mxu0 %v543
        %1150 = vmatpush1.msra.mxu0 %v542
        %1151 = vmatprep.subr.mxu0 %v540
        %1152 = vmatpush1.msra.mxu0 %v539
        %1153 = vmatprep.subr.mxu0 %v537
        %1154 = vmatpush1.msra.mxu0 %v536
        %1155 = vmatprep.subr.mxu0 %v534
        %1156 = vmatpush1.msra.mxu0 %v533
        %1157 = vmatprep.subr.mxu0 %v627
        %1158 = vmatpush2.msra.mxu0 %v626
        %1159 = vmatprep.subr.mxu0 %v624
        %1160 = vmatpush2.msra.mxu0 %v623
        %1161 = vmatprep.subr.mxu0 %v621
        %1162 = vmatpush2.msra.mxu0 %v620
        %1163 = vmatprep.subr.mxu0 %v618
        %1164 = vmatpush2.msra.mxu0 %v617
        %1165 = vmatprep.subr.mxu0 %v615
        %1166 = vmatpush2.msra.mxu0 %v614
        %1167 = vmatprep.subr.mxu0 %v612
        %1168 = vmatpush2.msra.mxu0 %v611
        %1169 = vmatprep.subr.mxu0 %v609
        %1170 = vmatpush2.msra.mxu0 %v608
        %1171 = vmatprep.subr.mxu0 %v606
        %1172 = vmatpush2.msra.mxu0 %v605
        %1173 = vmatprep.subr.mxu0 %v603
        %1174 = vmatpush2.msra.mxu0 %v602
        %1175 = vmatprep.subr.mxu0 %v600
        %1176 = vmatpush2.msra.mxu0 %v599
        %1177 = vmatprep.subr.mxu0 %v597
        %1178 = vmatpush2.msra.mxu0 %v596
        %1179 = vmatprep.subr.mxu0 %v594
        %1180 = vmatpush2.msra.mxu0 %v593
        %1181 = vmatprep.subr.mxu0 %v591
        %1182 = vmatpush2.msra.mxu0 %v590
        %1183 = vmatprep.subr.mxu0 %v588
        %1184 = vmatpush2.msra.mxu0 %v587
        %1185 = vmatprep.subr.mxu0 %v585
        %1186 = vmatpush2.msra.mxu0 %v584
        %1187 = vmatprep.subr.mxu0 %v582
        %1188 = vmatpush2.msra.mxu0 %v581
        %1189 = vmatprep.mubr.f32.mxu0 %v1107
        %1190 = vmatmul.mubr.f32.gmra.mxu0 %v1105
        %v1191 = vpop.f32.mrf.mxu0
        %v1192 = vadd.f32 %v1113, %v1191
        %v1193 = vpop.f32.mrf.mxu0
        %v1194 = vadd.f32 %v1117, %v1193
        %1195 = vdwg.mxu0
        %1196 = vmatprep.subr.mxu0 0.0
        %1197 = vmatpush1.msra.mxu0 %v580
        %1198 = vmatprep.subr.mxu0 0.0
        %1199 = vmatpush1.msra.mxu0 %v577
        %1200 = vmatprep.subr.mxu0 0.0
        %1201 = vmatpush1.msra.mxu0 %v574
        %1202 = vmatprep.subr.mxu0 0.0
        %1203 = vmatpush1.msra.mxu0 %v571
        %1204 = vmatprep.subr.mxu0 0.0
        %1205 = vmatpush1.msra.mxu0 %v568
        %1206 = vmatprep.subr.mxu0 0.0
        %1207 = vmatpush1.msra.mxu0 %v565
        %1208 = vmatprep.subr.mxu0 0.0
        %1209 = vmatpush1.msra.mxu0 %v562
        %1210 = vmatprep.subr.mxu0 0.0
        %1211 = vmatpush1.msra.mxu0 %v559
        %1212 = vmatprep.subr.mxu0 0.0
        %1213 = vmatpush1.msra.mxu0 %v556
        %1214 = vmatprep.subr.mxu0 0.0
        %1215 = vmatpush1.msra.mxu0 %v553
        %1216 = vmatprep.subr.mxu0 0.0
        %1217 = vmatpush1.msra.mxu0 %v550
        %1218 = vmatprep.subr.mxu0 0.0
        %1219 = vmatpush1.msra.mxu0 %v547
        %1220 = vmatprep.subr.mxu0 0.0
        %1221 = vmatpush1.msra.mxu0 %v544
        %1222 = vmatprep.subr.mxu0 0.0
        %1223 = vmatpush1.msra.mxu0 %v541
        %1224 = vmatprep.subr.mxu0 0.0
        %1225 = vmatpush1.msra.mxu0 %v538
        %1226 = vmatprep.subr.mxu0 0.0
        %1227 = vmatpush1.msra.mxu0 %v535
        %1228 = vmatprep.subr.mxu0 0.0
        %1229 = vmatpush2.msra.mxu0 %v628
        %1230 = vmatprep.subr.mxu0 0.0
        %1231 = vmatpush2.msra.mxu0 %v625
        %1232 = vmatprep.subr.mxu0 0.0
        %1233 = vmatpush2.msra.mxu0 %v622
        %1234 = vmatprep.subr.mxu0 0.0
        %1235 = vmatpush2.msra.mxu0 %v619
        %1236 = vmatprep.subr.mxu0 0.0
        %1237 = vmatpush2.msra.mxu0 %v616
        %1238 = vmatprep.subr.mxu0 0.0
        %1239 = vmatpush2.msra.mxu0 %v613
        %1240 = vmatprep.subr.mxu0 0.0
        %1241 = vmatpush2.msra.mxu0 %v610
        %1242 = vmatprep.subr.mxu0 0.0
        %1243 = vmatpush2.msra.mxu0 %v607
        %1244 = vmatprep.subr.mxu0 0.0
        %1245 = vmatpush2.msra.mxu0 %v604
        %1246 = vmatprep.subr.mxu0 0.0
        %1247 = vmatpush2.msra.mxu0 %v601
        %1248 = vmatprep.subr.mxu0 0.0
        %1249 = vmatpush2.msra.mxu0 %v598
        %1250 = vmatprep.subr.mxu0 0.0
        %1251 = vmatpush2.msra.mxu0 %v595
        %1252 = vmatprep.subr.mxu0 0.0
        %1253 = vmatpush2.msra.mxu0 %v592
        %1254 = vmatprep.subr.mxu0 0.0
        %1255 = vmatpush2.msra.mxu0 %v589
        %1256 = vmatprep.subr.mxu0 0.0
        %1257 = vmatpush2.msra.mxu0 %v586
        %1258 = vmatprep.subr.mxu0 0.0
        %1259 = vmatpush2.msra.mxu0 %v583
        %1260 = vmatprep.mubr.f32.mxu0 %v1107
        %1261 = vmatmul.mubr.f32.gmra.mxu0 %v1105
        %v1262 = vpop.f32.mrf.mxu0
        %v1263 = vadd.f32 %v1121, %v1262
        %v1264 = vpop.f32.mrf.mxu0
        %1265 = vdwg.mxu0
        %v1266 = vxor.u32 %v1192, 2147483648
        %v1267 = vmul.f32 %v1266, 1.442695
        %v1268 = vpow.pop %v1267
        %v1269 = vadd.f32 %v1268, 1.0
        %v1270 = vrcp.pop %v1269
        %v1271 = vmul.f32 1.0, %v1270
        %v1272 = vxor.u32 %v1194, 2147483648
        %v1273 = vmul.f32 %v1272, 1.442695
        %v1274 = vpow.pop %v1273
        %v1275 = vadd.f32 %v1274, 1.0
        %v1276 = vrcp.pop %v1275
        %v1277 = vmul.f32 1.0, %v1276
        %v1278 = vmul.f32 %v1271, 0.0
        %1279 = vmatprep.subr.mxu0 0.0
        %1280 = vmatpush1.msra.mxu0 0.0
        %1281 = vmatprep.subr.mxu0 0.0
        %1282 = vmatpush1.msra.mxu0 0.0
        %1283 = vmatprep.subr.mxu0 0.0
        %1284 = vmatpush1.msra.mxu0 0.0
        %1285 = vmatprep.subr.mxu0 0.0
        %1286 = vmatpush1.msra.mxu0 0.0
        %1287 = vmatprep.subr.mxu0 0.0
        %1288 = vmatpush1.msra.mxu0 0.0
        %1289 = vmatprep.subr.mxu0 0.0
        %1290 = vmatpush1.msra.mxu0 0.0
        %1291 = vmatprep.subr.mxu0 0.0
        %1292 = vmatpush1.msra.mxu0 0.0
        %1293 = vmatprep.subr.mxu0 0.0
        %1294 = vmatpush1.msra.mxu0 0.0
        %1295 = vmatprep.subr.mxu0 0.0
        %1296 = vmatpush1.msra.mxu0 0.0
        %1297 = vmatprep.subr.mxu0 0.0
        %1298 = vmatpush1.msra.mxu0 0.0
        %1299 = vmatprep.subr.mxu0 0.0
        %1300 = vmatpush1.msra.mxu0 0.0
        %1301 = vmatprep.subr.mxu0 0.0
        %1302 = vmatpush1.msra.mxu0 0.0
        %1303 = vmatprep.subr.mxu0 0.0
        %1304 = vmatpush1.msra.mxu0 0.0
        %1305 = vmatprep.subr.mxu0 0.0
        %1306 = vmatpush1.msra.mxu0 0.0
        %1307 = vmatprep.subr.mxu0 0.0
        %1308 = vmatpush1.msra.mxu0 0.0
        %1309 = vmatprep.subr.mxu0 0.0
        %1310 = vmatpush1.msra.mxu0 %v1278
        %1311 = vmatprep.subr.mxu0 0.0
        %1312 = vmatpush2.msra.mxu0 0.0
        %1313 = vmatprep.subr.mxu0 0.0
        %1314 = vmatpush2.msra.mxu0 0.0
        %1315 = vmatprep.subr.mxu0 0.0
        %1316 = vmatpush2.msra.mxu0 0.0
        %1317 = vmatprep.subr.mxu0 0.0
        %1318 = vmatpush2.msra.mxu0 0.0
        %1319 = vmatprep.subr.mxu0 0.0
        %1320 = vmatpush2.msra.mxu0 0.0
        %1321 = vmatprep.subr.mxu0 0.0
        %1322 = vmatpush2.msra.mxu0 0.0
        %1323 = vmatprep.subr.mxu0 0.0
        %1324 = vmatpush2.msra.mxu0 0.0
        %1325 = vmatprep.subr.mxu0 0.0
        %1326 = vmatpush2.msra.mxu0 0.0
        %1327 = vmatprep.subr.mxu0 0.0
        %1328 = vmatpush2.msra.mxu0 0.0
        %1329 = vmatprep.subr.mxu0 0.0
        %1330 = vmatpush2.msra.mxu0 0.0
        %1331 = vmatprep.subr.mxu0 0.0
        %1332 = vmatpush2.msra.mxu0 0.0
        %1333 = vmatprep.subr.mxu0 0.0
        %1334 = vmatpush2.msra.mxu0 0.0
        %1335 = vmatprep.subr.mxu0 0.0
        %1336 = vmatpush2.msra.mxu0 0.0
        %1337 = vmatprep.subr.mxu0 0.0
        %1338 = vmatpush2.msra.mxu0 0.0
        %1339 = vmatprep.subr.mxu0 0.0
        %1340 = vmatpush2.msra.mxu0 0.0
        %1341 = vmatprep.subr.mxu0 0.0
        %1342 = vmatpush2.msra.mxu0 0.0
        %1343 = vmatprep.mubr.f32.mxu0 0.0
        %1344 = vmatmul.mubr.f32.gmra.mxu0 %v649
        %v1345 = vpop.f32.mrf.mxu0
        %v1346 = vadd.f32 0.0, %v1345
        %v1347 = vpop.f32.mrf.mxu0
        %1348 = vdwg.mxu0
        %1349 = vmatprep.subr.mxu0 0.0
        %1350 = vmatpush1.msra.mxu0 %v644
        %1351 = vmatprep.subr.mxu0 0.0
        %1352 = vmatpush1.msra.mxu0 %v643
        %1353 = vmatprep.subr.mxu0 0.0
        %1354 = vmatpush1.msra.mxu0 %v642
        %1355 = vmatprep.subr.mxu0 0.0
        %1356 = vmatpush1.msra.mxu0 %v641
        %1357 = vmatprep.subr.mxu0 0.0
        %1358 = vmatpush1.msra.mxu0 %v640
        %1359 = vmatprep.subr.mxu0 0.0
        %1360 = vmatpush1.msra.mxu0 %v639
        %1361 = vmatprep.subr.mxu0 0.0
        %1362 = vmatpush1.msra.mxu0 %v638
        %1363 = vmatprep.subr.mxu0 0.0
        %1364 = vmatpush1.msra.mxu0 %v637
        %1365 = vmatprep.subr.mxu0 0.0
        %1366 = vmatpush1.msra.mxu0 %v636
        %1367 = vmatprep.subr.mxu0 0.0
        %1368 = vmatpush1.msra.mxu0 %v635
        %1369 = vmatprep.subr.mxu0 0.0
        %1370 = vmatpush1.msra.mxu0 %v634
        %1371 = vmatprep.subr.mxu0 0.0
        %1372 = vmatpush1.msra.mxu0 %v633
        %1373 = vmatprep.subr.mxu0 0.0
        %1374 = vmatpush1.msra.mxu0 %v632
        %1375 = vmatprep.subr.mxu0 0.0
        %1376 = vmatpush1.msra.mxu0 %v631
        %1377 = vmatprep.subr.mxu0 0.0
        %1378 = vmatpush1.msra.mxu0 %v630
        %1379 = vmatprep.subr.mxu0 0.0
        %1380 = vmatpush1.msra.mxu0 %v629
        %1381 = vmatprep.subr.mxu0 0.0
        %1382 = vmatpush2.msra.mxu0 0.0
        %1383 = vmatprep.subr.mxu0 0.0
        %1384 = vmatpush2.msra.mxu0 0.0
        %1385 = vmatprep.subr.mxu0 0.0
        %1386 = vmatpush2.msra.mxu0 0.0
        %1387 = vmatprep.subr.mxu0 0.0
        %1388 = vmatpush2.msra.mxu0 0.0
        %1389 = vmatprep.subr.mxu0 0.0
        %1390 = vmatpush2.msra.mxu0 0.0
        %1391 = vmatprep.subr.mxu0 0.0
        %1392 = vmatpush2.msra.mxu0 0.0
        %1393 = vmatprep.subr.mxu0 0.0
        %1394 = vmatpush2.msra.mxu0 0.0
        %1395 = vmatprep.subr.mxu0 0.0
        %1396 = vmatpush2.msra.mxu0 0.0
        %1397 = vmatprep.subr.mxu0 0.0
        %1398 = vmatpush2.msra.mxu0 0.0
        %1399 = vmatprep.subr.mxu0 0.0
        %1400 = vmatpush2.msra.mxu0 0.0
        %1401 = vmatprep.subr.mxu0 0.0
        %1402 = vmatpush2.msra.mxu0 0.0
        %1403 = vmatprep.subr.mxu0 0.0
        %1404 = vmatpush2.msra.mxu0 0.0
        %1405 = vmatprep.subr.mxu0 0.0
        %1406 = vmatpush2.msra.mxu0 0.0
        %1407 = vmatprep.subr.mxu0 0.0
        %1408 = vmatpush2.msra.mxu0 0.0
        %1409 = vmatprep.subr.mxu0 0.0
        %1410 = vmatpush2.msra.mxu0 0.0
        %1411 = vmatprep.subr.mxu0 0.0
        %1412 = vmatpush2.msra.mxu0 0.0
        %1413 = vmatprep.mubr.f32.mxu0 0.0
        %1414 = vmatmul.mubr.f32.gmra.mxu0 %v1346
        %v1415 = vpop.f32.mrf.mxu0
        %v1416 = vadd.f32 0.0, %v1415
        %v1417 = vpop.f32.mrf.mxu0
        %1418 = vdwg.mxu0
        %v1419 = vadd.f32 %v1263, %v1416
        %v1420 = vtanh.pop %v1419
        %v1421 = vmul.f32 %v1277, 0.0
        %v1422 = vsub.f32 1.0, %v1277
        %v1423 = vmul.f32 %v1422, %v1420
        %v1424 = vadd.f32 %v1421, %v1423
        %s1425 = scalar_lea.vmem %s365, 8 [#allocation5]
        %v1426 = vld [vmem:[%s1425] sm:$0xff]
        %1427 = vmatprep.subr.mxu0 0.0
        %1428 = vmatpush1.msra.mxu0 0.0
        %1429 = vmatprep.subr.mxu0 0.0
        %1430 = vmatpush1.msra.mxu0 0.0
        %1431 = vmatprep.subr.mxu0 0.0
        %1432 = vmatpush1.msra.mxu0 0.0
        %1433 = vmatprep.subr.mxu0 0.0
        %1434 = vmatpush1.msra.mxu0 0.0
        %1435 = vmatprep.subr.mxu0 0.0
        %1436 = vmatpush1.msra.mxu0 0.0
        %1437 = vmatprep.subr.mxu0 0.0
        %1438 = vmatpush1.msra.mxu0 0.0
        %1439 = vmatprep.subr.mxu0 0.0
        %1440 = vmatpush1.msra.mxu0 0.0
        %1441 = vmatprep.subr.mxu0 0.0
        %1442 = vmatpush1.msra.mxu0 0.0
        %1443 = vmatprep.subr.mxu0 0.0
        %1444 = vmatpush1.msra.mxu0 0.0
        %1445 = vmatprep.subr.mxu0 0.0
        %1446 = vmatpush1.msra.mxu0 0.0
        %1447 = vmatprep.subr.mxu0 0.0
        %1448 = vmatpush1.msra.mxu0 0.0
        %1449 = vmatprep.subr.mxu0 0.0
        %1450 = vmatpush1.msra.mxu0 0.0
        %1451 = vmatprep.subr.mxu0 0.0
        %1452 = vmatpush1.msra.mxu0 0.0
        %1453 = vmatprep.subr.mxu0 0.0
        %1454 = vmatpush1.msra.mxu0 0.0
        %1455 = vmatprep.subr.mxu0 0.0
        %1456 = vmatpush1.msra.mxu0 0.0
        %1457 = vmatprep.subr.mxu0 %v1037
        %1458 = vmatpush1.msra.mxu0 %v1426
        %1459 = vmatprep.subr.mxu0 0.0
        %1460 = vmatpush2.msra.mxu0 0.0
        %1461 = vmatprep.subr.mxu0 0.0
        %1462 = vmatpush2.msra.mxu0 0.0
        %1463 = vmatprep.subr.mxu0 0.0
        %1464 = vmatpush2.msra.mxu0 0.0
        %1465 = vmatprep.subr.mxu0 0.0
        %1466 = vmatpush2.msra.mxu0 0.0
        %1467 = vmatprep.subr.mxu0 0.0
        %1468 = vmatpush2.msra.mxu0 0.0
        %1469 = vmatprep.subr.mxu0 0.0
        %1470 = vmatpush2.msra.mxu0 0.0
        %1471 = vmatprep.subr.mxu0 0.0
        %1472 = vmatpush2.msra.mxu0 0.0
        %1473 = vmatprep.subr.mxu0 0.0
        %1474 = vmatpush2.msra.mxu0 0.0
        %1475 = vmatprep.subr.mxu0 0.0
        %1476 = vmatpush2.msra.mxu0 0.0
        %1477 = vmatprep.subr.mxu0 0.0
        %1478 = vmatpush2.msra.mxu0 0.0
        %1479 = vmatprep.subr.mxu0 0.0
        %1480 = vmatpush2.msra.mxu0 0.0
        %1481 = vmatprep.subr.mxu0 0.0
        %1482 = vmatpush2.msra.mxu0 0.0
        %1483 = vmatprep.subr.mxu0 0.0
        %1484 = vmatpush2.msra.mxu0 0.0
        %1485 = vmatprep.subr.mxu0 0.0
        %1486 = vmatpush2.msra.mxu0 0.0
        %1487 = vmatprep.subr.mxu0 0.0
        %1488 = vmatpush2.msra.mxu0 0.0
        %1489 = vmatprep.subr.mxu0 0.0
        %1490 = vmatpush2.msra.mxu0 0.0
        %1491 = vmatprep.mubr.f32.mxu0 0.0
        %1492 = vmatmul.mubr.f32.gmra.mxu0 %v649
        %v1493 = vpop.f32.mrf.mxu0
        %v1494 = vadd.f32 0.0, %v1493
        %v1495 = vpop.f32.mrf.mxu0
        %v1496 = vadd.f32 0.0, %v1495
        %1497 = vdwg.mxu0
        %1498 = vmatprep.subr.mxu0 %v466
        %1499 = vmatpush1.msra.mxu0 %v465
        %1500 = vmatprep.subr.mxu0 %v463
        %1501 = vmatpush1.msra.mxu0 %v462
        %1502 = vmatprep.subr.mxu0 %v460
        %1503 = vmatpush1.msra.mxu0 %v459
        %1504 = vmatprep.subr.mxu0 %v457
        %1505 = vmatpush1.msra.mxu0 %v456
        %1506 = vmatprep.subr.mxu0 %v454
        %1507 = vmatpush1.msra.mxu0 %v453
        %1508 = vmatprep.subr.mxu0 %v451
        %1509 = vmatpush1.msra.mxu0 %v450
        %1510 = vmatprep.subr.mxu0 %v448
        %1511 = vmatpush1.msra.mxu0 %v447
        %1512 = vmatprep.subr.mxu0 %v445
        %1513 = vmatpush1.msra.mxu0 %v444
        %1514 = vmatprep.subr.mxu0 %v442
        %1515 = vmatpush1.msra.mxu0 %v441
        %1516 = vmatprep.subr.mxu0 %v439
        %1517 = vmatpush1.msra.mxu0 %v438
        %1518 = vmatprep.subr.mxu0 %v436
        %1519 = vmatpush1.msra.mxu0 %v435
        %1520 = vmatprep.subr.mxu0 %v433
        %1521 = vmatpush1.msra.mxu0 %v432
        %1522 = vmatprep.subr.mxu0 %v430
        %1523 = vmatpush1.msra.mxu0 %v429
        %1524 = vmatprep.subr.mxu0 %v427
        %1525 = vmatpush1.msra.mxu0 %v426
        %1526 = vmatprep.subr.mxu0 %v424
        %1527 = vmatpush1.msra.mxu0 %v423
        %1528 = vmatprep.subr.mxu0 %v421
        %1529 = vmatpush1.msra.mxu0 %v420
        %1530 = vmatprep.subr.mxu0 %v514
        %1531 = vmatpush2.msra.mxu0 %v513
        %1532 = vmatprep.subr.mxu0 %v511
        %1533 = vmatpush2.msra.mxu0 %v510
        %1534 = vmatprep.subr.mxu0 %v508
        %1535 = vmatpush2.msra.mxu0 %v507
        %1536 = vmatprep.subr.mxu0 %v505
        %1537 = vmatpush2.msra.mxu0 %v504
        %1538 = vmatprep.subr.mxu0 %v502
        %1539 = vmatpush2.msra.mxu0 %v501
        %1540 = vmatprep.subr.mxu0 %v499
        %1541 = vmatpush2.msra.mxu0 %v498
        %1542 = vmatprep.subr.mxu0 %v496
        %1543 = vmatpush2.msra.mxu0 %v495
        %1544 = vmatprep.subr.mxu0 %v493
        %1545 = vmatpush2.msra.mxu0 %v492
        %1546 = vmatprep.subr.mxu0 %v490
        %1547 = vmatpush2.msra.mxu0 %v489
        %1548 = vmatprep.subr.mxu0 %v487
        %1549 = vmatpush2.msra.mxu0 %v486
        %1550 = vmatprep.subr.mxu0 %v484
        %1551 = vmatpush2.msra.mxu0 %v483
        %1552 = vmatprep.subr.mxu0 %v481
        %1553 = vmatpush2.msra.mxu0 %v480
        %1554 = vmatprep.subr.mxu0 %v478
        %1555 = vmatpush2.msra.mxu0 %v477
        %1556 = vmatprep.subr.mxu0 %v475
        %1557 = vmatpush2.msra.mxu0 %v474
        %1558 = vmatprep.subr.mxu0 %v472
        %1559 = vmatpush2.msra.mxu0 %v471
        %1560 = vmatprep.subr.mxu0 %v469
        %1561 = vmatpush2.msra.mxu0 %v468
        %1562 = vmatprep.mubr.f32.mxu0 %v1496
        %1563 = vmatmul.mubr.f32.gmra.mxu0 %v1494
        %v1564 = vpop.f32.mrf.mxu0
        %v1565 = vadd.f32 %v726, %v1564
        %v1566 = vpop.f32.mrf.mxu0
        %v1567 = vadd.f32 %v730, %v1566
        %1568 = vdwg.mxu0
        %1569 = vmatprep.subr.mxu0 0.0
        %1570 = vmatpush1.msra.mxu0 %v467
        %1571 = vmatprep.subr.mxu0 0.0
        %1572 = vmatpush1.msra.mxu0 %v464
        %1573 = vmatprep.subr.mxu0 0.0
        %1574 = vmatpush1.msra.mxu0 %v461
        %1575 = vmatprep.subr.mxu0 0.0
        %1576 = vmatpush1.msra.mxu0 %v458
        %1577 = vmatprep.subr.mxu0 0.0
        %1578 = vmatpush1.msra.mxu0 %v455
        %1579 = vmatprep.subr.mxu0 0.0
        %1580 = vmatpush1.msra.mxu0 %v452
        %1581 = vmatprep.subr.mxu0 0.0
        %1582 = vmatpush1.msra.mxu0 %v449
        %1583 = vmatprep.subr.mxu0 0.0
        %1584 = vmatpush1.msra.mxu0 %v446
        %1585 = vmatprep.subr.mxu0 0.0
        %1586 = vmatpush1.msra.mxu0 %v443
        %1587 = vmatprep.subr.mxu0 0.0
        %1588 = vmatpush1.msra.mxu0 %v440
        %1589 = vmatprep.subr.mxu0 0.0
        %1590 = vmatpush1.msra.mxu0 %v437
        %1591 = vmatprep.subr.mxu0 0.0
        %1592 = vmatpush1.msra.mxu0 %v434
        %1593 = vmatprep.subr.mxu0 0.0
        %1594 = vmatpush1.msra.mxu0 %v431
        %1595 = vmatprep.subr.mxu0 0.0
        %1596 = vmatpush1.msra.mxu0 %v428
        %1597 = vmatprep.subr.mxu0 0.0
        %1598 = vmatpush1.msra.mxu0 %v425
        %1599 = vmatprep.subr.mxu0 0.0
        %1600 = vmatpush1.msra.mxu0 %v422
        %1601 = vmatprep.subr.mxu0 0.0
        %1602 = vmatpush2.msra.mxu0 %v515
        %1603 = vmatprep.subr.mxu0 0.0
        %1604 = vmatpush2.msra.mxu0 %v512
        %1605 = vmatprep.subr.mxu0 0.0
        %1606 = vmatpush2.msra.mxu0 %v509
        %1607 = vmatprep.subr.mxu0 0.0
        %1608 = vmatpush2.msra.mxu0 %v506
        %1609 = vmatprep.subr.mxu0 0.0
        %1610 = vmatpush2.msra.mxu0 %v503
        %1611 = vmatprep.subr.mxu0 0.0
        %1612 = vmatpush2.msra.mxu0 %v500
        %1613 = vmatprep.subr.mxu0 0.0
        %1614 = vmatpush2.msra.mxu0 %v497
        %1615 = vmatprep.subr.mxu0 0.0
        %1616 = vmatpush2.msra.mxu0 %v494
        %1617 = vmatprep.subr.mxu0 0.0
        %1618 = vmatpush2.msra.mxu0 %v491
        %1619 = vmatprep.subr.mxu0 0.0
        %1620 = vmatpush2.msra.mxu0 %v488
        %1621 = vmatprep.subr.mxu0 0.0
        %1622 = vmatpush2.msra.mxu0 %v485
        %1623 = vmatprep.subr.mxu0 0.0
        %1624 = vmatpush2.msra.mxu0 %v482
        %1625 = vmatprep.subr.mxu0 0.0
        %1626 = vmatpush2.msra.mxu0 %v479
        %1627 = vmatprep.subr.mxu0 0.0
        %1628 = vmatpush2.msra.mxu0 %v476
        %1629 = vmatprep.subr.mxu0 0.0
        %1630 = vmatpush2.msra.mxu0 %v473
        %1631 = vmatprep.subr.mxu0 0.0
        %1632 = vmatpush2.msra.mxu0 %v470
        %1633 = vmatprep.mubr.f32.mxu0 %v1496
        %1634 = vmatmul.mubr.f32.gmra.mxu0 %v1494
        %v1635 = vpop.f32.mrf.mxu0
        %v1636 = vadd.f32 %v734, %v1635
        %v1637 = vpop.f32.mrf.mxu0
        %1638 = vdwg.mxu0
        %v1639 = vxor.u32 %v1565, 2147483648
        %v1640 = vmul.f32 %v1639, 1.442695
        %v1641 = vpow.pop %v1640
        %v1642 = vadd.f32 %v1641, 1.0
        %v1643 = vrcp.pop %v1642
        %v1644 = vmul.f32 1.0, %v1643
        %v1645 = vxor.u32 %v1567, 2147483648
        %v1646 = vmul.f32 %v1645, 1.442695
        %v1647 = vpow.pop %v1646
        %v1648 = vadd.f32 %v1647, 1.0
        %v1649 = vrcp.pop %v1648
        %v1650 = vmul.f32 1.0, %v1649
        %v1651 = vmul.f32 %v1644, %v1037
        %1652 = vmatprep.subr.mxu0 0.0
        %1653 = vmatpush1.msra.mxu0 0.0
        %1654 = vmatprep.subr.mxu0 0.0
        %1655 = vmatpush1.msra.mxu0 0.0
        %1656 = vmatprep.subr.mxu0 0.0
        %1657 = vmatpush1.msra.mxu0 0.0
        %1658 = vmatprep.subr.mxu0 0.0
        %1659 = vmatpush1.msra.mxu0 0.0
        %1660 = vmatprep.subr.mxu0 0.0
        %1661 = vmatpush1.msra.mxu0 0.0
        %1662 = vmatprep.subr.mxu0 0.0
        %1663 = vmatpush1.msra.mxu0 0.0
        %1664 = vmatprep.subr.mxu0 0.0
        %1665 = vmatpush1.msra.mxu0 0.0
        %1666 = vmatprep.subr.mxu0 0.0
        %1667 = vmatpush1.msra.mxu0 0.0
        %1668 = vmatprep.subr.mxu0 0.0
        %1669 = vmatpush1.msra.mxu0 0.0
        %1670 = vmatprep.subr.mxu0 0.0
        %1671 = vmatpush1.msra.mxu0 0.0
        %1672 = vmatprep.subr.mxu0 0.0
        %1673 = vmatpush1.msra.mxu0 0.0
        %1674 = vmatprep.subr.mxu0 0.0
        %1675 = vmatpush1.msra.mxu0 0.0
        %1676 = vmatprep.subr.mxu0 0.0
        %1677 = vmatpush1.msra.mxu0 0.0
        %1678 = vmatprep.subr.mxu0 0.0
        %1679 = vmatpush1.msra.mxu0 0.0
        %1680 = vmatprep.subr.mxu0 0.0
        %1681 = vmatpush1.msra.mxu0 0.0
        %1682 = vmatprep.subr.mxu0 0.0
        %1683 = vmatpush1.msra.mxu0 %v1651
        %1684 = vmatprep.subr.mxu0 0.0
        %1685 = vmatpush2.msra.mxu0 0.0
        %1686 = vmatprep.subr.mxu0 0.0
        %1687 = vmatpush2.msra.mxu0 0.0
        %1688 = vmatprep.subr.mxu0 0.0
        %1689 = vmatpush2.msra.mxu0 0.0
        %1690 = vmatprep.subr.mxu0 0.0
        %1691 = vmatpush2.msra.mxu0 0.0
        %1692 = vmatprep.subr.mxu0 0.0
        %1693 = vmatpush2.msra.mxu0 0.0
        %1694 = vmatprep.subr.mxu0 0.0
        %1695 = vmatpush2.msra.mxu0 0.0
        %1696 = vmatprep.subr.mxu0 0.0
        %1697 = vmatpush2.msra.mxu0 0.0
        %1698 = vmatprep.subr.mxu0 0.0
        %1699 = vmatpush2.msra.mxu0 0.0
        %1700 = vmatprep.subr.mxu0 0.0
        %1701 = vmatpush2.msra.mxu0 0.0
        %1702 = vmatprep.subr.mxu0 0.0
        %1703 = vmatpush2.msra.mxu0 0.0
        %1704 = vmatprep.subr.mxu0 0.0
        %1705 = vmatpush2.msra.mxu0 0.0
        %1706 = vmatprep.subr.mxu0 0.0
        %1707 = vmatpush2.msra.mxu0 0.0
        %1708 = vmatprep.subr.mxu0 0.0
        %1709 = vmatpush2.msra.mxu0 0.0
        %1710 = vmatprep.subr.mxu0 0.0
        %1711 = vmatpush2.msra.mxu0 0.0
        %1712 = vmatprep.subr.mxu0 0.0
        %1713 = vmatpush2.msra.mxu0 0.0
        %1714 = vmatprep.subr.mxu0 0.0
        %1715 = vmatpush2.msra.mxu0 0.0
        %1716 = vmatprep.mubr.f32.mxu0 0.0
        %1717 = vmatmul.mubr.f32.gmra.mxu0 %v649
        %v1718 = vpop.f32.mrf.mxu0
        %v1719 = vadd.f32 0.0, %v1718
        %v1720 = vpop.f32.mrf.mxu0
        %1721 = vdwg.mxu0
        %1722 = vmatprep.subr.mxu0 0.0
        %1723 = vmatpush1.msra.mxu0 %v531
        %1724 = vmatprep.subr.mxu0 0.0
        %1725 = vmatpush1.msra.mxu0 %v530
        %1726 = vmatprep.subr.mxu0 0.0
        %1727 = vmatpush1.msra.mxu0 %v529
        %1728 = vmatprep.subr.mxu0 0.0
        %1729 = vmatpush1.msra.mxu0 %v528
        %1730 = vmatprep.subr.mxu0 0.0
        %1731 = vmatpush1.msra.mxu0 %v527
        %1732 = vmatprep.subr.mxu0 0.0
        %1733 = vmatpush1.msra.mxu0 %v526
        %1734 = vmatprep.subr.mxu0 0.0
        %1735 = vmatpush1.msra.mxu0 %v525
        %1736 = vmatprep.subr.mxu0 0.0
        %1737 = vmatpush1.msra.mxu0 %v524
        %1738 = vmatprep.subr.mxu0 0.0
        %1739 = vmatpush1.msra.mxu0 %v523
        %1740 = vmatprep.subr.mxu0 0.0
        %1741 = vmatpush1.msra.mxu0 %v522
        %1742 = vmatprep.subr.mxu0 0.0
        %1743 = vmatpush1.msra.mxu0 %v521
        %1744 = vmatprep.subr.mxu0 0.0
        %1745 = vmatpush1.msra.mxu0 %v520
        %1746 = vmatprep.subr.mxu0 0.0
        %1747 = vmatpush1.msra.mxu0 %v519
        %1748 = vmatprep.subr.mxu0 0.0
        %1749 = vmatpush1.msra.mxu0 %v518
        %1750 = vmatprep.subr.mxu0 0.0
        %1751 = vmatpush1.msra.mxu0 %v517
        %1752 = vmatprep.subr.mxu0 0.0
        %1753 = vmatpush1.msra.mxu0 %v516
        %1754 = vmatprep.subr.mxu0 0.0
        %1755 = vmatpush2.msra.mxu0 0.0
        %1756 = vmatprep.subr.mxu0 0.0
        %1757 = vmatpush2.msra.mxu0 0.0
        %1758 = vmatprep.subr.mxu0 0.0
        %1759 = vmatpush2.msra.mxu0 0.0
        %1760 = vmatprep.subr.mxu0 0.0
        %1761 = vmatpush2.msra.mxu0 0.0
        %1762 = vmatprep.subr.mxu0 0.0
        %1763 = vmatpush2.msra.mxu0 0.0
        %1764 = vmatprep.subr.mxu0 0.0
        %1765 = vmatpush2.msra.mxu0 0.0
        %1766 = vmatprep.subr.mxu0 0.0
        %1767 = vmatpush2.msra.mxu0 0.0
        %1768 = vmatprep.subr.mxu0 0.0
        %1769 = vmatpush2.msra.mxu0 0.0
        %1770 = vmatprep.subr.mxu0 0.0
        %1771 = vmatpush2.msra.mxu0 0.0
        %1772 = vmatprep.subr.mxu0 0.0
        %1773 = vmatpush2.msra.mxu0 0.0
        %1774 = vmatprep.subr.mxu0 0.0
        %1775 = vmatpush2.msra.mxu0 0.0
        %1776 = vmatprep.subr.mxu0 0.0
        %1777 = vmatpush2.msra.mxu0 0.0
        %1778 = vmatprep.subr.mxu0 0.0
        %1779 = vmatpush2.msra.mxu0 0.0
        %1780 = vmatprep.subr.mxu0 0.0
        %1781 = vmatpush2.msra.mxu0 0.0
        %1782 = vmatprep.subr.mxu0 0.0
        %1783 = vmatpush2.msra.mxu0 0.0
        %1784 = vmatprep.subr.mxu0 0.0
        %1785 = vmatpush2.msra.mxu0 0.0
        %1786 = vmatprep.mubr.f32.mxu0 0.0
        %1787 = vmatmul.mubr.f32.gmra.mxu0 %v1719
        %v1788 = vpop.f32.mrf.mxu0
        %v1789 = vadd.f32 0.0, %v1788
        %v1790 = vpop.f32.mrf.mxu0
        %1791 = vdwg.mxu0
        %v1792 = vadd.f32 %v1636, %v1789
        %v1793 = vtanh.pop %v1792
        %v1794 = vmul.f32 %v1650, %v1037
        %v1795 = vsub.f32 1.0, %v1650
        %v1796 = vmul.f32 %v1795, %v1793
        %v1797 = vadd.f32 %v1794, %v1796
        %1798 = vmatprep.subr.mxu0 0.0
        %1799 = vmatpush1.msra.mxu0 0.0
        %1800 = vmatprep.subr.mxu0 0.0
        %1801 = vmatpush1.msra.mxu0 0.0
        %1802 = vmatprep.subr.mxu0 0.0
        %1803 = vmatpush1.msra.mxu0 0.0
        %1804 = vmatprep.subr.mxu0 0.0
        %1805 = vmatpush1.msra.mxu0 0.0
        %1806 = vmatprep.subr.mxu0 0.0
        %1807 = vmatpush1.msra.mxu0 0.0
        %1808 = vmatprep.subr.mxu0 0.0
        %1809 = vmatpush1.msra.mxu0 0.0
        %1810 = vmatprep.subr.mxu0 0.0
        %1811 = vmatpush1.msra.mxu0 0.0
        %1812 = vmatprep.subr.mxu0 0.0
        %1813 = vmatpush1.msra.mxu0 0.0
        %1814 = vmatprep.subr.mxu0 0.0
        %1815 = vmatpush1.msra.mxu0 0.0
        %1816 = vmatprep.subr.mxu0 0.0
        %1817 = vmatpush1.msra.mxu0 0.0
        %1818 = vmatprep.subr.mxu0 0.0
        %1819 = vmatpush1.msra.mxu0 0.0
        %1820 = vmatprep.subr.mxu0 0.0
        %1821 = vmatpush1.msra.mxu0 0.0
        %1822 = vmatprep.subr.mxu0 0.0
        %1823 = vmatpush1.msra.mxu0 0.0
        %1824 = vmatprep.subr.mxu0 0.0
        %1825 = vmatpush1.msra.mxu0 0.0
        %1826 = vmatprep.subr.mxu0 0.0
        %1827 = vmatpush1.msra.mxu0 0.0
        %1828 = vmatprep.subr.mxu0 %v1424
        %1829 = vmatpush1.msra.mxu0 %v1797
        %1830 = vmatprep.subr.mxu0 0.0
        %1831 = vmatpush2.msra.mxu0 0.0
        %1832 = vmatprep.subr.mxu0 0.0
        %1833 = vmatpush2.msra.mxu0 0.0
        %1834 = vmatprep.subr.mxu0 0.0
        %1835 = vmatpush2.msra.mxu0 0.0
        %1836 = vmatprep.subr.mxu0 0.0
        %1837 = vmatpush2.msra.mxu0 0.0
        %1838 = vmatprep.subr.mxu0 0.0
        %1839 = vmatpush2.msra.mxu0 0.0
        %1840 = vmatprep.subr.mxu0 0.0
        %1841 = vmatpush2.msra.mxu0 0.0
        %1842 = vmatprep.subr.mxu0 0.0
        %1843 = vmatpush2.msra.mxu0 0.0
        %1844 = vmatprep.subr.mxu0 0.0
        %1845 = vmatpush2.msra.mxu0 0.0
        %1846 = vmatprep.subr.mxu0 0.0
        %1847 = vmatpush2.msra.mxu0 0.0
        %1848 = vmatprep.subr.mxu0 0.0
        %1849 = vmatpush2.msra.mxu0 0.0
        %1850 = vmatprep.subr.mxu0 0.0
        %1851 = vmatpush2.msra.mxu0 0.0
        %1852 = vmatprep.subr.mxu0 0.0
        %1853 = vmatpush2.msra.mxu0 0.0
        %1854 = vmatprep.subr.mxu0 0.0
        %1855 = vmatpush2.msra.mxu0 0.0
        %1856 = vmatprep.subr.mxu0 0.0
        %1857 = vmatpush2.msra.mxu0 0.0
        %1858 = vmatprep.subr.mxu0 0.0
        %1859 = vmatpush2.msra.mxu0 0.0
        %1860 = vmatprep.subr.mxu0 0.0
        %1861 = vmatpush2.msra.mxu0 0.0
        %1862 = vmatprep.mubr.f32.mxu0 0.0
        %1863 = vmatmul.mubr.f32.gmra.mxu0 %v649
        %v1864 = vpop.f32.mrf.mxu0
        %v1865 = vadd.f32 0.0, %v1864
        %v1866 = vpop.f32.mrf.mxu0
        %v1867 = vadd.f32 0.0, %v1866
        %1868 = vdwg.mxu0
        %1869 = vmatprep.subr.mxu0 %v579
        %1870 = vmatpush1.msra.mxu0 %v578
        %1871 = vmatprep.subr.mxu0 %v576
        %1872 = vmatpush1.msra.mxu0 %v575
        %1873 = vmatprep.subr.mxu0 %v573
        %1874 = vmatpush1.msra.mxu0 %v572
        %1875 = vmatprep.subr.mxu0 %v570
        %1876 = vmatpush1.msra.mxu0 %v569
        %1877 = vmatprep.subr.mxu0 %v567
        %1878 = vmatpush1.msra.mxu0 %v566
        %1879 = vmatprep.subr.mxu0 %v564
        %1880 = vmatpush1.msra.mxu0 %v563
        %1881 = vmatprep.subr.mxu0 %v561
        %1882 = vmatpush1.msra.mxu0 %v560
        %1883 = vmatprep.subr.mxu0 %v558
        %1884 = vmatpush1.msra.mxu0 %v557
        %1885 = vmatprep.subr.mxu0 %v555
        %1886 = vmatpush1.msra.mxu0 %v554
        %1887 = vmatprep.subr.mxu0 %v552
        %1888 = vmatpush1.msra.mxu0 %v551
        %1889 = vmatprep.subr.mxu0 %v549
        %1890 = vmatpush1.msra.mxu0 %v548
        %1891 = vmatprep.subr.mxu0 %v546
        %1892 = vmatpush1.msra.mxu0 %v545
        %1893 = vmatprep.subr.mxu0 %v543
        %1894 = vmatpush1.msra.mxu0 %v542
        %1895 = vmatprep.subr.mxu0 %v540
        %1896 = vmatpush1.msra.mxu0 %v539
        %1897 = vmatprep.subr.mxu0 %v537
        %1898 = vmatpush1.msra.mxu0 %v536
        %1899 = vmatprep.subr.mxu0 %v534
        %1900 = vmatpush1.msra.mxu0 %v533
        %1901 = vmatprep.subr.mxu0 %v627
        %1902 = vmatpush2.msra.mxu0 %v626
        %1903 = vmatprep.subr.mxu0 %v624
        %1904 = vmatpush2.msra.mxu0 %v623
        %1905 = vmatprep.subr.mxu0 %v621
        %1906 = vmatpush2.msra.mxu0 %v620
        %1907 = vmatprep.subr.mxu0 %v618
        %1908 = vmatpush2.msra.mxu0 %v617
        %1909 = vmatprep.subr.mxu0 %v615
        %1910 = vmatpush2.msra.mxu0 %v614
        %1911 = vmatprep.subr.mxu0 %v612
        %1912 = vmatpush2.msra.mxu0 %v611
        %1913 = vmatprep.subr.mxu0 %v609
        %1914 = vmatpush2.msra.mxu0 %v608
        %1915 = vmatprep.subr.mxu0 %v606
        %1916 = vmatpush2.msra.mxu0 %v605
        %1917 = vmatprep.subr.mxu0 %v603
        %1918 = vmatpush2.msra.mxu0 %v602
        %1919 = vmatprep.subr.mxu0 %v600
        %1920 = vmatpush2.msra.mxu0 %v599
        %1921 = vmatprep.subr.mxu0 %v597
        %1922 = vmatpush2.msra.mxu0 %v596
        %1923 = vmatprep.subr.mxu0 %v594
        %1924 = vmatpush2.msra.mxu0 %v593
        %1925 = vmatprep.subr.mxu0 %v591
        %1926 = vmatpush2.msra.mxu0 %v590
        %1927 = vmatprep.subr.mxu0 %v588
        %1928 = vmatpush2.msra.mxu0 %v587
        %1929 = vmatprep.subr.mxu0 %v585
        %1930 = vmatpush2.msra.mxu0 %v584
        %1931 = vmatprep.subr.mxu0 %v582
        %1932 = vmatpush2.msra.mxu0 %v581
        %1933 = vmatprep.mubr.f32.mxu0 %v1867
        %1934 = vmatmul.mubr.f32.gmra.mxu0 %v1865
        %v1935 = vpop.f32.mrf.mxu0
        %v1936 = vadd.f32 %v1113, %v1935
        %v1937 = vpop.f32.mrf.mxu0
        %v1938 = vadd.f32 %v1117, %v1937
        %1939 = vdwg.mxu0
        %1940 = vmatprep.subr.mxu0 0.0
        %1941 = vmatpush1.msra.mxu0 %v580
        %1942 = vmatprep.subr.mxu0 0.0
        %1943 = vmatpush1.msra.mxu0 %v577
        %1944 = vmatprep.subr.mxu0 0.0
        %1945 = vmatpush1.msra.mxu0 %v574
        %1946 = vmatprep.subr.mxu0 0.0
        %1947 = vmatpush1.msra.mxu0 %v571
        %1948 = vmatprep.subr.mxu0 0.0
        %1949 = vmatpush1.msra.mxu0 %v568
        %1950 = vmatprep.subr.mxu0 0.0
        %1951 = vmatpush1.msra.mxu0 %v565
        %1952 = vmatprep.subr.mxu0 0.0
        %1953 = vmatpush1.msra.mxu0 %v562
        %1954 = vmatprep.subr.mxu0 0.0
        %1955 = vmatpush1.msra.mxu0 %v559
        %1956 = vmatprep.subr.mxu0 0.0
        %1957 = vmatpush1.msra.mxu0 %v556
        %1958 = vmatprep.subr.mxu0 0.0
        %1959 = vmatpush1.msra.mxu0 %v553
        %1960 = vmatprep.subr.mxu0 0.0
        %1961 = vmatpush1.msra.mxu0 %v550
        %1962 = vmatprep.subr.mxu0 0.0
        %1963 = vmatpush1.msra.mxu0 %v547
        %1964 = vmatprep.subr.mxu0 0.0
        %1965 = vmatpush1.msra.mxu0 %v544
        %1966 = vmatprep.subr.mxu0 0.0
        %1967 = vmatpush1.msra.mxu0 %v541
        %1968 = vmatprep.subr.mxu0 0.0
        %1969 = vmatpush1.msra.mxu0 %v538
        %1970 = vmatprep.subr.mxu0 0.0
        %1971 = vmatpush1.msra.mxu0 %v535
        %1972 = vmatprep.subr.mxu0 0.0
        %1973 = vmatpush2.msra.mxu0 %v628
        %1974 = vmatprep.subr.mxu0 0.0
        %1975 = vmatpush2.msra.mxu0 %v625
        %1976 = vmatprep.subr.mxu0 0.0
        %1977 = vmatpush2.msra.mxu0 %v622
        %1978 = vmatprep.subr.mxu0 0.0
        %1979 = vmatpush2.msra.mxu0 %v619
        %1980 = vmatprep.subr.mxu0 0.0
        %1981 = vmatpush2.msra.mxu0 %v616
        %1982 = vmatprep.subr.mxu0 0.0
        %1983 = vmatpush2.msra.mxu0 %v613
        %1984 = vmatprep.subr.mxu0 0.0
        %1985 = vmatpush2.msra.mxu0 %v610
        %1986 = vmatprep.subr.mxu0 0.0
        %1987 = vmatpush2.msra.mxu0 %v607
        %1988 = vmatprep.subr.mxu0 0.0
        %1989 = vmatpush2.msra.mxu0 %v604
        %1990 = vmatprep.subr.mxu0 0.0
        %1991 = vmatpush2.msra.mxu0 %v601
        %1992 = vmatprep.subr.mxu0 0.0
        %1993 = vmatpush2.msra.mxu0 %v598
        %1994 = vmatprep.subr.mxu0 0.0
        %1995 = vmatpush2.msra.mxu0 %v595
        %1996 = vmatprep.subr.mxu0 0.0
        %1997 = vmatpush2.msra.mxu0 %v592
        %1998 = vmatprep.subr.mxu0 0.0
        %1999 = vmatpush2.msra.mxu0 %v589
        %2000 = vmatprep.subr.mxu0 0.0
        %2001 = vmatpush2.msra.mxu0 %v586
        %2002 = vmatprep.subr.mxu0 0.0
        %2003 = vmatpush2.msra.mxu0 %v583
        %2004 = vmatprep.mubr.f32.mxu0 %v1867
        %2005 = vmatmul.mubr.f32.gmra.mxu0 %v1865
        %v2006 = vpop.f32.mrf.mxu0
        %v2007 = vadd.f32 %v1121, %v2006
        %v2008 = vpop.f32.mrf.mxu0
        %2009 = vdwg.mxu0
        %v2010 = vxor.u32 %v1936, 2147483648
        %v2011 = vmul.f32 %v2010, 1.442695
        %v2012 = vpow.pop %v2011
        %v2013 = vadd.f32 %v2012, 1.0
        %v2014 = vrcp.pop %v2013
        %v2015 = vmul.f32 1.0, %v2014
        %v2016 = vxor.u32 %v1938, 2147483648
        %v2017 = vmul.f32 %v2016, 1.442695
        %v2018 = vpow.pop %v2017
        %v2019 = vadd.f32 %v2018, 1.0
        %v2020 = vrcp.pop %v2019
        %v2021 = vmul.f32 1.0, %v2020
        %v2022 = vmul.f32 %v2015, %v1424
        %2023 = vmatprep.subr.mxu0 0.0
        %2024 = vmatpush1.msra.mxu0 0.0
        %2025 = vmatprep.subr.mxu0 0.0
        %2026 = vmatpush1.msra.mxu0 0.0
        %2027 = vmatprep.subr.mxu0 0.0
        %2028 = vmatpush1.msra.mxu0 0.0
        %2029 = vmatprep.subr.mxu0 0.0
        %2030 = vmatpush1.msra.mxu0 0.0
        %2031 = vmatprep.subr.mxu0 0.0
        %2032 = vmatpush1.msra.mxu0 0.0
        %2033 = vmatprep.subr.mxu0 0.0
        %2034 = vmatpush1.msra.mxu0 0.0
        %2035 = vmatprep.subr.mxu0 0.0
        %2036 = vmatpush1.msra.mxu0 0.0
        %2037 = vmatprep.subr.mxu0 0.0
        %2038 = vmatpush1.msra.mxu0 0.0
        %2039 = vmatprep.subr.mxu0 0.0
        %2040 = vmatpush1.msra.mxu0 0.0
        %2041 = vmatprep.subr.mxu0 0.0
        %2042 = vmatpush1.msra.mxu0 0.0
        %2043 = vmatprep.subr.mxu0 0.0
        %2044 = vmatpush1.msra.mxu0 0.0
        %2045 = vmatprep.subr.mxu0 0.0
        %2046 = vmatpush1.msra.mxu0 0.0
        %2047 = vmatprep.subr.mxu0 0.0
        %2048 = vmatpush1.msra.mxu0 0.0
        %2049 = vmatprep.subr.mxu0 0.0
        %2050 = vmatpush1.msra.mxu0 0.0
        %2051 = vmatprep.subr.mxu0 0.0
        %2052 = vmatpush1.msra.mxu0 0.0
        %2053 = vmatprep.subr.mxu0 0.0
        %2054 = vmatpush1.msra.mxu0 %v2022
        %2055 = vmatprep.subr.mxu0 0.0
        %2056 = vmatpush2.msra.mxu0 0.0
        %2057 = vmatprep.subr.mxu0 0.0
        %2058 = vmatpush2.msra.mxu0 0.0
        %2059 = vmatprep.subr.mxu0 0.0
        %2060 = vmatpush2.msra.mxu0 0.0
        %2061 = vmatprep.subr.mxu0 0.0
        %2062 = vmatpush2.msra.mxu0 0.0
        %2063 = vmatprep.subr.mxu0 0.0
        %2064 = vmatpush2.msra.mxu0 0.0
        %2065 = vmatprep.subr.mxu0 0.0
        %2066 = vmatpush2.msra.mxu0 0.0
        %2067 = vmatprep.subr.mxu0 0.0
        %2068 = vmatpush2.msra.mxu0 0.0
        %2069 = vmatprep.subr.mxu0 0.0
        %2070 = vmatpush2.msra.mxu0 0.0
        %2071 = vmatprep.subr.mxu0 0.0
        %2072 = vmatpush2.msra.mxu0 0.0
        %2073 = vmatprep.subr.mxu0 0.0
        %2074 = vmatpush2.msra.mxu0 0.0
        %2075 = vmatprep.subr.mxu0 0.0
        %2076 = vmatpush2.msra.mxu0 0.0
        %2077 = vmatprep.subr.mxu0 0.0
        %2078 = vmatpush2.msra.mxu0 0.0
        %2079 = vmatprep.subr.mxu0 0.0
        %2080 = vmatpush2.msra.mxu0 0.0
        %2081 = vmatprep.subr.mxu0 0.0
        %2082 = vmatpush2.msra.mxu0 0.0
        %2083 = vmatprep.subr.mxu0 0.0
        %2084 = vmatpush2.msra.mxu0 0.0
        %2085 = vmatprep.subr.mxu0 0.0
        %2086 = vmatpush2.msra.mxu0 0.0
        %2087 = vmatprep.mubr.f32.mxu0 0.0
        %2088 = vmatmul.mubr.f32.gmra.mxu0 %v649
        %v2089 = vpop.f32.mrf.mxu0
        %v2090 = vadd.f32 0.0, %v2089
        %v2091 = vpop.f32.mrf.mxu0
        %2092 = vdwg.mxu0
        %2093 = vmatprep.subr.mxu0 0.0
        %2094 = vmatpush1.msra.mxu0 %v644
        %2095 = vmatprep.subr.mxu0 0.0
        %2096 = vmatpush1.msra.mxu0 %v643
        %2097 = vmatprep.subr.mxu0 0.0
        %2098 = vmatpush1.msra.mxu0 %v642
        %2099 = vmatprep.subr.mxu0 0.0
        %2100 = vmatpush1.msra.mxu0 %v641
        %2101 = vmatprep.subr.mxu0 0.0
        %2102 = vmatpush1.msra.mxu0 %v640
        %2103 = vmatprep.subr.mxu0 0.0
        %2104 = vmatpush1.msra.mxu0 %v639
        %2105 = vmatprep.subr.mxu0 0.0
        %2106 = vmatpush1.msra.mxu0 %v638
        %2107 = vmatprep.subr.mxu0 0.0
        %2108 = vmatpush1.msra.mxu0 %v637
        %2109 = vmatprep.subr.mxu0 0.0
        %2110 = vmatpush1.msra.mxu0 %v636
        %2111 = vmatprep.subr.mxu0 0.0
        %2112 = vmatpush1.msra.mxu0 %v635
        %2113 = vmatprep.subr.mxu0 0.0
        %2114 = vmatpush1.msra.mxu0 %v634
        %2115 = vmatprep.subr.mxu0 0.0
        %2116 = vmatpush1.msra.mxu0 %v633
        %2117 = vmatprep.subr.mxu0 0.0
        %2118 = vmatpush1.msra.mxu0 %v632
        %2119 = vmatprep.subr.mxu0 0.0
        %2120 = vmatpush1.msra.mxu0 %v631
        %2121 = vmatprep.subr.mxu0 0.0
        %2122 = vmatpush1.msra.mxu0 %v630
        %2123 = vmatprep.subr.mxu0 0.0
        %2124 = vmatpush1.msra.mxu0 %v629
        %2125 = vmatprep.subr.mxu0 0.0
        %2126 = vmatpush2.msra.mxu0 0.0
        %2127 = vmatprep.subr.mxu0 0.0
        %2128 = vmatpush2.msra.mxu0 0.0
        %2129 = vmatprep.subr.mxu0 0.0
        %2130 = vmatpush2.msra.mxu0 0.0
        %2131 = vmatprep.subr.mxu0 0.0
        %2132 = vmatpush2.msra.mxu0 0.0
        %2133 = vmatprep.subr.mxu0 0.0
        %2134 = vmatpush2.msra.mxu0 0.0
        %2135 = vmatprep.subr.mxu0 0.0
        %2136 = vmatpush2.msra.mxu0 0.0
        %2137 = vmatprep.subr.mxu0 0.0
        %2138 = vmatpush2.msra.mxu0 0.0
        %2139 = vmatprep.subr.mxu0 0.0
        %2140 = vmatpush2.msra.mxu0 0.0
        %2141 = vmatprep.subr.mxu0 0.0
        %2142 = vmatpush2.msra.mxu0 0.0
        %2143 = vmatprep.subr.mxu0 0.0
        %2144 = vmatpush2.msra.mxu0 0.0
        %2145 = vmatprep.subr.mxu0 0.0
        %2146 = vmatpush2.msra.mxu0 0.0
        %2147 = vmatprep.subr.mxu0 0.0
        %2148 = vmatpush2.msra.mxu0 0.0
        %2149 = vmatprep.subr.mxu0 0.0
        %2150 = vmatpush2.msra.mxu0 0.0
        %2151 = vmatprep.subr.mxu0 0.0
        %2152 = vmatpush2.msra.mxu0 0.0
        %2153 = vmatprep.subr.mxu0 0.0
        %2154 = vmatpush2.msra.mxu0 0.0
        %2155 = vmatprep.subr.mxu0 0.0
        %2156 = vmatpush2.msra.mxu0 0.0
        %2157 = vmatprep.mubr.f32.mxu0 0.0
        %2158 = vmatmul.mubr.f32.gmra.mxu0 %v2090
        %v2159 = vpop.f32.mrf.mxu0
        %v2160 = vadd.f32 0.0, %v2159
        %v2161 = vpop.f32.mrf.mxu0
        %2162 = vdwg.mxu0
        %v2163 = vadd.f32 %v2007, %v2160
        %v2164 = vtanh.pop %v2163
        %v2165 = vmul.f32 %v2021, %v1424
        %v2166 = vsub.f32 1.0, %v2021
        %v2167 = vmul.f32 %v2166, %v2164
        %v2168 = vadd.f32 %v2165, %v2167
        %s2169 = scalar_lea.vmem %s365, 16 [#allocation5]
        %v2170 = vld [vmem:[%s2169] sm:$0xff]
        %2171 = vmatprep.subr.mxu0 0.0
        %2172 = vmatpush1.msra.mxu0 0.0
        %2173 = vmatprep.subr.mxu0 0.0
        %2174 = vmatpush1.msra.mxu0 0.0
        %2175 = vmatprep.subr.mxu0 0.0
        %2176 = vmatpush1.msra.mxu0 0.0
        %2177 = vmatprep.subr.mxu0 0.0
        %2178 = vmatpush1.msra.mxu0 0.0
        %2179 = vmatprep.subr.mxu0 0.0
        %2180 = vmatpush1.msra.mxu0 0.0
        %2181 = vmatprep.subr.mxu0 0.0
        %2182 = vmatpush1.msra.mxu0 0.0
        %2183 = vmatprep.subr.mxu0 0.0
        %2184 = vmatpush1.msra.mxu0 0.0
        %2185 = vmatprep.subr.mxu0 0.0
        %2186 = vmatpush1.msra.mxu0 0.0
        %2187 = vmatprep.subr.mxu0 0.0
        %2188 = vmatpush1.msra.mxu0 0.0
        %2189 = vmatprep.subr.mxu0 0.0
        %2190 = vmatpush1.msra.mxu0 0.0
        %2191 = vmatprep.subr.mxu0 0.0
        %2192 = vmatpush1.msra.mxu0 0.0
        %2193 = vmatprep.subr.mxu0 0.0
        %2194 = vmatpush1.msra.mxu0 0.0
        %2195 = vmatprep.subr.mxu0 0.0
        %2196 = vmatpush1.msra.mxu0 0.0
        %2197 = vmatprep.subr.mxu0 0.0
        %2198 = vmatpush1.msra.mxu0 0.0
        %2199 = vmatprep.subr.mxu0 0.0
        %2200 = vmatpush1.msra.mxu0 0.0
        %2201 = vmatprep.subr.mxu0 %v1797
        %2202 = vmatpush1.msra.mxu0 %v2170
        %2203 = vmatprep.subr.mxu0 0.0
        %2204 = vmatpush2.msra.mxu0 0.0
        %2205 = vmatprep.subr.mxu0 0.0
        %2206 = vmatpush2.msra.mxu0 0.0
        %2207 = vmatprep.subr.mxu0 0.0
        %2208 = vmatpush2.msra.mxu0 0.0
        %2209 = vmatprep.subr.mxu0 0.0
        %2210 = vmatpush2.msra.mxu0 0.0
        %2211 = vmatprep.subr.mxu0 0.0
        %2212 = vmatpush2.msra.mxu0 0.0
        %2213 = vmatprep.subr.mxu0 0.0
        %2214 = vmatpush2.msra.mxu0 0.0
        %2215 = vmatprep.subr.mxu0 0.0
        %2216 = vmatpush2.msra.mxu0 0.0
        %2217 = vmatprep.subr.mxu0 0.0
        %2218 = vmatpush2.msra.mxu0 0.0
        %2219 = vmatprep.subr.mxu0 0.0
        %2220 = vmatpush2.msra.mxu0 0.0
        %2221 = vmatprep.subr.mxu0 0.0
        %2222 = vmatpush2.msra.mxu0 0.0
        %2223 = vmatprep.subr.mxu0 0.0
        %2224 = vmatpush2.msra.mxu0 0.0
        %2225 = vmatprep.subr.mxu0 0.0
        %2226 = vmatpush2.msra.mxu0 0.0
        %2227 = vmatprep.subr.mxu0 0.0
        %2228 = vmatpush2.msra.mxu0 0.0
        %2229 = vmatprep.subr.mxu0 0.0
        %2230 = vmatpush2.msra.mxu0 0.0
        %2231 = vmatprep.subr.mxu0 0.0
        %2232 = vmatpush2.msra.mxu0 0.0
        %2233 = vmatprep.subr.mxu0 0.0
        %2234 = vmatpush2.msra.mxu0 0.0
        %2235 = vmatprep.mubr.f32.mxu0 0.0
        %2236 = vmatmul.mubr.f32.gmra.mxu0 %v649
        %v2237 = vpop.f32.mrf.mxu0
        %v2238 = vadd.f32 0.0, %v2237
        %v2239 = vpop.f32.mrf.mxu0
        %v2240 = vadd.f32 0.0, %v2239
        %2241 = vdwg.mxu0
        %2242 = vmatprep.subr.mxu0 %v466
        %2243 = vmatpush1.msra.mxu0 %v465
        %2244 = vmatprep.subr.mxu0 %v463
        %2245 = vmatpush1.msra.mxu0 %v462
        %2246 = vmatprep.subr.mxu0 %v460
        %2247 = vmatpush1.msra.mxu0 %v459
        %2248 = vmatprep.subr.mxu0 %v457
        %2249 = vmatpush1.msra.mxu0 %v456
        %2250 = vmatprep.subr.mxu0 %v454
        %2251 = vmatpush1.msra.mxu0 %v453
        %2252 = vmatprep.subr.mxu0 %v451
        %2253 = vmatpush1.msra.mxu0 %v450
        %2254 = vmatprep.subr.mxu0 %v448
        %2255 = vmatpush1.msra.mxu0 %v447
        %2256 = vmatprep.subr.mxu0 %v445
        %2257 = vmatpush1.msra.mxu0 %v444
        %2258 = vmatprep.subr.mxu0 %v442
        %2259 = vmatpush1.msra.mxu0 %v441
        %2260 = vmatprep.subr.mxu0 %v439
        %2261 = vmatpush1.msra.mxu0 %v438
        %2262 = vmatprep.subr.mxu0 %v436
        %2263 = vmatpush1.msra.mxu0 %v435
        %2264 = vmatprep.subr.mxu0 %v433
        %2265 = vmatpush1.msra.mxu0 %v432
        %2266 = vmatprep.subr.mxu0 %v430
        %2267 = vmatpush1.msra.mxu0 %v429
        %2268 = vmatprep.subr.mxu0 %v427
        %2269 = vmatpush1.msra.mxu0 %v426
        %2270 = vmatprep.subr.mxu0 %v424
        %2271 = vmatpush1.msra.mxu0 %v423
        %2272 = vmatprep.subr.mxu0 %v421
        %2273 = vmatpush1.msra.mxu0 %v420
        %2274 = vmatprep.subr.mxu0 %v514
        %2275 = vmatpush2.msra.mxu0 %v513
        %2276 = vmatprep.subr.mxu0 %v511
        %2277 = vmatpush2.msra.mxu0 %v510
        %2278 = vmatprep.subr.mxu0 %v508
        %2279 = vmatpush2.msra.mxu0 %v507
        %2280 = vmatprep.subr.mxu0 %v505
        %2281 = vmatpush2.msra.mxu0 %v504
        %2282 = vmatprep.subr.mxu0 %v502
        %2283 = vmatpush2.msra.mxu0 %v501
        %2284 = vmatprep.subr.mxu0 %v499
        %2285 = vmatpush2.msra.mxu0 %v498
        %2286 = vmatprep.subr.mxu0 %v496
        %2287 = vmatpush2.msra.mxu0 %v495
        %2288 = vmatprep.subr.mxu0 %v493
        %2289 = vmatpush2.msra.mxu0 %v492
        %2290 = vmatprep.subr.mxu0 %v490
        %2291 = vmatpush2.msra.mxu0 %v489
        %2292 = vmatprep.subr.mxu0 %v487
        %2293 = vmatpush2.msra.mxu0 %v486
        %2294 = vmatprep.subr.mxu0 %v484
        %2295 = vmatpush2.msra.mxu0 %v483
        %2296 = vmatprep.subr.mxu0 %v481
        %2297 = vmatpush2.msra.mxu0 %v480
        %2298 = vmatprep.subr.mxu0 %v478
        %2299 = vmatpush2.msra.mxu0 %v477
        %2300 = vmatprep.subr.mxu0 %v475
        %2301 = vmatpush2.msra.mxu0 %v474
        %2302 = vmatprep.subr.mxu0 %v472
        %2303 = vmatpush2.msra.mxu0 %v471
        %2304 = vmatprep.subr.mxu0 %v469
        %2305 = vmatpush2.msra.mxu0 %v468
        %2306 = vmatprep.mubr.f32.mxu0 %v2240
        %2307 = vmatmul.mubr.f32.gmra.mxu0 %v2238
        %v2308 = vpop.f32.mrf.mxu0
        %v2309 = vadd.f32 %v726, %v2308
        %v2310 = vpop.f32.mrf.mxu0
        %v2311 = vadd.f32 %v730, %v2310
        %2312 = vdwg.mxu0
        %2313 = vmatprep.subr.mxu0 0.0
        %2314 = vmatpush1.msra.mxu0 %v467
        %2315 = vmatprep.subr.mxu0 0.0
        %2316 = vmatpush1.msra.mxu0 %v464
        %2317 = vmatprep.subr.mxu0 0.0
        %2318 = vmatpush1.msra.mxu0 %v461
        %2319 = vmatprep.subr.mxu0 0.0
        %2320 = vmatpush1.msra.mxu0 %v458
        %2321 = vmatprep.subr.mxu0 0.0
        %2322 = vmatpush1.msra.mxu0 %v455
        %2323 = vmatprep.subr.mxu0 0.0
        %2324 = vmatpush1.msra.mxu0 %v452
        %2325 = vmatprep.subr.mxu0 0.0
        %2326 = vmatpush1.msra.mxu0 %v449
        %2327 = vmatprep.subr.mxu0 0.0
        %2328 = vmatpush1.msra.mxu0 %v446
        %2329 = vmatprep.subr.mxu0 0.0
        %2330 = vmatpush1.msra.mxu0 %v443
        %2331 = vmatprep.subr.mxu0 0.0
        %2332 = vmatpush1.msra.mxu0 %v440
        %2333 = vmatprep.subr.mxu0 0.0
        %2334 = vmatpush1.msra.mxu0 %v437
        %2335 = vmatprep.subr.mxu0 0.0
        %2336 = vmatpush1.msra.mxu0 %v434
        %2337 = vmatprep.subr.mxu0 0.0
        %2338 = vmatpush1.msra.mxu0 %v431
        %2339 = vmatprep.subr.mxu0 0.0
        %2340 = vmatpush1.msra.mxu0 %v428
        %2341 = vmatprep.subr.mxu0 0.0
        %2342 = vmatpush1.msra.mxu0 %v425
        %2343 = vmatprep.subr.mxu0 0.0
        %2344 = vmatpush1.msra.mxu0 %v422
        %2345 = vmatprep.subr.mxu0 0.0
        %2346 = vmatpush2.msra.mxu0 %v515
        %2347 = vmatprep.subr.mxu0 0.0
        %2348 = vmatpush2.msra.mxu0 %v512
        %2349 = vmatprep.subr.mxu0 0.0
        %2350 = vmatpush2.msra.mxu0 %v509
        %2351 = vmatprep.subr.mxu0 0.0
        %2352 = vmatpush2.msra.mxu0 %v506
        %2353 = vmatprep.subr.mxu0 0.0
        %2354 = vmatpush2.msra.mxu0 %v503
        %2355 = vmatprep.subr.mxu0 0.0
        %2356 = vmatpush2.msra.mxu0 %v500
        %2357 = vmatprep.subr.mxu0 0.0
        %2358 = vmatpush2.msra.mxu0 %v497
        %2359 = vmatprep.subr.mxu0 0.0
        %2360 = vmatpush2.msra.mxu0 %v494
        %2361 = vmatprep.subr.mxu0 0.0
        %2362 = vmatpush2.msra.mxu0 %v491
        %2363 = vmatprep.subr.mxu0 0.0
        %2364 = vmatpush2.msra.mxu0 %v488
        %2365 = vmatprep.subr.mxu0 0.0
        %2366 = vmatpush2.msra.mxu0 %v485
        %2367 = vmatprep.subr.mxu0 0.0
        %2368 = vmatpush2.msra.mxu0 %v482
        %2369 = vmatprep.subr.mxu0 0.0
        %2370 = vmatpush2.msra.mxu0 %v479
        %2371 = vmatprep.subr.mxu0 0.0
        %2372 = vmatpush2.msra.mxu0 %v476
        %2373 = vmatprep.subr.mxu0 0.0
        %2374 = vmatpush2.msra.mxu0 %v473
        %2375 = vmatprep.subr.mxu0 0.0
        %2376 = vmatpush2.msra.mxu0 %v470
        %2377 = vmatprep.mubr.f32.mxu0 %v2240
        %2378 = vmatmul.mubr.f32.gmra.mxu0 %v2238
        %v2379 = vpop.f32.mrf.mxu0
        %v2380 = vadd.f32 %v734, %v2379
        %v2381 = vpop.f32.mrf.mxu0
        %2382 = vdwg.mxu0
        %v2383 = vxor.u32 %v2309, 2147483648
        %v2384 = vmul.f32 %v2383, 1.442695
        %v2385 = vpow.pop %v2384
        %v2386 = vadd.f32 %v2385, 1.0
        %v2387 = vrcp.pop %v2386
        %v2388 = vmul.f32 1.0, %v2387
        %v2389 = vxor.u32 %v2311, 2147483648
        %v2390 = vmul.f32 %v2389, 1.442695
        %v2391 = vpow.pop %v2390
        %v2392 = vadd.f32 %v2391, 1.0
        %v2393 = vrcp.pop %v2392
        %v2394 = vmul.f32 1.0, %v2393
        %v2395 = vmul.f32 %v2388, %v1797
        %2396 = vmatprep.subr.mxu0 0.0
        %2397 = vmatpush1.msra.mxu0 0.0
        %2398 = vmatprep.subr.mxu0 0.0
        %2399 = vmatpush1.msra.mxu0 0.0
        %2400 = vmatprep.subr.mxu0 0.0
        %2401 = vmatpush1.msra.mxu0 0.0
        %2402 = vmatprep.subr.mxu0 0.0
        %2403 = vmatpush1.msra.mxu0 0.0
        %2404 = vmatprep.subr.mxu0 0.0
        %2405 = vmatpush1.msra.mxu0 0.0
        %2406 = vmatprep.subr.mxu0 0.0
        %2407 = vmatpush1.msra.mxu0 0.0
        %2408 = vmatprep.subr.mxu0 0.0
        %2409 = vmatpush1.msra.mxu0 0.0
        %2410 = vmatprep.subr.mxu0 0.0
        %2411 = vmatpush1.msra.mxu0 0.0
        %2412 = vmatprep.subr.mxu0 0.0
        %2413 = vmatpush1.msra.mxu0 0.0
        %2414 = vmatprep.subr.mxu0 0.0
        %2415 = vmatpush1.msra.mxu0 0.0
        %2416 = vmatprep.subr.mxu0 0.0
        %2417 = vmatpush1.msra.mxu0 0.0
        %2418 = vmatprep.subr.mxu0 0.0
        %2419 = vmatpush1.msra.mxu0 0.0
        %2420 = vmatprep.subr.mxu0 0.0
        %2421 = vmatpush1.msra.mxu0 0.0
        %2422 = vmatprep.subr.mxu0 0.0
        %2423 = vmatpush1.msra.mxu0 0.0
        %2424 = vmatprep.subr.mxu0 0.0
        %2425 = vmatpush1.msra.mxu0 0.0
        %2426 = vmatprep.subr.mxu0 0.0
        %2427 = vmatpush1.msra.mxu0 %v2395
        %2428 = vmatprep.subr.mxu0 0.0
        %2429 = vmatpush2.msra.mxu0 0.0
        %2430 = vmatprep.subr.mxu0 0.0
        %2431 = vmatpush2.msra.mxu0 0.0
        %2432 = vmatprep.subr.mxu0 0.0
        %2433 = vmatpush2.msra.mxu0 0.0
        %2434 = vmatprep.subr.mxu0 0.0
        %2435 = vmatpush2.msra.mxu0 0.0
        %2436 = vmatprep.subr.mxu0 0.0
        %2437 = vmatpush2.msra.mxu0 0.0
        %2438 = vmatprep.subr.mxu0 0.0
        %2439 = vmatpush2.msra.mxu0 0.0
        %2440 = vmatprep.subr.mxu0 0.0
        %2441 = vmatpush2.msra.mxu0 0.0
        %2442 = vmatprep.subr.mxu0 0.0
        %2443 = vmatpush2.msra.mxu0 0.0
        %2444 = vmatprep.subr.mxu0 0.0
        %2445 = vmatpush2.msra.mxu0 0.0
        %2446 = vmatprep.subr.mxu0 0.0
        %2447 = vmatpush2.msra.mxu0 0.0
        %2448 = vmatprep.subr.mxu0 0.0
        %2449 = vmatpush2.msra.mxu0 0.0
        %2450 = vmatprep.subr.mxu0 0.0
        %2451 = vmatpush2.msra.mxu0 0.0
        %2452 = vmatprep.subr.mxu0 0.0
        %2453 = vmatpush2.msra.mxu0 0.0
        %2454 = vmatprep.subr.mxu0 0.0
        %2455 = vmatpush2.msra.mxu0 0.0
        %2456 = vmatprep.subr.mxu0 0.0
        %2457 = vmatpush2.msra.mxu0 0.0
        %2458 = vmatprep.subr.mxu0 0.0
        %2459 = vmatpush2.msra.mxu0 0.0
        %2460 = vmatprep.mubr.f32.mxu0 0.0
        %2461 = vmatmul.mubr.f32.gmra.mxu0 %v649
        %v2462 = vpop.f32.mrf.mxu0
        %v2463 = vadd.f32 0.0, %v2462
        %v2464 = vpop.f32.mrf.mxu0
        %2465 = vdwg.mxu0
        %2466 = vmatprep.subr.mxu0 0.0
        %2467 = vmatpush1.msra.mxu0 %v531
        %2468 = vmatprep.subr.mxu0 0.0
        %2469 = vmatpush1.msra.mxu0 %v530
        %2470 = vmatprep.subr.mxu0 0.0
        %2471 = vmatpush1.msra.mxu0 %v529
        %2472 = vmatprep.subr.mxu0 0.0
        %2473 = vmatpush1.msra.mxu0 %v528
        %2474 = vmatprep.subr.mxu0 0.0
        %2475 = vmatpush1.msra.mxu0 %v527
        %2476 = vmatprep.subr.mxu0 0.0
        %2477 = vmatpush1.msra.mxu0 %v526
        %2478 = vmatprep.subr.mxu0 0.0
        %2479 = vmatpush1.msra.mxu0 %v525
        %2480 = vmatprep.subr.mxu0 0.0
        %2481 = vmatpush1.msra.mxu0 %v524
        %2482 = vmatprep.subr.mxu0 0.0
        %2483 = vmatpush1.msra.mxu0 %v523
        %2484 = vmatprep.subr.mxu0 0.0
        %2485 = vmatpush1.msra.mxu0 %v522
        %2486 = vmatprep.subr.mxu0 0.0
        %2487 = vmatpush1.msra.mxu0 %v521
        %2488 = vmatprep.subr.mxu0 0.0
        %2489 = vmatpush1.msra.mxu0 %v520
        %2490 = vmatprep.subr.mxu0 0.0
        %2491 = vmatpush1.msra.mxu0 %v519
        %2492 = vmatprep.subr.mxu0 0.0
        %2493 = vmatpush1.msra.mxu0 %v518
        %2494 = vmatprep.subr.mxu0 0.0
        %2495 = vmatpush1.msra.mxu0 %v517
        %2496 = vmatprep.subr.mxu0 0.0
        %2497 = vmatpush1.msra.mxu0 %v516
        %2498 = vmatprep.subr.mxu0 0.0
        %2499 = vmatpush2.msra.mxu0 0.0
        %2500 = vmatprep.subr.mxu0 0.0
        %2501 = vmatpush2.msra.mxu0 0.0
        %2502 = vmatprep.subr.mxu0 0.0
        %2503 = vmatpush2.msra.mxu0 0.0
        %2504 = vmatprep.subr.mxu0 0.0
        %2505 = vmatpush2.msra.mxu0 0.0
        %2506 = vmatprep.subr.mxu0 0.0
        %2507 = vmatpush2.msra.mxu0 0.0
        %2508 = vmatprep.subr.mxu0 0.0
        %2509 = vmatpush2.msra.mxu0 0.0
        %2510 = vmatprep.subr.mxu0 0.0
        %2511 = vmatpush2.msra.mxu0 0.0
        %2512 = vmatprep.subr.mxu0 0.0
        %2513 = vmatpush2.msra.mxu0 0.0
        %2514 = vmatprep.subr.mxu0 0.0
        %2515 = vmatpush2.msra.mxu0 0.0
        %2516 = vmatprep.subr.mxu0 0.0
        %2517 = vmatpush2.msra.mxu0 0.0
        %2518 = vmatprep.subr.mxu0 0.0
        %2519 = vmatpush2.msra.mxu0 0.0
        %2520 = vmatprep.subr.mxu0 0.0
        %2521 = vmatpush2.msra.mxu0 0.0
        %2522 = vmatprep.subr.mxu0 0.0
        %2523 = vmatpush2.msra.mxu0 0.0
        %2524 = vmatprep.subr.mxu0 0.0
        %2525 = vmatpush2.msra.mxu0 0.0
        %2526 = vmatprep.subr.mxu0 0.0
        %2527 = vmatpush2.msra.mxu0 0.0
        %2528 = vmatprep.subr.mxu0 0.0
        %2529 = vmatpush2.msra.mxu0 0.0
        %2530 = vmatprep.mubr.f32.mxu0 0.0
        %2531 = vmatmul.mubr.f32.gmra.mxu0 %v2463
        %v2532 = vpop.f32.mrf.mxu0
        %v2533 = vadd.f32 0.0, %v2532
        %v2534 = vpop.f32.mrf.mxu0
        %2535 = vdwg.mxu0
        %v2536 = vadd.f32 %v2380, %v2533
        %v2537 = vtanh.pop %v2536
        %v2538 = vmul.f32 %v2394, %v1797
        %v2539 = vsub.f32 1.0, %v2394
        %v2540 = vmul.f32 %v2539, %v2537
        %v2541 = vadd.f32 %v2538, %v2540
        %2542 = vmatprep.subr.mxu0 0.0
        %2543 = vmatpush1.msra.mxu0 0.0
        %2544 = vmatprep.subr.mxu0 0.0
        %2545 = vmatpush1.msra.mxu0 0.0
        %2546 = vmatprep.subr.mxu0 0.0
        %2547 = vmatpush1.msra.mxu0 0.0
        %2548 = vmatprep.subr.mxu0 0.0
        %2549 = vmatpush1.msra.mxu0 0.0
        %2550 = vmatprep.subr.mxu0 0.0
        %2551 = vmatpush1.msra.mxu0 0.0
        %2552 = vmatprep.subr.mxu0 0.0
        %2553 = vmatpush1.msra.mxu0 0.0
        %2554 = vmatprep.subr.mxu0 0.0
        %2555 = vmatpush1.msra.mxu0 0.0
        %2556 = vmatprep.subr.mxu0 0.0
        %2557 = vmatpush1.msra.mxu0 0.0
        %2558 = vmatprep.subr.mxu0 0.0
        %2559 = vmatpush1.msra.mxu0 0.0
        %2560 = vmatprep.subr.mxu0 0.0
        %2561 = vmatpush1.msra.mxu0 0.0
        %2562 = vmatprep.subr.mxu0 0.0
        %2563 = vmatpush1.msra.mxu0 0.0
        %2564 = vmatprep.subr.mxu0 0.0
        %2565 = vmatpush1.msra.mxu0 0.0
        %2566 = vmatprep.subr.mxu0 0.0
        %2567 = vmatpush1.msra.mxu0 0.0
        %2568 = vmatprep.subr.mxu0 0.0
        %2569 = vmatpush1.msra.mxu0 0.0
        %2570 = vmatprep.subr.mxu0 0.0
        %2571 = vmatpush1.msra.mxu0 0.0
        %2572 = vmatprep.subr.mxu0 %v2168
        %2573 = vmatpush1.msra.mxu0 %v2541
        %2574 = vmatprep.subr.mxu0 0.0
        %2575 = vmatpush2.msra.mxu0 0.0
        %2576 = vmatprep.subr.mxu0 0.0
        %2577 = vmatpush2.msra.mxu0 0.0
        %2578 = vmatprep.subr.mxu0 0.0
        %2579 = vmatpush2.msra.mxu0 0.0
        %2580 = vmatprep.subr.mxu0 0.0
        %2581 = vmatpush2.msra.mxu0 0.0
        %2582 = vmatprep.subr.mxu0 0.0
        %2583 = vmatpush2.msra.mxu0 0.0
        %2584 = vmatprep.subr.mxu0 0.0
        %2585 = vmatpush2.msra.mxu0 0.0
        %2586 = vmatprep.subr.mxu0 0.0
        %2587 = vmatpush2.msra.mxu0 0.0
        %2588 = vmatprep.subr.mxu0 0.0
        %2589 = vmatpush2.msra.mxu0 0.0
        %2590 = vmatprep.subr.mxu0 0.0
        %2591 = vmatpush2.msra.mxu0 0.0
        %2592 = vmatprep.subr.mxu0 0.0
        %2593 = vmatpush2.msra.mxu0 0.0
        %2594 = vmatprep.subr.mxu0 0.0
        %2595 = vmatpush2.msra.mxu0 0.0
        %2596 = vmatprep.subr.mxu0 0.0
        %2597 = vmatpush2.msra.mxu0 0.0
        %2598 = vmatprep.subr.mxu0 0.0
        %2599 = vmatpush2.msra.mxu0 0.0
        %2600 = vmatprep.subr.mxu0 0.0
        %2601 = vmatpush2.msra.mxu0 0.0
        %2602 = vmatprep.subr.mxu0 0.0
        %2603 = vmatpush2.msra.mxu0 0.0
        %2604 = vmatprep.subr.mxu0 0.0
        %2605 = vmatpush2.msra.mxu0 0.0
        %2606 = vmatprep.mubr.f32.mxu0 0.0
        %2607 = vmatmul.mubr.f32.gmra.mxu0 %v649
        %v2608 = vpop.f32.mrf.mxu0
        %v2609 = vadd.f32 0.0, %v2608
        %v2610 = vpop.f32.mrf.mxu0
        %v2611 = vadd.f32 0.0, %v2610
        %2612 = vdwg.mxu0
        %2613 = vmatprep.subr.mxu0 %v579
        %2614 = vmatpush1.msra.mxu0 %v578
        %2615 = vmatprep.subr.mxu0 %v576
        %2616 = vmatpush1.msra.mxu0 %v575
        %2617 = vmatprep.subr.mxu0 %v573
        %2618 = vmatpush1.msra.mxu0 %v572
        %2619 = vmatprep.subr.mxu0 %v570
        %2620 = vmatpush1.msra.mxu0 %v569
        %2621 = vmatprep.subr.mxu0 %v567
        %2622 = vmatpush1.msra.mxu0 %v566
        %2623 = vmatprep.subr.mxu0 %v564
        %2624 = vmatpush1.msra.mxu0 %v563
        %2625 = vmatprep.subr.mxu0 %v561
        %2626 = vmatpush1.msra.mxu0 %v560
        %2627 = vmatprep.subr.mxu0 %v558
        %2628 = vmatpush1.msra.mxu0 %v557
        %2629 = vmatprep.subr.mxu0 %v555
        %2630 = vmatpush1.msra.mxu0 %v554
        %2631 = vmatprep.subr.mxu0 %v552
        %2632 = vmatpush1.msra.mxu0 %v551
        %2633 = vmatprep.subr.mxu0 %v549
        %2634 = vmatpush1.msra.mxu0 %v548
        %2635 = vmatprep.subr.mxu0 %v546
        %2636 = vmatpush1.msra.mxu0 %v545
        %2637 = vmatprep.subr.mxu0 %v543
        %2638 = vmatpush1.msra.mxu0 %v542
        %2639 = vmatprep.subr.mxu0 %v540
        %2640 = vmatpush1.msra.mxu0 %v539
        %2641 = vmatprep.subr.mxu0 %v537
        %2642 = vmatpush1.msra.mxu0 %v536
        %2643 = vmatprep.subr.mxu0 %v534
        %2644 = vmatpush1.msra.mxu0 %v533
        %2645 = vmatprep.subr.mxu0 %v627
        %2646 = vmatpush2.msra.mxu0 %v626
        %2647 = vmatprep.subr.mxu0 %v624
        %2648 = vmatpush2.msra.mxu0 %v623
        %2649 = vmatprep.subr.mxu0 %v621
        %2650 = vmatpush2.msra.mxu0 %v620
        %2651 = vmatprep.subr.mxu0 %v618
        %2652 = vmatpush2.msra.mxu0 %v617
        %2653 = vmatprep.subr.mxu0 %v615
        %2654 = vmatpush2.msra.mxu0 %v614
        %2655 = vmatprep.subr.mxu0 %v612
        %2656 = vmatpush2.msra.mxu0 %v611
        %2657 = vmatprep.subr.mxu0 %v609
        %2658 = vmatpush2.msra.mxu0 %v608
        %2659 = vmatprep.subr.mxu0 %v606
        %2660 = vmatpush2.msra.mxu0 %v605
        %2661 = vmatprep.subr.mxu0 %v603
        %2662 = vmatpush2.msra.mxu0 %v602
        %2663 = vmatprep.subr.mxu0 %v600
        %2664 = vmatpush2.msra.mxu0 %v599
        %2665 = vmatprep.subr.mxu0 %v597
        %2666 = vmatpush2.msra.mxu0 %v596
        %2667 = vmatprep.subr.mxu0 %v594
        %2668 = vmatpush2.msra.mxu0 %v593
        %2669 = vmatprep.subr.mxu0 %v591
        %2670 = vmatpush2.msra.mxu0 %v590
        %2671 = vmatprep.subr.mxu0 %v588
        %2672 = vmatpush2.msra.mxu0 %v587
        %2673 = vmatprep.subr.mxu0 %v585
        %2674 = vmatpush2.msra.mxu0 %v584
        %2675 = vmatprep.subr.mxu0 %v582
        %2676 = vmatpush2.msra.mxu0 %v581
        %2677 = vmatprep.mubr.f32.mxu0 %v2611
        %2678 = vmatmul.mubr.f32.gmra.mxu0 %v2609
        %v2679 = vpop.f32.mrf.mxu0
        %v2680 = vadd.f32 %v1113, %v2679
        %v2681 = vpop.f32.mrf.mxu0
        %v2682 = vadd.f32 %v1117, %v2681
        %2683 = vdwg.mxu0
        %2684 = vmatprep.subr.mxu0 0.0
        %2685 = vmatpush1.msra.mxu0 %v580
        %2686 = vmatprep.subr.mxu0 0.0
        %2687 = vmatpush1.msra.mxu0 %v577
        %2688 = vmatprep.subr.mxu0 0.0
        %2689 = vmatpush1.msra.mxu0 %v574
        %2690 = vmatprep.subr.mxu0 0.0
        %2691 = vmatpush1.msra.mxu0 %v571
        %2692 = vmatprep.subr.mxu0 0.0
        %2693 = vmatpush1.msra.mxu0 %v568
        %2694 = vmatprep.subr.mxu0 0.0
        %2695 = vmatpush1.msra.mxu0 %v565
        %2696 = vmatprep.subr.mxu0 0.0
        %2697 = vmatpush1.msra.mxu0 %v562
        %2698 = vmatprep.subr.mxu0 0.0
        %2699 = vmatpush1.msra.mxu0 %v559
        %2700 = vmatprep.subr.mxu0 0.0
        %2701 = vmatpush1.msra.mxu0 %v556
        %2702 = vmatprep.subr.mxu0 0.0
        %2703 = vmatpush1.msra.mxu0 %v553
        %2704 = vmatprep.subr.mxu0 0.0
        %2705 = vmatpush1.msra.mxu0 %v550
        %2706 = vmatprep.subr.mxu0 0.0
        %2707 = vmatpush1.msra.mxu0 %v547
        %2708 = vmatprep.subr.mxu0 0.0
        %2709 = vmatpush1.msra.mxu0 %v544
        %2710 = vmatprep.subr.mxu0 0.0
        %2711 = vmatpush1.msra.mxu0 %v541
        %2712 = vmatprep.subr.mxu0 0.0
        %2713 = vmatpush1.msra.mxu0 %v538
        %2714 = vmatprep.subr.mxu0 0.0
        %2715 = vmatpush1.msra.mxu0 %v535
        %2716 = vmatprep.subr.mxu0 0.0
        %2717 = vmatpush2.msra.mxu0 %v628
        %2718 = vmatprep.subr.mxu0 0.0
        %2719 = vmatpush2.msra.mxu0 %v625
        %2720 = vmatprep.subr.mxu0 0.0
        %2721 = vmatpush2.msra.mxu0 %v622
        %2722 = vmatprep.subr.mxu0 0.0
        %2723 = vmatpush2.msra.mxu0 %v619
        %2724 = vmatprep.subr.mxu0 0.0
        %2725 = vmatpush2.msra.mxu0 %v616
        %2726 = vmatprep.subr.mxu0 0.0
        %2727 = vmatpush2.msra.mxu0 %v613
        %2728 = vmatprep.subr.mxu0 0.0
        %2729 = vmatpush2.msra.mxu0 %v610
        %2730 = vmatprep.subr.mxu0 0.0
        %2731 = vmatpush2.msra.mxu0 %v607
        %2732 = vmatprep.subr.mxu0 0.0
        %2733 = vmatpush2.msra.mxu0 %v604
        %2734 = vmatprep.subr.mxu0 0.0
        %2735 = vmatpush2.msra.mxu0 %v601
        %2736 = vmatprep.subr.mxu0 0.0
        %2737 = vmatpush2.msra.mxu0 %v598
        %2738 = vmatprep.subr.mxu0 0.0
        %2739 = vmatpush2.msra.mxu0 %v595
        %2740 = vmatprep.subr.mxu0 0.0
        %2741 = vmatpush2.msra.mxu0 %v592
        %2742 = vmatprep.subr.mxu0 0.0
        %2743 = vmatpush2.msra.mxu0 %v589
        %2744 = vmatprep.subr.mxu0 0.0
        %2745 = vmatpush2.msra.mxu0 %v586
        %2746 = vmatprep.subr.mxu0 0.0
        %2747 = vmatpush2.msra.mxu0 %v583
        %2748 = vmatprep.mubr.f32.mxu0 %v2611
        %2749 = vmatmul.mubr.f32.gmra.mxu0 %v2609
        %v2750 = vpop.f32.mrf.mxu0
        %v2751 = vadd.f32 %v1121, %v2750
        %v2752 = vpop.f32.mrf.mxu0
        %2753 = vdwg.mxu0
        %v2754 = vxor.u32 %v2680, 2147483648
        %v2755 = vmul.f32 %v2754, 1.442695
        %v2756 = vpow.pop %v2755
        %v2757 = vadd.f32 %v2756, 1.0
        %v2758 = vrcp.pop %v2757
        %v2759 = vmul.f32 1.0, %v2758
        %v2760 = vxor.u32 %v2682, 2147483648
        %v2761 = vmul.f32 %v2760, 1.442695
        %v2762 = vpow.pop %v2761
        %v2763 = vadd.f32 %v2762, 1.0
        %v2764 = vrcp.pop %v2763
        %v2765 = vmul.f32 1.0, %v2764
        %v2766 = vmul.f32 %v2759, %v2168
        %2767 = vmatprep.subr.mxu0 0.0
        %2768 = vmatpush1.msra.mxu0 0.0
        %2769 = vmatprep.subr.mxu0 0.0
        %2770 = vmatpush1.msra.mxu0 0.0
        %2771 = vmatprep.subr.mxu0 0.0
        %2772 = vmatpush1.msra.mxu0 0.0
        %2773 = vmatprep.subr.mxu0 0.0
        %2774 = vmatpush1.msra.mxu0 0.0
        %2775 = vmatprep.subr.mxu0 0.0
        %2776 = vmatpush1.msra.mxu0 0.0
        %2777 = vmatprep.subr.mxu0 0.0
        %2778 = vmatpush1.msra.mxu0 0.0
        %2779 = vmatprep.subr.mxu0 0.0
        %2780 = vmatpush1.msra.mxu0 0.0
        %2781 = vmatprep.subr.mxu0 0.0
        %2782 = vmatpush1.msra.mxu0 0.0
        %2783 = vmatprep.subr.mxu0 0.0
        %2784 = vmatpush1.msra.mxu0 0.0
        %2785 = vmatprep.subr.mxu0 0.0
        %2786 = vmatpush1.msra.mxu0 0.0
        %2787 = vmatprep.subr.mxu0 0.0
        %2788 = vmatpush1.msra.mxu0 0.0
        %2789 = vmatprep.subr.mxu0 0.0
        %2790 = vmatpush1.msra.mxu0 0.0
        %2791 = vmatprep.subr.mxu0 0.0
        %2792 = vmatpush1.msra.mxu0 0.0
        %2793 = vmatprep.subr.mxu0 0.0
        %2794 = vmatpush1.msra.mxu0 0.0
        %2795 = vmatprep.subr.mxu0 0.0
        %2796 = vmatpush1.msra.mxu0 0.0
        %2797 = vmatprep.subr.mxu0 0.0
        %2798 = vmatpush1.msra.mxu0 %v2766
        %2799 = vmatprep.subr.mxu0 0.0
        %2800 = vmatpush2.msra.mxu0 0.0
        %2801 = vmatprep.subr.mxu0 0.0
        %2802 = vmatpush2.msra.mxu0 0.0
        %2803 = vmatprep.subr.mxu0 0.0
        %2804 = vmatpush2.msra.mxu0 0.0
        %2805 = vmatprep.subr.mxu0 0.0
        %2806 = vmatpush2.msra.mxu0 0.0
        %2807 = vmatprep.subr.mxu0 0.0
        %2808 = vmatpush2.msra.mxu0 0.0
        %2809 = vmatprep.subr.mxu0 0.0
        %2810 = vmatpush2.msra.mxu0 0.0
        %2811 = vmatprep.subr.mxu0 0.0
        %2812 = vmatpush2.msra.mxu0 0.0
        %2813 = vmatprep.subr.mxu0 0.0
        %2814 = vmatpush2.msra.mxu0 0.0
        %2815 = vmatprep.subr.mxu0 0.0
        %2816 = vmatpush2.msra.mxu0 0.0
        %2817 = vmatprep.subr.mxu0 0.0
        %2818 = vmatpush2.msra.mxu0 0.0
        %2819 = vmatprep.subr.mxu0 0.0
        %2820 = vmatpush2.msra.mxu0 0.0
        %2821 = vmatprep.subr.mxu0 0.0
        %2822 = vmatpush2.msra.mxu0 0.0
        %2823 = vmatprep.subr.mxu0 0.0
        %2824 = vmatpush2.msra.mxu0 0.0
        %2825 = vmatprep.subr.mxu0 0.0
        %2826 = vmatpush2.msra.mxu0 0.0
        %2827 = vmatprep.subr.mxu0 0.0
        %2828 = vmatpush2.msra.mxu0 0.0
        %2829 = vmatprep.subr.mxu0 0.0
        %2830 = vmatpush2.msra.mxu0 0.0
        %2831 = vmatprep.mubr.f32.mxu0 0.0
        %2832 = vmatmul.mubr.f32.gmra.mxu0 %v649
        %v2833 = vpop.f32.mrf.mxu0
        %v2834 = vadd.f32 0.0, %v2833
        %v2835 = vpop.f32.mrf.mxu0
        %2836 = vdwg.mxu0
        %2837 = vmatprep.subr.mxu0 0.0
        %2838 = vmatpush1.msra.mxu0 %v644
        %2839 = vmatprep.subr.mxu0 0.0
        %2840 = vmatpush1.msra.mxu0 %v643
        %2841 = vmatprep.subr.mxu0 0.0
        %2842 = vmatpush1.msra.mxu0 %v642
        %2843 = vmatprep.subr.mxu0 0.0
        %2844 = vmatpush1.msra.mxu0 %v641
        %2845 = vmatprep.subr.mxu0 0.0
        %2846 = vmatpush1.msra.mxu0 %v640
        %2847 = vmatprep.subr.mxu0 0.0
        %2848 = vmatpush1.msra.mxu0 %v639
        %2849 = vmatprep.subr.mxu0 0.0
        %2850 = vmatpush1.msra.mxu0 %v638
        %2851 = vmatprep.subr.mxu0 0.0
        %2852 = vmatpush1.msra.mxu0 %v637
        %2853 = vmatprep.subr.mxu0 0.0
        %2854 = vmatpush1.msra.mxu0 %v636
        %2855 = vmatprep.subr.mxu0 0.0
        %2856 = vmatpush1.msra.mxu0 %v635
        %2857 = vmatprep.subr.mxu0 0.0
        %2858 = vmatpush1.msra.mxu0 %v634
        %2859 = vmatprep.subr.mxu0 0.0
        %2860 = vmatpush1.msra.mxu0 %v633
        %2861 = vmatprep.subr.mxu0 0.0
        %2862 = vmatpush1.msra.mxu0 %v632
        %2863 = vmatprep.subr.mxu0 0.0
        %2864 = vmatpush1.msra.mxu0 %v631
        %2865 = vmatprep.subr.mxu0 0.0
        %2866 = vmatpush1.msra.mxu0 %v630
        %2867 = vmatprep.subr.mxu0 0.0
        %2868 = vmatpush1.msra.mxu0 %v629
        %2869 = vmatprep.subr.mxu0 0.0
        %2870 = vmatpush2.msra.mxu0 0.0
        %2871 = vmatprep.subr.mxu0 0.0
        %2872 = vmatpush2.msra.mxu0 0.0
        %2873 = vmatprep.subr.mxu0 0.0
        %2874 = vmatpush2.msra.mxu0 0.0
        %2875 = vmatprep.subr.mxu0 0.0
        %2876 = vmatpush2.msra.mxu0 0.0
        %2877 = vmatprep.subr.mxu0 0.0
        %2878 = vmatpush2.msra.mxu0 0.0
        %2879 = vmatprep.subr.mxu0 0.0
        %2880 = vmatpush2.msra.mxu0 0.0
        %2881 = vmatprep.subr.mxu0 0.0
        %2882 = vmatpush2.msra.mxu0 0.0
        %2883 = vmatprep.subr.mxu0 0.0
        %2884 = vmatpush2.msra.mxu0 0.0
        %2885 = vmatprep.subr.mxu0 0.0
        %2886 = vmatpush2.msra.mxu0 0.0
        %2887 = vmatprep.subr.mxu0 0.0
        %2888 = vmatpush2.msra.mxu0 0.0
        %2889 = vmatprep.subr.mxu0 0.0
        %2890 = vmatpush2.msra.mxu0 0.0
        %2891 = vmatprep.subr.mxu0 0.0
        %2892 = vmatpush2.msra.mxu0 0.0
        %2893 = vmatprep.subr.mxu0 0.0
        %2894 = vmatpush2.msra.mxu0 0.0
        %2895 = vmatprep.subr.mxu0 0.0
        %2896 = vmatpush2.msra.mxu0 0.0
        %2897 = vmatprep.subr.mxu0 0.0
        %2898 = vmatpush2.msra.mxu0 0.0
        %2899 = vmatprep.subr.mxu0 0.0
        %2900 = vmatpush2.msra.mxu0 0.0
        %2901 = vmatprep.mubr.f32.mxu0 0.0
        %2902 = vmatmul.mubr.f32.gmra.mxu0 %v2834
        %v2903 = vpop.f32.mrf.mxu0
        %v2904 = vadd.f32 0.0, %v2903
        %v2905 = vpop.f32.mrf.mxu0
        %2906 = vdwg.mxu0
        %v2907 = vadd.f32 %v2751, %v2904
        %v2908 = vtanh.pop %v2907
        %v2909 = vmul.f32 %v2765, %v2168
        %v2910 = vsub.f32 1.0, %v2765
        %v2911 = vmul.f32 %v2910, %v2908
        %v2912 = vadd.f32 %v2909, %v2911
        %s2913 = scalar_lea.vmem %s365, 24 [#allocation5]
        %v2914 = vld [vmem:[%s2913] sm:$0xff]
        %2915 = vmatprep.subr.mxu0 0.0
        %2916 = vmatpush1.msra.mxu0 0.0
        %2917 = vmatprep.subr.mxu0 0.0
        %2918 = vmatpush1.msra.mxu0 0.0
        %2919 = vmatprep.subr.mxu0 0.0
        %2920 = vmatpush1.msra.mxu0 0.0
        %2921 = vmatprep.subr.mxu0 0.0
        %2922 = vmatpush1.msra.mxu0 0.0
        %2923 = vmatprep.subr.mxu0 0.0
        %2924 = vmatpush1.msra.mxu0 0.0
        %2925 = vmatprep.subr.mxu0 0.0
        %2926 = vmatpush1.msra.mxu0 0.0
        %2927 = vmatprep.subr.mxu0 0.0
        %2928 = vmatpush1.msra.mxu0 0.0
        %2929 = vmatprep.subr.mxu0 0.0
        %2930 = vmatpush1.msra.mxu0 0.0
        %2931 = vmatprep.subr.mxu0 0.0
        %2932 = vmatpush1.msra.mxu0 0.0
        %2933 = vmatprep.subr.mxu0 0.0
        %2934 = vmatpush1.msra.mxu0 0.0
        %2935 = vmatprep.subr.mxu0 0.0
        %2936 = vmatpush1.msra.mxu0 0.0
        %2937 = vmatprep.subr.mxu0 0.0
        %2938 = vmatpush1.msra.mxu0 0.0
        %2939 = vmatprep.subr.mxu0 0.0
        %2940 = vmatpush1.msra.mxu0 0.0
        %2941 = vmatprep.subr.mxu0 0.0
        %2942 = vmatpush1.msra.mxu0 0.0
        %2943 = vmatprep.subr.mxu0 0.0
        %2944 = vmatpush1.msra.mxu0 0.0
        %2945 = vmatprep.subr.mxu0 %v2541
        %2946 = vmatpush1.msra.mxu0 %v2914
        %2947 = vmatprep.subr.mxu0 0.0
        %2948 = vmatpush2.msra.mxu0 0.0
        %2949 = vmatprep.subr.mxu0 0.0
        %2950 = vmatpush2.msra.mxu0 0.0
        %2951 = vmatprep.subr.mxu0 0.0
        %2952 = vmatpush2.msra.mxu0 0.0
        %2953 = vmatprep.subr.mxu0 0.0
        %2954 = vmatpush2.msra.mxu0 0.0
        %2955 = vmatprep.subr.mxu0 0.0
        %2956 = vmatpush2.msra.mxu0 0.0
        %2957 = vmatprep.subr.mxu0 0.0
        %2958 = vmatpush2.msra.mxu0 0.0
        %2959 = vmatprep.subr.mxu0 0.0
        %2960 = vmatpush2.msra.mxu0 0.0
        %2961 = vmatprep.subr.mxu0 0.0
        %2962 = vmatpush2.msra.mxu0 0.0
        %2963 = vmatprep.subr.mxu0 0.0
        %2964 = vmatpush2.msra.mxu0 0.0
        %2965 = vmatprep.subr.mxu0 0.0
        %2966 = vmatpush2.msra.mxu0 0.0
        %2967 = vmatprep.subr.mxu0 0.0
        %2968 = vmatpush2.msra.mxu0 0.0
        %2969 = vmatprep.subr.mxu0 0.0
        %2970 = vmatpush2.msra.mxu0 0.0
        %2971 = vmatprep.subr.mxu0 0.0
        %2972 = vmatpush2.msra.mxu0 0.0
        %2973 = vmatprep.subr.mxu0 0.0
        %2974 = vmatpush2.msra.mxu0 0.0
        %2975 = vmatprep.subr.mxu0 0.0
        %2976 = vmatpush2.msra.mxu0 0.0
        %2977 = vmatprep.subr.mxu0 0.0
        %2978 = vmatpush2.msra.mxu0 0.0
        %2979 = vmatprep.mubr.f32.mxu0 0.0
        %2980 = vmatmul.mubr.f32.gmra.mxu0 %v649
        %v2981 = vpop.f32.mrf.mxu0
        %v2982 = vadd.f32 0.0, %v2981
        %v2983 = vpop.f32.mrf.mxu0
        %v2984 = vadd.f32 0.0, %v2983
        %2985 = vdwg.mxu0
        %2986 = vmatprep.subr.mxu0 %v466
        %2987 = vmatpush1.msra.mxu0 %v465
        %2988 = vmatprep.subr.mxu0 %v463
        %2989 = vmatpush1.msra.mxu0 %v462
        %2990 = vmatprep.subr.mxu0 %v460
        %2991 = vmatpush1.msra.mxu0 %v459
        %2992 = vmatprep.subr.mxu0 %v457
        %2993 = vmatpush1.msra.mxu0 %v456
        %2994 = vmatprep.subr.mxu0 %v454
        %2995 = vmatpush1.msra.mxu0 %v453
        %2996 = vmatprep.subr.mxu0 %v451
        %2997 = vmatpush1.msra.mxu0 %v450
        %2998 = vmatprep.subr.mxu0 %v448
        %2999 = vmatpush1.msra.mxu0 %v447
        %3000 = vmatprep.subr.mxu0 %v445
        %3001 = vmatpush1.msra.mxu0 %v444
        %3002 = vmatprep.subr.mxu0 %v442
        %3003 = vmatpush1.msra.mxu0 %v441
        %3004 = vmatprep.subr.mxu0 %v439
        %3005 = vmatpush1.msra.mxu0 %v438
        %3006 = vmatprep.subr.mxu0 %v436
        %3007 = vmatpush1.msra.mxu0 %v435
        %3008 = vmatprep.subr.mxu0 %v433
        %3009 = vmatpush1.msra.mxu0 %v432
        %3010 = vmatprep.subr.mxu0 %v430
        %3011 = vmatpush1.msra.mxu0 %v429
        %3012 = vmatprep.subr.mxu0 %v427
        %3013 = vmatpush1.msra.mxu0 %v426
        %3014 = vmatprep.subr.mxu0 %v424
        %3015 = vmatpush1.msra.mxu0 %v423
        %3016 = vmatprep.subr.mxu0 %v421
        %3017 = vmatpush1.msra.mxu0 %v420
        %3018 = vmatprep.subr.mxu0 %v514
        %3019 = vmatpush2.msra.mxu0 %v513
        %3020 = vmatprep.subr.mxu0 %v511
        %3021 = vmatpush2.msra.mxu0 %v510
        %3022 = vmatprep.subr.mxu0 %v508
        %3023 = vmatpush2.msra.mxu0 %v507
        %3024 = vmatprep.subr.mxu0 %v505
        %3025 = vmatpush2.msra.mxu0 %v504
        %3026 = vmatprep.subr.mxu0 %v502
        %3027 = vmatpush2.msra.mxu0 %v501
        %3028 = vmatprep.subr.mxu0 %v499
        %3029 = vmatpush2.msra.mxu0 %v498
        %3030 = vmatprep.subr.mxu0 %v496
        %3031 = vmatpush2.msra.mxu0 %v495
        %3032 = vmatprep.subr.mxu0 %v493
        %3033 = vmatpush2.msra.mxu0 %v492
        %3034 = vmatprep.subr.mxu0 %v490
        %3035 = vmatpush2.msra.mxu0 %v489
        %3036 = vmatprep.subr.mxu0 %v487
        %3037 = vmatpush2.msra.mxu0 %v486
        %3038 = vmatprep.subr.mxu0 %v484
        %3039 = vmatpush2.msra.mxu0 %v483
        %3040 = vmatprep.subr.mxu0 %v481
        %3041 = vmatpush2.msra.mxu0 %v480
        %3042 = vmatprep.subr.mxu0 %v478
        %3043 = vmatpush2.msra.mxu0 %v477
        %3044 = vmatprep.subr.mxu0 %v475
        %3045 = vmatpush2.msra.mxu0 %v474
        %3046 = vmatprep.subr.mxu0 %v472
        %3047 = vmatpush2.msra.mxu0 %v471
        %3048 = vmatprep.subr.mxu0 %v469
        %3049 = vmatpush2.msra.mxu0 %v468
        %3050 = vmatprep.mubr.f32.mxu0 %v2984
        %3051 = vmatmul.mubr.f32.gmra.mxu0 %v2982
        %v3052 = vpop.f32.mrf.mxu0
        %v3053 = vadd.f32 %v726, %v3052
        %v3054 = vpop.f32.mrf.mxu0
        %v3055 = vadd.f32 %v730, %v3054
        %3056 = vdwg.mxu0
        %3057 = vmatprep.subr.mxu0 0.0
        %3058 = vmatpush1.msra.mxu0 %v467
        %3059 = vmatprep.subr.mxu0 0.0
        %3060 = vmatpush1.msra.mxu0 %v464
        %3061 = vmatprep.subr.mxu0 0.0
        %3062 = vmatpush1.msra.mxu0 %v461
        %3063 = vmatprep.subr.mxu0 0.0
        %3064 = vmatpush1.msra.mxu0 %v458
        %3065 = vmatprep.subr.mxu0 0.0
        %3066 = vmatpush1.msra.mxu0 %v455
        %3067 = vmatprep.subr.mxu0 0.0
        %3068 = vmatpush1.msra.mxu0 %v452
        %3069 = vmatprep.subr.mxu0 0.0
        %3070 = vmatpush1.msra.mxu0 %v449
        %3071 = vmatprep.subr.mxu0 0.0
        %3072 = vmatpush1.msra.mxu0 %v446
        %3073 = vmatprep.subr.mxu0 0.0
        %3074 = vmatpush1.msra.mxu0 %v443
        %3075 = vmatprep.subr.mxu0 0.0
        %3076 = vmatpush1.msra.mxu0 %v440
        %3077 = vmatprep.subr.mxu0 0.0
        %3078 = vmatpush1.msra.mxu0 %v437
        %3079 = vmatprep.subr.mxu0 0.0
        %3080 = vmatpush1.msra.mxu0 %v434
        %3081 = vmatprep.subr.mxu0 0.0
        %3082 = vmatpush1.msra.mxu0 %v431
        %3083 = vmatprep.subr.mxu0 0.0
        %3084 = vmatpush1.msra.mxu0 %v428
        %3085 = vmatprep.subr.mxu0 0.0
        %3086 = vmatpush1.msra.mxu0 %v425
        %3087 = vmatprep.subr.mxu0 0.0
        %3088 = vmatpush1.msra.mxu0 %v422
        %3089 = vmatprep.subr.mxu0 0.0
        %3090 = vmatpush2.msra.mxu0 %v515
        %3091 = vmatprep.subr.mxu0 0.0
        %3092 = vmatpush2.msra.mxu0 %v512
        %3093 = vmatprep.subr.mxu0 0.0
        %3094 = vmatpush2.msra.mxu0 %v509
        %3095 = vmatprep.subr.mxu0 0.0
        %3096 = vmatpush2.msra.mxu0 %v506
        %3097 = vmatprep.subr.mxu0 0.0
        %3098 = vmatpush2.msra.mxu0 %v503
        %3099 = vmatprep.subr.mxu0 0.0
        %3100 = vmatpush2.msra.mxu0 %v500
        %3101 = vmatprep.subr.mxu0 0.0
        %3102 = vmatpush2.msra.mxu0 %v497
        %3103 = vmatprep.subr.mxu0 0.0
        %3104 = vmatpush2.msra.mxu0 %v494
        %3105 = vmatprep.subr.mxu0 0.0
        %3106 = vmatpush2.msra.mxu0 %v491
        %3107 = vmatprep.subr.mxu0 0.0
        %3108 = vmatpush2.msra.mxu0 %v488
        %3109 = vmatprep.subr.mxu0 0.0
        %3110 = vmatpush2.msra.mxu0 %v485
        %3111 = vmatprep.subr.mxu0 0.0
        %3112 = vmatpush2.msra.mxu0 %v482
        %3113 = vmatprep.subr.mxu0 0.0
        %3114 = vmatpush2.msra.mxu0 %v479
        %3115 = vmatprep.subr.mxu0 0.0
        %3116 = vmatpush2.msra.mxu0 %v476
        %3117 = vmatprep.subr.mxu0 0.0
        %3118 = vmatpush2.msra.mxu0 %v473
        %3119 = vmatprep.subr.mxu0 0.0
        %3120 = vmatpush2.msra.mxu0 %v470
        %3121 = vmatprep.mubr.f32.mxu0 %v2984
        %3122 = vmatmul.mubr.f32.gmra.mxu0 %v2982
        %v3123 = vpop.f32.mrf.mxu0
        %v3124 = vadd.f32 %v734, %v3123
        %v3125 = vpop.f32.mrf.mxu0
        %3126 = vdwg.mxu0
        %v3127 = vxor.u32 %v3053, 2147483648
        %v3128 = vmul.f32 %v3127, 1.442695
        %v3129 = vpow.pop %v3128
        %v3130 = vadd.f32 %v3129, 1.0
        %v3131 = vrcp.pop %v3130
        %v3132 = vmul.f32 1.0, %v3131
        %v3133 = vxor.u32 %v3055, 2147483648
        %v3134 = vmul.f32 %v3133, 1.442695
        %v3135 = vpow.pop %v3134
        %v3136 = vadd.f32 %v3135, 1.0
        %v3137 = vrcp.pop %v3136
        %v3138 = vmul.f32 1.0, %v3137
        %v3139 = vmul.f32 %v3132, %v2541
        %3140 = vmatprep.subr.mxu0 0.0
        %3141 = vmatpush1.msra.mxu0 0.0
        %3142 = vmatprep.subr.mxu0 0.0
        %3143 = vmatpush1.msra.mxu0 0.0
        %3144 = vmatprep.subr.mxu0 0.0
        %3145 = vmatpush1.msra.mxu0 0.0
        %3146 = vmatprep.subr.mxu0 0.0
        %3147 = vmatpush1.msra.mxu0 0.0
        %3148 = vmatprep.subr.mxu0 0.0
        %3149 = vmatpush1.msra.mxu0 0.0
        %3150 = vmatprep.subr.mxu0 0.0
        %3151 = vmatpush1.msra.mxu0 0.0
        %3152 = vmatprep.subr.mxu0 0.0
        %3153 = vmatpush1.msra.mxu0 0.0
        %3154 = vmatprep.subr.mxu0 0.0
        %3155 = vmatpush1.msra.mxu0 0.0
        %3156 = vmatprep.subr.mxu0 0.0
        %3157 = vmatpush1.msra.mxu0 0.0
        %3158 = vmatprep.subr.mxu0 0.0
        %3159 = vmatpush1.msra.mxu0 0.0
        %3160 = vmatprep.subr.mxu0 0.0
        %3161 = vmatpush1.msra.mxu0 0.0
        %3162 = vmatprep.subr.mxu0 0.0
        %3163 = vmatpush1.msra.mxu0 0.0
        %3164 = vmatprep.subr.mxu0 0.0
        %3165 = vmatpush1.msra.mxu0 0.0
        %3166 = vmatprep.subr.mxu0 0.0
        %3167 = vmatpush1.msra.mxu0 0.0
        %3168 = vmatprep.subr.mxu0 0.0
        %3169 = vmatpush1.msra.mxu0 0.0
        %3170 = vmatprep.subr.mxu0 0.0
        %3171 = vmatpush1.msra.mxu0 %v3139
        %3172 = vmatprep.subr.mxu0 0.0
        %3173 = vmatpush2.msra.mxu0 0.0
        %3174 = vmatprep.subr.mxu0 0.0
        %3175 = vmatpush2.msra.mxu0 0.0
        %3176 = vmatprep.subr.mxu0 0.0
        %3177 = vmatpush2.msra.mxu0 0.0
        %3178 = vmatprep.subr.mxu0 0.0
        %3179 = vmatpush2.msra.mxu0 0.0
        %3180 = vmatprep.subr.mxu0 0.0
        %3181 = vmatpush2.msra.mxu0 0.0
        %3182 = vmatprep.subr.mxu0 0.0
        %3183 = vmatpush2.msra.mxu0 0.0
        %3184 = vmatprep.subr.mxu0 0.0
        %3185 = vmatpush2.msra.mxu0 0.0
        %3186 = vmatprep.subr.mxu0 0.0
        %3187 = vmatpush2.msra.mxu0 0.0
        %3188 = vmatprep.subr.mxu0 0.0
        %3189 = vmatpush2.msra.mxu0 0.0
        %3190 = vmatprep.subr.mxu0 0.0
        %3191 = vmatpush2.msra.mxu0 0.0
        %3192 = vmatprep.subr.mxu0 0.0
        %3193 = vmatpush2.msra.mxu0 0.0
        %3194 = vmatprep.subr.mxu0 0.0
        %3195 = vmatpush2.msra.mxu0 0.0
        %3196 = vmatprep.subr.mxu0 0.0
        %3197 = vmatpush2.msra.mxu0 0.0
        %3198 = vmatprep.subr.mxu0 0.0
        %3199 = vmatpush2.msra.mxu0 0.0
        %3200 = vmatprep.subr.mxu0 0.0
        %3201 = vmatpush2.msra.mxu0 0.0
        %3202 = vmatprep.subr.mxu0 0.0
        %3203 = vmatpush2.msra.mxu0 0.0
        %3204 = vmatprep.mubr.f32.mxu0 0.0
        %3205 = vmatmul.mubr.f32.gmra.mxu0 %v649
        %v3206 = vpop.f32.mrf.mxu0
        %v3207 = vadd.f32 0.0, %v3206
        %v3208 = vpop.f32.mrf.mxu0
        %3209 = vdwg.mxu0
        %3210 = vmatprep.subr.mxu0 0.0
        %3211 = vmatpush1.msra.mxu0 %v531
        %3212 = vmatprep.subr.mxu0 0.0
        %3213 = vmatpush1.msra.mxu0 %v530
        %3214 = vmatprep.subr.mxu0 0.0
        %3215 = vmatpush1.msra.mxu0 %v529
        %3216 = vmatprep.subr.mxu0 0.0
        %3217 = vmatpush1.msra.mxu0 %v528
        %3218 = vmatprep.subr.mxu0 0.0
        %3219 = vmatpush1.msra.mxu0 %v527
        %3220 = vmatprep.subr.mxu0 0.0
        %3221 = vmatpush1.msra.mxu0 %v526
        %3222 = vmatprep.subr.mxu0 0.0
        %3223 = vmatpush1.msra.mxu0 %v525
        %3224 = vmatprep.subr.mxu0 0.0
        %3225 = vmatpush1.msra.mxu0 %v524
        %3226 = vmatprep.subr.mxu0 0.0
        %3227 = vmatpush1.msra.mxu0 %v523
        %3228 = vmatprep.subr.mxu0 0.0
        %3229 = vmatpush1.msra.mxu0 %v522
        %3230 = vmatprep.subr.mxu0 0.0
        %3231 = vmatpush1.msra.mxu0 %v521
        %3232 = vmatprep.subr.mxu0 0.0
        %3233 = vmatpush1.msra.mxu0 %v520
        %3234 = vmatprep.subr.mxu0 0.0
        %3235 = vmatpush1.msra.mxu0 %v519
        %3236 = vmatprep.subr.mxu0 0.0
        %3237 = vmatpush1.msra.mxu0 %v518
        %3238 = vmatprep.subr.mxu0 0.0
        %3239 = vmatpush1.msra.mxu0 %v517
        %3240 = vmatprep.subr.mxu0 0.0
        %3241 = vmatpush1.msra.mxu0 %v516
        %3242 = vmatprep.subr.mxu0 0.0
        %3243 = vmatpush2.msra.mxu0 0.0
        %3244 = vmatprep.subr.mxu0 0.0
        %3245 = vmatpush2.msra.mxu0 0.0
        %3246 = vmatprep.subr.mxu0 0.0
        %3247 = vmatpush2.msra.mxu0 0.0
        %3248 = vmatprep.subr.mxu0 0.0
        %3249 = vmatpush2.msra.mxu0 0.0
        %3250 = vmatprep.subr.mxu0 0.0
        %3251 = vmatpush2.msra.mxu0 0.0
        %3252 = vmatprep.subr.mxu0 0.0
        %3253 = vmatpush2.msra.mxu0 0.0
        %3254 = vmatprep.subr.mxu0 0.0
        %3255 = vmatpush2.msra.mxu0 0.0
        %3256 = vmatprep.subr.mxu0 0.0
        %3257 = vmatpush2.msra.mxu0 0.0
        %3258 = vmatprep.subr.mxu0 0.0
        %3259 = vmatpush2.msra.mxu0 0.0
        %3260 = vmatprep.subr.mxu0 0.0
        %3261 = vmatpush2.msra.mxu0 0.0
        %3262 = vmatprep.subr.mxu0 0.0
        %3263 = vmatpush2.msra.mxu0 0.0
        %3264 = vmatprep.subr.mxu0 0.0
        %3265 = vmatpush2.msra.mxu0 0.0
        %3266 = vmatprep.subr.mxu0 0.0
        %3267 = vmatpush2.msra.mxu0 0.0
        %3268 = vmatprep.subr.mxu0 0.0
        %3269 = vmatpush2.msra.mxu0 0.0
        %3270 = vmatprep.subr.mxu0 0.0
        %3271 = vmatpush2.msra.mxu0 0.0
        %3272 = vmatprep.subr.mxu0 0.0
        %3273 = vmatpush2.msra.mxu0 0.0
        %3274 = vmatprep.mubr.f32.mxu0 0.0
        %3275 = vmatmul.mubr.f32.gmra.mxu0 %v3207
        %v3276 = vpop.f32.mrf.mxu0
        %v3277 = vadd.f32 0.0, %v3276
        %v3278 = vpop.f32.mrf.mxu0
        %3279 = vdwg.mxu0
        %v3280 = vadd.f32 %v3124, %v3277
        %v3281 = vtanh.pop %v3280
        %v3282 = vmul.f32 %v3138, %v2541
        %v3283 = vsub.f32 1.0, %v3138
        %v3284 = vmul.f32 %v3283, %v3281
        %v3285 = vadd.f32 %v3282, %v3284
        %3286 = vmatprep.subr.mxu0 0.0
        %3287 = vmatpush1.msra.mxu0 0.0
        %3288 = vmatprep.subr.mxu0 0.0
        %3289 = vmatpush1.msra.mxu0 0.0
        %3290 = vmatprep.subr.mxu0 0.0
        %3291 = vmatpush1.msra.mxu0 0.0
        %3292 = vmatprep.subr.mxu0 0.0
        %3293 = vmatpush1.msra.mxu0 0.0
        %3294 = vmatprep.subr.mxu0 0.0
        %3295 = vmatpush1.msra.mxu0 0.0
        %3296 = vmatprep.subr.mxu0 0.0
        %3297 = vmatpush1.msra.mxu0 0.0
        %3298 = vmatprep.subr.mxu0 0.0
        %3299 = vmatpush1.msra.mxu0 0.0
        %3300 = vmatprep.subr.mxu0 0.0
        %3301 = vmatpush1.msra.mxu0 0.0
        %3302 = vmatprep.subr.mxu0 0.0
        %3303 = vmatpush1.msra.mxu0 0.0
        %3304 = vmatprep.subr.mxu0 0.0
        %3305 = vmatpush1.msra.mxu0 0.0
        %3306 = vmatprep.subr.mxu0 0.0
        %3307 = vmatpush1.msra.mxu0 0.0
        %3308 = vmatprep.subr.mxu0 0.0
        %3309 = vmatpush1.msra.mxu0 0.0
        %3310 = vmatprep.subr.mxu0 0.0
        %3311 = vmatpush1.msra.mxu0 0.0
        %3312 = vmatprep.subr.mxu0 0.0
        %3313 = vmatpush1.msra.mxu0 0.0
        %3314 = vmatprep.subr.mxu0 0.0
        %3315 = vmatpush1.msra.mxu0 0.0
        %3316 = vmatprep.subr.mxu0 %v2912
        %3317 = vmatpush1.msra.mxu0 %v3285
        %3318 = vmatprep.subr.mxu0 0.0
        %3319 = vmatpush2.msra.mxu0 0.0
        %3320 = vmatprep.subr.mxu0 0.0
        %3321 = vmatpush2.msra.mxu0 0.0
        %3322 = vmatprep.subr.mxu0 0.0
        %3323 = vmatpush2.msra.mxu0 0.0
        %3324 = vmatprep.subr.mxu0 0.0
        %3325 = vmatpush2.msra.mxu0 0.0
        %3326 = vmatprep.subr.mxu0 0.0
        %3327 = vmatpush2.msra.mxu0 0.0
        %3328 = vmatprep.subr.mxu0 0.0
        %3329 = vmatpush2.msra.mxu0 0.0
        %3330 = vmatprep.subr.mxu0 0.0
        %3331 = vmatpush2.msra.mxu0 0.0
        %3332 = vmatprep.subr.mxu0 0.0
        %3333 = vmatpush2.msra.mxu0 0.0
        %3334 = vmatprep.subr.mxu0 0.0
        %3335 = vmatpush2.msra.mxu0 0.0
        %3336 = vmatprep.subr.mxu0 0.0
        %3337 = vmatpush2.msra.mxu0 0.0
        %3338 = vmatprep.subr.mxu0 0.0
        %3339 = vmatpush2.msra.mxu0 0.0
        %3340 = vmatprep.subr.mxu0 0.0
        %3341 = vmatpush2.msra.mxu0 0.0
        %3342 = vmatprep.subr.mxu0 0.0
        %3343 = vmatpush2.msra.mxu0 0.0
        %3344 = vmatprep.subr.mxu0 0.0
        %3345 = vmatpush2.msra.mxu0 0.0
        %3346 = vmatprep.subr.mxu0 0.0
        %3347 = vmatpush2.msra.mxu0 0.0
        %3348 = vmatprep.subr.mxu0 0.0
        %3349 = vmatpush2.msra.mxu0 0.0
        %3350 = vmatprep.mubr.f32.mxu0 0.0
        %3351 = vmatmul.mubr.f32.gmra.mxu0 %v649
        %v3352 = vpop.f32.mrf.mxu0
        %v3353 = vadd.f32 0.0, %v3352
        %v3354 = vpop.f32.mrf.mxu0
        %v3355 = vadd.f32 0.0, %v3354
        %3356 = vdwg.mxu0
        %3357 = vmatprep.subr.mxu0 %v579
        %3358 = vmatpush1.msra.mxu0 %v578
        %3359 = vmatprep.subr.mxu0 %v576
        %3360 = vmatpush1.msra.mxu0 %v575
        %3361 = vmatprep.subr.mxu0 %v573
        %3362 = vmatpush1.msra.mxu0 %v572
        %3363 = vmatprep.subr.mxu0 %v570
        %3364 = vmatpush1.msra.mxu0 %v569
        %3365 = vmatprep.subr.mxu0 %v567
        %3366 = vmatpush1.msra.mxu0 %v566
        %3367 = vmatprep.subr.mxu0 %v564
        %3368 = vmatpush1.msra.mxu0 %v563
        %3369 = vmatprep.subr.mxu0 %v561
        %3370 = vmatpush1.msra.mxu0 %v560
        %3371 = vmatprep.subr.mxu0 %v558
        %3372 = vmatpush1.msra.mxu0 %v557
        %3373 = vmatprep.subr.mxu0 %v555
        %3374 = vmatpush1.msra.mxu0 %v554
        %3375 = vmatprep.subr.mxu0 %v552
        %3376 = vmatpush1.msra.mxu0 %v551
        %3377 = vmatprep.subr.mxu0 %v549
        %3378 = vmatpush1.msra.mxu0 %v548
        %3379 = vmatprep.subr.mxu0 %v546
        %3380 = vmatpush1.msra.mxu0 %v545
        %3381 = vmatprep.subr.mxu0 %v543
        %3382 = vmatpush1.msra.mxu0 %v542
        %3383 = vmatprep.subr.mxu0 %v540
        %3384 = vmatpush1.msra.mxu0 %v539
        %3385 = vmatprep.subr.mxu0 %v537
        %3386 = vmatpush1.msra.mxu0 %v536
        %3387 = vmatprep.subr.mxu0 %v534
        %3388 = vmatpush1.msra.mxu0 %v533
        %3389 = vmatprep.subr.mxu0 %v627
        %3390 = vmatpush2.msra.mxu0 %v626
        %3391 = vmatprep.subr.mxu0 %v624
        %3392 = vmatpush2.msra.mxu0 %v623
        %3393 = vmatprep.subr.mxu0 %v621
        %3394 = vmatpush2.msra.mxu0 %v620
        %3395 = vmatprep.subr.mxu0 %v618
        %3396 = vmatpush2.msra.mxu0 %v617
        %3397 = vmatprep.subr.mxu0 %v615
        %3398 = vmatpush2.msra.mxu0 %v614
        %3399 = vmatprep.subr.mxu0 %v612
        %3400 = vmatpush2.msra.mxu0 %v611
        %3401 = vmatprep.subr.mxu0 %v609
        %3402 = vmatpush2.msra.mxu0 %v608
        %3403 = vmatprep.subr.mxu0 %v606
        %3404 = vmatpush2.msra.mxu0 %v605
        %3405 = vmatprep.subr.mxu0 %v603
        %3406 = vmatpush2.msra.mxu0 %v602
        %3407 = vmatprep.subr.mxu0 %v600
        %3408 = vmatpush2.msra.mxu0 %v599
        %3409 = vmatprep.subr.mxu0 %v597
        %3410 = vmatpush2.msra.mxu0 %v596
        %3411 = vmatprep.subr.mxu0 %v594
        %3412 = vmatpush2.msra.mxu0 %v593
        %3413 = vmatprep.subr.mxu0 %v591
        %3414 = vmatpush2.msra.mxu0 %v590
        %3415 = vmatprep.subr.mxu0 %v588
        %3416 = vmatpush2.msra.mxu0 %v587
        %3417 = vmatprep.subr.mxu0 %v585
        %3418 = vmatpush2.msra.mxu0 %v584
        %3419 = vmatprep.subr.mxu0 %v582
        %3420 = vmatpush2.msra.mxu0 %v581
        %3421 = vmatprep.mubr.f32.mxu0 %v3355
        %3422 = vmatmul.mubr.f32.gmra.mxu0 %v3353
        %v3423 = vpop.f32.mrf.mxu0
        %v3424 = vadd.f32 %v1113, %v3423
        %v3425 = vpop.f32.mrf.mxu0
        %v3426 = vadd.f32 %v1117, %v3425
        %3427 = vdwg.mxu0
        %3428 = vmatprep.subr.mxu0 0.0
        %3429 = vmatpush1.msra.mxu0 %v580
        %3430 = vmatprep.subr.mxu0 0.0
        %3431 = vmatpush1.msra.mxu0 %v577
        %3432 = vmatprep.subr.mxu0 0.0
        %3433 = vmatpush1.msra.mxu0 %v574
        %3434 = vmatprep.subr.mxu0 0.0
        %3435 = vmatpush1.msra.mxu0 %v571
        %3436 = vmatprep.subr.mxu0 0.0
        %3437 = vmatpush1.msra.mxu0 %v568
        %3438 = vmatprep.subr.mxu0 0.0
        %3439 = vmatpush1.msra.mxu0 %v565
        %3440 = vmatprep.subr.mxu0 0.0
        %3441 = vmatpush1.msra.mxu0 %v562
        %3442 = vmatprep.subr.mxu0 0.0
        %3443 = vmatpush1.msra.mxu0 %v559
        %3444 = vmatprep.subr.mxu0 0.0
        %3445 = vmatpush1.msra.mxu0 %v556
        %3446 = vmatprep.subr.mxu0 0.0
        %3447 = vmatpush1.msra.mxu0 %v553
        %3448 = vmatprep.subr.mxu0 0.0
        %3449 = vmatpush1.msra.mxu0 %v550
        %3450 = vmatprep.subr.mxu0 0.0
        %3451 = vmatpush1.msra.mxu0 %v547
        %3452 = vmatprep.subr.mxu0 0.0
        %3453 = vmatpush1.msra.mxu0 %v544
        %3454 = vmatprep.subr.mxu0 0.0
        %3455 = vmatpush1.msra.mxu0 %v541
        %3456 = vmatprep.subr.mxu0 0.0
        %3457 = vmatpush1.msra.mxu0 %v538
        %3458 = vmatprep.subr.mxu0 0.0
        %3459 = vmatpush1.msra.mxu0 %v535
        %3460 = vmatprep.subr.mxu0 0.0
        %3461 = vmatpush2.msra.mxu0 %v628
        %3462 = vmatprep.subr.mxu0 0.0
        %3463 = vmatpush2.msra.mxu0 %v625
        %3464 = vmatprep.subr.mxu0 0.0
        %3465 = vmatpush2.msra.mxu0 %v622
        %3466 = vmatprep.subr.mxu0 0.0
        %3467 = vmatpush2.msra.mxu0 %v619
        %3468 = vmatprep.subr.mxu0 0.0
        %3469 = vmatpush2.msra.mxu0 %v616
        %3470 = vmatprep.subr.mxu0 0.0
        %3471 = vmatpush2.msra.mxu0 %v613
        %3472 = vmatprep.subr.mxu0 0.0
        %3473 = vmatpush2.msra.mxu0 %v610
        %3474 = vmatprep.subr.mxu0 0.0
        %3475 = vmatpush2.msra.mxu0 %v607
        %3476 = vmatprep.subr.mxu0 0.0
        %3477 = vmatpush2.msra.mxu0 %v604
        %3478 = vmatprep.subr.mxu0 0.0
        %3479 = vmatpush2.msra.mxu0 %v601
        %3480 = vmatprep.subr.mxu0 0.0
        %3481 = vmatpush2.msra.mxu0 %v598
        %3482 = vmatprep.subr.mxu0 0.0
        %3483 = vmatpush2.msra.mxu0 %v595
        %3484 = vmatprep.subr.mxu0 0.0
        %3485 = vmatpush2.msra.mxu0 %v592
        %3486 = vmatprep.subr.mxu0 0.0
        %3487 = vmatpush2.msra.mxu0 %v589
        %3488 = vmatprep.subr.mxu0 0.0
        %3489 = vmatpush2.msra.mxu0 %v586
        %3490 = vmatprep.subr.mxu0 0.0
        %3491 = vmatpush2.msra.mxu0 %v583
        %3492 = vmatprep.mubr.f32.mxu0 %v3355
        %3493 = vmatmul.mubr.f32.gmra.mxu0 %v3353
        %v3494 = vpop.f32.mrf.mxu0
        %v3495 = vadd.f32 %v1121, %v3494
        %v3496 = vpop.f32.mrf.mxu0
        %3497 = vdwg.mxu0
        %v3498 = vxor.u32 %v3424, 2147483648
        %v3499 = vmul.f32 %v3498, 1.442695
        %v3500 = vpow.pop %v3499
        %v3501 = vadd.f32 %v3500, 1.0
        %v3502 = vrcp.pop %v3501
        %v3503 = vmul.f32 1.0, %v3502
        %v3504 = vxor.u32 %v3426, 2147483648
        %v3505 = vmul.f32 %v3504, 1.442695
        %v3506 = vpow.pop %v3505
        %v3507 = vadd.f32 %v3506, 1.0
        %v3508 = vrcp.pop %v3507
        %v3509 = vmul.f32 1.0, %v3508
        %v3510 = vmul.f32 %v3503, %v2912
        %3511 = vmatprep.subr.mxu0 0.0
        %3512 = vmatpush1.msra.mxu0 0.0
        %3513 = vmatprep.subr.mxu0 0.0
        %3514 = vmatpush1.msra.mxu0 0.0
        %3515 = vmatprep.subr.mxu0 0.0
        %3516 = vmatpush1.msra.mxu0 0.0
        %3517 = vmatprep.subr.mxu0 0.0
        %3518 = vmatpush1.msra.mxu0 0.0
        %3519 = vmatprep.subr.mxu0 0.0
        %3520 = vmatpush1.msra.mxu0 0.0
        %3521 = vmatprep.subr.mxu0 0.0
        %3522 = vmatpush1.msra.mxu0 0.0
        %3523 = vmatprep.subr.mxu0 0.0
        %3524 = vmatpush1.msra.mxu0 0.0
        %3525 = vmatprep.subr.mxu0 0.0
        %3526 = vmatpush1.msra.mxu0 0.0
        %3527 = vmatprep.subr.mxu0 0.0
        %3528 = vmatpush1.msra.mxu0 0.0
        %3529 = vmatprep.subr.mxu0 0.0
        %3530 = vmatpush1.msra.mxu0 0.0
        %3531 = vmatprep.subr.mxu0 0.0
        %3532 = vmatpush1.msra.mxu0 0.0
        %3533 = vmatprep.subr.mxu0 0.0
        %3534 = vmatpush1.msra.mxu0 0.0
        %3535 = vmatprep.subr.mxu0 0.0
        %3536 = vmatpush1.msra.mxu0 0.0
        %3537 = vmatprep.subr.mxu0 0.0
        %3538 = vmatpush1.msra.mxu0 0.0
        %3539 = vmatprep.subr.mxu0 0.0
        %3540 = vmatpush1.msra.mxu0 0.0
        %3541 = vmatprep.subr.mxu0 0.0
        %3542 = vmatpush1.msra.mxu0 %v3510
        %3543 = vmatprep.subr.mxu0 0.0
        %3544 = vmatpush2.msra.mxu0 0.0
        %3545 = vmatprep.subr.mxu0 0.0
        %3546 = vmatpush2.msra.mxu0 0.0
        %3547 = vmatprep.subr.mxu0 0.0
        %3548 = vmatpush2.msra.mxu0 0.0
        %3549 = vmatprep.subr.mxu0 0.0
        %3550 = vmatpush2.msra.mxu0 0.0
        %3551 = vmatprep.subr.mxu0 0.0
        %3552 = vmatpush2.msra.mxu0 0.0
        %3553 = vmatprep.subr.mxu0 0.0
        %3554 = vmatpush2.msra.mxu0 0.0
        %3555 = vmatprep.subr.mxu0 0.0
        %3556 = vmatpush2.msra.mxu0 0.0
        %3557 = vmatprep.subr.mxu0 0.0
        %3558 = vmatpush2.msra.mxu0 0.0
        %3559 = vmatprep.subr.mxu0 0.0
        %3560 = vmatpush2.msra.mxu0 0.0
        %3561 = vmatprep.subr.mxu0 0.0
        %3562 = vmatpush2.msra.mxu0 0.0
        %3563 = vmatprep.subr.mxu0 0.0
        %3564 = vmatpush2.msra.mxu0 0.0
        %3565 = vmatprep.subr.mxu0 0.0
        %3566 = vmatpush2.msra.mxu0 0.0
        %3567 = vmatprep.subr.mxu0 0.0
        %3568 = vmatpush2.msra.mxu0 0.0
        %3569 = vmatprep.subr.mxu0 0.0
        %3570 = vmatpush2.msra.mxu0 0.0
        %3571 = vmatprep.subr.mxu0 0.0
        %3572 = vmatpush2.msra.mxu0 0.0
        %3573 = vmatprep.subr.mxu0 0.0
        %3574 = vmatpush2.msra.mxu0 0.0
        %3575 = vmatprep.mubr.f32.mxu0 0.0
        %3576 = vmatmul.mubr.f32.gmra.mxu0 %v649
        %v3577 = vpop.f32.mrf.mxu0
        %v3578 = vadd.f32 0.0, %v3577
        %v3579 = vpop.f32.mrf.mxu0
        %3580 = vdwg.mxu0
        %3581 = vmatprep.subr.mxu0 0.0
        %3582 = vmatpush1.msra.mxu0 %v644
        %3583 = vmatprep.subr.mxu0 0.0
        %3584 = vmatpush1.msra.mxu0 %v643
        %3585 = vmatprep.subr.mxu0 0.0
        %3586 = vmatpush1.msra.mxu0 %v642
        %3587 = vmatprep.subr.mxu0 0.0
        %3588 = vmatpush1.msra.mxu0 %v641
        %3589 = vmatprep.subr.mxu0 0.0
        %3590 = vmatpush1.msra.mxu0 %v640
        %3591 = vmatprep.subr.mxu0 0.0
        %3592 = vmatpush1.msra.mxu0 %v639
        %3593 = vmatprep.subr.mxu0 0.0
        %3594 = vmatpush1.msra.mxu0 %v638
        %3595 = vmatprep.subr.mxu0 0.0
        %3596 = vmatpush1.msra.mxu0 %v637
        %3597 = vmatprep.subr.mxu0 0.0
        %3598 = vmatpush1.msra.mxu0 %v636
        %3599 = vmatprep.subr.mxu0 0.0
        %3600 = vmatpush1.msra.mxu0 %v635
        %3601 = vmatprep.subr.mxu0 0.0
        %3602 = vmatpush1.msra.mxu0 %v634
        %3603 = vmatprep.subr.mxu0 0.0
        %3604 = vmatpush1.msra.mxu0 %v633
        %3605 = vmatprep.subr.mxu0 0.0
        %3606 = vmatpush1.msra.mxu0 %v632
        %3607 = vmatprep.subr.mxu0 0.0
        %3608 = vmatpush1.msra.mxu0 %v631
        %3609 = vmatprep.subr.mxu0 0.0
        %3610 = vmatpush1.msra.mxu0 %v630
        %3611 = vmatprep.subr.mxu0 0.0
        %3612 = vmatpush1.msra.mxu0 %v629
        %3613 = vmatprep.subr.mxu0 0.0
        %3614 = vmatpush2.msra.mxu0 0.0
        %3615 = vmatprep.subr.mxu0 0.0
        %3616 = vmatpush2.msra.mxu0 0.0
        %3617 = vmatprep.subr.mxu0 0.0
        %3618 = vmatpush2.msra.mxu0 0.0
        %3619 = vmatprep.subr.mxu0 0.0
        %3620 = vmatpush2.msra.mxu0 0.0
        %3621 = vmatprep.subr.mxu0 0.0
        %3622 = vmatpush2.msra.mxu0 0.0
        %3623 = vmatprep.subr.mxu0 0.0
        %3624 = vmatpush2.msra.mxu0 0.0
        %3625 = vmatprep.subr.mxu0 0.0
        %3626 = vmatpush2.msra.mxu0 0.0
        %3627 = vmatprep.subr.mxu0 0.0
        %3628 = vmatpush2.msra.mxu0 0.0
        %3629 = vmatprep.subr.mxu0 0.0
        %3630 = vmatpush2.msra.mxu0 0.0
        %3631 = vmatprep.subr.mxu0 0.0
        %3632 = vmatpush2.msra.mxu0 0.0
        %3633 = vmatprep.subr.mxu0 0.0
        %3634 = vmatpush2.msra.mxu0 0.0
        %3635 = vmatprep.subr.mxu0 0.0
        %3636 = vmatpush2.msra.mxu0 0.0
        %3637 = vmatprep.subr.mxu0 0.0
        %3638 = vmatpush2.msra.mxu0 0.0
        %3639 = vmatprep.subr.mxu0 0.0
        %3640 = vmatpush2.msra.mxu0 0.0
        %3641 = vmatprep.subr.mxu0 0.0
        %3642 = vmatpush2.msra.mxu0 0.0
        %3643 = vmatprep.subr.mxu0 0.0
        %3644 = vmatpush2.msra.mxu0 0.0
        %3645 = vmatprep.mubr.f32.mxu0 0.0
        %3646 = vmatmul.mubr.f32.gmra.mxu0 %v3578
        %v3647 = vpop.f32.mrf.mxu0
        %v3648 = vadd.f32 0.0, %v3647
        %v3649 = vpop.f32.mrf.mxu0
        %3650 = vdwg.mxu0
        %v3651 = vadd.f32 %v3495, %v3648
        %v3652 = vtanh.pop %v3651
        %v3653 = vmul.f32 %v3509, %v2912
        %v3654 = vsub.f32 1.0, %v3509
        %v3655 = vmul.f32 %v3654, %v3652
        %v3656 = vadd.f32 %v3653, %v3655
        %s3657 = scalar_lea.vmem %s365, 32 [#allocation5]
        %v3658 = vld [vmem:[%s3657] sm:$0xff]
        %3659 = vmatprep.subr.mxu0 0.0
        %3660 = vmatpush1.msra.mxu0 0.0
        %3661 = vmatprep.subr.mxu0 0.0
        %3662 = vmatpush1.msra.mxu0 0.0
        %3663 = vmatprep.subr.mxu0 0.0
        %3664 = vmatpush1.msra.mxu0 0.0
        %3665 = vmatprep.subr.mxu0 0.0
        %3666 = vmatpush1.msra.mxu0 0.0
        %3667 = vmatprep.subr.mxu0 0.0
        %3668 = vmatpush1.msra.mxu0 0.0
        %3669 = vmatprep.subr.mxu0 0.0
        %3670 = vmatpush1.msra.mxu0 0.0
        %3671 = vmatprep.subr.mxu0 0.0
        %3672 = vmatpush1.msra.mxu0 0.0
        %3673 = vmatprep.subr.mxu0 0.0
        %3674 = vmatpush1.msra.mxu0 0.0
        %3675 = vmatprep.subr.mxu0 0.0
        %3676 = vmatpush1.msra.mxu0 0.0
        %3677 = vmatprep.subr.mxu0 0.0
        %3678 = vmatpush1.msra.mxu0 0.0
        %3679 = vmatprep.subr.mxu0 0.0
        %3680 = vmatpush1.msra.mxu0 0.0
        %3681 = vmatprep.subr.mxu0 0.0
        %3682 = vmatpush1.msra.mxu0 0.0
        %3683 = vmatprep.subr.mxu0 0.0
        %3684 = vmatpush1.msra.mxu0 0.0
        %3685 = vmatprep.subr.mxu0 0.0
        %3686 = vmatpush1.msra.mxu0 0.0
        %3687 = vmatprep.subr.mxu0 0.0
        %3688 = vmatpush1.msra.mxu0 0.0
        %3689 = vmatprep.subr.mxu0 %v3285
        %3690 = vmatpush1.msra.mxu0 %v3658
        %3691 = vmatprep.subr.mxu0 0.0
        %3692 = vmatpush2.msra.mxu0 0.0
        %3693 = vmatprep.subr.mxu0 0.0
        %3694 = vmatpush2.msra.mxu0 0.0
        %3695 = vmatprep.subr.mxu0 0.0
        %3696 = vmatpush2.msra.mxu0 0.0
        %3697 = vmatprep.subr.mxu0 0.0
        %3698 = vmatpush2.msra.mxu0 0.0
        %3699 = vmatprep.subr.mxu0 0.0
        %3700 = vmatpush2.msra.mxu0 0.0
        %3701 = vmatprep.subr.mxu0 0.0
        %3702 = vmatpush2.msra.mxu0 0.0
        %3703 = vmatprep.subr.mxu0 0.0
        %3704 = vmatpush2.msra.mxu0 0.0
        %3705 = vmatprep.subr.mxu0 0.0
        %3706 = vmatpush2.msra.mxu0 0.0
        %3707 = vmatprep.subr.mxu0 0.0
        %3708 = vmatpush2.msra.mxu0 0.0
        %3709 = vmatprep.subr.mxu0 0.0
        %3710 = vmatpush2.msra.mxu0 0.0
        %3711 = vmatprep.subr.mxu0 0.0
        %3712 = vmatpush2.msra.mxu0 0.0
        %3713 = vmatprep.subr.mxu0 0.0
        %3714 = vmatpush2.msra.mxu0 0.0
        %3715 = vmatprep.subr.mxu0 0.0
        %3716 = vmatpush2.msra.mxu0 0.0
        %3717 = vmatprep.subr.mxu0 0.0
        %3718 = vmatpush2.msra.mxu0 0.0
        %3719 = vmatprep.subr.mxu0 0.0
        %3720 = vmatpush2.msra.mxu0 0.0
        %3721 = vmatprep.subr.mxu0 0.0
        %3722 = vmatpush2.msra.mxu0 0.0
        %3723 = vmatprep.mubr.f32.mxu0 0.0
        %3724 = vmatmul.mubr.f32.gmra.mxu0 %v649
        %v3725 = vpop.f32.mrf.mxu0
        %v3726 = vadd.f32 0.0, %v3725
        %v3727 = vpop.f32.mrf.mxu0
        %v3728 = vadd.f32 0.0, %v3727
        %3729 = vdwg.mxu0
        %3730 = vmatprep.subr.mxu0 %v466
        %3731 = vmatpush1.msra.mxu0 %v465
        %3732 = vmatprep.subr.mxu0 %v463
        %3733 = vmatpush1.msra.mxu0 %v462
        %3734 = vmatprep.subr.mxu0 %v460
        %3735 = vmatpush1.msra.mxu0 %v459
        %3736 = vmatprep.subr.mxu0 %v457
        %3737 = vmatpush1.msra.mxu0 %v456
        %3738 = vmatprep.subr.mxu0 %v454
        %3739 = vmatpush1.msra.mxu0 %v453
        %3740 = vmatprep.subr.mxu0 %v451
        %3741 = vmatpush1.msra.mxu0 %v450
        %3742 = vmatprep.subr.mxu0 %v448
        %3743 = vmatpush1.msra.mxu0 %v447
        %3744 = vmatprep.subr.mxu0 %v445
        %3745 = vmatpush1.msra.mxu0 %v444
        %3746 = vmatprep.subr.mxu0 %v442
        %3747 = vmatpush1.msra.mxu0 %v441
        %3748 = vmatprep.subr.mxu0 %v439
        %3749 = vmatpush1.msra.mxu0 %v438
        %3750 = vmatprep.subr.mxu0 %v436
        %3751 = vmatpush1.msra.mxu0 %v435
        %3752 = vmatprep.subr.mxu0 %v433
        %3753 = vmatpush1.msra.mxu0 %v432
        %3754 = vmatprep.subr.mxu0 %v430
        %3755 = vmatpush1.msra.mxu0 %v429
        %3756 = vmatprep.subr.mxu0 %v427
        %3757 = vmatpush1.msra.mxu0 %v426
        %3758 = vmatprep.subr.mxu0 %v424
        %3759 = vmatpush1.msra.mxu0 %v423
        %3760 = vmatprep.subr.mxu0 %v421
        %3761 = vmatpush1.msra.mxu0 %v420
        %3762 = vmatprep.subr.mxu0 %v514
        %3763 = vmatpush2.msra.mxu0 %v513
        %3764 = vmatprep.subr.mxu0 %v511
        %3765 = vmatpush2.msra.mxu0 %v510
        %3766 = vmatprep.subr.mxu0 %v508
        %3767 = vmatpush2.msra.mxu0 %v507
        %3768 = vmatprep.subr.mxu0 %v505
        %3769 = vmatpush2.msra.mxu0 %v504
        %3770 = vmatprep.subr.mxu0 %v502
        %3771 = vmatpush2.msra.mxu0 %v501
        %3772 = vmatprep.subr.mxu0 %v499
        %3773 = vmatpush2.msra.mxu0 %v498
        %3774 = vmatprep.subr.mxu0 %v496
        %3775 = vmatpush2.msra.mxu0 %v495
        %3776 = vmatprep.subr.mxu0 %v493
        %3777 = vmatpush2.msra.mxu0 %v492
        %3778 = vmatprep.subr.mxu0 %v490
        %3779 = vmatpush2.msra.mxu0 %v489
        %3780 = vmatprep.subr.mxu0 %v487
        %3781 = vmatpush2.msra.mxu0 %v486
        %3782 = vmatprep.subr.mxu0 %v484
        %3783 = vmatpush2.msra.mxu0 %v483
        %3784 = vmatprep.subr.mxu0 %v481
        %3785 = vmatpush2.msra.mxu0 %v480
        %3786 = vmatprep.subr.mxu0 %v478
        %3787 = vmatpush2.msra.mxu0 %v477
        %3788 = vmatprep.subr.mxu0 %v475
        %3789 = vmatpush2.msra.mxu0 %v474
        %3790 = vmatprep.subr.mxu0 %v472
        %3791 = vmatpush2.msra.mxu0 %v471
        %3792 = vmatprep.subr.mxu0 %v469
        %3793 = vmatpush2.msra.mxu0 %v468
        %3794 = vmatprep.mubr.f32.mxu0 %v3728
        %3795 = vmatmul.mubr.f32.gmra.mxu0 %v3726
        %v3796 = vpop.f32.mrf.mxu0
        %v3797 = vadd.f32 %v726, %v3796
        %v3798 = vpop.f32.mrf.mxu0
        %v3799 = vadd.f32 %v730, %v3798
        %3800 = vdwg.mxu0
        %3801 = vmatprep.subr.mxu0 0.0
        %3802 = vmatpush1.msra.mxu0 %v467
        %3803 = vmatprep.subr.mxu0 0.0
        %3804 = vmatpush1.msra.mxu0 %v464
        %3805 = vmatprep.subr.mxu0 0.0
        %3806 = vmatpush1.msra.mxu0 %v461
        %3807 = vmatprep.subr.mxu0 0.0
        %3808 = vmatpush1.msra.mxu0 %v458
        %3809 = vmatprep.subr.mxu0 0.0
        %3810 = vmatpush1.msra.mxu0 %v455
        %3811 = vmatprep.subr.mxu0 0.0
        %3812 = vmatpush1.msra.mxu0 %v452
        %3813 = vmatprep.subr.mxu0 0.0
        %3814 = vmatpush1.msra.mxu0 %v449
        %3815 = vmatprep.subr.mxu0 0.0
        %3816 = vmatpush1.msra.mxu0 %v446
        %3817 = vmatprep.subr.mxu0 0.0
        %3818 = vmatpush1.msra.mxu0 %v443
        %3819 = vmatprep.subr.mxu0 0.0
        %3820 = vmatpush1.msra.mxu0 %v440
        %3821 = vmatprep.subr.mxu0 0.0
        %3822 = vmatpush1.msra.mxu0 %v437
        %3823 = vmatprep.subr.mxu0 0.0
        %3824 = vmatpush1.msra.mxu0 %v434
        %3825 = vmatprep.subr.mxu0 0.0
        %3826 = vmatpush1.msra.mxu0 %v431
        %3827 = vmatprep.subr.mxu0 0.0
        %3828 = vmatpush1.msra.mxu0 %v428
        %3829 = vmatprep.subr.mxu0 0.0
        %3830 = vmatpush1.msra.mxu0 %v425
        %3831 = vmatprep.subr.mxu0 0.0
        %3832 = vmatpush1.msra.mxu0 %v422
        %3833 = vmatprep.subr.mxu0 0.0
        %3834 = vmatpush2.msra.mxu0 %v515
        %3835 = vmatprep.subr.mxu0 0.0
        %3836 = vmatpush2.msra.mxu0 %v512
        %3837 = vmatprep.subr.mxu0 0.0
        %3838 = vmatpush2.msra.mxu0 %v509
        %3839 = vmatprep.subr.mxu0 0.0
        %3840 = vmatpush2.msra.mxu0 %v506
        %3841 = vmatprep.subr.mxu0 0.0
        %3842 = vmatpush2.msra.mxu0 %v503
        %3843 = vmatprep.subr.mxu0 0.0
        %3844 = vmatpush2.msra.mxu0 %v500
        %3845 = vmatprep.subr.mxu0 0.0
        %3846 = vmatpush2.msra.mxu0 %v497
        %3847 = vmatprep.subr.mxu0 0.0
        %3848 = vmatpush2.msra.mxu0 %v494
        %3849 = vmatprep.subr.mxu0 0.0
        %3850 = vmatpush2.msra.mxu0 %v491
        %3851 = vmatprep.subr.mxu0 0.0
        %3852 = vmatpush2.msra.mxu0 %v488
        %3853 = vmatprep.subr.mxu0 0.0
        %3854 = vmatpush2.msra.mxu0 %v485
        %3855 = vmatprep.subr.mxu0 0.0
        %3856 = vmatpush2.msra.mxu0 %v482
        %3857 = vmatprep.subr.mxu0 0.0
        %3858 = vmatpush2.msra.mxu0 %v479
        %3859 = vmatprep.subr.mxu0 0.0
        %3860 = vmatpush2.msra.mxu0 %v476
        %3861 = vmatprep.subr.mxu0 0.0
        %3862 = vmatpush2.msra.mxu0 %v473
        %3863 = vmatprep.subr.mxu0 0.0
        %3864 = vmatpush2.msra.mxu0 %v470
        %3865 = vmatprep.mubr.f32.mxu0 %v3728
        %3866 = vmatmul.mubr.f32.gmra.mxu0 %v3726
        %v3867 = vpop.f32.mrf.mxu0
        %v3868 = vadd.f32 %v734, %v3867
        %v3869 = vpop.f32.mrf.mxu0
        %3870 = vdwg.mxu0
        %v3871 = vxor.u32 %v3797, 2147483648
        %v3872 = vmul.f32 %v3871, 1.442695
        %v3873 = vpow.pop %v3872
        %v3874 = vadd.f32 %v3873, 1.0
        %v3875 = vrcp.pop %v3874
        %v3876 = vmul.f32 1.0, %v3875
        %v3877 = vxor.u32 %v3799, 2147483648
        %v3878 = vmul.f32 %v3877, 1.442695
        %v3879 = vpow.pop %v3878
        %v3880 = vadd.f32 %v3879, 1.0
        %v3881 = vrcp.pop %v3880
        %v3882 = vmul.f32 1.0, %v3881
        %v3883 = vmul.f32 %v3876, %v3285
        %3884 = vmatprep.subr.mxu0 0.0
        %3885 = vmatpush1.msra.mxu0 0.0
        %3886 = vmatprep.subr.mxu0 0.0
        %3887 = vmatpush1.msra.mxu0 0.0
        %3888 = vmatprep.subr.mxu0 0.0
        %3889 = vmatpush1.msra.mxu0 0.0
        %3890 = vmatprep.subr.mxu0 0.0
        %3891 = vmatpush1.msra.mxu0 0.0
        %3892 = vmatprep.subr.mxu0 0.0
        %3893 = vmatpush1.msra.mxu0 0.0
        %3894 = vmatprep.subr.mxu0 0.0
        %3895 = vmatpush1.msra.mxu0 0.0
        %3896 = vmatprep.subr.mxu0 0.0
        %3897 = vmatpush1.msra.mxu0 0.0
        %3898 = vmatprep.subr.mxu0 0.0
        %3899 = vmatpush1.msra.mxu0 0.0
        %3900 = vmatprep.subr.mxu0 0.0
        %3901 = vmatpush1.msra.mxu0 0.0
        %3902 = vmatprep.subr.mxu0 0.0
        %3903 = vmatpush1.msra.mxu0 0.0
        %3904 = vmatprep.subr.mxu0 0.0
        %3905 = vmatpush1.msra.mxu0 0.0
        %3906 = vmatprep.subr.mxu0 0.0
        %3907 = vmatpush1.msra.mxu0 0.0
        %3908 = vmatprep.subr.mxu0 0.0
        %3909 = vmatpush1.msra.mxu0 0.0
        %3910 = vmatprep.subr.mxu0 0.0
        %3911 = vmatpush1.msra.mxu0 0.0
        %3912 = vmatprep.subr.mxu0 0.0
        %3913 = vmatpush1.msra.mxu0 0.0
        %3914 = vmatprep.subr.mxu0 0.0
        %3915 = vmatpush1.msra.mxu0 %v3883
        %3916 = vmatprep.subr.mxu0 0.0
        %3917 = vmatpush2.msra.mxu0 0.0
        %3918 = vmatprep.subr.mxu0 0.0
        %3919 = vmatpush2.msra.mxu0 0.0
        %3920 = vmatprep.subr.mxu0 0.0
        %3921 = vmatpush2.msra.mxu0 0.0
        %3922 = vmatprep.subr.mxu0 0.0
        %3923 = vmatpush2.msra.mxu0 0.0
        %3924 = vmatprep.subr.mxu0 0.0
        %3925 = vmatpush2.msra.mxu0 0.0
        %3926 = vmatprep.subr.mxu0 0.0
        %3927 = vmatpush2.msra.mxu0 0.0
        %3928 = vmatprep.subr.mxu0 0.0
        %3929 = vmatpush2.msra.mxu0 0.0
        %3930 = vmatprep.subr.mxu0 0.0
        %3931 = vmatpush2.msra.mxu0 0.0
        %3932 = vmatprep.subr.mxu0 0.0
        %3933 = vmatpush2.msra.mxu0 0.0
        %3934 = vmatprep.subr.mxu0 0.0
        %3935 = vmatpush2.msra.mxu0 0.0
        %3936 = vmatprep.subr.mxu0 0.0
        %3937 = vmatpush2.msra.mxu0 0.0
        %3938 = vmatprep.subr.mxu0 0.0
        %3939 = vmatpush2.msra.mxu0 0.0
        %3940 = vmatprep.subr.mxu0 0.0
        %3941 = vmatpush2.msra.mxu0 0.0
        %3942 = vmatprep.subr.mxu0 0.0
        %3943 = vmatpush2.msra.mxu0 0.0
        %3944 = vmatprep.subr.mxu0 0.0
        %3945 = vmatpush2.msra.mxu0 0.0
        %3946 = vmatprep.subr.mxu0 0.0
        %3947 = vmatpush2.msra.mxu0 0.0
        %3948 = vmatprep.mubr.f32.mxu0 0.0
        %3949 = vmatmul.mubr.f32.gmra.mxu0 %v649
        %v3950 = vpop.f32.mrf.mxu0
        %v3951 = vadd.f32 0.0, %v3950
        %v3952 = vpop.f32.mrf.mxu0
        %3953 = vdwg.mxu0
        %3954 = vmatprep.subr.mxu0 0.0
        %3955 = vmatpush1.msra.mxu0 %v531
        %3956 = vmatprep.subr.mxu0 0.0
        %3957 = vmatpush1.msra.mxu0 %v530
        %3958 = vmatprep.subr.mxu0 0.0
        %3959 = vmatpush1.msra.mxu0 %v529
        %3960 = vmatprep.subr.mxu0 0.0
        %3961 = vmatpush1.msra.mxu0 %v528
        %3962 = vmatprep.subr.mxu0 0.0
        %3963 = vmatpush1.msra.mxu0 %v527
        %3964 = vmatprep.subr.mxu0 0.0
        %3965 = vmatpush1.msra.mxu0 %v526
        %3966 = vmatprep.subr.mxu0 0.0
        %3967 = vmatpush1.msra.mxu0 %v525
        %3968 = vmatprep.subr.mxu0 0.0
        %3969 = vmatpush1.msra.mxu0 %v524
        %3970 = vmatprep.subr.mxu0 0.0
        %3971 = vmatpush1.msra.mxu0 %v523
        %3972 = vmatprep.subr.mxu0 0.0
        %3973 = vmatpush1.msra.mxu0 %v522
        %3974 = vmatprep.subr.mxu0 0.0
        %3975 = vmatpush1.msra.mxu0 %v521
        %3976 = vmatprep.subr.mxu0 0.0
        %3977 = vmatpush1.msra.mxu0 %v520
        %3978 = vmatprep.subr.mxu0 0.0
        %3979 = vmatpush1.msra.mxu0 %v519
        %3980 = vmatprep.subr.mxu0 0.0
        %3981 = vmatpush1.msra.mxu0 %v518
        %3982 = vmatprep.subr.mxu0 0.0
        %3983 = vmatpush1.msra.mxu0 %v517
        %3984 = vmatprep.subr.mxu0 0.0
        %3985 = vmatpush1.msra.mxu0 %v516
        %3986 = vmatprep.subr.mxu0 0.0
        %3987 = vmatpush2.msra.mxu0 0.0
        %3988 = vmatprep.subr.mxu0 0.0
        %3989 = vmatpush2.msra.mxu0 0.0
        %3990 = vmatprep.subr.mxu0 0.0
        %3991 = vmatpush2.msra.mxu0 0.0
        %3992 = vmatprep.subr.mxu0 0.0
        %3993 = vmatpush2.msra.mxu0 0.0
        %3994 = vmatprep.subr.mxu0 0.0
        %3995 = vmatpush2.msra.mxu0 0.0
        %3996 = vmatprep.subr.mxu0 0.0
        %3997 = vmatpush2.msra.mxu0 0.0
        %3998 = vmatprep.subr.mxu0 0.0
        %3999 = vmatpush2.msra.mxu0 0.0
        %4000 = vmatprep.subr.mxu0 0.0
        %4001 = vmatpush2.msra.mxu0 0.0
        %4002 = vmatprep.subr.mxu0 0.0
        %4003 = vmatpush2.msra.mxu0 0.0
        %4004 = vmatprep.subr.mxu0 0.0
        %4005 = vmatpush2.msra.mxu0 0.0
        %4006 = vmatprep.subr.mxu0 0.0
        %4007 = vmatpush2.msra.mxu0 0.0
        %4008 = vmatprep.subr.mxu0 0.0
        %4009 = vmatpush2.msra.mxu0 0.0
        %4010 = vmatprep.subr.mxu0 0.0
        %4011 = vmatpush2.msra.mxu0 0.0
        %4012 = vmatprep.subr.mxu0 0.0
        %4013 = vmatpush2.msra.mxu0 0.0
        %4014 = vmatprep.subr.mxu0 0.0
        %4015 = vmatpush2.msra.mxu0 0.0
        %4016 = vmatprep.subr.mxu0 0.0
        %4017 = vmatpush2.msra.mxu0 0.0
        %4018 = vmatprep.mubr.f32.mxu0 0.0
        %4019 = vmatmul.mubr.f32.gmra.mxu0 %v3951
        %v4020 = vpop.f32.mrf.mxu0
        %v4021 = vadd.f32 0.0, %v4020
        %v4022 = vpop.f32.mrf.mxu0
        %4023 = vdwg.mxu0
        %v4024 = vadd.f32 %v3868, %v4021
        %v4025 = vtanh.pop %v4024
        %v4026 = vmul.f32 %v3882, %v3285
        %v4027 = vsub.f32 1.0, %v3882
        %v4028 = vmul.f32 %v4027, %v4025
        %v4029 = vadd.f32 %v4026, %v4028
        %4030 = vmatprep.subr.mxu0 0.0
        %4031 = vmatpush1.msra.mxu0 0.0
        %4032 = vmatprep.subr.mxu0 0.0
        %4033 = vmatpush1.msra.mxu0 0.0
        %4034 = vmatprep.subr.mxu0 0.0
        %4035 = vmatpush1.msra.mxu0 0.0
        %4036 = vmatprep.subr.mxu0 0.0
        %4037 = vmatpush1.msra.mxu0 0.0
        %4038 = vmatprep.subr.mxu0 0.0
        %4039 = vmatpush1.msra.mxu0 0.0
        %4040 = vmatprep.subr.mxu0 0.0
        %4041 = vmatpush1.msra.mxu0 0.0
        %4042 = vmatprep.subr.mxu0 0.0
        %4043 = vmatpush1.msra.mxu0 0.0
        %4044 = vmatprep.subr.mxu0 0.0
        %4045 = vmatpush1.msra.mxu0 0.0
        %4046 = vmatprep.subr.mxu0 0.0
        %4047 = vmatpush1.msra.mxu0 0.0
        %4048 = vmatprep.subr.mxu0 0.0
        %4049 = vmatpush1.msra.mxu0 0.0
        %4050 = vmatprep.subr.mxu0 0.0
        %4051 = vmatpush1.msra.mxu0 0.0
        %4052 = vmatprep.subr.mxu0 0.0
        %4053 = vmatpush1.msra.mxu0 0.0
        %4054 = vmatprep.subr.mxu0 0.0
        %4055 = vmatpush1.msra.mxu0 0.0
        %4056 = vmatprep.subr.mxu0 0.0
        %4057 = vmatpush1.msra.mxu0 0.0
        %4058 = vmatprep.subr.mxu0 0.0
        %4059 = vmatpush1.msra.mxu0 0.0
        %4060 = vmatprep.subr.mxu0 %v3656
        %4061 = vmatpush1.msra.mxu0 %v4029
        %4062 = vmatprep.subr.mxu0 0.0
        %4063 = vmatpush2.msra.mxu0 0.0
        %4064 = vmatprep.subr.mxu0 0.0
        %4065 = vmatpush2.msra.mxu0 0.0
        %4066 = vmatprep.subr.mxu0 0.0
        %4067 = vmatpush2.msra.mxu0 0.0
        %4068 = vmatprep.subr.mxu0 0.0
        %4069 = vmatpush2.msra.mxu0 0.0
        %4070 = vmatprep.subr.mxu0 0.0
        %4071 = vmatpush2.msra.mxu0 0.0
        %4072 = vmatprep.subr.mxu0 0.0
        %4073 = vmatpush2.msra.mxu0 0.0
        %4074 = vmatprep.subr.mxu0 0.0
        %4075 = vmatpush2.msra.mxu0 0.0
        %4076 = vmatprep.subr.mxu0 0.0
        %4077 = vmatpush2.msra.mxu0 0.0
        %4078 = vmatprep.subr.mxu0 0.0
        %4079 = vmatpush2.msra.mxu0 0.0
        %4080 = vmatprep.subr.mxu0 0.0
        %4081 = vmatpush2.msra.mxu0 0.0
        %4082 = vmatprep.subr.mxu0 0.0
        %4083 = vmatpush2.msra.mxu0 0.0
        %4084 = vmatprep.subr.mxu0 0.0
        %4085 = vmatpush2.msra.mxu0 0.0
        %4086 = vmatprep.subr.mxu0 0.0
        %4087 = vmatpush2.msra.mxu0 0.0
        %4088 = vmatprep.subr.mxu0 0.0
        %4089 = vmatpush2.msra.mxu0 0.0
        %4090 = vmatprep.subr.mxu0 0.0
        %4091 = vmatpush2.msra.mxu0 0.0
        %4092 = vmatprep.subr.mxu0 0.0
        %4093 = vmatpush2.msra.mxu0 0.0
        %4094 = vmatprep.mubr.f32.mxu0 0.0
        %4095 = vmatmul.mubr.f32.gmra.mxu0 %v649
        %v4096 = vpop.f32.mrf.mxu0
        %v4097 = vadd.f32 0.0, %v4096
        %v4098 = vpop.f32.mrf.mxu0
        %v4099 = vadd.f32 0.0, %v4098
        %4100 = vdwg.mxu0
        %4101 = vmatprep.subr.mxu0 %v579
        %4102 = vmatpush1.msra.mxu0 %v578
        %4103 = vmatprep.subr.mxu0 %v576
        %4104 = vmatpush1.msra.mxu0 %v575
        %4105 = vmatprep.subr.mxu0 %v573
        %4106 = vmatpush1.msra.mxu0 %v572
        %4107 = vmatprep.subr.mxu0 %v570
        %4108 = vmatpush1.msra.mxu0 %v569
        %4109 = vmatprep.subr.mxu0 %v567
        %4110 = vmatpush1.msra.mxu0 %v566
        %4111 = vmatprep.subr.mxu0 %v564
        %4112 = vmatpush1.msra.mxu0 %v563
        %4113 = vmatprep.subr.mxu0 %v561
        %4114 = vmatpush1.msra.mxu0 %v560
        %4115 = vmatprep.subr.mxu0 %v558
        %4116 = vmatpush1.msra.mxu0 %v557
        %4117 = vmatprep.subr.mxu0 %v555
        %4118 = vmatpush1.msra.mxu0 %v554
        %4119 = vmatprep.subr.mxu0 %v552
        %4120 = vmatpush1.msra.mxu0 %v551
        %4121 = vmatprep.subr.mxu0 %v549
        %4122 = vmatpush1.msra.mxu0 %v548
        %4123 = vmatprep.subr.mxu0 %v546
        %4124 = vmatpush1.msra.mxu0 %v545
        %4125 = vmatprep.subr.mxu0 %v543
        %4126 = vmatpush1.msra.mxu0 %v542
        %4127 = vmatprep.subr.mxu0 %v540
        %4128 = vmatpush1.msra.mxu0 %v539
        %4129 = vmatprep.subr.mxu0 %v537
        %4130 = vmatpush1.msra.mxu0 %v536
        %4131 = vmatprep.subr.mxu0 %v534
        %4132 = vmatpush1.msra.mxu0 %v533
        %4133 = vmatprep.subr.mxu0 %v627
        %4134 = vmatpush2.msra.mxu0 %v626
        %4135 = vmatprep.subr.mxu0 %v624
        %4136 = vmatpush2.msra.mxu0 %v623
        %4137 = vmatprep.subr.mxu0 %v621
        %4138 = vmatpush2.msra.mxu0 %v620
        %4139 = vmatprep.subr.mxu0 %v618
        %4140 = vmatpush2.msra.mxu0 %v617
        %4141 = vmatprep.subr.mxu0 %v615
        %4142 = vmatpush2.msra.mxu0 %v614
        %4143 = vmatprep.subr.mxu0 %v612
        %4144 = vmatpush2.msra.mxu0 %v611
        %4145 = vmatprep.subr.mxu0 %v609
        %4146 = vmatpush2.msra.mxu0 %v608
        %4147 = vmatprep.subr.mxu0 %v606
        %4148 = vmatpush2.msra.mxu0 %v605
        %4149 = vmatprep.subr.mxu0 %v603
        %4150 = vmatpush2.msra.mxu0 %v602
        %4151 = vmatprep.subr.mxu0 %v600
        %4152 = vmatpush2.msra.mxu0 %v599
        %4153 = vmatprep.subr.mxu0 %v597
        %4154 = vmatpush2.msra.mxu0 %v596
        %4155 = vmatprep.subr.mxu0 %v594
        %4156 = vmatpush2.msra.mxu0 %v593
        %4157 = vmatprep.subr.mxu0 %v591
        %4158 = vmatpush2.msra.mxu0 %v590
        %4159 = vmatprep.subr.mxu0 %v588
        %4160 = vmatpush2.msra.mxu0 %v587
        %4161 = vmatprep.subr.mxu0 %v585
        %4162 = vmatpush2.msra.mxu0 %v584
        %4163 = vmatprep.subr.mxu0 %v582
        %4164 = vmatpush2.msra.mxu0 %v581
        %4165 = vmatprep.mubr.f32.mxu0 %v4099
        %4166 = vmatmul.mubr.f32.gmra.mxu0 %v4097
        %v4167 = vpop.f32.mrf.mxu0
        %v4168 = vadd.f32 %v1113, %v4167
        %v4169 = vpop.f32.mrf.mxu0
        %v4170 = vadd.f32 %v1117, %v4169
        %4171 = vdwg.mxu0
        %4172 = vmatprep.subr.mxu0 0.0
        %4173 = vmatpush1.msra.mxu0 %v580
        %4174 = vmatprep.subr.mxu0 0.0
        %4175 = vmatpush1.msra.mxu0 %v577
        %4176 = vmatprep.subr.mxu0 0.0
        %4177 = vmatpush1.msra.mxu0 %v574
        %4178 = vmatprep.subr.mxu0 0.0
        %4179 = vmatpush1.msra.mxu0 %v571
        %4180 = vmatprep.subr.mxu0 0.0
        %4181 = vmatpush1.msra.mxu0 %v568
        %4182 = vmatprep.subr.mxu0 0.0
        %4183 = vmatpush1.msra.mxu0 %v565
        %4184 = vmatprep.subr.mxu0 0.0
        %4185 = vmatpush1.msra.mxu0 %v562
        %4186 = vmatprep.subr.mxu0 0.0
        %4187 = vmatpush1.msra.mxu0 %v559
        %4188 = vmatprep.subr.mxu0 0.0
        %4189 = vmatpush1.msra.mxu0 %v556
        %4190 = vmatprep.subr.mxu0 0.0
        %4191 = vmatpush1.msra.mxu0 %v553
        %4192 = vmatprep.subr.mxu0 0.0
        %4193 = vmatpush1.msra.mxu0 %v550
        %4194 = vmatprep.subr.mxu0 0.0
        %4195 = vmatpush1.msra.mxu0 %v547
        %4196 = vmatprep.subr.mxu0 0.0
        %4197 = vmatpush1.msra.mxu0 %v544
        %4198 = vmatprep.subr.mxu0 0.0
        %4199 = vmatpush1.msra.mxu0 %v541
        %4200 = vmatprep.subr.mxu0 0.0
        %4201 = vmatpush1.msra.mxu0 %v538
        %4202 = vmatprep.subr.mxu0 0.0
        %4203 = vmatpush1.msra.mxu0 %v535
        %4204 = vmatprep.subr.mxu0 0.0
        %4205 = vmatpush2.msra.mxu0 %v628
        %4206 = vmatprep.subr.mxu0 0.0
        %4207 = vmatpush2.msra.mxu0 %v625
        %4208 = vmatprep.subr.mxu0 0.0
        %4209 = vmatpush2.msra.mxu0 %v622
        %4210 = vmatprep.subr.mxu0 0.0
        %4211 = vmatpush2.msra.mxu0 %v619
        %4212 = vmatprep.subr.mxu0 0.0
        %4213 = vmatpush2.msra.mxu0 %v616
        %4214 = vmatprep.subr.mxu0 0.0
        %4215 = vmatpush2.msra.mxu0 %v613
        %4216 = vmatprep.subr.mxu0 0.0
        %4217 = vmatpush2.msra.mxu0 %v610
        %4218 = vmatprep.subr.mxu0 0.0
        %4219 = vmatpush2.msra.mxu0 %v607
        %4220 = vmatprep.subr.mxu0 0.0
        %4221 = vmatpush2.msra.mxu0 %v604
        %4222 = vmatprep.subr.mxu0 0.0
        %4223 = vmatpush2.msra.mxu0 %v601
        %4224 = vmatprep.subr.mxu0 0.0
        %4225 = vmatpush2.msra.mxu0 %v598
        %4226 = vmatprep.subr.mxu0 0.0
        %4227 = vmatpush2.msra.mxu0 %v595
        %4228 = vmatprep.subr.mxu0 0.0
        %4229 = vmatpush2.msra.mxu0 %v592
        %4230 = vmatprep.subr.mxu0 0.0
        %4231 = vmatpush2.msra.mxu0 %v589
        %4232 = vmatprep.subr.mxu0 0.0
        %4233 = vmatpush2.msra.mxu0 %v586
        %4234 = vmatprep.subr.mxu0 0.0
        %4235 = vmatpush2.msra.mxu0 %v583
        %4236 = vmatprep.mubr.f32.mxu0 %v4099
        %4237 = vmatmul.mubr.f32.gmra.mxu0 %v4097
        %v4238 = vpop.f32.mrf.mxu0
        %v4239 = vadd.f32 %v1121, %v4238
        %v4240 = vpop.f32.mrf.mxu0
        %4241 = vdwg.mxu0
        %v4242 = vxor.u32 %v4168, 2147483648
        %v4243 = vmul.f32 %v4242, 1.442695
        %v4244 = vpow.pop %v4243
        %v4245 = vadd.f32 %v4244, 1.0
        %v4246 = vrcp.pop %v4245
        %v4247 = vmul.f32 1.0, %v4246
        %v4248 = vxor.u32 %v4170, 2147483648
        %v4249 = vmul.f32 %v4248, 1.442695
        %v4250 = vpow.pop %v4249
        %v4251 = vadd.f32 %v4250, 1.0
        %v4252 = vrcp.pop %v4251
        %v4253 = vmul.f32 1.0, %v4252
        %v4254 = vmul.f32 %v4247, %v3656
        %4255 = vmatprep.subr.mxu0 0.0
        %4256 = vmatpush1.msra.mxu0 0.0
        %4257 = vmatprep.subr.mxu0 0.0
        %4258 = vmatpush1.msra.mxu0 0.0
        %4259 = vmatprep.subr.mxu0 0.0
        %4260 = vmatpush1.msra.mxu0 0.0
        %4261 = vmatprep.subr.mxu0 0.0
        %4262 = vmatpush1.msra.mxu0 0.0
        %4263 = vmatprep.subr.mxu0 0.0
        %4264 = vmatpush1.msra.mxu0 0.0
        %4265 = vmatprep.subr.mxu0 0.0
        %4266 = vmatpush1.msra.mxu0 0.0
        %4267 = vmatprep.subr.mxu0 0.0
        %4268 = vmatpush1.msra.mxu0 0.0
        %4269 = vmatprep.subr.mxu0 0.0
        %4270 = vmatpush1.msra.mxu0 0.0
        %4271 = vmatprep.subr.mxu0 0.0
        %4272 = vmatpush1.msra.mxu0 0.0
        %4273 = vmatprep.subr.mxu0 0.0
        %4274 = vmatpush1.msra.mxu0 0.0
        %4275 = vmatprep.subr.mxu0 0.0
        %4276 = vmatpush1.msra.mxu0 0.0
        %4277 = vmatprep.subr.mxu0 0.0
        %4278 = vmatpush1.msra.mxu0 0.0
        %4279 = vmatprep.subr.mxu0 0.0
        %4280 = vmatpush1.msra.mxu0 0.0
        %4281 = vmatprep.subr.mxu0 0.0
        %4282 = vmatpush1.msra.mxu0 0.0
        %4283 = vmatprep.subr.mxu0 0.0
        %4284 = vmatpush1.msra.mxu0 0.0
        %4285 = vmatprep.subr.mxu0 0.0
        %4286 = vmatpush1.msra.mxu0 %v4254
        %4287 = vmatprep.subr.mxu0 0.0
        %4288 = vmatpush2.msra.mxu0 0.0
        %4289 = vmatprep.subr.mxu0 0.0
        %4290 = vmatpush2.msra.mxu0 0.0
        %4291 = vmatprep.subr.mxu0 0.0
        %4292 = vmatpush2.msra.mxu0 0.0
        %4293 = vmatprep.subr.mxu0 0.0
        %4294 = vmatpush2.msra.mxu0 0.0
        %4295 = vmatprep.subr.mxu0 0.0
        %4296 = vmatpush2.msra.mxu0 0.0
        %4297 = vmatprep.subr.mxu0 0.0
        %4298 = vmatpush2.msra.mxu0 0.0
        %4299 = vmatprep.subr.mxu0 0.0
        %4300 = vmatpush2.msra.mxu0 0.0
        %4301 = vmatprep.subr.mxu0 0.0
        %4302 = vmatpush2.msra.mxu0 0.0
        %4303 = vmatprep.subr.mxu0 0.0
        %4304 = vmatpush2.msra.mxu0 0.0
        %4305 = vmatprep.subr.mxu0 0.0
        %4306 = vmatpush2.msra.mxu0 0.0
        %4307 = vmatprep.subr.mxu0 0.0
        %4308 = vmatpush2.msra.mxu0 0.0
        %4309 = vmatprep.subr.mxu0 0.0
        %4310 = vmatpush2.msra.mxu0 0.0
        %4311 = vmatprep.subr.mxu0 0.0
        %4312 = vmatpush2.msra.mxu0 0.0
        %4313 = vmatprep.subr.mxu0 0.0
        %4314 = vmatpush2.msra.mxu0 0.0
        %4315 = vmatprep.subr.mxu0 0.0
        %4316 = vmatpush2.msra.mxu0 0.0
        %4317 = vmatprep.subr.mxu0 0.0
        %4318 = vmatpush2.msra.mxu0 0.0
        %4319 = vmatprep.mubr.f32.mxu0 0.0
        %4320 = vmatmul.mubr.f32.gmra.mxu0 %v649
        %v4321 = vpop.f32.mrf.mxu0
        %v4322 = vadd.f32 0.0, %v4321
        %v4323 = vpop.f32.mrf.mxu0
        %4324 = vdwg.mxu0
        %4325 = vmatprep.subr.mxu0 0.0
        %4326 = vmatpush1.msra.mxu0 %v644
        %4327 = vmatprep.subr.mxu0 0.0
        %4328 = vmatpush1.msra.mxu0 %v643
        %4329 = vmatprep.subr.mxu0 0.0
        %4330 = vmatpush1.msra.mxu0 %v642
        %4331 = vmatprep.subr.mxu0 0.0
        %4332 = vmatpush1.msra.mxu0 %v641
        %4333 = vmatprep.subr.mxu0 0.0
        %4334 = vmatpush1.msra.mxu0 %v640
        %4335 = vmatprep.subr.mxu0 0.0
        %4336 = vmatpush1.msra.mxu0 %v639
        %4337 = vmatprep.subr.mxu0 0.0
        %4338 = vmatpush1.msra.mxu0 %v638
        %4339 = vmatprep.subr.mxu0 0.0
        %4340 = vmatpush1.msra.mxu0 %v637
        %4341 = vmatprep.subr.mxu0 0.0
        %4342 = vmatpush1.msra.mxu0 %v636
        %4343 = vmatprep.subr.mxu0 0.0
        %4344 = vmatpush1.msra.mxu0 %v635
        %4345 = vmatprep.subr.mxu0 0.0
        %4346 = vmatpush1.msra.mxu0 %v634
        %4347 = vmatprep.subr.mxu0 0.0
        %4348 = vmatpush1.msra.mxu0 %v633
        %4349 = vmatprep.subr.mxu0 0.0
        %4350 = vmatpush1.msra.mxu0 %v632
        %4351 = vmatprep.subr.mxu0 0.0
        %4352 = vmatpush1.msra.mxu0 %v631
        %4353 = vmatprep.subr.mxu0 0.0
        %4354 = vmatpush1.msra.mxu0 %v630
        %4355 = vmatprep.subr.mxu0 0.0
        %4356 = vmatpush1.msra.mxu0 %v629
        %4357 = vmatprep.subr.mxu0 0.0
        %4358 = vmatpush2.msra.mxu0 0.0
        %4359 = vmatprep.subr.mxu0 0.0
        %4360 = vmatpush2.msra.mxu0 0.0
        %4361 = vmatprep.subr.mxu0 0.0
        %4362 = vmatpush2.msra.mxu0 0.0
        %4363 = vmatprep.subr.mxu0 0.0
        %4364 = vmatpush2.msra.mxu0 0.0
        %4365 = vmatprep.subr.mxu0 0.0
        %4366 = vmatpush2.msra.mxu0 0.0
        %4367 = vmatprep.subr.mxu0 0.0
        %4368 = vmatpush2.msra.mxu0 0.0
        %4369 = vmatprep.subr.mxu0 0.0
        %4370 = vmatpush2.msra.mxu0 0.0
        %4371 = vmatprep.subr.mxu0 0.0
        %4372 = vmatpush2.msra.mxu0 0.0
        %4373 = vmatprep.subr.mxu0 0.0
        %4374 = vmatpush2.msra.mxu0 0.0
        %4375 = vmatprep.subr.mxu0 0.0
        %4376 = vmatpush2.msra.mxu0 0.0
        %4377 = vmatprep.subr.mxu0 0.0
        %4378 = vmatpush2.msra.mxu0 0.0
        %4379 = vmatprep.subr.mxu0 0.0
        %4380 = vmatpush2.msra.mxu0 0.0
        %4381 = vmatprep.subr.mxu0 0.0
        %4382 = vmatpush2.msra.mxu0 0.0
        %4383 = vmatprep.subr.mxu0 0.0
        %4384 = vmatpush2.msra.mxu0 0.0
        %4385 = vmatprep.subr.mxu0 0.0
        %4386 = vmatpush2.msra.mxu0 0.0
        %4387 = vmatprep.subr.mxu0 0.0
        %4388 = vmatpush2.msra.mxu0 0.0
        %4389 = vmatprep.mubr.f32.mxu0 0.0
        %4390 = vmatmul.mubr.f32.gmra.mxu0 %v4322
        %v4391 = vpop.f32.mrf.mxu0
        %v4392 = vadd.f32 0.0, %v4391
        %v4393 = vpop.f32.mrf.mxu0
        %4394 = vdwg.mxu0
        %v4395 = vadd.f32 %v4239, %v4392
        %v4396 = vtanh.pop %v4395
        %v4397 = vmul.f32 %v4253, %v3656
        %v4398 = vsub.f32 1.0, %v4253
        %v4399 = vmul.f32 %v4398, %v4396
        %v4400 = vadd.f32 %v4397, %v4399
        %s4401 = scalar_lea.vmem %s365, 40 [#allocation5]
        %v4402 = vld [vmem:[%s4401] sm:$0xff]
        %4403 = vmatprep.subr.mxu0 0.0
        %4404 = vmatpush1.msra.mxu0 0.0
        %4405 = vmatprep.subr.mxu0 0.0
        %4406 = vmatpush1.msra.mxu0 0.0
        %4407 = vmatprep.subr.mxu0 0.0
        %4408 = vmatpush1.msra.mxu0 0.0
        %4409 = vmatprep.subr.mxu0 0.0
        %4410 = vmatpush1.msra.mxu0 0.0
        %4411 = vmatprep.subr.mxu0 0.0
        %4412 = vmatpush1.msra.mxu0 0.0
        %4413 = vmatprep.subr.mxu0 0.0
        %4414 = vmatpush1.msra.mxu0 0.0
        %4415 = vmatprep.subr.mxu0 0.0
        %4416 = vmatpush1.msra.mxu0 0.0
        %4417 = vmatprep.subr.mxu0 0.0
        %4418 = vmatpush1.msra.mxu0 0.0
        %4419 = vmatprep.subr.mxu0 0.0
        %4420 = vmatpush1.msra.mxu0 0.0
        %4421 = vmatprep.subr.mxu0 0.0
        %4422 = vmatpush1.msra.mxu0 0.0
        %4423 = vmatprep.subr.mxu0 0.0
        %4424 = vmatpush1.msra.mxu0 0.0
        %4425 = vmatprep.subr.mxu0 0.0
        %4426 = vmatpush1.msra.mxu0 0.0
        %4427 = vmatprep.subr.mxu0 0.0
        %4428 = vmatpush1.msra.mxu0 0.0
        %4429 = vmatprep.subr.mxu0 0.0
        %4430 = vmatpush1.msra.mxu0 0.0
        %4431 = vmatprep.subr.mxu0 0.0
        %4432 = vmatpush1.msra.mxu0 0.0
        %4433 = vmatprep.subr.mxu0 %v4029
        %4434 = vmatpush1.msra.mxu0 %v4402
        %4435 = vmatprep.subr.mxu0 0.0
        %4436 = vmatpush2.msra.mxu0 0.0
        %4437 = vmatprep.subr.mxu0 0.0
        %4438 = vmatpush2.msra.mxu0 0.0
        %4439 = vmatprep.subr.mxu0 0.0
        %4440 = vmatpush2.msra.mxu0 0.0
        %4441 = vmatprep.subr.mxu0 0.0
        %4442 = vmatpush2.msra.mxu0 0.0
        %4443 = vmatprep.subr.mxu0 0.0
        %4444 = vmatpush2.msra.mxu0 0.0
        %4445 = vmatprep.subr.mxu0 0.0
        %4446 = vmatpush2.msra.mxu0 0.0
        %4447 = vmatprep.subr.mxu0 0.0
        %4448 = vmatpush2.msra.mxu0 0.0
        %4449 = vmatprep.subr.mxu0 0.0
        %4450 = vmatpush2.msra.mxu0 0.0
        %4451 = vmatprep.subr.mxu0 0.0
        %4452 = vmatpush2.msra.mxu0 0.0
        %4453 = vmatprep.subr.mxu0 0.0
        %4454 = vmatpush2.msra.mxu0 0.0
        %4455 = vmatprep.subr.mxu0 0.0
        %4456 = vmatpush2.msra.mxu0 0.0
        %4457 = vmatprep.subr.mxu0 0.0
        %4458 = vmatpush2.msra.mxu0 0.0
        %4459 = vmatprep.subr.mxu0 0.0
        %4460 = vmatpush2.msra.mxu0 0.0
        %4461 = vmatprep.subr.mxu0 0.0
        %4462 = vmatpush2.msra.mxu0 0.0
        %4463 = vmatprep.subr.mxu0 0.0
        %4464 = vmatpush2.msra.mxu0 0.0
        %4465 = vmatprep.subr.mxu0 0.0
        %4466 = vmatpush2.msra.mxu0 0.0
        %4467 = vmatprep.mubr.f32.mxu0 0.0
        %4468 = vmatmul.mubr.f32.gmra.mxu0 %v649
        %v4469 = vpop.f32.mrf.mxu0
        %v4470 = vadd.f32 0.0, %v4469
        %v4471 = vpop.f32.mrf.mxu0
        %v4472 = vadd.f32 0.0, %v4471
        %4473 = vdwg.mxu0
        %4474 = vmatprep.subr.mxu0 %v466
        %4475 = vmatpush1.msra.mxu0 %v465
        %4476 = vmatprep.subr.mxu0 %v463
        %4477 = vmatpush1.msra.mxu0 %v462
        %4478 = vmatprep.subr.mxu0 %v460
        %4479 = vmatpush1.msra.mxu0 %v459
        %4480 = vmatprep.subr.mxu0 %v457
        %4481 = vmatpush1.msra.mxu0 %v456
        %4482 = vmatprep.subr.mxu0 %v454
        %4483 = vmatpush1.msra.mxu0 %v453
        %4484 = vmatprep.subr.mxu0 %v451
        %4485 = vmatpush1.msra.mxu0 %v450
        %4486 = vmatprep.subr.mxu0 %v448
        %4487 = vmatpush1.msra.mxu0 %v447
        %4488 = vmatprep.subr.mxu0 %v445
        %4489 = vmatpush1.msra.mxu0 %v444
        %4490 = vmatprep.subr.mxu0 %v442
        %4491 = vmatpush1.msra.mxu0 %v441
        %4492 = vmatprep.subr.mxu0 %v439
        %4493 = vmatpush1.msra.mxu0 %v438
        %4494 = vmatprep.subr.mxu0 %v436
        %4495 = vmatpush1.msra.mxu0 %v435
        %4496 = vmatprep.subr.mxu0 %v433
        %4497 = vmatpush1.msra.mxu0 %v432
        %4498 = vmatprep.subr.mxu0 %v430
        %4499 = vmatpush1.msra.mxu0 %v429
        %4500 = vmatprep.subr.mxu0 %v427
        %4501 = vmatpush1.msra.mxu0 %v426
        %4502 = vmatprep.subr.mxu0 %v424
        %4503 = vmatpush1.msra.mxu0 %v423
        %4504 = vmatprep.subr.mxu0 %v421
        %4505 = vmatpush1.msra.mxu0 %v420
        %4506 = vmatprep.subr.mxu0 %v514
        %4507 = vmatpush2.msra.mxu0 %v513
        %4508 = vmatprep.subr.mxu0 %v511
        %4509 = vmatpush2.msra.mxu0 %v510
        %4510 = vmatprep.subr.mxu0 %v508
        %4511 = vmatpush2.msra.mxu0 %v507
        %4512 = vmatprep.subr.mxu0 %v505
        %4513 = vmatpush2.msra.mxu0 %v504
        %4514 = vmatprep.subr.mxu0 %v502
        %4515 = vmatpush2.msra.mxu0 %v501
        %4516 = vmatprep.subr.mxu0 %v499
        %4517 = vmatpush2.msra.mxu0 %v498
        %4518 = vmatprep.subr.mxu0 %v496
        %4519 = vmatpush2.msra.mxu0 %v495
        %4520 = vmatprep.subr.mxu0 %v493
        %4521 = vmatpush2.msra.mxu0 %v492
        %4522 = vmatprep.subr.mxu0 %v490
        %4523 = vmatpush2.msra.mxu0 %v489
        %4524 = vmatprep.subr.mxu0 %v487
        %4525 = vmatpush2.msra.mxu0 %v486
        %4526 = vmatprep.subr.mxu0 %v484
        %4527 = vmatpush2.msra.mxu0 %v483
        %4528 = vmatprep.subr.mxu0 %v481
        %4529 = vmatpush2.msra.mxu0 %v480
        %4530 = vmatprep.subr.mxu0 %v478
        %4531 = vmatpush2.msra.mxu0 %v477
        %4532 = vmatprep.subr.mxu0 %v475
        %4533 = vmatpush2.msra.mxu0 %v474
        %4534 = vmatprep.subr.mxu0 %v472
        %4535 = vmatpush2.msra.mxu0 %v471
        %4536 = vmatprep.subr.mxu0 %v469
        %4537 = vmatpush2.msra.mxu0 %v468
        %4538 = vmatprep.mubr.f32.mxu0 %v4472
        %4539 = vmatmul.mubr.f32.gmra.mxu0 %v4470
        %v4540 = vpop.f32.mrf.mxu0
        %v4541 = vadd.f32 %v726, %v4540
        %v4542 = vpop.f32.mrf.mxu0
        %v4543 = vadd.f32 %v730, %v4542
        %4544 = vdwg.mxu0
        %4545 = vmatprep.subr.mxu0 0.0
        %4546 = vmatpush1.msra.mxu0 %v467
        %4547 = vmatprep.subr.mxu0 0.0
        %4548 = vmatpush1.msra.mxu0 %v464
        %4549 = vmatprep.subr.mxu0 0.0
        %4550 = vmatpush1.msra.mxu0 %v461
        %4551 = vmatprep.subr.mxu0 0.0
        %4552 = vmatpush1.msra.mxu0 %v458
        %4553 = vmatprep.subr.mxu0 0.0
        %4554 = vmatpush1.msra.mxu0 %v455
        %4555 = vmatprep.subr.mxu0 0.0
        %4556 = vmatpush1.msra.mxu0 %v452
        %4557 = vmatprep.subr.mxu0 0.0
        %4558 = vmatpush1.msra.mxu0 %v449
        %4559 = vmatprep.subr.mxu0 0.0
        %4560 = vmatpush1.msra.mxu0 %v446
        %4561 = vmatprep.subr.mxu0 0.0
        %4562 = vmatpush1.msra.mxu0 %v443
        %4563 = vmatprep.subr.mxu0 0.0
        %4564 = vmatpush1.msra.mxu0 %v440
        %4565 = vmatprep.subr.mxu0 0.0
        %4566 = vmatpush1.msra.mxu0 %v437
        %4567 = vmatprep.subr.mxu0 0.0
        %4568 = vmatpush1.msra.mxu0 %v434
        %4569 = vmatprep.subr.mxu0 0.0
        %4570 = vmatpush1.msra.mxu0 %v431
        %4571 = vmatprep.subr.mxu0 0.0
        %4572 = vmatpush1.msra.mxu0 %v428
        %4573 = vmatprep.subr.mxu0 0.0
        %4574 = vmatpush1.msra.mxu0 %v425
        %4575 = vmatprep.subr.mxu0 0.0
        %4576 = vmatpush1.msra.mxu0 %v422
        %4577 = vmatprep.subr.mxu0 0.0
        %4578 = vmatpush2.msra.mxu0 %v515
        %4579 = vmatprep.subr.mxu0 0.0
        %4580 = vmatpush2.msra.mxu0 %v512
        %4581 = vmatprep.subr.mxu0 0.0
        %4582 = vmatpush2.msra.mxu0 %v509
        %4583 = vmatprep.subr.mxu0 0.0
        %4584 = vmatpush2.msra.mxu0 %v506
        %4585 = vmatprep.subr.mxu0 0.0
        %4586 = vmatpush2.msra.mxu0 %v503
        %4587 = vmatprep.subr.mxu0 0.0
        %4588 = vmatpush2.msra.mxu0 %v500
        %4589 = vmatprep.subr.mxu0 0.0
        %4590 = vmatpush2.msra.mxu0 %v497
        %4591 = vmatprep.subr.mxu0 0.0
        %4592 = vmatpush2.msra.mxu0 %v494
        %4593 = vmatprep.subr.mxu0 0.0
        %4594 = vmatpush2.msra.mxu0 %v491
        %4595 = vmatprep.subr.mxu0 0.0
        %4596 = vmatpush2.msra.mxu0 %v488
        %4597 = vmatprep.subr.mxu0 0.0
        %4598 = vmatpush2.msra.mxu0 %v485
        %4599 = vmatprep.subr.mxu0 0.0
        %4600 = vmatpush2.msra.mxu0 %v482
        %4601 = vmatprep.subr.mxu0 0.0
        %4602 = vmatpush2.msra.mxu0 %v479
        %4603 = vmatprep.subr.mxu0 0.0
        %4604 = vmatpush2.msra.mxu0 %v476
        %4605 = vmatprep.subr.mxu0 0.0
        %4606 = vmatpush2.msra.mxu0 %v473
        %4607 = vmatprep.subr.mxu0 0.0
        %4608 = vmatpush2.msra.mxu0 %v470
        %4609 = vmatprep.mubr.f32.mxu0 %v4472
        %4610 = vmatmul.mubr.f32.gmra.mxu0 %v4470
        %v4611 = vpop.f32.mrf.mxu0
        %v4612 = vadd.f32 %v734, %v4611
        %v4613 = vpop.f32.mrf.mxu0
        %4614 = vdwg.mxu0
        %v4615 = vxor.u32 %v4541, 2147483648
        %v4616 = vmul.f32 %v4615, 1.442695
        %v4617 = vpow.pop %v4616
        %v4618 = vadd.f32 %v4617, 1.0
        %v4619 = vrcp.pop %v4618
        %v4620 = vmul.f32 1.0, %v4619
        %v4621 = vxor.u32 %v4543, 2147483648
        %v4622 = vmul.f32 %v4621, 1.442695
        %v4623 = vpow.pop %v4622
        %v4624 = vadd.f32 %v4623, 1.0
        %v4625 = vrcp.pop %v4624
        %v4626 = vmul.f32 1.0, %v4625
        %v4627 = vmul.f32 %v4620, %v4029
        %4628 = vmatprep.subr.mxu0 0.0
        %4629 = vmatpush1.msra.mxu0 0.0
        %4630 = vmatprep.subr.mxu0 0.0
        %4631 = vmatpush1.msra.mxu0 0.0
        %4632 = vmatprep.subr.mxu0 0.0
        %4633 = vmatpush1.msra.mxu0 0.0
        %4634 = vmatprep.subr.mxu0 0.0
        %4635 = vmatpush1.msra.mxu0 0.0
        %4636 = vmatprep.subr.mxu0 0.0
        %4637 = vmatpush1.msra.mxu0 0.0
        %4638 = vmatprep.subr.mxu0 0.0
        %4639 = vmatpush1.msra.mxu0 0.0
        %4640 = vmatprep.subr.mxu0 0.0
        %4641 = vmatpush1.msra.mxu0 0.0
        %4642 = vmatprep.subr.mxu0 0.0
        %4643 = vmatpush1.msra.mxu0 0.0
        %4644 = vmatprep.subr.mxu0 0.0
        %4645 = vmatpush1.msra.mxu0 0.0
        %4646 = vmatprep.subr.mxu0 0.0
        %4647 = vmatpush1.msra.mxu0 0.0
        %4648 = vmatprep.subr.mxu0 0.0
        %4649 = vmatpush1.msra.mxu0 0.0
        %4650 = vmatprep.subr.mxu0 0.0
        %4651 = vmatpush1.msra.mxu0 0.0
        %4652 = vmatprep.subr.mxu0 0.0
        %4653 = vmatpush1.msra.mxu0 0.0
        %4654 = vmatprep.subr.mxu0 0.0
        %4655 = vmatpush1.msra.mxu0 0.0
        %4656 = vmatprep.subr.mxu0 0.0
        %4657 = vmatpush1.msra.mxu0 0.0
        %4658 = vmatprep.subr.mxu0 0.0
        %4659 = vmatpush1.msra.mxu0 %v4627
        %4660 = vmatprep.subr.mxu0 0.0
        %4661 = vmatpush2.msra.mxu0 0.0
        %4662 = vmatprep.subr.mxu0 0.0
        %4663 = vmatpush2.msra.mxu0 0.0
        %4664 = vmatprep.subr.mxu0 0.0
        %4665 = vmatpush2.msra.mxu0 0.0
        %4666 = vmatprep.subr.mxu0 0.0
        %4667 = vmatpush2.msra.mxu0 0.0
        %4668 = vmatprep.subr.mxu0 0.0
        %4669 = vmatpush2.msra.mxu0 0.0
        %4670 = vmatprep.subr.mxu0 0.0
        %4671 = vmatpush2.msra.mxu0 0.0
        %4672 = vmatprep.subr.mxu0 0.0
        %4673 = vmatpush2.msra.mxu0 0.0
        %4674 = vmatprep.subr.mxu0 0.0
        %4675 = vmatpush2.msra.mxu0 0.0
        %4676 = vmatprep.subr.mxu0 0.0
        %4677 = vmatpush2.msra.mxu0 0.0
        %4678 = vmatprep.subr.mxu0 0.0
        %4679 = vmatpush2.msra.mxu0 0.0
        %4680 = vmatprep.subr.mxu0 0.0
        %4681 = vmatpush2.msra.mxu0 0.0
        %4682 = vmatprep.subr.mxu0 0.0
        %4683 = vmatpush2.msra.mxu0 0.0
        %4684 = vmatprep.subr.mxu0 0.0
        %4685 = vmatpush2.msra.mxu0 0.0
        %4686 = vmatprep.subr.mxu0 0.0
        %4687 = vmatpush2.msra.mxu0 0.0
        %4688 = vmatprep.subr.mxu0 0.0
        %4689 = vmatpush2.msra.mxu0 0.0
        %4690 = vmatprep.subr.mxu0 0.0
        %4691 = vmatpush2.msra.mxu0 0.0
        %4692 = vmatprep.mubr.f32.mxu0 0.0
        %4693 = vmatmul.mubr.f32.gmra.mxu0 %v649
        %v4694 = vpop.f32.mrf.mxu0
        %v4695 = vadd.f32 0.0, %v4694
        %v4696 = vpop.f32.mrf.mxu0
        %4697 = vdwg.mxu0
        %4698 = vmatprep.subr.mxu0 0.0
        %4699 = vmatpush1.msra.mxu0 %v531
        %4700 = vmatprep.subr.mxu0 0.0
        %4701 = vmatpush1.msra.mxu0 %v530
        %4702 = vmatprep.subr.mxu0 0.0
        %4703 = vmatpush1.msra.mxu0 %v529
        %4704 = vmatprep.subr.mxu0 0.0
        %4705 = vmatpush1.msra.mxu0 %v528
        %4706 = vmatprep.subr.mxu0 0.0
        %4707 = vmatpush1.msra.mxu0 %v527
        %4708 = vmatprep.subr.mxu0 0.0
        %4709 = vmatpush1.msra.mxu0 %v526
        %4710 = vmatprep.subr.mxu0 0.0
        %4711 = vmatpush1.msra.mxu0 %v525
        %4712 = vmatprep.subr.mxu0 0.0
        %4713 = vmatpush1.msra.mxu0 %v524
        %4714 = vmatprep.subr.mxu0 0.0
        %4715 = vmatpush1.msra.mxu0 %v523
        %4716 = vmatprep.subr.mxu0 0.0
        %4717 = vmatpush1.msra.mxu0 %v522
        %4718 = vmatprep.subr.mxu0 0.0
        %4719 = vmatpush1.msra.mxu0 %v521
        %4720 = vmatprep.subr.mxu0 0.0
        %4721 = vmatpush1.msra.mxu0 %v520
        %4722 = vmatprep.subr.mxu0 0.0
        %4723 = vmatpush1.msra.mxu0 %v519
        %4724 = vmatprep.subr.mxu0 0.0
        %4725 = vmatpush1.msra.mxu0 %v518
        %4726 = vmatprep.subr.mxu0 0.0
        %4727 = vmatpush1.msra.mxu0 %v517
        %4728 = vmatprep.subr.mxu0 0.0
        %4729 = vmatpush1.msra.mxu0 %v516
        %4730 = vmatprep.subr.mxu0 0.0
        %4731 = vmatpush2.msra.mxu0 0.0
        %4732 = vmatprep.subr.mxu0 0.0
        %4733 = vmatpush2.msra.mxu0 0.0
        %4734 = vmatprep.subr.mxu0 0.0
        %4735 = vmatpush2.msra.mxu0 0.0
        %4736 = vmatprep.subr.mxu0 0.0
        %4737 = vmatpush2.msra.mxu0 0.0
        %4738 = vmatprep.subr.mxu0 0.0
        %4739 = vmatpush2.msra.mxu0 0.0
        %4740 = vmatprep.subr.mxu0 0.0
        %4741 = vmatpush2.msra.mxu0 0.0
        %4742 = vmatprep.subr.mxu0 0.0
        %4743 = vmatpush2.msra.mxu0 0.0
        %4744 = vmatprep.subr.mxu0 0.0
        %4745 = vmatpush2.msra.mxu0 0.0
        %4746 = vmatprep.subr.mxu0 0.0
        %4747 = vmatpush2.msra.mxu0 0.0
        %4748 = vmatprep.subr.mxu0 0.0
        %4749 = vmatpush2.msra.mxu0 0.0
        %4750 = vmatprep.subr.mxu0 0.0
        %4751 = vmatpush2.msra.mxu0 0.0
        %4752 = vmatprep.subr.mxu0 0.0
        %4753 = vmatpush2.msra.mxu0 0.0
        %4754 = vmatprep.subr.mxu0 0.0
        %4755 = vmatpush2.msra.mxu0 0.0
        %4756 = vmatprep.subr.mxu0 0.0
        %4757 = vmatpush2.msra.mxu0 0.0
        %4758 = vmatprep.subr.mxu0 0.0
        %4759 = vmatpush2.msra.mxu0 0.0
        %4760 = vmatprep.subr.mxu0 0.0
        %4761 = vmatpush2.msra.mxu0 0.0
        %4762 = vmatprep.mubr.f32.mxu0 0.0
        %4763 = vmatmul.mubr.f32.gmra.mxu0 %v4695
        %v4764 = vpop.f32.mrf.mxu0
        %v4765 = vadd.f32 0.0, %v4764
        %v4766 = vpop.f32.mrf.mxu0
        %4767 = vdwg.mxu0
        %v4768 = vadd.f32 %v4612, %v4765
        %v4769 = vtanh.pop %v4768
        %v4770 = vmul.f32 %v4626, %v4029
        %v4771 = vsub.f32 1.0, %v4626
        %v4772 = vmul.f32 %v4771, %v4769
        %v4773 = vadd.f32 %v4770, %v4772
        %4774 = vmatprep.subr.mxu0 0.0
        %4775 = vmatpush1.msra.mxu0 0.0
        %4776 = vmatprep.subr.mxu0 0.0
        %4777 = vmatpush1.msra.mxu0 0.0
        %4778 = vmatprep.subr.mxu0 0.0
        %4779 = vmatpush1.msra.mxu0 0.0
        %4780 = vmatprep.subr.mxu0 0.0
        %4781 = vmatpush1.msra.mxu0 0.0
        %4782 = vmatprep.subr.mxu0 0.0
        %4783 = vmatpush1.msra.mxu0 0.0
        %4784 = vmatprep.subr.mxu0 0.0
        %4785 = vmatpush1.msra.mxu0 0.0
        %4786 = vmatprep.subr.mxu0 0.0
        %4787 = vmatpush1.msra.mxu0 0.0
        %4788 = vmatprep.subr.mxu0 0.0
        %4789 = vmatpush1.msra.mxu0 0.0
        %4790 = vmatprep.subr.mxu0 0.0
        %4791 = vmatpush1.msra.mxu0 0.0
        %4792 = vmatprep.subr.mxu0 0.0
        %4793 = vmatpush1.msra.mxu0 0.0
        %4794 = vmatprep.subr.mxu0 0.0
        %4795 = vmatpush1.msra.mxu0 0.0
        %4796 = vmatprep.subr.mxu0 0.0
        %4797 = vmatpush1.msra.mxu0 0.0
        %4798 = vmatprep.subr.mxu0 0.0
        %4799 = vmatpush1.msra.mxu0 0.0
        %4800 = vmatprep.subr.mxu0 0.0
        %4801 = vmatpush1.msra.mxu0 0.0
        %4802 = vmatprep.subr.mxu0 0.0
        %4803 = vmatpush1.msra.mxu0 0.0
        %4804 = vmatprep.subr.mxu0 %v4400
        %4805 = vmatpush1.msra.mxu0 %v4773
        %4806 = vmatprep.subr.mxu0 0.0
        %4807 = vmatpush2.msra.mxu0 0.0
        %4808 = vmatprep.subr.mxu0 0.0
        %4809 = vmatpush2.msra.mxu0 0.0
        %4810 = vmatprep.subr.mxu0 0.0
        %4811 = vmatpush2.msra.mxu0 0.0
        %4812 = vmatprep.subr.mxu0 0.0
        %4813 = vmatpush2.msra.mxu0 0.0
        %4814 = vmatprep.subr.mxu0 0.0
        %4815 = vmatpush2.msra.mxu0 0.0
        %4816 = vmatprep.subr.mxu0 0.0
        %4817 = vmatpush2.msra.mxu0 0.0
        %4818 = vmatprep.subr.mxu0 0.0
        %4819 = vmatpush2.msra.mxu0 0.0
        %4820 = vmatprep.subr.mxu0 0.0
        %4821 = vmatpush2.msra.mxu0 0.0
        %4822 = vmatprep.subr.mxu0 0.0
        %4823 = vmatpush2.msra.mxu0 0.0
        %4824 = vmatprep.subr.mxu0 0.0
        %4825 = vmatpush2.msra.mxu0 0.0
        %4826 = vmatprep.subr.mxu0 0.0
        %4827 = vmatpush2.msra.mxu0 0.0
        %4828 = vmatprep.subr.mxu0 0.0
        %4829 = vmatpush2.msra.mxu0 0.0
        %4830 = vmatprep.subr.mxu0 0.0
        %4831 = vmatpush2.msra.mxu0 0.0
        %4832 = vmatprep.subr.mxu0 0.0
        %4833 = vmatpush2.msra.mxu0 0.0
        %4834 = vmatprep.subr.mxu0 0.0
        %4835 = vmatpush2.msra.mxu0 0.0
        %4836 = vmatprep.subr.mxu0 0.0
        %4837 = vmatpush2.msra.mxu0 0.0
        %4838 = vmatprep.mubr.f32.mxu0 0.0
        %4839 = vmatmul.mubr.f32.gmra.mxu0 %v649
        %v4840 = vpop.f32.mrf.mxu0
        %v4841 = vadd.f32 0.0, %v4840
        %v4842 = vpop.f32.mrf.mxu0
        %v4843 = vadd.f32 0.0, %v4842
        %4844 = vdwg.mxu0
        %4845 = vmatprep.subr.mxu0 %v579
        %4846 = vmatpush1.msra.mxu0 %v578
        %4847 = vmatprep.subr.mxu0 %v576
        %4848 = vmatpush1.msra.mxu0 %v575
        %4849 = vmatprep.subr.mxu0 %v573
        %4850 = vmatpush1.msra.mxu0 %v572
        %4851 = vmatprep.subr.mxu0 %v570
        %4852 = vmatpush1.msra.mxu0 %v569
        %4853 = vmatprep.subr.mxu0 %v567
        %4854 = vmatpush1.msra.mxu0 %v566
        %4855 = vmatprep.subr.mxu0 %v564
        %4856 = vmatpush1.msra.mxu0 %v563
        %4857 = vmatprep.subr.mxu0 %v561
        %4858 = vmatpush1.msra.mxu0 %v560
        %4859 = vmatprep.subr.mxu0 %v558
        %4860 = vmatpush1.msra.mxu0 %v557
        %4861 = vmatprep.subr.mxu0 %v555
        %4862 = vmatpush1.msra.mxu0 %v554
        %4863 = vmatprep.subr.mxu0 %v552
        %4864 = vmatpush1.msra.mxu0 %v551
        %4865 = vmatprep.subr.mxu0 %v549
        %4866 = vmatpush1.msra.mxu0 %v548
        %4867 = vmatprep.subr.mxu0 %v546
        %4868 = vmatpush1.msra.mxu0 %v545
        %4869 = vmatprep.subr.mxu0 %v543
        %4870 = vmatpush1.msra.mxu0 %v542
        %4871 = vmatprep.subr.mxu0 %v540
        %4872 = vmatpush1.msra.mxu0 %v539
        %4873 = vmatprep.subr.mxu0 %v537
        %4874 = vmatpush1.msra.mxu0 %v536
        %4875 = vmatprep.subr.mxu0 %v534
        %4876 = vmatpush1.msra.mxu0 %v533
        %4877 = vmatprep.subr.mxu0 %v627
        %4878 = vmatpush2.msra.mxu0 %v626
        %4879 = vmatprep.subr.mxu0 %v624
        %4880 = vmatpush2.msra.mxu0 %v623
        %4881 = vmatprep.subr.mxu0 %v621
        %4882 = vmatpush2.msra.mxu0 %v620
        %4883 = vmatprep.subr.mxu0 %v618
        %4884 = vmatpush2.msra.mxu0 %v617
        %4885 = vmatprep.subr.mxu0 %v615
        %4886 = vmatpush2.msra.mxu0 %v614
        %4887 = vmatprep.subr.mxu0 %v612
        %4888 = vmatpush2.msra.mxu0 %v611
        %4889 = vmatprep.subr.mxu0 %v609
        %4890 = vmatpush2.msra.mxu0 %v608
        %4891 = vmatprep.subr.mxu0 %v606
        %4892 = vmatpush2.msra.mxu0 %v605
        %4893 = vmatprep.subr.mxu0 %v603
        %4894 = vmatpush2.msra.mxu0 %v602
        %4895 = vmatprep.subr.mxu0 %v600
        %4896 = vmatpush2.msra.mxu0 %v599
        %4897 = vmatprep.subr.mxu0 %v597
        %4898 = vmatpush2.msra.mxu0 %v596
        %4899 = vmatprep.subr.mxu0 %v594
        %4900 = vmatpush2.msra.mxu0 %v593
        %4901 = vmatprep.subr.mxu0 %v591
        %4902 = vmatpush2.msra.mxu0 %v590
        %4903 = vmatprep.subr.mxu0 %v588
        %4904 = vmatpush2.msra.mxu0 %v587
        %4905 = vmatprep.subr.mxu0 %v585
        %4906 = vmatpush2.msra.mxu0 %v584
        %4907 = vmatprep.subr.mxu0 %v582
        %4908 = vmatpush2.msra.mxu0 %v581
        %4909 = vmatprep.mubr.f32.mxu0 %v4843
        %4910 = vmatmul.mubr.f32.gmra.mxu0 %v4841
        %v4911 = vpop.f32.mrf.mxu0
        %v4912 = vadd.f32 %v1113, %v4911
        %v4913 = vpop.f32.mrf.mxu0
        %v4914 = vadd.f32 %v1117, %v4913
        %4915 = vdwg.mxu0
        %4916 = vmatprep.subr.mxu0 0.0
        %4917 = vmatpush1.msra.mxu0 %v580
        %4918 = vmatprep.subr.mxu0 0.0
        %4919 = vmatpush1.msra.mxu0 %v577
        %4920 = vmatprep.subr.mxu0 0.0
        %4921 = vmatpush1.msra.mxu0 %v574
        %4922 = vmatprep.subr.mxu0 0.0
        %4923 = vmatpush1.msra.mxu0 %v571
        %4924 = vmatprep.subr.mxu0 0.0
        %4925 = vmatpush1.msra.mxu0 %v568
        %4926 = vmatprep.subr.mxu0 0.0
        %4927 = vmatpush1.msra.mxu0 %v565
        %4928 = vmatprep.subr.mxu0 0.0
        %4929 = vmatpush1.msra.mxu0 %v562
        %4930 = vmatprep.subr.mxu0 0.0
        %4931 = vmatpush1.msra.mxu0 %v559
        %4932 = vmatprep.subr.mxu0 0.0
        %4933 = vmatpush1.msra.mxu0 %v556
        %4934 = vmatprep.subr.mxu0 0.0
        %4935 = vmatpush1.msra.mxu0 %v553
        %4936 = vmatprep.subr.mxu0 0.0
        %4937 = vmatpush1.msra.mxu0 %v550
        %4938 = vmatprep.subr.mxu0 0.0
        %4939 = vmatpush1.msra.mxu0 %v547
        %4940 = vmatprep.subr.mxu0 0.0
        %4941 = vmatpush1.msra.mxu0 %v544
        %4942 = vmatprep.subr.mxu0 0.0
        %4943 = vmatpush1.msra.mxu0 %v541
        %4944 = vmatprep.subr.mxu0 0.0
        %4945 = vmatpush1.msra.mxu0 %v538
        %4946 = vmatprep.subr.mxu0 0.0
        %4947 = vmatpush1.msra.mxu0 %v535
        %4948 = vmatprep.subr.mxu0 0.0
        %4949 = vmatpush2.msra.mxu0 %v628
        %4950 = vmatprep.subr.mxu0 0.0
        %4951 = vmatpush2.msra.mxu0 %v625
        %4952 = vmatprep.subr.mxu0 0.0
        %4953 = vmatpush2.msra.mxu0 %v622
        %4954 = vmatprep.subr.mxu0 0.0
        %4955 = vmatpush2.msra.mxu0 %v619
        %4956 = vmatprep.subr.mxu0 0.0
        %4957 = vmatpush2.msra.mxu0 %v616
        %4958 = vmatprep.subr.mxu0 0.0
        %4959 = vmatpush2.msra.mxu0 %v613
        %4960 = vmatprep.subr.mxu0 0.0
        %4961 = vmatpush2.msra.mxu0 %v610
        %4962 = vmatprep.subr.mxu0 0.0
        %4963 = vmatpush2.msra.mxu0 %v607
        %4964 = vmatprep.subr.mxu0 0.0
        %4965 = vmatpush2.msra.mxu0 %v604
        %4966 = vmatprep.subr.mxu0 0.0
        %4967 = vmatpush2.msra.mxu0 %v601
        %4968 = vmatprep.subr.mxu0 0.0
        %4969 = vmatpush2.msra.mxu0 %v598
        %4970 = vmatprep.subr.mxu0 0.0
        %4971 = vmatpush2.msra.mxu0 %v595
        %4972 = vmatprep.subr.mxu0 0.0
        %4973 = vmatpush2.msra.mxu0 %v592
        %4974 = vmatprep.subr.mxu0 0.0
        %4975 = vmatpush2.msra.mxu0 %v589
        %4976 = vmatprep.subr.mxu0 0.0
        %4977 = vmatpush2.msra.mxu0 %v586
        %4978 = vmatprep.subr.mxu0 0.0
        %4979 = vmatpush2.msra.mxu0 %v583
        %4980 = vmatprep.mubr.f32.mxu0 %v4843
        %4981 = vmatmul.mubr.f32.gmra.mxu0 %v4841
        %v4982 = vpop.f32.mrf.mxu0
        %v4983 = vadd.f32 %v1121, %v4982
        %v4984 = vpop.f32.mrf.mxu0
        %4985 = vdwg.mxu0
        %v4986 = vxor.u32 %v4912, 2147483648
        %v4987 = vmul.f32 %v4986, 1.442695
        %v4988 = vpow.pop %v4987
        %v4989 = vadd.f32 %v4988, 1.0
        %v4990 = vrcp.pop %v4989
        %v4991 = vmul.f32 1.0, %v4990
        %v4992 = vxor.u32 %v4914, 2147483648
        %v4993 = vmul.f32 %v4992, 1.442695
        %v4994 = vpow.pop %v4993
        %v4995 = vadd.f32 %v4994, 1.0
        %v4996 = vrcp.pop %v4995
        %v4997 = vmul.f32 1.0, %v4996
        %v4998 = vmul.f32 %v4991, %v4400
        %4999 = vmatprep.subr.mxu0 0.0
        %5000 = vmatpush1.msra.mxu0 0.0
        %5001 = vmatprep.subr.mxu0 0.0
        %5002 = vmatpush1.msra.mxu0 0.0
        %5003 = vmatprep.subr.mxu0 0.0
        %5004 = vmatpush1.msra.mxu0 0.0
        %5005 = vmatprep.subr.mxu0 0.0
        %5006 = vmatpush1.msra.mxu0 0.0
        %5007 = vmatprep.subr.mxu0 0.0
        %5008 = vmatpush1.msra.mxu0 0.0
        %5009 = vmatprep.subr.mxu0 0.0
        %5010 = vmatpush1.msra.mxu0 0.0
        %5011 = vmatprep.subr.mxu0 0.0
        %5012 = vmatpush1.msra.mxu0 0.0
        %5013 = vmatprep.subr.mxu0 0.0
        %5014 = vmatpush1.msra.mxu0 0.0
        %5015 = vmatprep.subr.mxu0 0.0
        %5016 = vmatpush1.msra.mxu0 0.0
        %5017 = vmatprep.subr.mxu0 0.0
        %5018 = vmatpush1.msra.mxu0 0.0
        %5019 = vmatprep.subr.mxu0 0.0
        %5020 = vmatpush1.msra.mxu0 0.0
        %5021 = vmatprep.subr.mxu0 0.0
        %5022 = vmatpush1.msra.mxu0 0.0
        %5023 = vmatprep.subr.mxu0 0.0
        %5024 = vmatpush1.msra.mxu0 0.0
        %5025 = vmatprep.subr.mxu0 0.0
        %5026 = vmatpush1.msra.mxu0 0.0
        %5027 = vmatprep.subr.mxu0 0.0
        %5028 = vmatpush1.msra.mxu0 0.0
        %5029 = vmatprep.subr.mxu0 0.0
        %5030 = vmatpush1.msra.mxu0 %v4998
        %5031 = vmatprep.subr.mxu0 0.0
        %5032 = vmatpush2.msra.mxu0 0.0
        %5033 = vmatprep.subr.mxu0 0.0
        %5034 = vmatpush2.msra.mxu0 0.0
        %5035 = vmatprep.subr.mxu0 0.0
        %5036 = vmatpush2.msra.mxu0 0.0
        %5037 = vmatprep.subr.mxu0 0.0
        %5038 = vmatpush2.msra.mxu0 0.0
        %5039 = vmatprep.subr.mxu0 0.0
        %5040 = vmatpush2.msra.mxu0 0.0
        %5041 = vmatprep.subr.mxu0 0.0
        %5042 = vmatpush2.msra.mxu0 0.0
        %5043 = vmatprep.subr.mxu0 0.0
        %5044 = vmatpush2.msra.mxu0 0.0
        %5045 = vmatprep.subr.mxu0 0.0
        %5046 = vmatpush2.msra.mxu0 0.0
        %5047 = vmatprep.subr.mxu0 0.0
        %5048 = vmatpush2.msra.mxu0 0.0
        %5049 = vmatprep.subr.mxu0 0.0
        %5050 = vmatpush2.msra.mxu0 0.0
        %5051 = vmatprep.subr.mxu0 0.0
        %5052 = vmatpush2.msra.mxu0 0.0
        %5053 = vmatprep.subr.mxu0 0.0
        %5054 = vmatpush2.msra.mxu0 0.0
        %5055 = vmatprep.subr.mxu0 0.0
        %5056 = vmatpush2.msra.mxu0 0.0
        %5057 = vmatprep.subr.mxu0 0.0
        %5058 = vmatpush2.msra.mxu0 0.0
        %5059 = vmatprep.subr.mxu0 0.0
        %5060 = vmatpush2.msra.mxu0 0.0
        %5061 = vmatprep.subr.mxu0 0.0
        %5062 = vmatpush2.msra.mxu0 0.0
        %5063 = vmatprep.mubr.f32.mxu0 0.0
        %5064 = vmatmul.mubr.f32.gmra.mxu0 %v649
        %v5065 = vpop.f32.mrf.mxu0
        %v5066 = vadd.f32 0.0, %v5065
        %v5067 = vpop.f32.mrf.mxu0
        %5068 = vdwg.mxu0
        %5069 = vmatprep.subr.mxu0 0.0
        %5070 = vmatpush1.msra.mxu0 %v644
        %5071 = vmatprep.subr.mxu0 0.0
        %5072 = vmatpush1.msra.mxu0 %v643
        %5073 = vmatprep.subr.mxu0 0.0
        %5074 = vmatpush1.msra.mxu0 %v642
        %5075 = vmatprep.subr.mxu0 0.0
        %5076 = vmatpush1.msra.mxu0 %v641
        %5077 = vmatprep.subr.mxu0 0.0
        %5078 = vmatpush1.msra.mxu0 %v640
        %5079 = vmatprep.subr.mxu0 0.0
        %5080 = vmatpush1.msra.mxu0 %v639
        %5081 = vmatprep.subr.mxu0 0.0
        %5082 = vmatpush1.msra.mxu0 %v638
        %5083 = vmatprep.subr.mxu0 0.0
        %5084 = vmatpush1.msra.mxu0 %v637
        %5085 = vmatprep.subr.mxu0 0.0
        %5086 = vmatpush1.msra.mxu0 %v636
        %5087 = vmatprep.subr.mxu0 0.0
        %5088 = vmatpush1.msra.mxu0 %v635
        %5089 = vmatprep.subr.mxu0 0.0
        %5090 = vmatpush1.msra.mxu0 %v634
        %5091 = vmatprep.subr.mxu0 0.0
        %5092 = vmatpush1.msra.mxu0 %v633
        %5093 = vmatprep.subr.mxu0 0.0
        %5094 = vmatpush1.msra.mxu0 %v632
        %5095 = vmatprep.subr.mxu0 0.0
        %5096 = vmatpush1.msra.mxu0 %v631
        %5097 = vmatprep.subr.mxu0 0.0
        %5098 = vmatpush1.msra.mxu0 %v630
        %5099 = vmatprep.subr.mxu0 0.0
        %5100 = vmatpush1.msra.mxu0 %v629
        %5101 = vmatprep.subr.mxu0 0.0
        %5102 = vmatpush2.msra.mxu0 0.0
        %5103 = vmatprep.subr.mxu0 0.0
        %5104 = vmatpush2.msra.mxu0 0.0
        %5105 = vmatprep.subr.mxu0 0.0
        %5106 = vmatpush2.msra.mxu0 0.0
        %5107 = vmatprep.subr.mxu0 0.0
        %5108 = vmatpush2.msra.mxu0 0.0
        %5109 = vmatprep.subr.mxu0 0.0
        %5110 = vmatpush2.msra.mxu0 0.0
        %5111 = vmatprep.subr.mxu0 0.0
        %5112 = vmatpush2.msra.mxu0 0.0
        %5113 = vmatprep.subr.mxu0 0.0
        %5114 = vmatpush2.msra.mxu0 0.0
        %5115 = vmatprep.subr.mxu0 0.0
        %5116 = vmatpush2.msra.mxu0 0.0
        %5117 = vmatprep.subr.mxu0 0.0
        %5118 = vmatpush2.msra.mxu0 0.0
        %5119 = vmatprep.subr.mxu0 0.0
        %5120 = vmatpush2.msra.mxu0 0.0
        %5121 = vmatprep.subr.mxu0 0.0
        %5122 = vmatpush2.msra.mxu0 0.0
        %5123 = vmatprep.subr.mxu0 0.0
        %5124 = vmatpush2.msra.mxu0 0.0
        %5125 = vmatprep.subr.mxu0 0.0
        %5126 = vmatpush2.msra.mxu0 0.0
        %5127 = vmatprep.subr.mxu0 0.0
        %5128 = vmatpush2.msra.mxu0 0.0
        %5129 = vmatprep.subr.mxu0 0.0
        %5130 = vmatpush2.msra.mxu0 0.0
        %5131 = vmatprep.subr.mxu0 0.0
        %5132 = vmatpush2.msra.mxu0 0.0
        %5133 = vmatprep.mubr.f32.mxu0 0.0
        %5134 = vmatmul.mubr.f32.gmra.mxu0 %v5066
        %v5135 = vpop.f32.mrf.mxu0
        %v5136 = vadd.f32 0.0, %v5135
        %v5137 = vpop.f32.mrf.mxu0
        %5138 = vdwg.mxu0
        %v5139 = vadd.f32 %v4983, %v5136
        %v5140 = vtanh.pop %v5139
        %v5141 = vmul.f32 %v4997, %v4400
        %v5142 = vsub.f32 1.0, %v4997
        %v5143 = vmul.f32 %v5142, %v5140
        %v5144 = vadd.f32 %v5141, %v5143
        %s5145 = scalar_lea.vmem %s365, 48 [#allocation5]
        %v5146 = vld [vmem:[%s5145] sm:$0xff]
        %5147 = vmatprep.subr.mxu0 0.0
        %5148 = vmatpush1.msra.mxu0 0.0
        %5149 = vmatprep.subr.mxu0 0.0
        %5150 = vmatpush1.msra.mxu0 0.0
        %5151 = vmatprep.subr.mxu0 0.0
        %5152 = vmatpush1.msra.mxu0 0.0
        %5153 = vmatprep.subr.mxu0 0.0
        %5154 = vmatpush1.msra.mxu0 0.0
        %5155 = vmatprep.subr.mxu0 0.0
        %5156 = vmatpush1.msra.mxu0 0.0
        %5157 = vmatprep.subr.mxu0 0.0
        %5158 = vmatpush1.msra.mxu0 0.0
        %5159 = vmatprep.subr.mxu0 0.0
        %5160 = vmatpush1.msra.mxu0 0.0
        %5161 = vmatprep.subr.mxu0 0.0
        %5162 = vmatpush1.msra.mxu0 0.0
        %5163 = vmatprep.subr.mxu0 0.0
        %5164 = vmatpush1.msra.mxu0 0.0
        %5165 = vmatprep.subr.mxu0 0.0
        %5166 = vmatpush1.msra.mxu0 0.0
        %5167 = vmatprep.subr.mxu0 0.0
        %5168 = vmatpush1.msra.mxu0 0.0
        %5169 = vmatprep.subr.mxu0 0.0
        %5170 = vmatpush1.msra.mxu0 0.0
        %5171 = vmatprep.subr.mxu0 0.0
        %5172 = vmatpush1.msra.mxu0 0.0
        %5173 = vmatprep.subr.mxu0 0.0
        %5174 = vmatpush1.msra.mxu0 0.0
        %5175 = vmatprep.subr.mxu0 0.0
        %5176 = vmatpush1.msra.mxu0 0.0
        %5177 = vmatprep.subr.mxu0 %v4773
        %5178 = vmatpush1.msra.mxu0 %v5146
        %5179 = vmatprep.subr.mxu0 0.0
        %5180 = vmatpush2.msra.mxu0 0.0
        %5181 = vmatprep.subr.mxu0 0.0
        %5182 = vmatpush2.msra.mxu0 0.0
        %5183 = vmatprep.subr.mxu0 0.0
        %5184 = vmatpush2.msra.mxu0 0.0
        %5185 = vmatprep.subr.mxu0 0.0
        %5186 = vmatpush2.msra.mxu0 0.0
        %5187 = vmatprep.subr.mxu0 0.0
        %5188 = vmatpush2.msra.mxu0 0.0
        %5189 = vmatprep.subr.mxu0 0.0
        %5190 = vmatpush2.msra.mxu0 0.0
        %5191 = vmatprep.subr.mxu0 0.0
        %5192 = vmatpush2.msra.mxu0 0.0
        %5193 = vmatprep.subr.mxu0 0.0
        %5194 = vmatpush2.msra.mxu0 0.0
        %5195 = vmatprep.subr.mxu0 0.0
        %5196 = vmatpush2.msra.mxu0 0.0
        %5197 = vmatprep.subr.mxu0 0.0
        %5198 = vmatpush2.msra.mxu0 0.0
        %5199 = vmatprep.subr.mxu0 0.0
        %5200 = vmatpush2.msra.mxu0 0.0
        %5201 = vmatprep.subr.mxu0 0.0
        %5202 = vmatpush2.msra.mxu0 0.0
        %5203 = vmatprep.subr.mxu0 0.0
        %5204 = vmatpush2.msra.mxu0 0.0
        %5205 = vmatprep.subr.mxu0 0.0
        %5206 = vmatpush2.msra.mxu0 0.0
        %5207 = vmatprep.subr.mxu0 0.0
        %5208 = vmatpush2.msra.mxu0 0.0
        %5209 = vmatprep.subr.mxu0 0.0
        %5210 = vmatpush2.msra.mxu0 0.0
        %5211 = vmatprep.mubr.f32.mxu0 0.0
        %5212 = vmatmul.mubr.f32.gmra.mxu0 %v649
        %v5213 = vpop.f32.mrf.mxu0
        %v5214 = vadd.f32 0.0, %v5213
        %v5215 = vpop.f32.mrf.mxu0
        %v5216 = vadd.f32 0.0, %v5215
        %5217 = vdwg.mxu0
        %5218 = vmatprep.subr.mxu0 %v466
        %5219 = vmatpush1.msra.mxu0 %v465
        %5220 = vmatprep.subr.mxu0 %v463
        %5221 = vmatpush1.msra.mxu0 %v462
        %5222 = vmatprep.subr.mxu0 %v460
        %5223 = vmatpush1.msra.mxu0 %v459
        %5224 = vmatprep.subr.mxu0 %v457
        %5225 = vmatpush1.msra.mxu0 %v456
        %5226 = vmatprep.subr.mxu0 %v454
        %5227 = vmatpush1.msra.mxu0 %v453
        %5228 = vmatprep.subr.mxu0 %v451
        %5229 = vmatpush1.msra.mxu0 %v450
        %5230 = vmatprep.subr.mxu0 %v448
        %5231 = vmatpush1.msra.mxu0 %v447
        %5232 = vmatprep.subr.mxu0 %v445
        %5233 = vmatpush1.msra.mxu0 %v444
        %5234 = vmatprep.subr.mxu0 %v442
        %5235 = vmatpush1.msra.mxu0 %v441
        %5236 = vmatprep.subr.mxu0 %v439
        %5237 = vmatpush1.msra.mxu0 %v438
        %5238 = vmatprep.subr.mxu0 %v436
        %5239 = vmatpush1.msra.mxu0 %v435
        %5240 = vmatprep.subr.mxu0 %v433
        %5241 = vmatpush1.msra.mxu0 %v432
        %5242 = vmatprep.subr.mxu0 %v430
        %5243 = vmatpush1.msra.mxu0 %v429
        %5244 = vmatprep.subr.mxu0 %v427
        %5245 = vmatpush1.msra.mxu0 %v426
        %5246 = vmatprep.subr.mxu0 %v424
        %5247 = vmatpush1.msra.mxu0 %v423
        %5248 = vmatprep.subr.mxu0 %v421
        %5249 = vmatpush1.msra.mxu0 %v420
        %5250 = vmatprep.subr.mxu0 %v514
        %5251 = vmatpush2.msra.mxu0 %v513
        %5252 = vmatprep.subr.mxu0 %v511
        %5253 = vmatpush2.msra.mxu0 %v510
        %5254 = vmatprep.subr.mxu0 %v508
        %5255 = vmatpush2.msra.mxu0 %v507
        %5256 = vmatprep.subr.mxu0 %v505
        %5257 = vmatpush2.msra.mxu0 %v504
        %5258 = vmatprep.subr.mxu0 %v502
        %5259 = vmatpush2.msra.mxu0 %v501
        %5260 = vmatprep.subr.mxu0 %v499
        %5261 = vmatpush2.msra.mxu0 %v498
        %5262 = vmatprep.subr.mxu0 %v496
        %5263 = vmatpush2.msra.mxu0 %v495
        %5264 = vmatprep.subr.mxu0 %v493
        %5265 = vmatpush2.msra.mxu0 %v492
        %5266 = vmatprep.subr.mxu0 %v490
        %5267 = vmatpush2.msra.mxu0 %v489
        %5268 = vmatprep.subr.mxu0 %v487
        %5269 = vmatpush2.msra.mxu0 %v486
        %5270 = vmatprep.subr.mxu0 %v484
        %5271 = vmatpush2.msra.mxu0 %v483
        %5272 = vmatprep.subr.mxu0 %v481
        %5273 = vmatpush2.msra.mxu0 %v480
        %5274 = vmatprep.subr.mxu0 %v478
        %5275 = vmatpush2.msra.mxu0 %v477
        %5276 = vmatprep.subr.mxu0 %v475
        %5277 = vmatpush2.msra.mxu0 %v474
        %5278 = vmatprep.subr.mxu0 %v472
        %5279 = vmatpush2.msra.mxu0 %v471
        %5280 = vmatprep.subr.mxu0 %v469
        %5281 = vmatpush2.msra.mxu0 %v468
        %5282 = vmatprep.mubr.f32.mxu0 %v5216
        %5283 = vmatmul.mubr.f32.gmra.mxu0 %v5214
        %v5284 = vpop.f32.mrf.mxu0
        %v5285 = vadd.f32 %v726, %v5284
        %v5286 = vpop.f32.mrf.mxu0
        %v5287 = vadd.f32 %v730, %v5286
        %5288 = vdwg.mxu0
        %5289 = vmatprep.subr.mxu0 0.0
        %5290 = vmatpush1.msra.mxu0 %v467
        %5291 = vmatprep.subr.mxu0 0.0
        %5292 = vmatpush1.msra.mxu0 %v464
        %5293 = vmatprep.subr.mxu0 0.0
        %5294 = vmatpush1.msra.mxu0 %v461
        %5295 = vmatprep.subr.mxu0 0.0
        %5296 = vmatpush1.msra.mxu0 %v458
        %5297 = vmatprep.subr.mxu0 0.0
        %5298 = vmatpush1.msra.mxu0 %v455
        %5299 = vmatprep.subr.mxu0 0.0
        %5300 = vmatpush1.msra.mxu0 %v452
        %5301 = vmatprep.subr.mxu0 0.0
        %5302 = vmatpush1.msra.mxu0 %v449
        %5303 = vmatprep.subr.mxu0 0.0
        %5304 = vmatpush1.msra.mxu0 %v446
        %5305 = vmatprep.subr.mxu0 0.0
        %5306 = vmatpush1.msra.mxu0 %v443
        %5307 = vmatprep.subr.mxu0 0.0
        %5308 = vmatpush1.msra.mxu0 %v440
        %5309 = vmatprep.subr.mxu0 0.0
        %5310 = vmatpush1.msra.mxu0 %v437
        %5311 = vmatprep.subr.mxu0 0.0
        %5312 = vmatpush1.msra.mxu0 %v434
        %5313 = vmatprep.subr.mxu0 0.0
        %5314 = vmatpush1.msra.mxu0 %v431
        %5315 = vmatprep.subr.mxu0 0.0
        %5316 = vmatpush1.msra.mxu0 %v428
        %5317 = vmatprep.subr.mxu0 0.0
        %5318 = vmatpush1.msra.mxu0 %v425
        %5319 = vmatprep.subr.mxu0 0.0
        %5320 = vmatpush1.msra.mxu0 %v422
        %5321 = vmatprep.subr.mxu0 0.0
        %5322 = vmatpush2.msra.mxu0 %v515
        %5323 = vmatprep.subr.mxu0 0.0
        %5324 = vmatpush2.msra.mxu0 %v512
        %5325 = vmatprep.subr.mxu0 0.0
        %5326 = vmatpush2.msra.mxu0 %v509
        %5327 = vmatprep.subr.mxu0 0.0
        %5328 = vmatpush2.msra.mxu0 %v506
        %5329 = vmatprep.subr.mxu0 0.0
        %5330 = vmatpush2.msra.mxu0 %v503
        %5331 = vmatprep.subr.mxu0 0.0
        %5332 = vmatpush2.msra.mxu0 %v500
        %5333 = vmatprep.subr.mxu0 0.0
        %5334 = vmatpush2.msra.mxu0 %v497
        %5335 = vmatprep.subr.mxu0 0.0
        %5336 = vmatpush2.msra.mxu0 %v494
        %5337 = vmatprep.subr.mxu0 0.0
        %5338 = vmatpush2.msra.mxu0 %v491
        %5339 = vmatprep.subr.mxu0 0.0
        %5340 = vmatpush2.msra.mxu0 %v488
        %5341 = vmatprep.subr.mxu0 0.0
        %5342 = vmatpush2.msra.mxu0 %v485
        %5343 = vmatprep.subr.mxu0 0.0
        %5344 = vmatpush2.msra.mxu0 %v482
        %5345 = vmatprep.subr.mxu0 0.0
        %5346 = vmatpush2.msra.mxu0 %v479
        %5347 = vmatprep.subr.mxu0 0.0
        %5348 = vmatpush2.msra.mxu0 %v476
        %5349 = vmatprep.subr.mxu0 0.0
        %5350 = vmatpush2.msra.mxu0 %v473
        %5351 = vmatprep.subr.mxu0 0.0
        %5352 = vmatpush2.msra.mxu0 %v470
        %5353 = vmatprep.mubr.f32.mxu0 %v5216
        %5354 = vmatmul.mubr.f32.gmra.mxu0 %v5214
        %v5355 = vpop.f32.mrf.mxu0
        %v5356 = vadd.f32 %v734, %v5355
        %v5357 = vpop.f32.mrf.mxu0
        %5358 = vdwg.mxu0
        %v5359 = vxor.u32 %v5285, 2147483648
        %v5360 = vmul.f32 %v5359, 1.442695
        %v5361 = vpow.pop %v5360
        %v5362 = vadd.f32 %v5361, 1.0
        %v5363 = vrcp.pop %v5362
        %v5364 = vmul.f32 1.0, %v5363
        %v5365 = vxor.u32 %v5287, 2147483648
        %v5366 = vmul.f32 %v5365, 1.442695
        %v5367 = vpow.pop %v5366
        %v5368 = vadd.f32 %v5367, 1.0
        %v5369 = vrcp.pop %v5368
        %v5370 = vmul.f32 1.0, %v5369
        %v5371 = vmul.f32 %v5364, %v4773
        %5372 = vmatprep.subr.mxu0 0.0
        %5373 = vmatpush1.msra.mxu0 0.0
        %5374 = vmatprep.subr.mxu0 0.0
        %5375 = vmatpush1.msra.mxu0 0.0
        %5376 = vmatprep.subr.mxu0 0.0
        %5377 = vmatpush1.msra.mxu0 0.0
        %5378 = vmatprep.subr.mxu0 0.0
        %5379 = vmatpush1.msra.mxu0 0.0
        %5380 = vmatprep.subr.mxu0 0.0
        %5381 = vmatpush1.msra.mxu0 0.0
        %5382 = vmatprep.subr.mxu0 0.0
        %5383 = vmatpush1.msra.mxu0 0.0
        %5384 = vmatprep.subr.mxu0 0.0
        %5385 = vmatpush1.msra.mxu0 0.0
        %5386 = vmatprep.subr.mxu0 0.0
        %5387 = vmatpush1.msra.mxu0 0.0
        %5388 = vmatprep.subr.mxu0 0.0
        %5389 = vmatpush1.msra.mxu0 0.0
        %5390 = vmatprep.subr.mxu0 0.0
        %5391 = vmatpush1.msra.mxu0 0.0
        %5392 = vmatprep.subr.mxu0 0.0
        %5393 = vmatpush1.msra.mxu0 0.0
        %5394 = vmatprep.subr.mxu0 0.0
        %5395 = vmatpush1.msra.mxu0 0.0
        %5396 = vmatprep.subr.mxu0 0.0
        %5397 = vmatpush1.msra.mxu0 0.0
        %5398 = vmatprep.subr.mxu0 0.0
        %5399 = vmatpush1.msra.mxu0 0.0
        %5400 = vmatprep.subr.mxu0 0.0
        %5401 = vmatpush1.msra.mxu0 0.0
        %5402 = vmatprep.subr.mxu0 0.0
        %5403 = vmatpush1.msra.mxu0 %v5371
        %5404 = vmatprep.subr.mxu0 0.0
        %5405 = vmatpush2.msra.mxu0 0.0
        %5406 = vmatprep.subr.mxu0 0.0
        %5407 = vmatpush2.msra.mxu0 0.0
        %5408 = vmatprep.subr.mxu0 0.0
        %5409 = vmatpush2.msra.mxu0 0.0
        %5410 = vmatprep.subr.mxu0 0.0
        %5411 = vmatpush2.msra.mxu0 0.0
        %5412 = vmatprep.subr.mxu0 0.0
        %5413 = vmatpush2.msra.mxu0 0.0
        %5414 = vmatprep.subr.mxu0 0.0
        %5415 = vmatpush2.msra.mxu0 0.0
        %5416 = vmatprep.subr.mxu0 0.0
        %5417 = vmatpush2.msra.mxu0 0.0
        %5418 = vmatprep.subr.mxu0 0.0
        %5419 = vmatpush2.msra.mxu0 0.0
        %5420 = vmatprep.subr.mxu0 0.0
        %5421 = vmatpush2.msra.mxu0 0.0
        %5422 = vmatprep.subr.mxu0 0.0
        %5423 = vmatpush2.msra.mxu0 0.0
        %5424 = vmatprep.subr.mxu0 0.0
        %5425 = vmatpush2.msra.mxu0 0.0
        %5426 = vmatprep.subr.mxu0 0.0
        %5427 = vmatpush2.msra.mxu0 0.0
        %5428 = vmatprep.subr.mxu0 0.0
        %5429 = vmatpush2.msra.mxu0 0.0
        %5430 = vmatprep.subr.mxu0 0.0
        %5431 = vmatpush2.msra.mxu0 0.0
        %5432 = vmatprep.subr.mxu0 0.0
        %5433 = vmatpush2.msra.mxu0 0.0
        %5434 = vmatprep.subr.mxu0 0.0
        %5435 = vmatpush2.msra.mxu0 0.0
        %5436 = vmatprep.mubr.f32.mxu0 0.0
        %5437 = vmatmul.mubr.f32.gmra.mxu0 %v649
        %v5438 = vpop.f32.mrf.mxu0
        %v5439 = vadd.f32 0.0, %v5438
        %v5440 = vpop.f32.mrf.mxu0
        %5441 = vdwg.mxu0
        %5442 = vmatprep.subr.mxu0 0.0
        %5443 = vmatpush1.msra.mxu0 %v531
        %5444 = vmatprep.subr.mxu0 0.0
        %5445 = vmatpush1.msra.mxu0 %v530
        %5446 = vmatprep.subr.mxu0 0.0
        %5447 = vmatpush1.msra.mxu0 %v529
        %5448 = vmatprep.subr.mxu0 0.0
        %5449 = vmatpush1.msra.mxu0 %v528
        %5450 = vmatprep.subr.mxu0 0.0
        %5451 = vmatpush1.msra.mxu0 %v527
        %5452 = vmatprep.subr.mxu0 0.0
        %5453 = vmatpush1.msra.mxu0 %v526
        %5454 = vmatprep.subr.mxu0 0.0
        %5455 = vmatpush1.msra.mxu0 %v525
        %5456 = vmatprep.subr.mxu0 0.0
        %5457 = vmatpush1.msra.mxu0 %v524
        %5458 = vmatprep.subr.mxu0 0.0
        %5459 = vmatpush1.msra.mxu0 %v523
        %5460 = vmatprep.subr.mxu0 0.0
        %5461 = vmatpush1.msra.mxu0 %v522
        %5462 = vmatprep.subr.mxu0 0.0
        %5463 = vmatpush1.msra.mxu0 %v521
        %5464 = vmatprep.subr.mxu0 0.0
        %5465 = vmatpush1.msra.mxu0 %v520
        %5466 = vmatprep.subr.mxu0 0.0
        %5467 = vmatpush1.msra.mxu0 %v519
        %5468 = vmatprep.subr.mxu0 0.0
        %5469 = vmatpush1.msra.mxu0 %v518
        %5470 = vmatprep.subr.mxu0 0.0
        %5471 = vmatpush1.msra.mxu0 %v517
        %5472 = vmatprep.subr.mxu0 0.0
        %5473 = vmatpush1.msra.mxu0 %v516
        %5474 = vmatprep.subr.mxu0 0.0
        %5475 = vmatpush2.msra.mxu0 0.0
        %5476 = vmatprep.subr.mxu0 0.0
        %5477 = vmatpush2.msra.mxu0 0.0
        %5478 = vmatprep.subr.mxu0 0.0
        %5479 = vmatpush2.msra.mxu0 0.0
        %5480 = vmatprep.subr.mxu0 0.0
        %5481 = vmatpush2.msra.mxu0 0.0
        %5482 = vmatprep.subr.mxu0 0.0
        %5483 = vmatpush2.msra.mxu0 0.0
        %5484 = vmatprep.subr.mxu0 0.0
        %5485 = vmatpush2.msra.mxu0 0.0
        %5486 = vmatprep.subr.mxu0 0.0
        %5487 = vmatpush2.msra.mxu0 0.0
        %5488 = vmatprep.subr.mxu0 0.0
        %5489 = vmatpush2.msra.mxu0 0.0
        %5490 = vmatprep.subr.mxu0 0.0
        %5491 = vmatpush2.msra.mxu0 0.0
        %5492 = vmatprep.subr.mxu0 0.0
        %5493 = vmatpush2.msra.mxu0 0.0
        %5494 = vmatprep.subr.mxu0 0.0
        %5495 = vmatpush2.msra.mxu0 0.0
        %5496 = vmatprep.subr.mxu0 0.0
        %5497 = vmatpush2.msra.mxu0 0.0
        %5498 = vmatprep.subr.mxu0 0.0
        %5499 = vmatpush2.msra.mxu0 0.0
        %5500 = vmatprep.subr.mxu0 0.0
        %5501 = vmatpush2.msra.mxu0 0.0
        %5502 = vmatprep.subr.mxu0 0.0
        %5503 = vmatpush2.msra.mxu0 0.0
        %5504 = vmatprep.subr.mxu0 0.0
        %5505 = vmatpush2.msra.mxu0 0.0
        %5506 = vmatprep.mubr.f32.mxu0 0.0
        %5507 = vmatmul.mubr.f32.gmra.mxu0 %v5439
        %v5508 = vpop.f32.mrf.mxu0
        %v5509 = vadd.f32 0.0, %v5508
        %v5510 = vpop.f32.mrf.mxu0
        %5511 = vdwg.mxu0
        %v5512 = vadd.f32 %v5356, %v5509
        %v5513 = vtanh.pop %v5512
        %v5514 = vmul.f32 %v5370, %v4773
        %v5515 = vsub.f32 1.0, %v5370
        %v5516 = vmul.f32 %v5515, %v5513
        %v5517 = vadd.f32 %v5514, %v5516
        %5518 = vmatprep.subr.mxu0 0.0
        %5519 = vmatpush1.msra.mxu0 0.0
        %5520 = vmatprep.subr.mxu0 0.0
        %5521 = vmatpush1.msra.mxu0 0.0
        %5522 = vmatprep.subr.mxu0 0.0
        %5523 = vmatpush1.msra.mxu0 0.0
        %5524 = vmatprep.subr.mxu0 0.0
        %5525 = vmatpush1.msra.mxu0 0.0
        %5526 = vmatprep.subr.mxu0 0.0
        %5527 = vmatpush1.msra.mxu0 0.0
        %5528 = vmatprep.subr.mxu0 0.0
        %5529 = vmatpush1.msra.mxu0 0.0
        %5530 = vmatprep.subr.mxu0 0.0
        %5531 = vmatpush1.msra.mxu0 0.0
        %5532 = vmatprep.subr.mxu0 0.0
        %5533 = vmatpush1.msra.mxu0 0.0
        %5534 = vmatprep.subr.mxu0 0.0
        %5535 = vmatpush1.msra.mxu0 0.0
        %5536 = vmatprep.subr.mxu0 0.0
        %5537 = vmatpush1.msra.mxu0 0.0
        %5538 = vmatprep.subr.mxu0 0.0
        %5539 = vmatpush1.msra.mxu0 0.0
        %5540 = vmatprep.subr.mxu0 0.0
        %5541 = vmatpush1.msra.mxu0 0.0
        %5542 = vmatprep.subr.mxu0 0.0
        %5543 = vmatpush1.msra.mxu0 0.0
        %5544 = vmatprep.subr.mxu0 0.0
        %5545 = vmatpush1.msra.mxu0 0.0
        %5546 = vmatprep.subr.mxu0 0.0
        %5547 = vmatpush1.msra.mxu0 0.0
        %5548 = vmatprep.subr.mxu0 %v5144
        %5549 = vmatpush1.msra.mxu0 %v5517
        %5550 = vmatprep.subr.mxu0 0.0
        %5551 = vmatpush2.msra.mxu0 0.0
        %5552 = vmatprep.subr.mxu0 0.0
        %5553 = vmatpush2.msra.mxu0 0.0
        %5554 = vmatprep.subr.mxu0 0.0
        %5555 = vmatpush2.msra.mxu0 0.0
        %5556 = vmatprep.subr.mxu0 0.0
        %5557 = vmatpush2.msra.mxu0 0.0
        %5558 = vmatprep.subr.mxu0 0.0
        %5559 = vmatpush2.msra.mxu0 0.0
        %5560 = vmatprep.subr.mxu0 0.0
        %5561 = vmatpush2.msra.mxu0 0.0
        %5562 = vmatprep.subr.mxu0 0.0
        %5563 = vmatpush2.msra.mxu0 0.0
        %5564 = vmatprep.subr.mxu0 0.0
        %5565 = vmatpush2.msra.mxu0 0.0
        %5566 = vmatprep.subr.mxu0 0.0
        %5567 = vmatpush2.msra.mxu0 0.0
        %5568 = vmatprep.subr.mxu0 0.0
        %5569 = vmatpush2.msra.mxu0 0.0
        %5570 = vmatprep.subr.mxu0 0.0
        %5571 = vmatpush2.msra.mxu0 0.0
        %5572 = vmatprep.subr.mxu0 0.0
        %5573 = vmatpush2.msra.mxu0 0.0
        %5574 = vmatprep.subr.mxu0 0.0
        %5575 = vmatpush2.msra.mxu0 0.0
        %5576 = vmatprep.subr.mxu0 0.0
        %5577 = vmatpush2.msra.mxu0 0.0
        %5578 = vmatprep.subr.mxu0 0.0
        %5579 = vmatpush2.msra.mxu0 0.0
        %5580 = vmatprep.subr.mxu0 0.0
        %5581 = vmatpush2.msra.mxu0 0.0
        %5582 = vmatprep.mubr.f32.mxu0 0.0
        %5583 = vmatmul.mubr.f32.gmra.mxu0 %v649
        %v5584 = vpop.f32.mrf.mxu0
        %v5585 = vadd.f32 0.0, %v5584
        %v5586 = vpop.f32.mrf.mxu0
        %v5587 = vadd.f32 0.0, %v5586
        %5588 = vdwg.mxu0
        %5589 = vmatprep.subr.mxu0 %v579
        %5590 = vmatpush1.msra.mxu0 %v578
        %5591 = vmatprep.subr.mxu0 %v576
        %5592 = vmatpush1.msra.mxu0 %v575
        %5593 = vmatprep.subr.mxu0 %v573
        %5594 = vmatpush1.msra.mxu0 %v572
        %5595 = vmatprep.subr.mxu0 %v570
        %5596 = vmatpush1.msra.mxu0 %v569
        %5597 = vmatprep.subr.mxu0 %v567
        %5598 = vmatpush1.msra.mxu0 %v566
        %5599 = vmatprep.subr.mxu0 %v564
        %5600 = vmatpush1.msra.mxu0 %v563
        %5601 = vmatprep.subr.mxu0 %v561
        %5602 = vmatpush1.msra.mxu0 %v560
        %5603 = vmatprep.subr.mxu0 %v558
        %5604 = vmatpush1.msra.mxu0 %v557
        %5605 = vmatprep.subr.mxu0 %v555
        %5606 = vmatpush1.msra.mxu0 %v554
        %5607 = vmatprep.subr.mxu0 %v552
        %5608 = vmatpush1.msra.mxu0 %v551
        %5609 = vmatprep.subr.mxu0 %v549
        %5610 = vmatpush1.msra.mxu0 %v548
        %5611 = vmatprep.subr.mxu0 %v546
        %5612 = vmatpush1.msra.mxu0 %v545
        %5613 = vmatprep.subr.mxu0 %v543
        %5614 = vmatpush1.msra.mxu0 %v542
        %5615 = vmatprep.subr.mxu0 %v540
        %5616 = vmatpush1.msra.mxu0 %v539
        %5617 = vmatprep.subr.mxu0 %v537
        %5618 = vmatpush1.msra.mxu0 %v536
        %5619 = vmatprep.subr.mxu0 %v534
        %5620 = vmatpush1.msra.mxu0 %v533
        %5621 = vmatprep.subr.mxu0 %v627
        %5622 = vmatpush2.msra.mxu0 %v626
        %5623 = vmatprep.subr.mxu0 %v624
        %5624 = vmatpush2.msra.mxu0 %v623
        %5625 = vmatprep.subr.mxu0 %v621
        %5626 = vmatpush2.msra.mxu0 %v620
        %5627 = vmatprep.subr.mxu0 %v618
        %5628 = vmatpush2.msra.mxu0 %v617
        %5629 = vmatprep.subr.mxu0 %v615
        %5630 = vmatpush2.msra.mxu0 %v614
        %5631 = vmatprep.subr.mxu0 %v612
        %5632 = vmatpush2.msra.mxu0 %v611
        %5633 = vmatprep.subr.mxu0 %v609
        %5634 = vmatpush2.msra.mxu0 %v608
        %5635 = vmatprep.subr.mxu0 %v606
        %5636 = vmatpush2.msra.mxu0 %v605
        %5637 = vmatprep.subr.mxu0 %v603
        %5638 = vmatpush2.msra.mxu0 %v602
        %5639 = vmatprep.subr.mxu0 %v600
        %5640 = vmatpush2.msra.mxu0 %v599
        %5641 = vmatprep.subr.mxu0 %v597
        %5642 = vmatpush2.msra.mxu0 %v596
        %5643 = vmatprep.subr.mxu0 %v594
        %5644 = vmatpush2.msra.mxu0 %v593
        %5645 = vmatprep.subr.mxu0 %v591
        %5646 = vmatpush2.msra.mxu0 %v590
        %5647 = vmatprep.subr.mxu0 %v588
        %5648 = vmatpush2.msra.mxu0 %v587
        %5649 = vmatprep.subr.mxu0 %v585
        %5650 = vmatpush2.msra.mxu0 %v584
        %5651 = vmatprep.subr.mxu0 %v582
        %5652 = vmatpush2.msra.mxu0 %v581
        %5653 = vmatprep.mubr.f32.mxu0 %v5587
        %5654 = vmatmul.mubr.f32.gmra.mxu0 %v5585
        %v5655 = vpop.f32.mrf.mxu0
        %v5656 = vadd.f32 %v1113, %v5655
        %v5657 = vpop.f32.mrf.mxu0
        %v5658 = vadd.f32 %v1117, %v5657
        %5659 = vdwg.mxu0
        %5660 = vmatprep.subr.mxu0 0.0
        %5661 = vmatpush1.msra.mxu0 %v580
        %5662 = vmatprep.subr.mxu0 0.0
        %5663 = vmatpush1.msra.mxu0 %v577
        %5664 = vmatprep.subr.mxu0 0.0
        %5665 = vmatpush1.msra.mxu0 %v574
        %5666 = vmatprep.subr.mxu0 0.0
        %5667 = vmatpush1.msra.mxu0 %v571
        %5668 = vmatprep.subr.mxu0 0.0
        %5669 = vmatpush1.msra.mxu0 %v568
        %5670 = vmatprep.subr.mxu0 0.0
        %5671 = vmatpush1.msra.mxu0 %v565
        %5672 = vmatprep.subr.mxu0 0.0
        %5673 = vmatpush1.msra.mxu0 %v562
        %5674 = vmatprep.subr.mxu0 0.0
        %5675 = vmatpush1.msra.mxu0 %v559
        %5676 = vmatprep.subr.mxu0 0.0
        %5677 = vmatpush1.msra.mxu0 %v556
        %5678 = vmatprep.subr.mxu0 0.0
        %5679 = vmatpush1.msra.mxu0 %v553
        %5680 = vmatprep.subr.mxu0 0.0
        %5681 = vmatpush1.msra.mxu0 %v550
        %5682 = vmatprep.subr.mxu0 0.0
        %5683 = vmatpush1.msra.mxu0 %v547
        %5684 = vmatprep.subr.mxu0 0.0
        %5685 = vmatpush1.msra.mxu0 %v544
        %5686 = vmatprep.subr.mxu0 0.0
        %5687 = vmatpush1.msra.mxu0 %v541
        %5688 = vmatprep.subr.mxu0 0.0
        %5689 = vmatpush1.msra.mxu0 %v538
        %5690 = vmatprep.subr.mxu0 0.0
        %5691 = vmatpush1.msra.mxu0 %v535
        %5692 = vmatprep.subr.mxu0 0.0
        %5693 = vmatpush2.msra.mxu0 %v628
        %5694 = vmatprep.subr.mxu0 0.0
        %5695 = vmatpush2.msra.mxu0 %v625
        %5696 = vmatprep.subr.mxu0 0.0
        %5697 = vmatpush2.msra.mxu0 %v622
        %5698 = vmatprep.subr.mxu0 0.0
        %5699 = vmatpush2.msra.mxu0 %v619
        %5700 = vmatprep.subr.mxu0 0.0
        %5701 = vmatpush2.msra.mxu0 %v616
        %5702 = vmatprep.subr.mxu0 0.0
        %5703 = vmatpush2.msra.mxu0 %v613
        %5704 = vmatprep.subr.mxu0 0.0
        %5705 = vmatpush2.msra.mxu0 %v610
        %5706 = vmatprep.subr.mxu0 0.0
        %5707 = vmatpush2.msra.mxu0 %v607
        %5708 = vmatprep.subr.mxu0 0.0
        %5709 = vmatpush2.msra.mxu0 %v604
        %5710 = vmatprep.subr.mxu0 0.0
        %5711 = vmatpush2.msra.mxu0 %v601
        %5712 = vmatprep.subr.mxu0 0.0
        %5713 = vmatpush2.msra.mxu0 %v598
        %5714 = vmatprep.subr.mxu0 0.0
        %5715 = vmatpush2.msra.mxu0 %v595
        %5716 = vmatprep.subr.mxu0 0.0
        %5717 = vmatpush2.msra.mxu0 %v592
        %5718 = vmatprep.subr.mxu0 0.0
        %5719 = vmatpush2.msra.mxu0 %v589
        %5720 = vmatprep.subr.mxu0 0.0
        %5721 = vmatpush2.msra.mxu0 %v586
        %5722 = vmatprep.subr.mxu0 0.0
        %5723 = vmatpush2.msra.mxu0 %v583
        %5724 = vmatprep.mubr.f32.mxu0 %v5587
        %5725 = vmatmul.mubr.f32.gmra.mxu0 %v5585
        %v5726 = vpop.f32.mrf.mxu0
        %v5727 = vadd.f32 %v1121, %v5726
        %v5728 = vpop.f32.mrf.mxu0
        %5729 = vdwg.mxu0
        %v5730 = vxor.u32 %v5656, 2147483648
        %v5731 = vmul.f32 %v5730, 1.442695
        %v5732 = vpow.pop %v5731
        %v5733 = vadd.f32 %v5732, 1.0
        %v5734 = vrcp.pop %v5733
        %v5735 = vmul.f32 1.0, %v5734
        %v5736 = vxor.u32 %v5658, 2147483648
        %v5737 = vmul.f32 %v5736, 1.442695
        %v5738 = vpow.pop %v5737
        %v5739 = vadd.f32 %v5738, 1.0
        %v5740 = vrcp.pop %v5739
        %v5741 = vmul.f32 1.0, %v5740
        %v5742 = vmul.f32 %v5735, %v5144
        %5743 = vmatprep.subr.mxu0 0.0
        %5744 = vmatpush1.msra.mxu0 0.0
        %5745 = vmatprep.subr.mxu0 0.0
        %5746 = vmatpush1.msra.mxu0 0.0
        %5747 = vmatprep.subr.mxu0 0.0
        %5748 = vmatpush1.msra.mxu0 0.0
        %5749 = vmatprep.subr.mxu0 0.0
        %5750 = vmatpush1.msra.mxu0 0.0
        %5751 = vmatprep.subr.mxu0 0.0
        %5752 = vmatpush1.msra.mxu0 0.0
        %5753 = vmatprep.subr.mxu0 0.0
        %5754 = vmatpush1.msra.mxu0 0.0
        %5755 = vmatprep.subr.mxu0 0.0
        %5756 = vmatpush1.msra.mxu0 0.0
        %5757 = vmatprep.subr.mxu0 0.0
        %5758 = vmatpush1.msra.mxu0 0.0
        %5759 = vmatprep.subr.mxu0 0.0
        %5760 = vmatpush1.msra.mxu0 0.0
        %5761 = vmatprep.subr.mxu0 0.0
        %5762 = vmatpush1.msra.mxu0 0.0
        %5763 = vmatprep.subr.mxu0 0.0
        %5764 = vmatpush1.msra.mxu0 0.0
        %5765 = vmatprep.subr.mxu0 0.0
        %5766 = vmatpush1.msra.mxu0 0.0
        %5767 = vmatprep.subr.mxu0 0.0
        %5768 = vmatpush1.msra.mxu0 0.0
        %5769 = vmatprep.subr.mxu0 0.0
        %5770 = vmatpush1.msra.mxu0 0.0
        %5771 = vmatprep.subr.mxu0 0.0
        %5772 = vmatpush1.msra.mxu0 0.0
        %5773 = vmatprep.subr.mxu0 0.0
        %5774 = vmatpush1.msra.mxu0 %v5742
        %5775 = vmatprep.subr.mxu0 0.0
        %5776 = vmatpush2.msra.mxu0 0.0
        %5777 = vmatprep.subr.mxu0 0.0
        %5778 = vmatpush2.msra.mxu0 0.0
        %5779 = vmatprep.subr.mxu0 0.0
        %5780 = vmatpush2.msra.mxu0 0.0
        %5781 = vmatprep.subr.mxu0 0.0
        %5782 = vmatpush2.msra.mxu0 0.0
        %5783 = vmatprep.subr.mxu0 0.0
        %5784 = vmatpush2.msra.mxu0 0.0
        %5785 = vmatprep.subr.mxu0 0.0
        %5786 = vmatpush2.msra.mxu0 0.0
        %5787 = vmatprep.subr.mxu0 0.0
        %5788 = vmatpush2.msra.mxu0 0.0
        %5789 = vmatprep.subr.mxu0 0.0
        %5790 = vmatpush2.msra.mxu0 0.0
        %5791 = vmatprep.subr.mxu0 0.0
        %5792 = vmatpush2.msra.mxu0 0.0
        %5793 = vmatprep.subr.mxu0 0.0
        %5794 = vmatpush2.msra.mxu0 0.0
        %5795 = vmatprep.subr.mxu0 0.0
        %5796 = vmatpush2.msra.mxu0 0.0
        %5797 = vmatprep.subr.mxu0 0.0
        %5798 = vmatpush2.msra.mxu0 0.0
        %5799 = vmatprep.subr.mxu0 0.0
        %5800 = vmatpush2.msra.mxu0 0.0
        %5801 = vmatprep.subr.mxu0 0.0
        %5802 = vmatpush2.msra.mxu0 0.0
        %5803 = vmatprep.subr.mxu0 0.0
        %5804 = vmatpush2.msra.mxu0 0.0
        %5805 = vmatprep.subr.mxu0 0.0
        %5806 = vmatpush2.msra.mxu0 0.0
        %5807 = vmatprep.mubr.f32.mxu0 0.0
        %5808 = vmatmul.mubr.f32.gmra.mxu0 %v649
        %v5809 = vpop.f32.mrf.mxu0
        %v5810 = vadd.f32 0.0, %v5809
        %v5811 = vpop.f32.mrf.mxu0
        %5812 = vdwg.mxu0
        %5813 = vmatprep.subr.mxu0 0.0
        %5814 = vmatpush1.msra.mxu0 %v644
        %5815 = vmatprep.subr.mxu0 0.0
        %5816 = vmatpush1.msra.mxu0 %v643
        %5817 = vmatprep.subr.mxu0 0.0
        %5818 = vmatpush1.msra.mxu0 %v642
        %5819 = vmatprep.subr.mxu0 0.0
        %5820 = vmatpush1.msra.mxu0 %v641
        %5821 = vmatprep.subr.mxu0 0.0
        %5822 = vmatpush1.msra.mxu0 %v640
        %5823 = vmatprep.subr.mxu0 0.0
        %5824 = vmatpush1.msra.mxu0 %v639
        %5825 = vmatprep.subr.mxu0 0.0
        %5826 = vmatpush1.msra.mxu0 %v638
        %5827 = vmatprep.subr.mxu0 0.0
        %5828 = vmatpush1.msra.mxu0 %v637
        %5829 = vmatprep.subr.mxu0 0.0
        %5830 = vmatpush1.msra.mxu0 %v636
        %5831 = vmatprep.subr.mxu0 0.0
        %5832 = vmatpush1.msra.mxu0 %v635
        %5833 = vmatprep.subr.mxu0 0.0
        %5834 = vmatpush1.msra.mxu0 %v634
        %5835 = vmatprep.subr.mxu0 0.0
        %5836 = vmatpush1.msra.mxu0 %v633
        %5837 = vmatprep.subr.mxu0 0.0
        %5838 = vmatpush1.msra.mxu0 %v632
        %5839 = vmatprep.subr.mxu0 0.0
        %5840 = vmatpush1.msra.mxu0 %v631
        %5841 = vmatprep.subr.mxu0 0.0
        %5842 = vmatpush1.msra.mxu0 %v630
        %5843 = vmatprep.subr.mxu0 0.0
        %5844 = vmatpush1.msra.mxu0 %v629
        %5845 = vmatprep.subr.mxu0 0.0
        %5846 = vmatpush2.msra.mxu0 0.0
        %5847 = vmatprep.subr.mxu0 0.0
        %5848 = vmatpush2.msra.mxu0 0.0
        %5849 = vmatprep.subr.mxu0 0.0
        %5850 = vmatpush2.msra.mxu0 0.0
        %5851 = vmatprep.subr.mxu0 0.0
        %5852 = vmatpush2.msra.mxu0 0.0
        %5853 = vmatprep.subr.mxu0 0.0
        %5854 = vmatpush2.msra.mxu0 0.0
        %5855 = vmatprep.subr.mxu0 0.0
        %5856 = vmatpush2.msra.mxu0 0.0
        %5857 = vmatprep.subr.mxu0 0.0
        %5858 = vmatpush2.msra.mxu0 0.0
        %5859 = vmatprep.subr.mxu0 0.0
        %5860 = vmatpush2.msra.mxu0 0.0
        %5861 = vmatprep.subr.mxu0 0.0
        %5862 = vmatpush2.msra.mxu0 0.0
        %5863 = vmatprep.subr.mxu0 0.0
        %5864 = vmatpush2.msra.mxu0 0.0
        %5865 = vmatprep.subr.mxu0 0.0
        %5866 = vmatpush2.msra.mxu0 0.0
        %5867 = vmatprep.subr.mxu0 0.0
        %5868 = vmatpush2.msra.mxu0 0.0
        %5869 = vmatprep.subr.mxu0 0.0
        %5870 = vmatpush2.msra.mxu0 0.0
        %5871 = vmatprep.subr.mxu0 0.0
        %5872 = vmatpush2.msra.mxu0 0.0
        %5873 = vmatprep.subr.mxu0 0.0
        %5874 = vmatpush2.msra.mxu0 0.0
        %5875 = vmatprep.subr.mxu0 0.0
        %5876 = vmatpush2.msra.mxu0 0.0
        %5877 = vmatprep.mubr.f32.mxu0 0.0
        %5878 = vmatmul.mubr.f32.gmra.mxu0 %v5810
        %v5879 = vpop.f32.mrf.mxu0
        %v5880 = vadd.f32 0.0, %v5879
        %v5881 = vpop.f32.mrf.mxu0
        %5882 = vdwg.mxu0
        %v5883 = vadd.f32 %v5727, %v5880
        %v5884 = vtanh.pop %v5883
        %v5885 = vmul.f32 %v5741, %v5144
        %v5886 = vsub.f32 1.0, %v5741
        %v5887 = vmul.f32 %v5886, %v5884
        %v5888 = vadd.f32 %v5885, %v5887
        %s5889 = scalar_lea.vmem %s365, 56 [#allocation5]
        %v5890 = vld [vmem:[%s5889] sm:$0xff]
        %5891 = vmatprep.subr.mxu0 0.0
        %5892 = vmatpush1.msra.mxu0 0.0
        %5893 = vmatprep.subr.mxu0 0.0
        %5894 = vmatpush1.msra.mxu0 0.0
        %5895 = vmatprep.subr.mxu0 0.0
        %5896 = vmatpush1.msra.mxu0 0.0
        %5897 = vmatprep.subr.mxu0 0.0
        %5898 = vmatpush1.msra.mxu0 0.0
        %5899 = vmatprep.subr.mxu0 0.0
        %5900 = vmatpush1.msra.mxu0 0.0
        %5901 = vmatprep.subr.mxu0 0.0
        %5902 = vmatpush1.msra.mxu0 0.0
        %5903 = vmatprep.subr.mxu0 0.0
        %5904 = vmatpush1.msra.mxu0 0.0
        %5905 = vmatprep.subr.mxu0 0.0
        %5906 = vmatpush1.msra.mxu0 0.0
        %5907 = vmatprep.subr.mxu0 0.0
        %5908 = vmatpush1.msra.mxu0 0.0
        %5909 = vmatprep.subr.mxu0 0.0
        %5910 = vmatpush1.msra.mxu0 0.0
        %5911 = vmatprep.subr.mxu0 0.0
        %5912 = vmatpush1.msra.mxu0 0.0
        %5913 = vmatprep.subr.mxu0 0.0
        %5914 = vmatpush1.msra.mxu0 0.0
        %5915 = vmatprep.subr.mxu0 0.0
        %5916 = vmatpush1.msra.mxu0 0.0
        %5917 = vmatprep.subr.mxu0 0.0
        %5918 = vmatpush1.msra.mxu0 0.0
        %5919 = vmatprep.subr.mxu0 0.0
        %5920 = vmatpush1.msra.mxu0 0.0
        %5921 = vmatprep.subr.mxu0 %v5517
        %5922 = vmatpush1.msra.mxu0 %v5890
        %5923 = vmatprep.subr.mxu0 0.0
        %5924 = vmatpush2.msra.mxu0 0.0
        %5925 = vmatprep.subr.mxu0 0.0
        %5926 = vmatpush2.msra.mxu0 0.0
        %5927 = vmatprep.subr.mxu0 0.0
        %5928 = vmatpush2.msra.mxu0 0.0
        %5929 = vmatprep.subr.mxu0 0.0
        %5930 = vmatpush2.msra.mxu0 0.0
        %5931 = vmatprep.subr.mxu0 0.0
        %5932 = vmatpush2.msra.mxu0 0.0
        %5933 = vmatprep.subr.mxu0 0.0
        %5934 = vmatpush2.msra.mxu0 0.0
        %5935 = vmatprep.subr.mxu0 0.0
        %5936 = vmatpush2.msra.mxu0 0.0
        %5937 = vmatprep.subr.mxu0 0.0
        %5938 = vmatpush2.msra.mxu0 0.0
        %5939 = vmatprep.subr.mxu0 0.0
        %5940 = vmatpush2.msra.mxu0 0.0
        %5941 = vmatprep.subr.mxu0 0.0
        %5942 = vmatpush2.msra.mxu0 0.0
        %5943 = vmatprep.subr.mxu0 0.0
        %5944 = vmatpush2.msra.mxu0 0.0
        %5945 = vmatprep.subr.mxu0 0.0
        %5946 = vmatpush2.msra.mxu0 0.0
        %5947 = vmatprep.subr.mxu0 0.0
        %5948 = vmatpush2.msra.mxu0 0.0
        %5949 = vmatprep.subr.mxu0 0.0
        %5950 = vmatpush2.msra.mxu0 0.0
        %5951 = vmatprep.subr.mxu0 0.0
        %5952 = vmatpush2.msra.mxu0 0.0
        %5953 = vmatprep.subr.mxu0 0.0
        %5954 = vmatpush2.msra.mxu0 0.0
        %5955 = vmatprep.mubr.f32.mxu0 0.0
        %5956 = vmatmul.mubr.f32.gmra.mxu0 %v649
        %v5957 = vpop.f32.mrf.mxu0
        %v5958 = vadd.f32 0.0, %v5957
        %v5959 = vpop.f32.mrf.mxu0
        %v5960 = vadd.f32 0.0, %v5959
        %5961 = vdwg.mxu0
        %5962 = vmatprep.subr.mxu0 %v466
        %5963 = vmatpush1.msra.mxu0 %v465
        %5964 = vmatprep.subr.mxu0 %v463
        %5965 = vmatpush1.msra.mxu0 %v462
        %5966 = vmatprep.subr.mxu0 %v460
        %5967 = vmatpush1.msra.mxu0 %v459
        %5968 = vmatprep.subr.mxu0 %v457
        %5969 = vmatpush1.msra.mxu0 %v456
        %5970 = vmatprep.subr.mxu0 %v454
        %5971 = vmatpush1.msra.mxu0 %v453
        %5972 = vmatprep.subr.mxu0 %v451
        %5973 = vmatpush1.msra.mxu0 %v450
        %5974 = vmatprep.subr.mxu0 %v448
        %5975 = vmatpush1.msra.mxu0 %v447
        %5976 = vmatprep.subr.mxu0 %v445
        %5977 = vmatpush1.msra.mxu0 %v444
        %5978 = vmatprep.subr.mxu0 %v442
        %5979 = vmatpush1.msra.mxu0 %v441
        %5980 = vmatprep.subr.mxu0 %v439
        %5981 = vmatpush1.msra.mxu0 %v438
        %5982 = vmatprep.subr.mxu0 %v436
        %5983 = vmatpush1.msra.mxu0 %v435
        %5984 = vmatprep.subr.mxu0 %v433
        %5985 = vmatpush1.msra.mxu0 %v432
        %5986 = vmatprep.subr.mxu0 %v430
        %5987 = vmatpush1.msra.mxu0 %v429
        %5988 = vmatprep.subr.mxu0 %v427
        %5989 = vmatpush1.msra.mxu0 %v426
        %5990 = vmatprep.subr.mxu0 %v424
        %5991 = vmatpush1.msra.mxu0 %v423
        %5992 = vmatprep.subr.mxu0 %v421
        %5993 = vmatpush1.msra.mxu0 %v420
        %5994 = vmatprep.subr.mxu0 %v514
        %5995 = vmatpush2.msra.mxu0 %v513
        %5996 = vmatprep.subr.mxu0 %v511
        %5997 = vmatpush2.msra.mxu0 %v510
        %5998 = vmatprep.subr.mxu0 %v508
        %5999 = vmatpush2.msra.mxu0 %v507
        %6000 = vmatprep.subr.mxu0 %v505
        %6001 = vmatpush2.msra.mxu0 %v504
        %6002 = vmatprep.subr.mxu0 %v502
        %6003 = vmatpush2.msra.mxu0 %v501
        %6004 = vmatprep.subr.mxu0 %v499
        %6005 = vmatpush2.msra.mxu0 %v498
        %6006 = vmatprep.subr.mxu0 %v496
        %6007 = vmatpush2.msra.mxu0 %v495
        %6008 = vmatprep.subr.mxu0 %v493
        %6009 = vmatpush2.msra.mxu0 %v492
        %6010 = vmatprep.subr.mxu0 %v490
        %6011 = vmatpush2.msra.mxu0 %v489
        %6012 = vmatprep.subr.mxu0 %v487
        %6013 = vmatpush2.msra.mxu0 %v486
        %6014 = vmatprep.subr.mxu0 %v484
        %6015 = vmatpush2.msra.mxu0 %v483
        %6016 = vmatprep.subr.mxu0 %v481
        %6017 = vmatpush2.msra.mxu0 %v480
        %6018 = vmatprep.subr.mxu0 %v478
        %6019 = vmatpush2.msra.mxu0 %v477
        %6020 = vmatprep.subr.mxu0 %v475
        %6021 = vmatpush2.msra.mxu0 %v474
        %6022 = vmatprep.subr.mxu0 %v472
        %6023 = vmatpush2.msra.mxu0 %v471
        %6024 = vmatprep.subr.mxu0 %v469
        %6025 = vmatpush2.msra.mxu0 %v468
        %6026 = vmatprep.mubr.f32.mxu0 %v5960
        %6027 = vmatmul.mubr.f32.gmra.mxu0 %v5958
        %v6028 = vpop.f32.mrf.mxu0
        %v6029 = vadd.f32 %v726, %v6028
        %v6030 = vpop.f32.mrf.mxu0
        %v6031 = vadd.f32 %v730, %v6030
        %6032 = vdwg.mxu0
        %6033 = vmatprep.subr.mxu0 0.0
        %6034 = vmatpush1.msra.mxu0 %v467
        %6035 = vmatprep.subr.mxu0 0.0
        %6036 = vmatpush1.msra.mxu0 %v464
        %6037 = vmatprep.subr.mxu0 0.0
        %6038 = vmatpush1.msra.mxu0 %v461
        %6039 = vmatprep.subr.mxu0 0.0
        %6040 = vmatpush1.msra.mxu0 %v458
        %6041 = vmatprep.subr.mxu0 0.0
        %6042 = vmatpush1.msra.mxu0 %v455
        %6043 = vmatprep.subr.mxu0 0.0
        %6044 = vmatpush1.msra.mxu0 %v452
        %6045 = vmatprep.subr.mxu0 0.0
        %6046 = vmatpush1.msra.mxu0 %v449
        %6047 = vmatprep.subr.mxu0 0.0
        %6048 = vmatpush1.msra.mxu0 %v446
        %6049 = vmatprep.subr.mxu0 0.0
        %6050 = vmatpush1.msra.mxu0 %v443
        %6051 = vmatprep.subr.mxu0 0.0
        %6052 = vmatpush1.msra.mxu0 %v440
        %6053 = vmatprep.subr.mxu0 0.0
        %6054 = vmatpush1.msra.mxu0 %v437
        %6055 = vmatprep.subr.mxu0 0.0
        %6056 = vmatpush1.msra.mxu0 %v434
        %6057 = vmatprep.subr.mxu0 0.0
        %6058 = vmatpush1.msra.mxu0 %v431
        %6059 = vmatprep.subr.mxu0 0.0
        %6060 = vmatpush1.msra.mxu0 %v428
        %6061 = vmatprep.subr.mxu0 0.0
        %6062 = vmatpush1.msra.mxu0 %v425
        %6063 = vmatprep.subr.mxu0 0.0
        %6064 = vmatpush1.msra.mxu0 %v422
        %6065 = vmatprep.subr.mxu0 0.0
        %6066 = vmatpush2.msra.mxu0 %v515
        %6067 = vmatprep.subr.mxu0 0.0
        %6068 = vmatpush2.msra.mxu0 %v512
        %6069 = vmatprep.subr.mxu0 0.0
        %6070 = vmatpush2.msra.mxu0 %v509
        %6071 = vmatprep.subr.mxu0 0.0
        %6072 = vmatpush2.msra.mxu0 %v506
        %6073 = vmatprep.subr.mxu0 0.0
        %6074 = vmatpush2.msra.mxu0 %v503
        %6075 = vmatprep.subr.mxu0 0.0
        %6076 = vmatpush2.msra.mxu0 %v500
        %6077 = vmatprep.subr.mxu0 0.0
        %6078 = vmatpush2.msra.mxu0 %v497
        %6079 = vmatprep.subr.mxu0 0.0
        %6080 = vmatpush2.msra.mxu0 %v494
        %6081 = vmatprep.subr.mxu0 0.0
        %6082 = vmatpush2.msra.mxu0 %v491
        %6083 = vmatprep.subr.mxu0 0.0
        %6084 = vmatpush2.msra.mxu0 %v488
        %6085 = vmatprep.subr.mxu0 0.0
        %6086 = vmatpush2.msra.mxu0 %v485
        %6087 = vmatprep.subr.mxu0 0.0
        %6088 = vmatpush2.msra.mxu0 %v482
        %6089 = vmatprep.subr.mxu0 0.0
        %6090 = vmatpush2.msra.mxu0 %v479
        %6091 = vmatprep.subr.mxu0 0.0
        %6092 = vmatpush2.msra.mxu0 %v476
        %6093 = vmatprep.subr.mxu0 0.0
        %6094 = vmatpush2.msra.mxu0 %v473
        %6095 = vmatprep.subr.mxu0 0.0
        %6096 = vmatpush2.msra.mxu0 %v470
        %6097 = vmatprep.mubr.f32.mxu0 %v5960
        %6098 = vmatmul.mubr.f32.gmra.mxu0 %v5958
        %v6099 = vpop.f32.mrf.mxu0
        %v6100 = vadd.f32 %v734, %v6099
        %v6101 = vpop.f32.mrf.mxu0
        %6102 = vdwg.mxu0
        %v6103 = vxor.u32 %v6029, 2147483648
        %v6104 = vmul.f32 %v6103, 1.442695
        %v6105 = vpow.pop %v6104
        %v6106 = vadd.f32 %v6105, 1.0
        %v6107 = vrcp.pop %v6106
        %v6108 = vmul.f32 1.0, %v6107
        %v6109 = vxor.u32 %v6031, 2147483648
        %v6110 = vmul.f32 %v6109, 1.442695
        %v6111 = vpow.pop %v6110
        %v6112 = vadd.f32 %v6111, 1.0
        %v6113 = vrcp.pop %v6112
        %v6114 = vmul.f32 1.0, %v6113
        %v6115 = vmul.f32 %v6108, %v5517
        %6116 = vmatprep.subr.mxu0 0.0
        %6117 = vmatpush1.msra.mxu0 0.0
        %6118 = vmatprep.subr.mxu0 0.0
        %6119 = vmatpush1.msra.mxu0 0.0
        %6120 = vmatprep.subr.mxu0 0.0
        %6121 = vmatpush1.msra.mxu0 0.0
        %6122 = vmatprep.subr.mxu0 0.0
        %6123 = vmatpush1.msra.mxu0 0.0
        %6124 = vmatprep.subr.mxu0 0.0
        %6125 = vmatpush1.msra.mxu0 0.0
        %6126 = vmatprep.subr.mxu0 0.0
        %6127 = vmatpush1.msra.mxu0 0.0
        %6128 = vmatprep.subr.mxu0 0.0
        %6129 = vmatpush1.msra.mxu0 0.0
        %6130 = vmatprep.subr.mxu0 0.0
        %6131 = vmatpush1.msra.mxu0 0.0
        %6132 = vmatprep.subr.mxu0 0.0
        %6133 = vmatpush1.msra.mxu0 0.0
        %6134 = vmatprep.subr.mxu0 0.0
        %6135 = vmatpush1.msra.mxu0 0.0
        %6136 = vmatprep.subr.mxu0 0.0
        %6137 = vmatpush1.msra.mxu0 0.0
        %6138 = vmatprep.subr.mxu0 0.0
        %6139 = vmatpush1.msra.mxu0 0.0
        %6140 = vmatprep.subr.mxu0 0.0
        %6141 = vmatpush1.msra.mxu0 0.0
        %6142 = vmatprep.subr.mxu0 0.0
        %6143 = vmatpush1.msra.mxu0 0.0
        %6144 = vmatprep.subr.mxu0 0.0
        %6145 = vmatpush1.msra.mxu0 0.0
        %6146 = vmatprep.subr.mxu0 0.0
        %6147 = vmatpush1.msra.mxu0 %v6115
        %6148 = vmatprep.subr.mxu0 0.0
        %6149 = vmatpush2.msra.mxu0 0.0
        %6150 = vmatprep.subr.mxu0 0.0
        %6151 = vmatpush2.msra.mxu0 0.0
        %6152 = vmatprep.subr.mxu0 0.0
        %6153 = vmatpush2.msra.mxu0 0.0
        %6154 = vmatprep.subr.mxu0 0.0
        %6155 = vmatpush2.msra.mxu0 0.0
        %6156 = vmatprep.subr.mxu0 0.0
        %6157 = vmatpush2.msra.mxu0 0.0
        %6158 = vmatprep.subr.mxu0 0.0
        %6159 = vmatpush2.msra.mxu0 0.0
        %6160 = vmatprep.subr.mxu0 0.0
        %6161 = vmatpush2.msra.mxu0 0.0
        %6162 = vmatprep.subr.mxu0 0.0
        %6163 = vmatpush2.msra.mxu0 0.0
        %6164 = vmatprep.subr.mxu0 0.0
        %6165 = vmatpush2.msra.mxu0 0.0
        %6166 = vmatprep.subr.mxu0 0.0
        %6167 = vmatpush2.msra.mxu0 0.0
        %6168 = vmatprep.subr.mxu0 0.0
        %6169 = vmatpush2.msra.mxu0 0.0
        %6170 = vmatprep.subr.mxu0 0.0
        %6171 = vmatpush2.msra.mxu0 0.0
        %6172 = vmatprep.subr.mxu0 0.0
        %6173 = vmatpush2.msra.mxu0 0.0
        %6174 = vmatprep.subr.mxu0 0.0
        %6175 = vmatpush2.msra.mxu0 0.0
        %6176 = vmatprep.subr.mxu0 0.0
        %6177 = vmatpush2.msra.mxu0 0.0
        %6178 = vmatprep.subr.mxu0 0.0
        %6179 = vmatpush2.msra.mxu0 0.0
        %6180 = vmatprep.mubr.f32.mxu0 0.0
        %6181 = vmatmul.mubr.f32.gmra.mxu0 %v649
        %v6182 = vpop.f32.mrf.mxu0
        %v6183 = vadd.f32 0.0, %v6182
        %v6184 = vpop.f32.mrf.mxu0
        %6185 = vdwg.mxu0
        %6186 = vmatprep.subr.mxu0 0.0
        %6187 = vmatpush1.msra.mxu0 %v531
        %6188 = vmatprep.subr.mxu0 0.0
        %6189 = vmatpush1.msra.mxu0 %v530
        %6190 = vmatprep.subr.mxu0 0.0
        %6191 = vmatpush1.msra.mxu0 %v529
        %6192 = vmatprep.subr.mxu0 0.0
        %6193 = vmatpush1.msra.mxu0 %v528
        %6194 = vmatprep.subr.mxu0 0.0
        %6195 = vmatpush1.msra.mxu0 %v527
        %6196 = vmatprep.subr.mxu0 0.0
        %6197 = vmatpush1.msra.mxu0 %v526
        %6198 = vmatprep.subr.mxu0 0.0
        %6199 = vmatpush1.msra.mxu0 %v525
        %6200 = vmatprep.subr.mxu0 0.0
        %6201 = vmatpush1.msra.mxu0 %v524
        %6202 = vmatprep.subr.mxu0 0.0
        %6203 = vmatpush1.msra.mxu0 %v523
        %6204 = vmatprep.subr.mxu0 0.0
        %6205 = vmatpush1.msra.mxu0 %v522
        %6206 = vmatprep.subr.mxu0 0.0
        %6207 = vmatpush1.msra.mxu0 %v521
        %6208 = vmatprep.subr.mxu0 0.0
        %6209 = vmatpush1.msra.mxu0 %v520
        %6210 = vmatprep.subr.mxu0 0.0
        %6211 = vmatpush1.msra.mxu0 %v519
        %6212 = vmatprep.subr.mxu0 0.0
        %6213 = vmatpush1.msra.mxu0 %v518
        %6214 = vmatprep.subr.mxu0 0.0
        %6215 = vmatpush1.msra.mxu0 %v517
        %6216 = vmatprep.subr.mxu0 0.0
        %6217 = vmatpush1.msra.mxu0 %v516
        %6218 = vmatprep.subr.mxu0 0.0
        %6219 = vmatpush2.msra.mxu0 0.0
        %6220 = vmatprep.subr.mxu0 0.0
        %6221 = vmatpush2.msra.mxu0 0.0
        %6222 = vmatprep.subr.mxu0 0.0
        %6223 = vmatpush2.msra.mxu0 0.0
        %6224 = vmatprep.subr.mxu0 0.0
        %6225 = vmatpush2.msra.mxu0 0.0
        %6226 = vmatprep.subr.mxu0 0.0
        %6227 = vmatpush2.msra.mxu0 0.0
        %6228 = vmatprep.subr.mxu0 0.0
        %6229 = vmatpush2.msra.mxu0 0.0
        %6230 = vmatprep.subr.mxu0 0.0
        %6231 = vmatpush2.msra.mxu0 0.0
        %6232 = vmatprep.subr.mxu0 0.0
        %6233 = vmatpush2.msra.mxu0 0.0
        %6234 = vmatprep.subr.mxu0 0.0
        %6235 = vmatpush2.msra.mxu0 0.0
        %6236 = vmatprep.subr.mxu0 0.0
        %6237 = vmatpush2.msra.mxu0 0.0
        %6238 = vmatprep.subr.mxu0 0.0
        %6239 = vmatpush2.msra.mxu0 0.0
        %6240 = vmatprep.subr.mxu0 0.0
        %6241 = vmatpush2.msra.mxu0 0.0
        %6242 = vmatprep.subr.mxu0 0.0
        %6243 = vmatpush2.msra.mxu0 0.0
        %6244 = vmatprep.subr.mxu0 0.0
        %6245 = vmatpush2.msra.mxu0 0.0
        %6246 = vmatprep.subr.mxu0 0.0
        %6247 = vmatpush2.msra.mxu0 0.0
        %6248 = vmatprep.subr.mxu0 0.0
        %6249 = vmatpush2.msra.mxu0 0.0
        %6250 = vmatprep.mubr.f32.mxu0 0.0
        %6251 = vmatmul.mubr.f32.gmra.mxu0 %v6183
        %v6252 = vpop.f32.mrf.mxu0
        %v6253 = vadd.f32 0.0, %v6252
        %v6254 = vpop.f32.mrf.mxu0
        %6255 = vdwg.mxu0
        %v6256 = vadd.f32 %v6100, %v6253
        %v6257 = vtanh.pop %v6256
        %v6258 = vmul.f32 %v6114, %v5517
        %v6259 = vsub.f32 1.0, %v6114
        %v6260 = vmul.f32 %v6259, %v6257
        %v6261 = vadd.f32 %v6258, %v6260
        %6262 = vmatprep.subr.mxu0 0.0
        %6263 = vmatpush1.msra.mxu0 0.0
        %6264 = vmatprep.subr.mxu0 0.0
        %6265 = vmatpush1.msra.mxu0 0.0
        %6266 = vmatprep.subr.mxu0 0.0
        %6267 = vmatpush1.msra.mxu0 0.0
        %6268 = vmatprep.subr.mxu0 0.0
        %6269 = vmatpush1.msra.mxu0 0.0
        %6270 = vmatprep.subr.mxu0 0.0
        %6271 = vmatpush1.msra.mxu0 0.0
        %6272 = vmatprep.subr.mxu0 0.0
        %6273 = vmatpush1.msra.mxu0 0.0
        %6274 = vmatprep.subr.mxu0 0.0
        %6275 = vmatpush1.msra.mxu0 0.0
        %6276 = vmatprep.subr.mxu0 0.0
        %6277 = vmatpush1.msra.mxu0 0.0
        %6278 = vmatprep.subr.mxu0 0.0
        %6279 = vmatpush1.msra.mxu0 0.0
        %6280 = vmatprep.subr.mxu0 0.0
        %6281 = vmatpush1.msra.mxu0 0.0
        %6282 = vmatprep.subr.mxu0 0.0
        %6283 = vmatpush1.msra.mxu0 0.0
        %6284 = vmatprep.subr.mxu0 0.0
        %6285 = vmatpush1.msra.mxu0 0.0
        %6286 = vmatprep.subr.mxu0 0.0
        %6287 = vmatpush1.msra.mxu0 0.0
        %6288 = vmatprep.subr.mxu0 0.0
        %6289 = vmatpush1.msra.mxu0 0.0
        %6290 = vmatprep.subr.mxu0 0.0
        %6291 = vmatpush1.msra.mxu0 0.0
        %6292 = vmatprep.subr.mxu0 %v5888
        %6293 = vmatpush1.msra.mxu0 %v6261
        %6294 = vmatprep.subr.mxu0 0.0
        %6295 = vmatpush2.msra.mxu0 0.0
        %6296 = vmatprep.subr.mxu0 0.0
        %6297 = vmatpush2.msra.mxu0 0.0
        %6298 = vmatprep.subr.mxu0 0.0
        %6299 = vmatpush2.msra.mxu0 0.0
        %6300 = vmatprep.subr.mxu0 0.0
        %6301 = vmatpush2.msra.mxu0 0.0
        %6302 = vmatprep.subr.mxu0 0.0
        %6303 = vmatpush2.msra.mxu0 0.0
        %6304 = vmatprep.subr.mxu0 0.0
        %6305 = vmatpush2.msra.mxu0 0.0
        %6306 = vmatprep.subr.mxu0 0.0
        %6307 = vmatpush2.msra.mxu0 0.0
        %6308 = vmatprep.subr.mxu0 0.0
        %6309 = vmatpush2.msra.mxu0 0.0
        %6310 = vmatprep.subr.mxu0 0.0
        %6311 = vmatpush2.msra.mxu0 0.0
        %6312 = vmatprep.subr.mxu0 0.0
        %6313 = vmatpush2.msra.mxu0 0.0
        %6314 = vmatprep.subr.mxu0 0.0
        %6315 = vmatpush2.msra.mxu0 0.0
        %6316 = vmatprep.subr.mxu0 0.0
        %6317 = vmatpush2.msra.mxu0 0.0
        %6318 = vmatprep.subr.mxu0 0.0
        %6319 = vmatpush2.msra.mxu0 0.0
        %6320 = vmatprep.subr.mxu0 0.0
        %6321 = vmatpush2.msra.mxu0 0.0
        %6322 = vmatprep.subr.mxu0 0.0
        %6323 = vmatpush2.msra.mxu0 0.0
        %6324 = vmatprep.subr.mxu0 0.0
        %6325 = vmatpush2.msra.mxu0 0.0
        %6326 = vmatprep.mubr.f32.mxu0 0.0
        %6327 = vmatmul.mubr.f32.gmra.mxu0 %v649
        %v6328 = vpop.f32.mrf.mxu0
        %v6329 = vadd.f32 0.0, %v6328
        %v6330 = vpop.f32.mrf.mxu0
        %v6331 = vadd.f32 0.0, %v6330
        %6332 = vdwg.mxu0
        %6333 = vmatprep.subr.mxu0 %v579
        %6334 = vmatpush1.msra.mxu0 %v578
        %6335 = vmatprep.subr.mxu0 %v576
        %6336 = vmatpush1.msra.mxu0 %v575
        %6337 = vmatprep.subr.mxu0 %v573
        %6338 = vmatpush1.msra.mxu0 %v572
        %6339 = vmatprep.subr.mxu0 %v570
        %6340 = vmatpush1.msra.mxu0 %v569
        %6341 = vmatprep.subr.mxu0 %v567
        %6342 = vmatpush1.msra.mxu0 %v566
        %6343 = vmatprep.subr.mxu0 %v564
        %6344 = vmatpush1.msra.mxu0 %v563
        %6345 = vmatprep.subr.mxu0 %v561
        %6346 = vmatpush1.msra.mxu0 %v560
        %6347 = vmatprep.subr.mxu0 %v558
        %6348 = vmatpush1.msra.mxu0 %v557
        %6349 = vmatprep.subr.mxu0 %v555
        %6350 = vmatpush1.msra.mxu0 %v554
        %6351 = vmatprep.subr.mxu0 %v552
        %6352 = vmatpush1.msra.mxu0 %v551
        %6353 = vmatprep.subr.mxu0 %v549
        %6354 = vmatpush1.msra.mxu0 %v548
        %6355 = vmatprep.subr.mxu0 %v546
        %6356 = vmatpush1.msra.mxu0 %v545
        %6357 = vmatprep.subr.mxu0 %v543
        %6358 = vmatpush1.msra.mxu0 %v542
        %6359 = vmatprep.subr.mxu0 %v540
        %6360 = vmatpush1.msra.mxu0 %v539
        %6361 = vmatprep.subr.mxu0 %v537
        %6362 = vmatpush1.msra.mxu0 %v536
        %6363 = vmatprep.subr.mxu0 %v534
        %6364 = vmatpush1.msra.mxu0 %v533
        %6365 = vmatprep.subr.mxu0 %v627
        %6366 = vmatpush2.msra.mxu0 %v626
        %6367 = vmatprep.subr.mxu0 %v624
        %6368 = vmatpush2.msra.mxu0 %v623
        %6369 = vmatprep.subr.mxu0 %v621
        %6370 = vmatpush2.msra.mxu0 %v620
        %6371 = vmatprep.subr.mxu0 %v618
        %6372 = vmatpush2.msra.mxu0 %v617
        %6373 = vmatprep.subr.mxu0 %v615
        %6374 = vmatpush2.msra.mxu0 %v614
        %6375 = vmatprep.subr.mxu0 %v612
        %6376 = vmatpush2.msra.mxu0 %v611
        %6377 = vmatprep.subr.mxu0 %v609
        %6378 = vmatpush2.msra.mxu0 %v608
        %6379 = vmatprep.subr.mxu0 %v606
        %6380 = vmatpush2.msra.mxu0 %v605
        %6381 = vmatprep.subr.mxu0 %v603
        %6382 = vmatpush2.msra.mxu0 %v602
        %6383 = vmatprep.subr.mxu0 %v600
        %6384 = vmatpush2.msra.mxu0 %v599
        %6385 = vmatprep.subr.mxu0 %v597
        %6386 = vmatpush2.msra.mxu0 %v596
        %6387 = vmatprep.subr.mxu0 %v594
        %6388 = vmatpush2.msra.mxu0 %v593
        %6389 = vmatprep.subr.mxu0 %v591
        %6390 = vmatpush2.msra.mxu0 %v590
        %6391 = vmatprep.subr.mxu0 %v588
        %6392 = vmatpush2.msra.mxu0 %v587
        %6393 = vmatprep.subr.mxu0 %v585
        %6394 = vmatpush2.msra.mxu0 %v584
        %6395 = vmatprep.subr.mxu0 %v582
        %6396 = vmatpush2.msra.mxu0 %v581
        %6397 = vmatprep.mubr.f32.mxu0 %v6331
        %6398 = vmatmul.mubr.f32.gmra.mxu0 %v6329
        %v6399 = vpop.f32.mrf.mxu0
        %v6400 = vadd.f32 %v1113, %v6399
        %v6401 = vpop.f32.mrf.mxu0
        %v6402 = vadd.f32 %v1117, %v6401
        %6403 = vdwg.mxu0
        %6404 = vmatprep.subr.mxu0 0.0
        %6405 = vmatpush1.msra.mxu0 %v580
        %6406 = vmatprep.subr.mxu0 0.0
        %6407 = vmatpush1.msra.mxu0 %v577
        %6408 = vmatprep.subr.mxu0 0.0
        %6409 = vmatpush1.msra.mxu0 %v574
        %6410 = vmatprep.subr.mxu0 0.0
        %6411 = vmatpush1.msra.mxu0 %v571
        %6412 = vmatprep.subr.mxu0 0.0
        %6413 = vmatpush1.msra.mxu0 %v568
        %6414 = vmatprep.subr.mxu0 0.0
        %6415 = vmatpush1.msra.mxu0 %v565
        %6416 = vmatprep.subr.mxu0 0.0
        %6417 = vmatpush1.msra.mxu0 %v562
        %6418 = vmatprep.subr.mxu0 0.0
        %6419 = vmatpush1.msra.mxu0 %v559
        %6420 = vmatprep.subr.mxu0 0.0
        %6421 = vmatpush1.msra.mxu0 %v556
        %6422 = vmatprep.subr.mxu0 0.0
        %6423 = vmatpush1.msra.mxu0 %v553
        %6424 = vmatprep.subr.mxu0 0.0
        %6425 = vmatpush1.msra.mxu0 %v550
        %6426 = vmatprep.subr.mxu0 0.0
        %6427 = vmatpush1.msra.mxu0 %v547
        %6428 = vmatprep.subr.mxu0 0.0
        %6429 = vmatpush1.msra.mxu0 %v544
        %6430 = vmatprep.subr.mxu0 0.0
        %6431 = vmatpush1.msra.mxu0 %v541
        %6432 = vmatprep.subr.mxu0 0.0
        %6433 = vmatpush1.msra.mxu0 %v538
        %6434 = vmatprep.subr.mxu0 0.0
        %6435 = vmatpush1.msra.mxu0 %v535
        %6436 = vmatprep.subr.mxu0 0.0
        %6437 = vmatpush2.msra.mxu0 %v628
        %6438 = vmatprep.subr.mxu0 0.0
        %6439 = vmatpush2.msra.mxu0 %v625
        %6440 = vmatprep.subr.mxu0 0.0
        %6441 = vmatpush2.msra.mxu0 %v622
        %6442 = vmatprep.subr.mxu0 0.0
        %6443 = vmatpush2.msra.mxu0 %v619
        %6444 = vmatprep.subr.mxu0 0.0
        %6445 = vmatpush2.msra.mxu0 %v616
        %6446 = vmatprep.subr.mxu0 0.0
        %6447 = vmatpush2.msra.mxu0 %v613
        %6448 = vmatprep.subr.mxu0 0.0
        %6449 = vmatpush2.msra.mxu0 %v610
        %6450 = vmatprep.subr.mxu0 0.0
        %6451 = vmatpush2.msra.mxu0 %v607
        %6452 = vmatprep.subr.mxu0 0.0
        %6453 = vmatpush2.msra.mxu0 %v604
        %6454 = vmatprep.subr.mxu0 0.0
        %6455 = vmatpush2.msra.mxu0 %v601
        %6456 = vmatprep.subr.mxu0 0.0
        %6457 = vmatpush2.msra.mxu0 %v598
        %6458 = vmatprep.subr.mxu0 0.0
        %6459 = vmatpush2.msra.mxu0 %v595
        %6460 = vmatprep.subr.mxu0 0.0
        %6461 = vmatpush2.msra.mxu0 %v592
        %6462 = vmatprep.subr.mxu0 0.0
        %6463 = vmatpush2.msra.mxu0 %v589
        %6464 = vmatprep.subr.mxu0 0.0
        %6465 = vmatpush2.msra.mxu0 %v586
        %6466 = vmatprep.subr.mxu0 0.0
        %6467 = vmatpush2.msra.mxu0 %v583
        %6468 = vmatprep.mubr.f32.mxu0 %v6331
        %6469 = vmatmul.mubr.f32.gmra.mxu0 %v6329
        %v6470 = vpop.f32.mrf.mxu0
        %v6471 = vadd.f32 %v1121, %v6470
        %v6472 = vpop.f32.mrf.mxu0
        %6473 = vdwg.mxu0
        %v6474 = vxor.u32 %v6400, 2147483648
        %v6475 = vmul.f32 %v6474, 1.442695
        %v6476 = vpow.pop %v6475
        %v6477 = vadd.f32 %v6476, 1.0
        %v6478 = vrcp.pop %v6477
        %v6479 = vmul.f32 1.0, %v6478
        %v6480 = vxor.u32 %v6402, 2147483648
        %v6481 = vmul.f32 %v6480, 1.442695
        %v6482 = vpow.pop %v6481
        %v6483 = vadd.f32 %v6482, 1.0
        %v6484 = vrcp.pop %v6483
        %v6485 = vmul.f32 1.0, %v6484
        %v6486 = vmul.f32 %v6479, %v5888
        %6487 = vmatprep.subr.mxu0 0.0
        %6488 = vmatpush1.msra.mxu0 0.0
        %6489 = vmatprep.subr.mxu0 0.0
        %6490 = vmatpush1.msra.mxu0 0.0
        %6491 = vmatprep.subr.mxu0 0.0
        %6492 = vmatpush1.msra.mxu0 0.0
        %6493 = vmatprep.subr.mxu0 0.0
        %6494 = vmatpush1.msra.mxu0 0.0
        %6495 = vmatprep.subr.mxu0 0.0
        %6496 = vmatpush1.msra.mxu0 0.0
        %6497 = vmatprep.subr.mxu0 0.0
        %6498 = vmatpush1.msra.mxu0 0.0
        %6499 = vmatprep.subr.mxu0 0.0
        %6500 = vmatpush1.msra.mxu0 0.0
        %6501 = vmatprep.subr.mxu0 0.0
        %6502 = vmatpush1.msra.mxu0 0.0
        %6503 = vmatprep.subr.mxu0 0.0
        %6504 = vmatpush1.msra.mxu0 0.0
        %6505 = vmatprep.subr.mxu0 0.0
        %6506 = vmatpush1.msra.mxu0 0.0
        %6507 = vmatprep.subr.mxu0 0.0
        %6508 = vmatpush1.msra.mxu0 0.0
        %6509 = vmatprep.subr.mxu0 0.0
        %6510 = vmatpush1.msra.mxu0 0.0
        %6511 = vmatprep.subr.mxu0 0.0
        %6512 = vmatpush1.msra.mxu0 0.0
        %6513 = vmatprep.subr.mxu0 0.0
        %6514 = vmatpush1.msra.mxu0 0.0
        %6515 = vmatprep.subr.mxu0 0.0
        %6516 = vmatpush1.msra.mxu0 0.0
        %6517 = vmatprep.subr.mxu0 0.0
        %6518 = vmatpush1.msra.mxu0 %v6486
        %6519 = vmatprep.subr.mxu0 0.0
        %6520 = vmatpush2.msra.mxu0 0.0
        %6521 = vmatprep.subr.mxu0 0.0
        %6522 = vmatpush2.msra.mxu0 0.0
        %6523 = vmatprep.subr.mxu0 0.0
        %6524 = vmatpush2.msra.mxu0 0.0
        %6525 = vmatprep.subr.mxu0 0.0
        %6526 = vmatpush2.msra.mxu0 0.0
        %6527 = vmatprep.subr.mxu0 0.0
        %6528 = vmatpush2.msra.mxu0 0.0
        %6529 = vmatprep.subr.mxu0 0.0
        %6530 = vmatpush2.msra.mxu0 0.0
        %6531 = vmatprep.subr.mxu0 0.0
        %6532 = vmatpush2.msra.mxu0 0.0
        %6533 = vmatprep.subr.mxu0 0.0
        %6534 = vmatpush2.msra.mxu0 0.0
        %6535 = vmatprep.subr.mxu0 0.0
        %6536 = vmatpush2.msra.mxu0 0.0
        %6537 = vmatprep.subr.mxu0 0.0
        %6538 = vmatpush2.msra.mxu0 0.0
        %6539 = vmatprep.subr.mxu0 0.0
        %6540 = vmatpush2.msra.mxu0 0.0
        %6541 = vmatprep.subr.mxu0 0.0
        %6542 = vmatpush2.msra.mxu0 0.0
        %6543 = vmatprep.subr.mxu0 0.0
        %6544 = vmatpush2.msra.mxu0 0.0
        %6545 = vmatprep.subr.mxu0 0.0
        %6546 = vmatpush2.msra.mxu0 0.0
        %6547 = vmatprep.subr.mxu0 0.0
        %6548 = vmatpush2.msra.mxu0 0.0
        %6549 = vmatprep.subr.mxu0 0.0
        %6550 = vmatpush2.msra.mxu0 0.0
        %6551 = vmatprep.mubr.f32.mxu0 0.0
        %6552 = vmatmul.mubr.f32.gmra.mxu0 %v649
        %v6553 = vpop.f32.mrf.mxu0
        %v6554 = vadd.f32 0.0, %v6553
        %v6555 = vpop.f32.mrf.mxu0
        %6556 = vdwg.mxu0
        %6557 = vmatprep.subr.mxu0 0.0
        %6558 = vmatpush1.msra.mxu0 %v644
        %6559 = vmatprep.subr.mxu0 0.0
        %6560 = vmatpush1.msra.mxu0 %v643
        %6561 = vmatprep.subr.mxu0 0.0
        %6562 = vmatpush1.msra.mxu0 %v642
        %6563 = vmatprep.subr.mxu0 0.0
        %6564 = vmatpush1.msra.mxu0 %v641
        %6565 = vmatprep.subr.mxu0 0.0
        %6566 = vmatpush1.msra.mxu0 %v640
        %6567 = vmatprep.subr.mxu0 0.0
        %6568 = vmatpush1.msra.mxu0 %v639
        %6569 = vmatprep.subr.mxu0 0.0
        %6570 = vmatpush1.msra.mxu0 %v638
        %6571 = vmatprep.subr.mxu0 0.0
        %6572 = vmatpush1.msra.mxu0 %v637
        %6573 = vmatprep.subr.mxu0 0.0
        %6574 = vmatpush1.msra.mxu0 %v636
        %6575 = vmatprep.subr.mxu0 0.0
        %6576 = vmatpush1.msra.mxu0 %v635
        %6577 = vmatprep.subr.mxu0 0.0
        %6578 = vmatpush1.msra.mxu0 %v634
        %6579 = vmatprep.subr.mxu0 0.0
        %6580 = vmatpush1.msra.mxu0 %v633
        %6581 = vmatprep.subr.mxu0 0.0
        %6582 = vmatpush1.msra.mxu0 %v632
        %6583 = vmatprep.subr.mxu0 0.0
        %6584 = vmatpush1.msra.mxu0 %v631
        %6585 = vmatprep.subr.mxu0 0.0
        %6586 = vmatpush1.msra.mxu0 %v630
        %6587 = vmatprep.subr.mxu0 0.0
        %6588 = vmatpush1.msra.mxu0 %v629
        %6589 = vmatprep.subr.mxu0 0.0
        %6590 = vmatpush2.msra.mxu0 0.0
        %6591 = vmatprep.subr.mxu0 0.0
        %6592 = vmatpush2.msra.mxu0 0.0
        %6593 = vmatprep.subr.mxu0 0.0
        %6594 = vmatpush2.msra.mxu0 0.0
        %6595 = vmatprep.subr.mxu0 0.0
        %6596 = vmatpush2.msra.mxu0 0.0
        %6597 = vmatprep.subr.mxu0 0.0
        %6598 = vmatpush2.msra.mxu0 0.0
        %6599 = vmatprep.subr.mxu0 0.0
        %6600 = vmatpush2.msra.mxu0 0.0
        %6601 = vmatprep.subr.mxu0 0.0
        %6602 = vmatpush2.msra.mxu0 0.0
        %6603 = vmatprep.subr.mxu0 0.0
        %6604 = vmatpush2.msra.mxu0 0.0
        %6605 = vmatprep.subr.mxu0 0.0
        %6606 = vmatpush2.msra.mxu0 0.0
        %6607 = vmatprep.subr.mxu0 0.0
        %6608 = vmatpush2.msra.mxu0 0.0
        %6609 = vmatprep.subr.mxu0 0.0
        %6610 = vmatpush2.msra.mxu0 0.0
        %6611 = vmatprep.subr.mxu0 0.0
        %6612 = vmatpush2.msra.mxu0 0.0
        %6613 = vmatprep.subr.mxu0 0.0
        %6614 = vmatpush2.msra.mxu0 0.0
        %6615 = vmatprep.subr.mxu0 0.0
        %6616 = vmatpush2.msra.mxu0 0.0
        %6617 = vmatprep.subr.mxu0 0.0
        %6618 = vmatpush2.msra.mxu0 0.0
        %6619 = vmatprep.subr.mxu0 0.0
        %6620 = vmatpush2.msra.mxu0 0.0
        %6621 = vmatprep.mubr.f32.mxu0 0.0
        %6622 = vmatmul.mubr.f32.gmra.mxu0 %v6554
        %v6623 = vpop.f32.mrf.mxu0
        %v6624 = vadd.f32 0.0, %v6623
        %v6625 = vpop.f32.mrf.mxu0
        %6626 = vdwg.mxu0
        %v6627 = vadd.f32 %v6471, %v6624
        %v6628 = vtanh.pop %v6627
        %v6629 = vmul.f32 %v6485, %v5888
        %v6630 = vsub.f32 1.0, %v6485
        %v6631 = vmul.f32 %v6630, %v6628
        %v6632 = vadd.f32 %v6629, %v6631
        %6633 = vst [vmem:[%s418] sm:$0xff] %v6261
        %s6634 = scalar_lea.vmem %s418, 8 [#allocation13]
        %6635 = vst [vmem:[%s6634] sm:$0xff] %v6632
        %s6636 = sand.u32 %s216, 1
        %s6637 = scalar_lea.sflag [#allocation4], %s6636
        %s6638 = sand.u32 %s216, 1
        %s6639 = smul.addr %s6638, 16
        %s6640 = scalar_lea.vmem [#allocation13], %s6639
        // Predicated region
        $region77: #{tpu_custom_call.1} parent=51 // pred_check
          %p6641 = pneg %p226
        $region78: #{tpu_custom_call.1} parent=51 // pred_check_branch
          %6643 = sbr.rel (%p6641) target = $region80
        $region79: #{tpu_custom_call.1} parent=51 // pred_region
          %s6645 = ssub.s32 256, 256
          %6646 = vsyncadd %s6637, %s6645
          %s6647 = smul.addr %s30, 2
          %s6648 = smul.addr %s6647, 128
          %s6649 = scalar_lea.hbm %s8, %s6648
          %s6650 = sshll.u32 %s6640, 4
          %s6651 = int_to_ptr.vmem [resolvable:$true] %s6650
          %6656 = dma.vmem_to_hbm [thread:$0]  %s6651, 256, %s6649, %s6637, 128, 128, 8
        $region80: #{tpu_custom_call.1} parent=51 // pred_fallthru
          _
      $region52: #{tpu_custom_call.1} parent=5 // pred_fallthru
        _
      %p6657 = scmp.le.s32.totalorder 2, %s25
      // Predicated region
      $region81: #{tpu_custom_call.1} parent=5 // pred_check
        %p6658 = pneg %p6657
      $region82: #{tpu_custom_call.1} parent=5 // pred_check_branch
        %6660 = sbr.rel (%p6658) target = $region84
      $region83: #{tpu_custom_call.1} parent=5 // pred_region
        %s6661 = ssub.s32 %s25, 2
        // Predicated region
        $region85: #{tpu_custom_call.1} parent=83 // pred_check
          %p6662 = pneg %p232
        $region86: #{tpu_custom_call.1} parent=83 // pred_check_branch
          %6664 = sbr.rel (%p6662) target = $region88
        $region87: #{tpu_custom_call.1} parent=83 // pred_region
          %s6665 = sand.u32 %s217, 1
          %s6666 = scalar_lea.sflag [#allocation4], %s6665
          %s6667 = sand.u32 %s217, 1
          %s6668 = smul.addr %s6667, 16
          %s6669 = scalar_lea.vmem [#allocation13], %s6668
          %6670 = dma.done %s6666, 256
        $region88: #{tpu_custom_call.1} parent=83 // pred_fallthru
          _
      $region84: #{tpu_custom_call.1} parent=5 // pred_fallthru
        _
    $region6: #{tpu_custom_call.1} parent=1 // loop_footer
      %s29 = sadd.s32 1, %s25
    $region7: #{tpu_custom_call.1} parent=1 // loop_footer_branch
      %24 = sbr.rel target = $region3
    $region8: #{tpu_custom_call.1} parent=1 // loop_exit
      _
    %6671 = vsyncpa [#allocation3], 1
    %s6672 = scalar_lea.sflag [#allocation3], 1
    %6673 = vsyncpa %s6672, 1
    %6674 = vsyncpa [#allocation6], 1
    %s6675 = scalar_lea.sflag [#allocation6], 1
    %6676 = vsyncpa %s6675, 1
    %6677 = vsyncpa [#allocation9], 1
    %6678 = vsyncpa [#allocation12], 1
    %6679 = vsyncpa [#allocation4], 1
    %s6680 = scalar_lea.sflag [#allocation4], 1
    %6681 = vsyncpa %s6680, 1

</llo_original>
